<compile_context>
chip_gen: v7x
topology: tpu7x:2x2x1
jax: 0.10.0
libtpu: 0.0.40
codegen_flags: <defaults>
</compile_context>

<pallas_src>
import jax
import jax.numpy as jnp
from jax.experimental import pallas as pl
from jax.experimental.pallas import tpu as pltpu

# ---------------- module-consistent config ----------------
C, H, W = 4, 16, 16          # image_dim
PATCH = 4                    # layers.patch_size
N_EMBD = 32                  # layers.n_embd
N_HEAD = 4                   # layers.n_head
N_LAYER = 2                  # layers.n_layers
CLASSES = 10                 # kwargs['classes'] (>2 -> head outputs CLASSES logits)
B = 2

NB_PATCHES = (H // PATCH) * (W // PATCH)     # 16
T = NB_PATCHES + 1                           # 17 (cls token + patches)
TP = ((T + 7) // 8) * 8                      # 24: per-batch rows, sublane multiple of 8
P_DIM = C * PATCH * PATCH                    # 64
HIDDEN = 4 * N_EMBD                          # 128
HD = N_EMBD // N_HEAD                        # 8 (head dim)
CLS_ROW = NB_PATCHES                         # cls token stored at 8-aligned row 16


# ------------- glue: patch extraction (pure reshape/transpose, fused by XLA) ----------
def image_to_patches(x, p):
    b, c, h, w = x.shape
    x = x.reshape(b, c, h // p, p, w // p, p)
    x = x.transpose(0, 2, 4, 1, 3, 5)                  # (B, H/p, W/p, C, p, p)
    return x.reshape(b, (h // p) * (w // p), c * p * p)


# ---------------- in-kernel helpers ----------------
def _layernorm(x, g, b, eps=1e-5):
    mu = jnp.mean(x, axis=-1, keepdims=True)
    var = jnp.mean((x - mu) ** 2, axis=-1, keepdims=True)
    return (x - mu) * jax.lax.rsqrt(var + eps) * g + b


# ---------------- the single fused kernel ----------------
def vit_kernel(patches_ref, wp_ref, bp_ref, cls_ref, pos_ref,
               ln1g_ref, ln1b_ref, wq_ref, bq_ref, wk_ref, bk_ref,
               wv_ref, bv_ref, wo_ref, bo_ref, ln2g_ref, ln2b_ref,
               w1_ref, b1_ref, w2_ref, b2_ref, wh_ref, bh_ref,
               out_ref, seq_scr):
    f32 = jnp.float32

    # ---- 1. patch projection + cls token + positional embedding (batch folded) ----
    patches = patches_ref[...].reshape(B * NB_PATCHES, P_DIM)                 # (32, 64)
    proj = jnp.dot(patches, wp_ref[...], preferred_element_type=f32) + bp_ref[...]

    # Assemble the padded sequence (B*TP, E) with 8-aligned direct stores (no concat).
    # Layout per batch slab: rows 0..15 = patches (+pos[1..16]),
    #                        row 16     = cls (+pos[0]),
    #                        rows 17..23 = zero padding (finite -> masked to weight 0).
    seq_scr[...] = jnp.zeros_like(seq_scr)
    cls_row = cls_ref[...] + pos_ref[0:1, :]                                  # (1, E)
    pos_patch = pos_ref[1:T, :]                                               # (16, E)
    for b in range(B):
        base = b * TP                                                         # 0, 24
        seq_scr[base:base + NB_PATCHES, :] = (
            proj[b * NB_PATCHES:(b + 1) * NB_PATCHES, :] + pos_patch)         # aligned
        seq_scr[base + CLS_ROW:base + CLS_ROW + 1, :] = cls_row                # row 16/40
    x = seq_scr[...]                                                          # (B*TP, E)

    # ---- 2. transformer blocks (weights stacked on a leading layer axis) ----
    scale = 1.0 / float(HD) ** 0.5
    # Mask for padded key columns (same for every batch / head / layer).
    key_valid = jax.lax.broadcasted_iota(jnp.int32, (B, TP, TP), 2) < T
    neg_inf = jnp.float32(-1e30)

    for l in range(N_LAYER):
        # --- multi-head self-attention (pre-LN, non-causal) ---
        h = _layernorm(x, ln1g_ref[l], ln1b_ref[l])
        q = (jnp.dot(h, wq_ref[l], preferred_element_type=f32) + bq_ref[l]) * scale
        k = jnp.dot(h, wk_ref[l], preferred_element_type=f32) + bk_ref[l]
        v = jnp.dot(h, wv_ref[l], preferred_element_type=f32) + bv_ref[l]
        q3 = q.reshape(B, TP, N_EMBD)
        k3 = k.reshape(B, TP, N_EMBD)
        v3 = v.reshape(B, TP, N_EMBD)
        wo_l = wo_ref[l]

        sa = jnp.zeros((B * TP, N_EMBD), f32)
        for hh in range(N_HEAD):
            sl = slice(hh * HD, (hh + 1) * HD)                                # lane slice
            s = jnp.einsum('bqd,bkd->bqk', q3[:, :, sl], k3[:, :, sl],
                           preferred_element_type=f32)                       # (B, TP, TP)
            s = jnp.where(key_valid, s, neg_inf)      # mask padded key columns
            s = s - jnp.max(s, axis=-1, keepdims=True)
            p = jnp.exp(s)
            p = p * pl.reciprocal(jnp.sum(p, axis=-1, keepdims=True), approx=True)
            oh = jnp.einsum('bqk,bkd->bqd', p, v3[:, :, sl],
                            preferred_element_type=f32)                      # (B, TP, HD)
            # Fold the output projection: concat_h(o_h) @ Wo == sum_h o_h @ Wo[slice_h]
            sa = sa + jnp.dot(oh.reshape(B * TP, HD), wo_l[sl, :],
                              preferred_element_type=f32)
        x = x + sa + bo_ref[l]                        # residual 1 (dropout = identity)

        # --- feed-forward ---
        h2 = _layernorm(x, ln2g_ref[l], ln2b_ref[l])
        ff = jnp.dot(h2, w1_ref[l], preferred_element_type=f32) + b1_ref[l]
        ff = jnp.maximum(ff, 0.0)  # TODO(synk): minBackbones FeedForward assumed ReLU (Karpathy-style); swap to GELU if the repo uses it.
        x = x + jnp.dot(ff, w2_ref[l], preferred_element_type=f32) + b2_ref[l]

    # ---- 3. classification head on the cls rows only ----
    cls_tokens = jnp.concatenate(
        [x[b * TP + CLS_ROW:b * TP + CLS_ROW + 1, :] for b in range(B)], axis=0)
    out_ref[...] = (jnp.dot(cls_tokens, wh_ref[...], preferred_element_type=f32)
                    + bh_ref[...])


# ---------------- wrapper ----------------
@jax.jit
def vit_forward(x, params):
    patches = image_to_patches(x, PATCH)              # (B, NB_PATCHES, P_DIM)
    logits = pl.pallas_call(
        vit_kernel,
        out_shape=jax.ShapeDtypeStruct((B, CLASSES), jnp.float32),
        scratch_shapes=[pltpu.VMEM((B * TP, N_EMBD), jnp.float32)],
    )(patches,
      params["w_proj"], params["b_proj"], params["cls"], params["pos"],
      params["ln1_g"], params["ln1_b"],
      params["wq"], params["bq"], params["wk"], params["bk"],
      params["wv"], params["bv"], params["wo"], params["bo"],
      params["ln2_g"], params["ln2_b"],
      params["w1"], params["b1"], params["w2"], params["b2"],
      params["w_head"], params["b_head"])
    return jnp.squeeze(logits)                        # matches x.squeeze() in torch


# --------- deterministic parameter init (synthetic, stacked per-layer) ----------------
def init_params(key):
    keys = jax.random.split(key, 32)
    kit = iter(range(32))

    def nrm(shape, scale=0.02):
        return scale * jax.random.normal(keys[next(kit)], shape, jnp.float32)

    L = N_LAYER
    return {
        "w_proj": nrm((P_DIM, N_EMBD)),
        "b_proj": nrm((1, N_EMBD), 0.01),
        "cls": jnp.zeros((1, N_EMBD), jnp.float32),           # torch.zeros in __init__
        "pos": nrm((T, N_EMBD)),
        "w_head": nrm((N_EMBD, CLASSES)),
        "b_head": nrm((1, CLASSES), 0.01),
        # per-layer weights stacked on a leading layer axis
        "ln1_g": jnp.ones((L, 1, N_EMBD), jnp.float32),
        "ln1_b": jnp.zeros((L, 1, N_EMBD), jnp.float32),
        "wq": nrm((L, N_EMBD, N_EMBD)), "bq": nrm((L, 1, N_EMBD), 0.01),
        "wk": nrm((L, N_EMBD, N_EMBD)), "bk": nrm((L, 1, N_EMBD), 0.01),
        "wv": nrm((L, N_EMBD, N_EMBD)), "bv": nrm((L, 1, N_EMBD), 0.01),
        "wo": nrm((L, N_EMBD, N_EMBD)), "bo": nrm((L, 1, N_EMBD), 0.01),
        "ln2_g": jnp.ones((L, 1, N_EMBD), jnp.float32),
        "ln2_b": jnp.zeros((L, 1, N_EMBD), jnp.float32),
        "w1": nrm((L, N_EMBD, HIDDEN)), "b1": nrm((L, 1, HIDDEN), 0.01),
        "w2": nrm((L, HIDDEN, N_EMBD)), "b2": nrm((L, 1, N_EMBD), 0.01),
    }


if __name__ == "__main__":
    root = jax.random.PRNGKey(0)
    k_x, k_p = jax.random.split(root)
    x = jax.random.normal(k_x, (B, C, H, W), jnp.float32)
    params = init_params(k_p)

    out = vit_forward(x, params)
    out = jax.block_until_ready(out)
    assert out.shape == (B, CLASSES), out.shape
    assert bool(jnp.all(jnp.isfinite(out))), "non-finite logits"
    print("KERNEL_OK")
</pallas_src>

<mosaic_0001>
module attributes {stable_mosaic.version = 11 : i64} {
  func.func @vit_kernel(%arg0: memref<2x16x64xf32, #tpu.memory_space<vmem>>, %arg1: memref<64x32xf32, #tpu.memory_space<vmem>>, %arg2: memref<1x32xf32, #tpu.memory_space<vmem>>, %arg3: memref<1x32xf32, #tpu.memory_space<vmem>>, %arg4: memref<17x32xf32, #tpu.memory_space<vmem>>, %arg5: memref<2x1x32xf32, #tpu.memory_space<vmem>>, %arg6: memref<2x1x32xf32, #tpu.memory_space<vmem>>, %arg7: memref<2x32x32xf32, #tpu.memory_space<vmem>>, %arg8: memref<2x1x32xf32, #tpu.memory_space<vmem>>, %arg9: memref<2x32x32xf32, #tpu.memory_space<vmem>>, %arg10: memref<2x1x32xf32, #tpu.memory_space<vmem>>, %arg11: memref<2x32x32xf32, #tpu.memory_space<vmem>>, %arg12: memref<2x1x32xf32, #tpu.memory_space<vmem>>, %arg13: memref<2x32x32xf32, #tpu.memory_space<vmem>>, %arg14: memref<2x1x32xf32, #tpu.memory_space<vmem>>, %arg15: memref<2x1x32xf32, #tpu.memory_space<vmem>>, %arg16: memref<2x1x32xf32, #tpu.memory_space<vmem>>, %arg17: memref<2x32x128xf32, #tpu.memory_space<vmem>>, %arg18: memref<2x1x128xf32, #tpu.memory_space<vmem>>, %arg19: memref<2x128x32xf32, #tpu.memory_space<vmem>>, %arg20: memref<2x1x32xf32, #tpu.memory_space<vmem>>, %arg21: memref<32x10xf32, #tpu.memory_space<vmem>>, %arg22: memref<1x10xf32, #tpu.memory_space<vmem>>, %arg23: memref<2x10xf32, #tpu.memory_space<vmem>>, %arg24: memref<48x32xf32, #tpu.memory_space<vmem>>) attributes {dimension_semantics = [], scalar_prefetch = 0 : i64, scratch_operands = 1 : i64, tpu.core_type = #tpu.core_type<tc>} {
    %c0 = arith.constant 0 : index
    %c0_0 = arith.constant 0 : index
    %c0_1 = arith.constant 0 : index
    %0 = vector.load %arg0[%c0, %c0_0, %c0_1] : memref<2x16x64xf32, #tpu.memory_space<vmem>>, vector<2x16x64xf32>
    %1 = vector.shape_cast %0 : vector<2x16x64xf32> to vector<32x64xf32>
    %c0_2 = arith.constant 0 : index
    %c0_3 = arith.constant 0 : index
    %2 = vector.load %arg1[%c0_2, %c0_3] : memref<64x32xf32, #tpu.memory_space<vmem>>, vector<64x32xf32>
    %cst = arith.constant dense<0.000000e+00> : vector<32x32xf32>
    %3 = tpu.matmul %1, %2, %cst {dimension_numbers = #tpu.dot_dimension_numbers<[1], [0], [0], [1], [0, 0, 1, 1], [], []>} : vector<32x64xf32>, vector<64x32xf32>, vector<32x32xf32> -> vector<32x32xf32>
    %c0_4 = arith.constant 0 : index
    %c0_5 = arith.constant 0 : index
    %4 = vector.load %arg2[%c0_4, %c0_5] : memref<1x32xf32, #tpu.memory_space<vmem>>, vector<1x32xf32>
    %5 = vector.broadcast %4 : vector<1x32xf32> to vector<32x32xf32>
    %6 = arith.addf %3, %5 : vector<32x32xf32>
    %cst_6 = arith.constant 0.000000e+00 : f32
    %7 = vector.broadcast %cst_6 : f32 to vector<48x32xf32>
    %c0_7 = arith.constant 0 : index
    %c0_8 = arith.constant 0 : index
    %8 = vector.load %arg24[%c0_7, %c0_8] : memref<48x32xf32, #tpu.memory_space<vmem>>, vector<48x32xf32>
    tpu.vector_store %arg24[%c0_7, %c0_8], %7 {strides = array<i32>} : memref<48x32xf32, #tpu.memory_space<vmem>>, vector<48x32xf32>,
    %c0_9 = arith.constant 0 : index
    %c0_10 = arith.constant 0 : index
    %9 = vector.load %arg3[%c0_9, %c0_10] : memref<1x32xf32, #tpu.memory_space<vmem>>, vector<1x32xf32>
    %c0_11 = arith.constant 0 : index
    %c0_12 = arith.constant 0 : index
    %10 = vector.load %arg4[%c0_11, %c0_12] : memref<17x32xf32, #tpu.memory_space<vmem>>, vector<1x32xf32>
    %11 = arith.addf %9, %10 : vector<1x32xf32>
    %c1 = arith.constant 1 : index
    %c0_13 = arith.constant 0 : index
    %12 = vector.load %arg4[%c1, %c0_13] : memref<17x32xf32, #tpu.memory_space<vmem>>, vector<16x32xf32>
    %13 = vector.extract_strided_slice %6 {offsets = [0, 0], sizes = [16, 32], strides = [1, 1]} : vector<32x32xf32> to vector<16x32xf32>
    %14 = arith.addf %13, %12 : vector<16x32xf32>
    %c0_14 = arith.constant 0 : index
    %c0_15 = arith.constant 0 : index
    %15 = vector.load %arg24[%c0_14, %c0_15] : memref<48x32xf32, #tpu.memory_space<vmem>>, vector<16x32xf32>
    tpu.vector_store %arg24[%c0_14, %c0_15], %14 {strides = array<i32>} : memref<48x32xf32, #tpu.memory_space<vmem>>, vector<16x32xf32>,
    %c16 = arith.constant 16 : index
    %c0_16 = arith.constant 0 : index
    %16 = vector.load %arg24[%c16, %c0_16] : memref<48x32xf32, #tpu.memory_space<vmem>>, vector<1x32xf32>
    tpu.vector_store %arg24[%c16, %c0_16], %11 {strides = array<i32>} : memref<48x32xf32, #tpu.memory_space<vmem>>, vector<1x32xf32>,
    %17 = vector.extract_strided_slice %6 {offsets = [16, 0], sizes = [16, 32], strides = [1, 1]} : vector<32x32xf32> to vector<16x32xf32>
    %18 = arith.addf %17, %12 : vector<16x32xf32>
    %c24 = arith.constant 24 : index
    %c0_17 = arith.constant 0 : index
    %19 = vector.load %arg24[%c24, %c0_17] : memref<48x32xf32, #tpu.memory_space<vmem>>, vector<16x32xf32>
    tpu.vector_store %arg24[%c24, %c0_17], %18 {strides = array<i32>} : memref<48x32xf32, #tpu.memory_space<vmem>>, vector<16x32xf32>,
    %c40 = arith.constant 40 : index
    %c0_18 = arith.constant 0 : index
    %20 = vector.load %arg24[%c40, %c0_18] : memref<48x32xf32, #tpu.memory_space<vmem>>, vector<1x32xf32>
    tpu.vector_store %arg24[%c40, %c0_18], %11 {strides = array<i32>} : memref<48x32xf32, #tpu.memory_space<vmem>>, vector<1x32xf32>,
    %c0_19 = arith.constant 0 : index
    %c0_20 = arith.constant 0 : index
    %21 = vector.load %arg24[%c0_19, %c0_20] : memref<48x32xf32, #tpu.memory_space<vmem>>, vector<48x32xf32>
    %22 = tpu.iota {dimensions = array<i32: 2>} : vector<2x24x24xi32>
    %c17_i32 = arith.constant 17 : i32
    %23 = vector.broadcast %c17_i32 : i32 to vector<2x24x24xi32>
    %24 = arith.cmpi slt, %22, %23 : vector<2x24x24xi32>
    %c0_21 = arith.constant 0 : index
    %c0_22 = arith.constant 0 : index
    %c0_23 = arith.constant 0 : index
    %25 = vector.load %arg5[%c0_21, %c0_22, %c0_23] : memref<2x1x32xf32, #tpu.memory_space<vmem>>, vector<1x1x32xf32>
    %26 = vector.shape_cast %25 : vector<1x1x32xf32> to vector<1x32xf32>
    %c0_24 = arith.constant 0 : index
    %c0_25 = arith.constant 0 : index
    %c0_26 = arith.constant 0 : index
    %27 = vector.load %arg6[%c0_24, %c0_25, %c0_26] : memref<2x1x32xf32, #tpu.memory_space<vmem>>, vector<1x1x32xf32>
    %28 = vector.shape_cast %27 : vector<1x1x32xf32> to vector<1x32xf32>
    %cst_27 = arith.constant dense<0.000000e+00> : vector<48xf32>
    %29 = vector.multi_reduction <add>, %21, %cst_27 [1] : vector<48x32xf32> to vector<48xf32>
    %30 = vector.shape_cast %29 : vector<48xf32> to vector<48x1xf32>
    %cst_28 = arith.constant 3.200000e+01 : f32
    %31 = vector.broadcast %cst_28 : f32 to vector<48x1xf32>
    %32 = arith.divf %30, %31 : vector<48x1xf32>
    %33 = vector.broadcast %32 : vector<48x1xf32> to vector<48x32xf32>
    %34 = arith.subf %21, %33 : vector<48x32xf32>
    %35 = arith.mulf %34, %34 : vector<48x32xf32>
    %cst_29 = arith.constant dense<0.000000e+00> : vector<48xf32>
    %36 = vector.multi_reduction <add>, %35, %cst_29 [1] : vector<48x32xf32> to vector<48xf32>
    %37 = vector.shape_cast %36 : vector<48xf32> to vector<48x1xf32>
    %cst_30 = arith.constant 3.200000e+01 : f32
    %38 = vector.broadcast %cst_30 : f32 to vector<48x1xf32>
    %39 = arith.divf %37, %38 : vector<48x1xf32>
    %40 = vector.broadcast %32 : vector<48x1xf32> to vector<48x32xf32>
    %41 = arith.subf %21, %40 : vector<48x32xf32>
    %cst_31 = arith.constant 9.99999974E-6 : f32
    %42 = vector.broadcast %cst_31 : f32 to vector<48x1xf32>
    %43 = arith.addf %39, %42 : vector<48x1xf32>
    %44 = math.rsqrt %43 : vector<48x1xf32>
    %45 = vector.broadcast %44 : vector<48x1xf32> to vector<48x32xf32>
    %46 = arith.mulf %41, %45 : vector<48x32xf32>
    %47 = vector.broadcast %26 : vector<1x32xf32> to vector<48x32xf32>
    %48 = arith.mulf %46, %47 : vector<48x32xf32>
    %49 = vector.broadcast %28 : vector<1x32xf32> to vector<48x32xf32>
    %50 = arith.addf %48, %49 : vector<48x32xf32>
    %c0_32 = arith.constant 0 : index
    %c0_33 = arith.constant 0 : index
    %c0_34 = arith.constant 0 : index
    %51 = vector.load %arg7[%c0_32, %c0_33, %c0_34] : memref<2x32x32xf32, #tpu.memory_space<vmem>>, vector<1x32x32xf32>
    %52 = vector.shape_cast %51 : vector<1x32x32xf32> to vector<32x32xf32>
    %cst_35 = arith.constant dense<0.000000e+00> : vector<48x32xf32>
    %53 = tpu.matmul %50, %52, %cst_35 {dimension_numbers = #tpu.dot_dimension_numbers<[1], [0], [0], [1], [0, 0, 1, 1], [], []>} : vector<48x32xf32>, vector<32x32xf32>, vector<48x32xf32> -> vector<48x32xf32>
    %c0_36 = arith.constant 0 : index
    %c0_37 = arith.constant 0 : index
    %c0_38 = arith.constant 0 : index
    %54 = vector.load %arg8[%c0_36, %c0_37, %c0_38] : memref<2x1x32xf32, #tpu.memory_space<vmem>>, vector<1x1x32xf32>
    %55 = vector.shape_cast %54 : vector<1x1x32xf32> to vector<1x32xf32>
    %56 = vector.broadcast %55 : vector<1x32xf32> to vector<48x32xf32>
    %57 = arith.addf %53, %56 : vector<48x32xf32>
    %cst_39 = arith.constant 0.353553385 : f32
    %58 = vector.broadcast %cst_39 : f32 to vector<48x32xf32>
    %59 = arith.mulf %57, %58 : vector<48x32xf32>
    %c0_40 = arith.constant 0 : index
    %c0_41 = arith.constant 0 : index
    %c0_42 = arith.constant 0 : index
    %60 = vector.load %arg9[%c0_40, %c0_41, %c0_42] : memref<2x32x32xf32, #tpu.memory_space<vmem>>, vector<1x32x32xf32>
    %61 = vector.shape_cast %60 : vector<1x32x32xf32> to vector<32x32xf32>
    %cst_43 = arith.constant dense<0.000000e+00> : vector<48x32xf32>
    %62 = tpu.matmul %50, %61, %cst_43 {dimension_numbers = #tpu.dot_dimension_numbers<[1], [0], [0], [1], [0, 0, 1, 1], [], []>} : vector<48x32xf32>, vector<32x32xf32>, vector<48x32xf32> -> vector<48x32xf32>
    %c0_44 = arith.constant 0 : index
    %c0_45 = arith.constant 0 : index
    %c0_46 = arith.constant 0 : index
    %63 = vector.load %arg10[%c0_44, %c0_45, %c0_46] : memref<2x1x32xf32, #tpu.memory_space<vmem>>, vector<1x1x32xf32>
    %64 = vector.shape_cast %63 : vector<1x1x32xf32> to vector<1x32xf32>
    %65 = vector.broadcast %64 : vector<1x32xf32> to vector<48x32xf32>
    %66 = arith.addf %62, %65 : vector<48x32xf32>
    %c0_47 = arith.constant 0 : index
    %c0_48 = arith.constant 0 : index
    %c0_49 = arith.constant 0 : index
    %67 = vector.load %arg11[%c0_47, %c0_48, %c0_49] : memref<2x32x32xf32, #tpu.memory_space<vmem>>, vector<1x32x32xf32>
    %68 = vector.shape_cast %67 : vector<1x32x32xf32> to vector<32x32xf32>
    %cst_50 = arith.constant dense<0.000000e+00> : vector<48x32xf32>
    %69 = tpu.matmul %50, %68, %cst_50 {dimension_numbers = #tpu.dot_dimension_numbers<[1], [0], [0], [1], [0, 0, 1, 1], [], []>} : vector<48x32xf32>, vector<32x32xf32>, vector<48x32xf32> -> vector<48x32xf32>
    %c0_51 = arith.constant 0 : index
    %c0_52 = arith.constant 0 : index
    %c0_53 = arith.constant 0 : index
    %70 = vector.load %arg12[%c0_51, %c0_52, %c0_53] : memref<2x1x32xf32, #tpu.memory_space<vmem>>, vector<1x1x32xf32>
    %71 = vector.shape_cast %70 : vector<1x1x32xf32> to vector<1x32xf32>
    %72 = vector.broadcast %71 : vector<1x32xf32> to vector<48x32xf32>
    %73 = arith.addf %69, %72 : vector<48x32xf32>
    %74 = vector.shape_cast %59 : vector<48x32xf32> to vector<2x24x32xf32>
    %75 = vector.shape_cast %66 : vector<48x32xf32> to vector<2x24x32xf32>
    %76 = vector.shape_cast %73 : vector<48x32xf32> to vector<2x24x32xf32>
    %c0_54 = arith.constant 0 : index
    %c0_55 = arith.constant 0 : index
    %c0_56 = arith.constant 0 : index
    %77 = vector.load %arg13[%c0_54, %c0_55, %c0_56] : memref<2x32x32xf32, #tpu.memory_space<vmem>>, vector<1x32x32xf32>
    %78 = vector.shape_cast %77 : vector<1x32x32xf32> to vector<32x32xf32>
    %cst_57 = arith.constant 0.000000e+00 : f32
    %79 = vector.broadcast %cst_57 : f32 to vector<48x32xf32>
    %80 = vector.extract_strided_slice %74 {offsets = [0, 0, 0], sizes = [2, 24, 8], strides = [1, 1, 1]} : vector<2x24x32xf32> to vector<2x24x8xf32>
    %81 = vector.extract_strided_slice %75 {offsets = [0, 0, 0], sizes = [2, 24, 8], strides = [1, 1, 1]} : vector<2x24x32xf32> to vector<2x24x8xf32>
    "tpu.trace_start"() <{level = 10 : i32, message = "bqd,bkd->bqk"}> : () -> ()
    %cst_58 = arith.constant dense<0.000000e+00> : vector<2x24x24xf32>
    %82 = tpu.matmul %80, %81, %cst_58 {dimension_numbers = #tpu.dot_dimension_numbers<[2], [2], [1], [1], [0, 0, 0, 1, 1, 1], [0], [0]>} : vector<2x24x8xf32>, vector<2x24x8xf32>, vector<2x24x24xf32> -> vector<2x24x24xf32>
    %cst_59 = arith.constant -1.000000e+30 : f32
    "tpu.trace_stop"() : () -> ()
    %83 = vector.broadcast %cst_59 : f32 to vector<2x24x24xf32>
    %84 = arith.select %24, %82, %83 : vector<2x24x24xi1>, vector<2x24x24xf32>
    %cst_60 = arith.constant dense<0xFF800000> : vector<2x24xf32>
    %85 = vector.multi_reduction <maximumf>, %84, %cst_60 [2] : vector<2x24x24xf32> to vector<2x24xf32>
    %86 = vector.shape_cast %85 : vector<2x24xf32> to vector<2x24x1xf32>
    %87 = vector.broadcast %86 : vector<2x24x1xf32> to vector<2x24x24xf32>
    %88 = arith.subf %84, %87 : vector<2x24x24xf32>
    %89 = math.exp %88 : vector<2x24x24xf32>
    %cst_61 = arith.constant dense<0.000000e+00> : vector<2x24xf32>
    %90 = vector.multi_reduction <add>, %89, %cst_61 [2] : vector<2x24x24xf32> to vector<2x24xf32>
    %91 = vector.shape_cast %90 : vector<2x24xf32> to vector<2x24x1xf32>
    %92 = tpu.reciprocal %91 {approx = true} : vector<2x24x1xf32> -> vector<2x24x1xf32>
    %93 = vector.broadcast %92 : vector<2x24x1xf32> to vector<2x24x24xf32>
    %94 = arith.mulf %89, %93 : vector<2x24x24xf32>
    %95 = vector.extract_strided_slice %76 {offsets = [0, 0, 0], sizes = [2, 24, 8], strides = [1, 1, 1]} : vector<2x24x32xf32> to vector<2x24x8xf32>
    "tpu.trace_start"() <{level = 10 : i32, message = "bqk,bkd->bqd"}> : () -> ()
    %cst_62 = arith.constant dense<0.000000e+00> : vector<2x24x8xf32>
    %96 = tpu.matmul %94, %95, %cst_62 {dimension_numbers = #tpu.dot_dimension_numbers<[2], [1], [1], [2], [0, 0, 0, 1, 1, 2], [0], [0]>} : vector<2x24x24xf32>, vector<2x24x8xf32>, vector<2x24x8xf32> -> vector<2x24x8xf32>
    "tpu.trace_stop"() : () -> ()
    %97 = vector.shape_cast %96 : vector<2x24x8xf32> to vector<48x8xf32>
    %98 = vector.extract_strided_slice %78 {offsets = [0, 0], sizes = [8, 32], strides = [1, 1]} : vector<32x32xf32> to vector<8x32xf32>
    %cst_63 = arith.constant dense<0.000000e+00> : vector<48x32xf32>
    %99 = tpu.matmul %97, %98, %cst_63 {dimension_numbers = #tpu.dot_dimension_numbers<[1], [0], [0], [1], [0, 0, 1, 1], [], []>} : vector<48x8xf32>, vector<8x32xf32>, vector<48x32xf32> -> vector<48x32xf32>
    %100 = arith.addf %79, %99 : vector<48x32xf32>
    %101 = vector.extract_strided_slice %74 {offsets = [0, 0, 8], sizes = [2, 24, 8], strides = [1, 1, 1]} : vector<2x24x32xf32> to vector<2x24x8xf32>
    %102 = vector.extract_strided_slice %75 {offsets = [0, 0, 8], sizes = [2, 24, 8], strides = [1, 1, 1]} : vector<2x24x32xf32> to vector<2x24x8xf32>
    "tpu.trace_start"() <{level = 10 : i32, message = "bqd,bkd->bqk"}> : () -> ()
    %cst_64 = arith.constant dense<0.000000e+00> : vector<2x24x24xf32>
    %103 = tpu.matmul %101, %102, %cst_64 {dimension_numbers = #tpu.dot_dimension_numbers<[2], [2], [1], [1], [0, 0, 0, 1, 1, 1], [0], [0]>} : vector<2x24x8xf32>, vector<2x24x8xf32>, vector<2x24x24xf32> -> vector<2x24x24xf32>
    %cst_65 = arith.constant -1.000000e+30 : f32
    "tpu.trace_stop"() : () -> ()
    %104 = vector.broadcast %cst_65 : f32 to vector<2x24x24xf32>
    %105 = arith.select %24, %103, %104 : vector<2x24x24xi1>, vector<2x24x24xf32>
    %cst_66 = arith.constant dense<0xFF800000> : vector<2x24xf32>
    %106 = vector.multi_reduction <maximumf>, %105, %cst_66 [2] : vector<2x24x24xf32> to vector<2x24xf32>
    %107 = vector.shape_cast %106 : vector<2x24xf32> to vector<2x24x1xf32>
    %108 = vector.broadcast %107 : vector<2x24x1xf32> to vector<2x24x24xf32>
    %109 = arith.subf %105, %108 : vector<2x24x24xf32>
    %110 = math.exp %109 : vector<2x24x24xf32>
    %cst_67 = arith.constant dense<0.000000e+00> : vector<2x24xf32>
    %111 = vector.multi_reduction <add>, %110, %cst_67 [2] : vector<2x24x24xf32> to vector<2x24xf32>
    %112 = vector.shape_cast %111 : vector<2x24xf32> to vector<2x24x1xf32>
    %113 = tpu.reciprocal %112 {approx = true} : vector<2x24x1xf32> -> vector<2x24x1xf32>
    %114 = vector.broadcast %113 : vector<2x24x1xf32> to vector<2x24x24xf32>
    %115 = arith.mulf %110, %114 : vector<2x24x24xf32>
    %116 = vector.extract_strided_slice %76 {offsets = [0, 0, 8], sizes = [2, 24, 8], strides = [1, 1, 1]} : vector<2x24x32xf32> to vector<2x24x8xf32>
    "tpu.trace_start"() <{level = 10 : i32, message = "bqk,bkd->bqd"}> : () -> ()
    %cst_68 = arith.constant dense<0.000000e+00> : vector<2x24x8xf32>
    %117 = tpu.matmul %115, %116, %cst_68 {dimension_numbers = #tpu.dot_dimension_numbers<[2], [1], [1], [2], [0, 0, 0, 1, 1, 2], [0], [0]>} : vector<2x24x24xf32>, vector<2x24x8xf32>, vector<2x24x8xf32> -> vector<2x24x8xf32>
    "tpu.trace_stop"() : () -> ()
    %118 = vector.shape_cast %117 : vector<2x24x8xf32> to vector<48x8xf32>
    %119 = vector.extract_strided_slice %78 {offsets = [8, 0], sizes = [8, 32], strides = [1, 1]} : vector<32x32xf32> to vector<8x32xf32>
    %cst_69 = arith.constant dense<0.000000e+00> : vector<48x32xf32>
    %120 = tpu.matmul %118, %119, %cst_69 {dimension_numbers = #tpu.dot_dimension_numbers<[1], [0], [0], [1], [0, 0, 1, 1], [], []>} : vector<48x8xf32>, vector<8x32xf32>, vector<48x32xf32> -> vector<48x32xf32>
    %121 = arith.addf %100, %120 : vector<48x32xf32>
    %122 = vector.extract_strided_slice %74 {offsets = [0, 0, 16], sizes = [2, 24, 8], strides = [1, 1, 1]} : vector<2x24x32xf32> to vector<2x24x8xf32>
    %123 = vector.extract_strided_slice %75 {offsets = [0, 0, 16], sizes = [2, 24, 8], strides = [1, 1, 1]} : vector<2x24x32xf32> to vector<2x24x8xf32>
    "tpu.trace_start"() <{level = 10 : i32, message = "bqd,bkd->bqk"}> : () -> ()
    %cst_70 = arith.constant dense<0.000000e+00> : vector<2x24x24xf32>
    %124 = tpu.matmul %122, %123, %cst_70 {dimension_numbers = #tpu.dot_dimension_numbers<[2], [2], [1], [1], [0, 0, 0, 1, 1, 1], [0], [0]>} : vector<2x24x8xf32>, vector<2x24x8xf32>, vector<2x24x24xf32> -> vector<2x24x24xf32>
    %cst_71 = arith.constant -1.000000e+30 : f32
    "tpu.trace_stop"() : () -> ()
    %125 = vector.broadcast %cst_71 : f32 to vector<2x24x24xf32>
    %126 = arith.select %24, %124, %125 : vector<2x24x24xi1>, vector<2x24x24xf32>
    %cst_72 = arith.constant dense<0xFF800000> : vector<2x24xf32>
    %127 = vector.multi_reduction <maximumf>, %126, %cst_72 [2] : vector<2x24x24xf32> to vector<2x24xf32>
    %128 = vector.shape_cast %127 : vector<2x24xf32> to vector<2x24x1xf32>
    %129 = vector.broadcast %128 : vector<2x24x1xf32> to vector<2x24x24xf32>
    %130 = arith.subf %126, %129 : vector<2x24x24xf32>
    %131 = math.exp %130 : vector<2x24x24xf32>
    %cst_73 = arith.constant dense<0.000000e+00> : vector<2x24xf32>
    %132 = vector.multi_reduction <add>, %131, %cst_73 [2] : vector<2x24x24xf32> to vector<2x24xf32>
    %133 = vector.shape_cast %132 : vector<2x24xf32> to vector<2x24x1xf32>
    %134 = tpu.reciprocal %133 {approx = true} : vector<2x24x1xf32> -> vector<2x24x1xf32>
    %135 = vector.broadcast %134 : vector<2x24x1xf32> to vector<2x24x24xf32>
    %136 = arith.mulf %131, %135 : vector<2x24x24xf32>
    %137 = vector.extract_strided_slice %76 {offsets = [0, 0, 16], sizes = [2, 24, 8], strides = [1, 1, 1]} : vector<2x24x32xf32> to vector<2x24x8xf32>
    "tpu.trace_start"() <{level = 10 : i32, message = "bqk,bkd->bqd"}> : () -> ()
    %cst_74 = arith.constant dense<0.000000e+00> : vector<2x24x8xf32>
    %138 = tpu.matmul %136, %137, %cst_74 {dimension_numbers = #tpu.dot_dimension_numbers<[2], [1], [1], [2], [0, 0, 0, 1, 1, 2], [0], [0]>} : vector<2x24x24xf32>, vector<2x24x8xf32>, vector<2x24x8xf32> -> vector<2x24x8xf32>
    "tpu.trace_stop"() : () -> ()
    %139 = vector.shape_cast %138 : vector<2x24x8xf32> to vector<48x8xf32>
    %140 = vector.extract_strided_slice %78 {offsets = [16, 0], sizes = [8, 32], strides = [1, 1]} : vector<32x32xf32> to vector<8x32xf32>
    %cst_75 = arith.constant dense<0.000000e+00> : vector<48x32xf32>
    %141 = tpu.matmul %139, %140, %cst_75 {dimension_numbers = #tpu.dot_dimension_numbers<[1], [0], [0], [1], [0, 0, 1, 1], [], []>} : vector<48x8xf32>, vector<8x32xf32>, vector<48x32xf32> -> vector<48x32xf32>
    %142 = arith.addf %121, %141 : vector<48x32xf32>
    %143 = vector.extract_strided_slice %74 {offsets = [0, 0, 24], sizes = [2, 24, 8], strides = [1, 1, 1]} : vector<2x24x32xf32> to vector<2x24x8xf32>
    %144 = vector.extract_strided_slice %75 {offsets = [0, 0, 24], sizes = [2, 24, 8], strides = [1, 1, 1]} : vector<2x24x32xf32> to vector<2x24x8xf32>
    "tpu.trace_start"() <{level = 10 : i32, message = "bqd,bkd->bqk"}> : () -> ()
    %cst_76 = arith.constant dense<0.000000e+00> : vector<2x24x24xf32>
    %145 = tpu.matmul %143, %144, %cst_76 {dimension_numbers = #tpu.dot_dimension_numbers<[2], [2], [1], [1], [0, 0, 0, 1, 1, 1], [0], [0]>} : vector<2x24x8xf32>, vector<2x24x8xf32>, vector<2x24x24xf32> -> vector<2x24x24xf32>
    %cst_77 = arith.constant -1.000000e+30 : f32
    "tpu.trace_stop"() : () -> ()
    %146 = vector.broadcast %cst_77 : f32 to vector<2x24x24xf32>
    %147 = arith.select %24, %145, %146 : vector<2x24x24xi1>, vector<2x24x24xf32>
    %cst_78 = arith.constant dense<0xFF800000> : vector<2x24xf32>
    %148 = vector.multi_reduction <maximumf>, %147, %cst_78 [2] : vector<2x24x24xf32> to vector<2x24xf32>
    %149 = vector.shape_cast %148 : vector<2x24xf32> to vector<2x24x1xf32>
    %150 = vector.broadcast %149 : vector<2x24x1xf32> to vector<2x24x24xf32>
    %151 = arith.subf %147, %150 : vector<2x24x24xf32>
    %152 = math.exp %151 : vector<2x24x24xf32>
    %cst_79 = arith.constant dense<0.000000e+00> : vector<2x24xf32>
    %153 = vector.multi_reduction <add>, %152, %cst_79 [2] : vector<2x24x24xf32> to vector<2x24xf32>
    %154 = vector.shape_cast %153 : vector<2x24xf32> to vector<2x24x1xf32>
    %155 = tpu.reciprocal %154 {approx = true} : vector<2x24x1xf32> -> vector<2x24x1xf32>
    %156 = vector.broadcast %155 : vector<2x24x1xf32> to vector<2x24x24xf32>
    %157 = arith.mulf %152, %156 : vector<2x24x24xf32>
    %158 = vector.extract_strided_slice %76 {offsets = [0, 0, 24], sizes = [2, 24, 8], strides = [1, 1, 1]} : vector<2x24x32xf32> to vector<2x24x8xf32>
    "tpu.trace_start"() <{level = 10 : i32, message = "bqk,bkd->bqd"}> : () -> ()
    %cst_80 = arith.constant dense<0.000000e+00> : vector<2x24x8xf32>
    %159 = tpu.matmul %157, %158, %cst_80 {dimension_numbers = #tpu.dot_dimension_numbers<[2], [1], [1], [2], [0, 0, 0, 1, 1, 2], [0], [0]>} : vector<2x24x24xf32>, vector<2x24x8xf32>, vector<2x24x8xf32> -> vector<2x24x8xf32>
    "tpu.trace_stop"() : () -> ()
    %160 = vector.shape_cast %159 : vector<2x24x8xf32> to vector<48x8xf32>
    %161 = vector.extract_strided_slice %78 {offsets = [24, 0], sizes = [8, 32], strides = [1, 1]} : vector<32x32xf32> to vector<8x32xf32>
    %cst_81 = arith.constant dense<0.000000e+00> : vector<48x32xf32>
    %162 = tpu.matmul %160, %161, %cst_81 {dimension_numbers = #tpu.dot_dimension_numbers<[1], [0], [0], [1], [0, 0, 1, 1], [], []>} : vector<48x8xf32>, vector<8x32xf32>, vector<48x32xf32> -> vector<48x32xf32>
    %163 = arith.addf %142, %162 : vector<48x32xf32>
    %164 = arith.addf %21, %163 : vector<48x32xf32>
    %c0_82 = arith.constant 0 : index
    %c0_83 = arith.constant 0 : index
    %c0_84 = arith.constant 0 : index
    %165 = vector.load %arg14[%c0_82, %c0_83, %c0_84] : memref<2x1x32xf32, #tpu.memory_space<vmem>>, vector<1x1x32xf32>
    %166 = vector.shape_cast %165 : vector<1x1x32xf32> to vector<1x32xf32>
    %167 = vector.broadcast %166 : vector<1x32xf32> to vector<48x32xf32>
    %168 = arith.addf %164, %167 : vector<48x32xf32>
    %c0_85 = arith.constant 0 : index
    %c0_86 = arith.constant 0 : index
    %c0_87 = arith.constant 0 : index
    %169 = vector.load %arg15[%c0_85, %c0_86, %c0_87] : memref<2x1x32xf32, #tpu.memory_space<vmem>>, vector<1x1x32xf32>
    %170 = vector.shape_cast %169 : vector<1x1x32xf32> to vector<1x32xf32>
    %c0_88 = arith.constant 0 : index
    %c0_89 = arith.constant 0 : index
    %c0_90 = arith.constant 0 : index
    %171 = vector.load %arg16[%c0_88, %c0_89, %c0_90] : memref<2x1x32xf32, #tpu.memory_space<vmem>>, vector<1x1x32xf32>
    %172 = vector.shape_cast %171 : vector<1x1x32xf32> to vector<1x32xf32>
    %cst_91 = arith.constant dense<0.000000e+00> : vector<48xf32>
    %173 = vector.multi_reduction <add>, %168, %cst_91 [1] : vector<48x32xf32> to vector<48xf32>
    %174 = vector.shape_cast %173 : vector<48xf32> to vector<48x1xf32>
    %cst_92 = arith.constant 3.200000e+01 : f32
    %175 = vector.broadcast %cst_92 : f32 to vector<48x1xf32>
    %176 = arith.divf %174, %175 : vector<48x1xf32>
    %177 = vector.broadcast %176 : vector<48x1xf32> to vector<48x32xf32>
    %178 = arith.subf %168, %177 : vector<48x32xf32>
    %179 = arith.mulf %178, %178 : vector<48x32xf32>
    %cst_93 = arith.constant dense<0.000000e+00> : vector<48xf32>
    %180 = vector.multi_reduction <add>, %179, %cst_93 [1] : vector<48x32xf32> to vector<48xf32>
    %181 = vector.shape_cast %180 : vector<48xf32> to vector<48x1xf32>
    %cst_94 = arith.constant 3.200000e+01 : f32
    %182 = vector.broadcast %cst_94 : f32 to vector<48x1xf32>
    %183 = arith.divf %181, %182 : vector<48x1xf32>
    %184 = vector.broadcast %176 : vector<48x1xf32> to vector<48x32xf32>
    %185 = arith.subf %168, %184 : vector<48x32xf32>
    %cst_95 = arith.constant 9.99999974E-6 : f32
    %186 = vector.broadcast %cst_95 : f32 to vector<48x1xf32>
    %187 = arith.addf %183, %186 : vector<48x1xf32>
    %188 = math.rsqrt %187 : vector<48x1xf32>
    %189 = vector.broadcast %188 : vector<48x1xf32> to vector<48x32xf32>
    %190 = arith.mulf %185, %189 : vector<48x32xf32>
    %191 = vector.broadcast %170 : vector<1x32xf32> to vector<48x32xf32>
    %192 = arith.mulf %190, %191 : vector<48x32xf32>
    %193 = vector.broadcast %172 : vector<1x32xf32> to vector<48x32xf32>
    %194 = arith.addf %192, %193 : vector<48x32xf32>
    %c0_96 = arith.constant 0 : index
    %c0_97 = arith.constant 0 : index
    %c0_98 = arith.constant 0 : index
    %195 = vector.load %arg17[%c0_96, %c0_97, %c0_98] : memref<2x32x128xf32, #tpu.memory_space<vmem>>, vector<1x32x128xf32>
    %196 = vector.shape_cast %195 : vector<1x32x128xf32> to vector<32x128xf32>
    %cst_99 = arith.constant dense<0.000000e+00> : vector<48x128xf32>
    %197 = tpu.matmul %194, %196, %cst_99 {dimension_numbers = #tpu.dot_dimension_numbers<[1], [0], [0], [1], [0, 0, 1, 1], [], []>} : vector<48x32xf32>, vector<32x128xf32>, vector<48x128xf32> -> vector<48x128xf32>
    %c0_100 = arith.constant 0 : index
    %c0_101 = arith.constant 0 : index
    %c0_102 = arith.constant 0 : index
    %198 = vector.load %arg18[%c0_100, %c0_101, %c0_102] : memref<2x1x128xf32, #tpu.memory_space<vmem>>, vector<1x1x128xf32>
    %199 = vector.shape_cast %198 : vector<1x1x128xf32> to vector<1x128xf32>
    %200 = vector.broadcast %199 : vector<1x128xf32> to vector<48x128xf32>
    %201 = arith.addf %197, %200 : vector<48x128xf32>
    %cst_103 = arith.constant 0.000000e+00 : f32
    %202 = vector.broadcast %cst_103 : f32 to vector<48x128xf32>
    %203 = arith.maximumf %201, %202 : vector<48x128xf32>
    %c0_104 = arith.constant 0 : index
    %c0_105 = arith.constant 0 : index
    %c0_106 = arith.constant 0 : index
    %204 = vector.load %arg19[%c0_104, %c0_105, %c0_106] : memref<2x128x32xf32, #tpu.memory_space<vmem>>, vector<1x128x32xf32>
    %205 = vector.shape_cast %204 : vector<1x128x32xf32> to vector<128x32xf32>
    %cst_107 = arith.constant dense<0.000000e+00> : vector<48x32xf32>
    %206 = tpu.matmul %203, %205, %cst_107 {dimension_numbers = #tpu.dot_dimension_numbers<[1], [0], [0], [1], [0, 0, 1, 1], [], []>} : vector<48x128xf32>, vector<128x32xf32>, vector<48x32xf32> -> vector<48x32xf32>
    %207 = arith.addf %168, %206 : vector<48x32xf32>
    %c0_108 = arith.constant 0 : index
    %c0_109 = arith.constant 0 : index
    %c0_110 = arith.constant 0 : index
    %208 = vector.load %arg20[%c0_108, %c0_109, %c0_110] : memref<2x1x32xf32, #tpu.memory_space<vmem>>, vector<1x1x32xf32>
    %209 = vector.shape_cast %208 : vector<1x1x32xf32> to vector<1x32xf32>
    %210 = vector.broadcast %209 : vector<1x32xf32> to vector<48x32xf32>
    %211 = arith.addf %207, %210 : vector<48x32xf32>
    %c1_111 = arith.constant 1 : index
    %c0_112 = arith.constant 0 : index
    %c0_113 = arith.constant 0 : index
    %212 = vector.load %arg5[%c1_111, %c0_112, %c0_113] : memref<2x1x32xf32, #tpu.memory_space<vmem>>, vector<1x1x32xf32>
    %213 = vector.shape_cast %212 : vector<1x1x32xf32> to vector<1x32xf32>
    %c1_114 = arith.constant 1 : index
    %c0_115 = arith.constant 0 : index
    %c0_116 = arith.constant 0 : index
    %214 = vector.load %arg6[%c1_114, %c0_115, %c0_116] : memref<2x1x32xf32, #tpu.memory_space<vmem>>, vector<1x1x32xf32>
    %215 = vector.shape_cast %214 : vector<1x1x32xf32> to vector<1x32xf32>
    %cst_117 = arith.constant dense<0.000000e+00> : vector<48xf32>
    %216 = vector.multi_reduction <add>, %211, %cst_117 [1] : vector<48x32xf32> to vector<48xf32>
    %217 = vector.shape_cast %216 : vector<48xf32> to vector<48x1xf32>
    %cst_118 = arith.constant 3.200000e+01 : f32
    %218 = vector.broadcast %cst_118 : f32 to vector<48x1xf32>
    %219 = arith.divf %217, %218 : vector<48x1xf32>
    %220 = vector.broadcast %219 : vector<48x1xf32> to vector<48x32xf32>
    %221 = arith.subf %211, %220 : vector<48x32xf32>
    %222 = arith.mulf %221, %221 : vector<48x32xf32>
    %cst_119 = arith.constant dense<0.000000e+00> : vector<48xf32>
    %223 = vector.multi_reduction <add>, %222, %cst_119 [1] : vector<48x32xf32> to vector<48xf32>
    %224 = vector.shape_cast %223 : vector<48xf32> to vector<48x1xf32>
    %cst_120 = arith.constant 3.200000e+01 : f32
    %225 = vector.broadcast %cst_120 : f32 to vector<48x1xf32>
    %226 = arith.divf %224, %225 : vector<48x1xf32>
    %227 = vector.broadcast %219 : vector<48x1xf32> to vector<48x32xf32>
    %228 = arith.subf %211, %227 : vector<48x32xf32>
    %cst_121 = arith.constant 9.99999974E-6 : f32
    %229 = vector.broadcast %cst_121 : f32 to vector<48x1xf32>
    %230 = arith.addf %226, %229 : vector<48x1xf32>
    %231 = math.rsqrt %230 : vector<48x1xf32>
    %232 = vector.broadcast %231 : vector<48x1xf32> to vector<48x32xf32>
    %233 = arith.mulf %228, %232 : vector<48x32xf32>
    %234 = vector.broadcast %213 : vector<1x32xf32> to vector<48x32xf32>
    %235 = arith.mulf %233, %234 : vector<48x32xf32>
    %236 = vector.broadcast %215 : vector<1x32xf32> to vector<48x32xf32>
    %237 = arith.addf %235, %236 : vector<48x32xf32>
    %c1_122 = arith.constant 1 : index
    %c0_123 = arith.constant 0 : index
    %c0_124 = arith.constant 0 : index
    %238 = vector.load %arg7[%c1_122, %c0_123, %c0_124] : memref<2x32x32xf32, #tpu.memory_space<vmem>>, vector<1x32x32xf32>
    %239 = vector.shape_cast %238 : vector<1x32x32xf32> to vector<32x32xf32>
    %cst_125 = arith.constant dense<0.000000e+00> : vector<48x32xf32>
    %240 = tpu.matmul %237, %239, %cst_125 {dimension_numbers = #tpu.dot_dimension_numbers<[1], [0], [0], [1], [0, 0, 1, 1], [], []>} : vector<48x32xf32>, vector<32x32xf32>, vector<48x32xf32> -> vector<48x32xf32>
    %c1_126 = arith.constant 1 : index
    %c0_127 = arith.constant 0 : index
    %c0_128 = arith.constant 0 : index
    %241 = vector.load %arg8[%c1_126, %c0_127, %c0_128] : memref<2x1x32xf32, #tpu.memory_space<vmem>>, vector<1x1x32xf32>
    %242 = vector.shape_cast %241 : vector<1x1x32xf32> to vector<1x32xf32>
    %243 = vector.broadcast %242 : vector<1x32xf32> to vector<48x32xf32>
    %244 = arith.addf %240, %243 : vector<48x32xf32>
    %cst_129 = arith.constant 0.353553385 : f32
    %245 = vector.broadcast %cst_129 : f32 to vector<48x32xf32>
    %246 = arith.mulf %244, %245 : vector<48x32xf32>
    %c1_130 = arith.constant 1 : index
    %c0_131 = arith.constant 0 : index
    %c0_132 = arith.constant 0 : index
    %247 = vector.load %arg9[%c1_130, %c0_131, %c0_132] : memref<2x32x32xf32, #tpu.memory_space<vmem>>, vector<1x32x32xf32>
    %248 = vector.shape_cast %247 : vector<1x32x32xf32> to vector<32x32xf32>
    %cst_133 = arith.constant dense<0.000000e+00> : vector<48x32xf32>
    %249 = tpu.matmul %237, %248, %cst_133 {dimension_numbers = #tpu.dot_dimension_numbers<[1], [0], [0], [1], [0, 0, 1, 1], [], []>} : vector<48x32xf32>, vector<32x32xf32>, vector<48x32xf32> -> vector<48x32xf32>
    %c1_134 = arith.constant 1 : index
    %c0_135 = arith.constant 0 : index
    %c0_136 = arith.constant 0 : index
    %250 = vector.load %arg10[%c1_134, %c0_135, %c0_136] : memref<2x1x32xf32, #tpu.memory_space<vmem>>, vector<1x1x32xf32>
    %251 = vector.shape_cast %250 : vector<1x1x32xf32> to vector<1x32xf32>
    %252 = vector.broadcast %251 : vector<1x32xf32> to vector<48x32xf32>
    %253 = arith.addf %249, %252 : vector<48x32xf32>
    %c1_137 = arith.constant 1 : index
    %c0_138 = arith.constant 0 : index
    %c0_139 = arith.constant 0 : index
    %254 = vector.load %arg11[%c1_137, %c0_138, %c0_139] : memref<2x32x32xf32, #tpu.memory_space<vmem>>, vector<1x32x32xf32>
    %255 = vector.shape_cast %254 : vector<1x32x32xf32> to vector<32x32xf32>
    %cst_140 = arith.constant dense<0.000000e+00> : vector<48x32xf32>
    %256 = tpu.matmul %237, %255, %cst_140 {dimension_numbers = #tpu.dot_dimension_numbers<[1], [0], [0], [1], [0, 0, 1, 1], [], []>} : vector<48x32xf32>, vector<32x32xf32>, vector<48x32xf32> -> vector<48x32xf32>
    %c1_141 = arith.constant 1 : index
    %c0_142 = arith.constant 0 : index
    %c0_143 = arith.constant 0 : index
    %257 = vector.load %arg12[%c1_141, %c0_142, %c0_143] : memref<2x1x32xf32, #tpu.memory_space<vmem>>, vector<1x1x32xf32>
    %258 = vector.shape_cast %257 : vector<1x1x32xf32> to vector<1x32xf32>
    %259 = vector.broadcast %258 : vector<1x32xf32> to vector<48x32xf32>
    %260 = arith.addf %256, %259 : vector<48x32xf32>
    %261 = vector.shape_cast %246 : vector<48x32xf32> to vector<2x24x32xf32>
    %262 = vector.shape_cast %253 : vector<48x32xf32> to vector<2x24x32xf32>
    %263 = vector.shape_cast %260 : vector<48x32xf32> to vector<2x24x32xf32>
    %c1_144 = arith.constant 1 : index
    %c0_145 = arith.constant 0 : index
    %c0_146 = arith.constant 0 : index
    %264 = vector.load %arg13[%c1_144, %c0_145, %c0_146] : memref<2x32x32xf32, #tpu.memory_space<vmem>>, vector<1x32x32xf32>
    %265 = vector.shape_cast %264 : vector<1x32x32xf32> to vector<32x32xf32>
    %cst_147 = arith.constant 0.000000e+00 : f32
    %266 = vector.broadcast %cst_147 : f32 to vector<48x32xf32>
    %267 = vector.extract_strided_slice %261 {offsets = [0, 0, 0], sizes = [2, 24, 8], strides = [1, 1, 1]} : vector<2x24x32xf32> to vector<2x24x8xf32>
    %268 = vector.extract_strided_slice %262 {offsets = [0, 0, 0], sizes = [2, 24, 8], strides = [1, 1, 1]} : vector<2x24x32xf32> to vector<2x24x8xf32>
    "tpu.trace_start"() <{level = 10 : i32, message = "bqd,bkd->bqk"}> : () -> ()
    %cst_148 = arith.constant dense<0.000000e+00> : vector<2x24x24xf32>
    %269 = tpu.matmul %267, %268, %cst_148 {dimension_numbers = #tpu.dot_dimension_numbers<[2], [2], [1], [1], [0, 0, 0, 1, 1, 1], [0], [0]>} : vector<2x24x8xf32>, vector<2x24x8xf32>, vector<2x24x24xf32> -> vector<2x24x24xf32>
    %cst_149 = arith.constant -1.000000e+30 : f32
    "tpu.trace_stop"() : () -> ()
    %270 = vector.broadcast %cst_149 : f32 to vector<2x24x24xf32>
    %271 = arith.select %24, %269, %270 : vector<2x24x24xi1>, vector<2x24x24xf32>
    %cst_150 = arith.constant dense<0xFF800000> : vector<2x24xf32>
    %272 = vector.multi_reduction <maximumf>, %271, %cst_150 [2] : vector<2x24x24xf32> to vector<2x24xf32>
    %273 = vector.shape_cast %272 : vector<2x24xf32> to vector<2x24x1xf32>
    %274 = vector.broadcast %273 : vector<2x24x1xf32> to vector<2x24x24xf32>
    %275 = arith.subf %271, %274 : vector<2x24x24xf32>
    %276 = math.exp %275 : vector<2x24x24xf32>
    %cst_151 = arith.constant dense<0.000000e+00> : vector<2x24xf32>
    %277 = vector.multi_reduction <add>, %276, %cst_151 [2] : vector<2x24x24xf32> to vector<2x24xf32>
    %278 = vector.shape_cast %277 : vector<2x24xf32> to vector<2x24x1xf32>
    %279 = tpu.reciprocal %278 {approx = true} : vector<2x24x1xf32> -> vector<2x24x1xf32>
    %280 = vector.broadcast %279 : vector<2x24x1xf32> to vector<2x24x24xf32>
    %281 = arith.mulf %276, %280 : vector<2x24x24xf32>
    %282 = vector.extract_strided_slice %263 {offsets = [0, 0, 0], sizes = [2, 24, 8], strides = [1, 1, 1]} : vector<2x24x32xf32> to vector<2x24x8xf32>
    "tpu.trace_start"() <{level = 10 : i32, message = "bqk,bkd->bqd"}> : () -> ()
    %cst_152 = arith.constant dense<0.000000e+00> : vector<2x24x8xf32>
    %283 = tpu.matmul %281, %282, %cst_152 {dimension_numbers = #tpu.dot_dimension_numbers<[2], [1], [1], [2], [0, 0, 0, 1, 1, 2], [0], [0]>} : vector<2x24x24xf32>, vector<2x24x8xf32>, vector<2x24x8xf32> -> vector<2x24x8xf32>
    "tpu.trace_stop"() : () -> ()
    %284 = vector.shape_cast %283 : vector<2x24x8xf32> to vector<48x8xf32>
    %285 = vector.extract_strided_slice %265 {offsets = [0, 0], sizes = [8, 32], strides = [1, 1]} : vector<32x32xf32> to vector<8x32xf32>
    %cst_153 = arith.constant dense<0.000000e+00> : vector<48x32xf32>
    %286 = tpu.matmul %284, %285, %cst_153 {dimension_numbers = #tpu.dot_dimension_numbers<[1], [0], [0], [1], [0, 0, 1, 1], [], []>} : vector<48x8xf32>, vector<8x32xf32>, vector<48x32xf32> -> vector<48x32xf32>
    %287 = arith.addf %266, %286 : vector<48x32xf32>
    %288 = vector.extract_strided_slice %261 {offsets = [0, 0, 8], sizes = [2, 24, 8], strides = [1, 1, 1]} : vector<2x24x32xf32> to vector<2x24x8xf32>
    %289 = vector.extract_strided_slice %262 {offsets = [0, 0, 8], sizes = [2, 24, 8], strides = [1, 1, 1]} : vector<2x24x32xf32> to vector<2x24x8xf32>
    "tpu.trace_start"() <{level = 10 : i32, message = "bqd,bkd->bqk"}> : () -> ()
    %cst_154 = arith.constant dense<0.000000e+00> : vector<2x24x24xf32>
    %290 = tpu.matmul %288, %289, %cst_154 {dimension_numbers = #tpu.dot_dimension_numbers<[2], [2], [1], [1], [0, 0, 0, 1, 1, 1], [0], [0]>} : vector<2x24x8xf32>, vector<2x24x8xf32>, vector<2x24x24xf32> -> vector<2x24x24xf32>
    %cst_155 = arith.constant -1.000000e+30 : f32
    "tpu.trace_stop"() : () -> ()
    %291 = vector.broadcast %cst_155 : f32 to vector<2x24x24xf32>
    %292 = arith.select %24, %290, %291 : vector<2x24x24xi1>, vector<2x24x24xf32>
    %cst_156 = arith.constant dense<0xFF800000> : vector<2x24xf32>
    %293 = vector.multi_reduction <maximumf>, %292, %cst_156 [2] : vector<2x24x24xf32> to vector<2x24xf32>
    %294 = vector.shape_cast %293 : vector<2x24xf32> to vector<2x24x1xf32>
    %295 = vector.broadcast %294 : vector<2x24x1xf32> to vector<2x24x24xf32>
    %296 = arith.subf %292, %295 : vector<2x24x24xf32>
    %297 = math.exp %296 : vector<2x24x24xf32>
    %cst_157 = arith.constant dense<0.000000e+00> : vector<2x24xf32>
    %298 = vector.multi_reduction <add>, %297, %cst_157 [2] : vector<2x24x24xf32> to vector<2x24xf32>
    %299 = vector.shape_cast %298 : vector<2x24xf32> to vector<2x24x1xf32>
    %300 = tpu.reciprocal %299 {approx = true} : vector<2x24x1xf32> -> vector<2x24x1xf32>
    %301 = vector.broadcast %300 : vector<2x24x1xf32> to vector<2x24x24xf32>
    %302 = arith.mulf %297, %301 : vector<2x24x24xf32>
    %303 = vector.extract_strided_slice %263 {offsets = [0, 0, 8], sizes = [2, 24, 8], strides = [1, 1, 1]} : vector<2x24x32xf32> to vector<2x24x8xf32>
    "tpu.trace_start"() <{level = 10 : i32, message = "bqk,bkd->bqd"}> : () -> ()
    %cst_158 = arith.constant dense<0.000000e+00> : vector<2x24x8xf32>
    %304 = tpu.matmul %302, %303, %cst_158 {dimension_numbers = #tpu.dot_dimension_numbers<[2], [1], [1], [2], [0, 0, 0, 1, 1, 2], [0], [0]>} : vector<2x24x24xf32>, vector<2x24x8xf32>, vector<2x24x8xf32> -> vector<2x24x8xf32>
    "tpu.trace_stop"() : () -> ()
    %305 = vector.shape_cast %304 : vector<2x24x8xf32> to vector<48x8xf32>
    %306 = vector.extract_strided_slice %265 {offsets = [8, 0], sizes = [8, 32], strides = [1, 1]} : vector<32x32xf32> to vector<8x32xf32>
    %cst_159 = arith.constant dense<0.000000e+00> : vector<48x32xf32>
    %307 = tpu.matmul %305, %306, %cst_159 {dimension_numbers = #tpu.dot_dimension_numbers<[1], [0], [0], [1], [0, 0, 1, 1], [], []>} : vector<48x8xf32>, vector<8x32xf32>, vector<48x32xf32> -> vector<48x32xf32>
    %308 = arith.addf %287, %307 : vector<48x32xf32>
    %309 = vector.extract_strided_slice %261 {offsets = [0, 0, 16], sizes = [2, 24, 8], strides = [1, 1, 1]} : vector<2x24x32xf32> to vector<2x24x8xf32>
    %310 = vector.extract_strided_slice %262 {offsets = [0, 0, 16], sizes = [2, 24, 8], strides = [1, 1, 1]} : vector<2x24x32xf32> to vector<2x24x8xf32>
    "tpu.trace_start"() <{level = 10 : i32, message = "bqd,bkd->bqk"}> : () -> ()
    %cst_160 = arith.constant dense<0.000000e+00> : vector<2x24x24xf32>
    %311 = tpu.matmul %309, %310, %cst_160 {dimension_numbers = #tpu.dot_dimension_numbers<[2], [2], [1], [1], [0, 0, 0, 1, 1, 1], [0], [0]>} : vector<2x24x8xf32>, vector<2x24x8xf32>, vector<2x24x24xf32> -> vector<2x24x24xf32>
    %cst_161 = arith.constant -1.000000e+30 : f32
    "tpu.trace_stop"() : () -> ()
    %312 = vector.broadcast %cst_161 : f32 to vector<2x24x24xf32>
    %313 = arith.select %24, %311, %312 : vector<2x24x24xi1>, vector<2x24x24xf32>
    %cst_162 = arith.constant dense<0xFF800000> : vector<2x24xf32>
    %314 = vector.multi_reduction <maximumf>, %313, %cst_162 [2] : vector<2x24x24xf32> to vector<2x24xf32>
    %315 = vector.shape_cast %314 : vector<2x24xf32> to vector<2x24x1xf32>
    %316 = vector.broadcast %315 : vector<2x24x1xf32> to vector<2x24x24xf32>
    %317 = arith.subf %313, %316 : vector<2x24x24xf32>
    %318 = math.exp %317 : vector<2x24x24xf32>
    %cst_163 = arith.constant dense<0.000000e+00> : vector<2x24xf32>
    %319 = vector.multi_reduction <add>, %318, %cst_163 [2] : vector<2x24x24xf32> to vector<2x24xf32>
    %320 = vector.shape_cast %319 : vector<2x24xf32> to vector<2x24x1xf32>
    %321 = tpu.reciprocal %320 {approx = true} : vector<2x24x1xf32> -> vector<2x24x1xf32>
    %322 = vector.broadcast %321 : vector<2x24x1xf32> to vector<2x24x24xf32>
    %323 = arith.mulf %318, %322 : vector<2x24x24xf32>
    %324 = vector.extract_strided_slice %263 {offsets = [0, 0, 16], sizes = [2, 24, 8], strides = [1, 1, 1]} : vector<2x24x32xf32> to vector<2x24x8xf32>
    "tpu.trace_start"() <{level = 10 : i32, message = "bqk,bkd->bqd"}> : () -> ()
    %cst_164 = arith.constant dense<0.000000e+00> : vector<2x24x8xf32>
    %325 = tpu.matmul %323, %324, %cst_164 {dimension_numbers = #tpu.dot_dimension_numbers<[2], [1], [1], [2], [0, 0, 0, 1, 1, 2], [0], [0]>} : vector<2x24x24xf32>, vector<2x24x8xf32>, vector<2x24x8xf32> -> vector<2x24x8xf32>
    "tpu.trace_stop"() : () -> ()
    %326 = vector.shape_cast %325 : vector<2x24x8xf32> to vector<48x8xf32>
    %327 = vector.extract_strided_slice %265 {offsets = [16, 0], sizes = [8, 32], strides = [1, 1]} : vector<32x32xf32> to vector<8x32xf32>
    %cst_165 = arith.constant dense<0.000000e+00> : vector<48x32xf32>
    %328 = tpu.matmul %326, %327, %cst_165 {dimension_numbers = #tpu.dot_dimension_numbers<[1], [0], [0], [1], [0, 0, 1, 1], [], []>} : vector<48x8xf32>, vector<8x32xf32>, vector<48x32xf32> -> vector<48x32xf32>
    %329 = arith.addf %308, %328 : vector<48x32xf32>
    %330 = vector.extract_strided_slice %261 {offsets = [0, 0, 24], sizes = [2, 24, 8], strides = [1, 1, 1]} : vector<2x24x32xf32> to vector<2x24x8xf32>
    %331 = vector.extract_strided_slice %262 {offsets = [0, 0, 24], sizes = [2, 24, 8], strides = [1, 1, 1]} : vector<2x24x32xf32> to vector<2x24x8xf32>
    "tpu.trace_start"() <{level = 10 : i32, message = "bqd,bkd->bqk"}> : () -> ()
    %cst_166 = arith.constant dense<0.000000e+00> : vector<2x24x24xf32>
    %332 = tpu.matmul %330, %331, %cst_166 {dimension_numbers = #tpu.dot_dimension_numbers<[2], [2], [1], [1], [0, 0, 0, 1, 1, 1], [0], [0]>} : vector<2x24x8xf32>, vector<2x24x8xf32>, vector<2x24x24xf32> -> vector<2x24x24xf32>
    %cst_167 = arith.constant -1.000000e+30 : f32
    "tpu.trace_stop"() : () -> ()
    %333 = vector.broadcast %cst_167 : f32 to vector<2x24x24xf32>
    %334 = arith.select %24, %332, %333 : vector<2x24x24xi1>, vector<2x24x24xf32>
    %cst_168 = arith.constant dense<0xFF800000> : vector<2x24xf32>
    %335 = vector.multi_reduction <maximumf>, %334, %cst_168 [2] : vector<2x24x24xf32> to vector<2x24xf32>
    %336 = vector.shape_cast %335 : vector<2x24xf32> to vector<2x24x1xf32>
    %337 = vector.broadcast %336 : vector<2x24x1xf32> to vector<2x24x24xf32>
    %338 = arith.subf %334, %337 : vector<2x24x24xf32>
    %339 = math.exp %338 : vector<2x24x24xf32>
    %cst_169 = arith.constant dense<0.000000e+00> : vector<2x24xf32>
    %340 = vector.multi_reduction <add>, %339, %cst_169 [2] : vector<2x24x24xf32> to vector<2x24xf32>
    %341 = vector.shape_cast %340 : vector<2x24xf32> to vector<2x24x1xf32>
    %342 = tpu.reciprocal %341 {approx = true} : vector<2x24x1xf32> -> vector<2x24x1xf32>
    %343 = vector.broadcast %342 : vector<2x24x1xf32> to vector<2x24x24xf32>
    %344 = arith.mulf %339, %343 : vector<2x24x24xf32>
    %345 = vector.extract_strided_slice %263 {offsets = [0, 0, 24], sizes = [2, 24, 8], strides = [1, 1, 1]} : vector<2x24x32xf32> to vector<2x24x8xf32>
    "tpu.trace_start"() <{level = 10 : i32, message = "bqk,bkd->bqd"}> : () -> ()
    %cst_170 = arith.constant dense<0.000000e+00> : vector<2x24x8xf32>
    %346 = tpu.matmul %344, %345, %cst_170 {dimension_numbers = #tpu.dot_dimension_numbers<[2], [1], [1], [2], [0, 0, 0, 1, 1, 2], [0], [0]>} : vector<2x24x24xf32>, vector<2x24x8xf32>, vector<2x24x8xf32> -> vector<2x24x8xf32>
    "tpu.trace_stop"() : () -> ()
    %347 = vector.shape_cast %346 : vector<2x24x8xf32> to vector<48x8xf32>
    %348 = vector.extract_strided_slice %265 {offsets = [24, 0], sizes = [8, 32], strides = [1, 1]} : vector<32x32xf32> to vector<8x32xf32>
    %cst_171 = arith.constant dense<0.000000e+00> : vector<48x32xf32>
    %349 = tpu.matmul %347, %348, %cst_171 {dimension_numbers = #tpu.dot_dimension_numbers<[1], [0], [0], [1], [0, 0, 1, 1], [], []>} : vector<48x8xf32>, vector<8x32xf32>, vector<48x32xf32> -> vector<48x32xf32>
    %350 = arith.addf %329, %349 : vector<48x32xf32>
    %351 = arith.addf %211, %350 : vector<48x32xf32>
    %c1_172 = arith.constant 1 : index
    %c0_173 = arith.constant 0 : index
    %c0_174 = arith.constant 0 : index
    %352 = vector.load %arg14[%c1_172, %c0_173, %c0_174] : memref<2x1x32xf32, #tpu.memory_space<vmem>>, vector<1x1x32xf32>
    %353 = vector.shape_cast %352 : vector<1x1x32xf32> to vector<1x32xf32>
    %354 = vector.broadcast %353 : vector<1x32xf32> to vector<48x32xf32>
    %355 = arith.addf %351, %354 : vector<48x32xf32>
    %c1_175 = arith.constant 1 : index
    %c0_176 = arith.constant 0 : index
    %c0_177 = arith.constant 0 : index
    %356 = vector.load %arg15[%c1_175, %c0_176, %c0_177] : memref<2x1x32xf32, #tpu.memory_space<vmem>>, vector<1x1x32xf32>
    %357 = vector.shape_cast %356 : vector<1x1x32xf32> to vector<1x32xf32>
    %c1_178 = arith.constant 1 : index
    %c0_179 = arith.constant 0 : index
    %c0_180 = arith.constant 0 : index
    %358 = vector.load %arg16[%c1_178, %c0_179, %c0_180] : memref<2x1x32xf32, #tpu.memory_space<vmem>>, vector<1x1x32xf32>
    %359 = vector.shape_cast %358 : vector<1x1x32xf32> to vector<1x32xf32>
    %cst_181 = arith.constant dense<0.000000e+00> : vector<48xf32>
    %360 = vector.multi_reduction <add>, %355, %cst_181 [1] : vector<48x32xf32> to vector<48xf32>
    %361 = vector.shape_cast %360 : vector<48xf32> to vector<48x1xf32>
    %cst_182 = arith.constant 3.200000e+01 : f32
    %362 = vector.broadcast %cst_182 : f32 to vector<48x1xf32>
    %363 = arith.divf %361, %362 : vector<48x1xf32>
    %364 = vector.broadcast %363 : vector<48x1xf32> to vector<48x32xf32>
    %365 = arith.subf %355, %364 : vector<48x32xf32>
    %366 = arith.mulf %365, %365 : vector<48x32xf32>
    %cst_183 = arith.constant dense<0.000000e+00> : vector<48xf32>
    %367 = vector.multi_reduction <add>, %366, %cst_183 [1] : vector<48x32xf32> to vector<48xf32>
    %368 = vector.shape_cast %367 : vector<48xf32> to vector<48x1xf32>
    %cst_184 = arith.constant 3.200000e+01 : f32
    %369 = vector.broadcast %cst_184 : f32 to vector<48x1xf32>
    %370 = arith.divf %368, %369 : vector<48x1xf32>
    %371 = vector.broadcast %363 : vector<48x1xf32> to vector<48x32xf32>
    %372 = arith.subf %355, %371 : vector<48x32xf32>
    %cst_185 = arith.constant 9.99999974E-6 : f32
    %373 = vector.broadcast %cst_185 : f32 to vector<48x1xf32>
    %374 = arith.addf %370, %373 : vector<48x1xf32>
    %375 = math.rsqrt %374 : vector<48x1xf32>
    %376 = vector.broadcast %375 : vector<48x1xf32> to vector<48x32xf32>
    %377 = arith.mulf %372, %376 : vector<48x32xf32>
    %378 = vector.broadcast %357 : vector<1x32xf32> to vector<48x32xf32>
    %379 = arith.mulf %377, %378 : vector<48x32xf32>
    %380 = vector.broadcast %359 : vector<1x32xf32> to vector<48x32xf32>
    %381 = arith.addf %379, %380 : vector<48x32xf32>
    %c1_186 = arith.constant 1 : index
    %c0_187 = arith.constant 0 : index
    %c0_188 = arith.constant 0 : index
    %382 = vector.load %arg17[%c1_186, %c0_187, %c0_188] : memref<2x32x128xf32, #tpu.memory_space<vmem>>, vector<1x32x128xf32>
    %383 = vector.shape_cast %382 : vector<1x32x128xf32> to vector<32x128xf32>
    %cst_189 = arith.constant dense<0.000000e+00> : vector<48x128xf32>
    %384 = tpu.matmul %381, %383, %cst_189 {dimension_numbers = #tpu.dot_dimension_numbers<[1], [0], [0], [1], [0, 0, 1, 1], [], []>} : vector<48x32xf32>, vector<32x128xf32>, vector<48x128xf32> -> vector<48x128xf32>
    %c1_190 = arith.constant 1 : index
    %c0_191 = arith.constant 0 : index
    %c0_192 = arith.constant 0 : index
    %385 = vector.load %arg18[%c1_190, %c0_191, %c0_192] : memref<2x1x128xf32, #tpu.memory_space<vmem>>, vector<1x1x128xf32>
    %386 = vector.shape_cast %385 : vector<1x1x128xf32> to vector<1x128xf32>
    %387 = vector.broadcast %386 : vector<1x128xf32> to vector<48x128xf32>
    %388 = arith.addf %384, %387 : vector<48x128xf32>
    %cst_193 = arith.constant 0.000000e+00 : f32
    %389 = vector.broadcast %cst_193 : f32 to vector<48x128xf32>
    %390 = arith.maximumf %388, %389 : vector<48x128xf32>
    %c1_194 = arith.constant 1 : index
    %c0_195 = arith.constant 0 : index
    %c0_196 = arith.constant 0 : index
    %391 = vector.load %arg19[%c1_194, %c0_195, %c0_196] : memref<2x128x32xf32, #tpu.memory_space<vmem>>, vector<1x128x32xf32>
    %392 = vector.shape_cast %391 : vector<1x128x32xf32> to vector<128x32xf32>
    %cst_197 = arith.constant dense<0.000000e+00> : vector<48x32xf32>
    %393 = tpu.matmul %390, %392, %cst_197 {dimension_numbers = #tpu.dot_dimension_numbers<[1], [0], [0], [1], [0, 0, 1, 1], [], []>} : vector<48x128xf32>, vector<128x32xf32>, vector<48x32xf32> -> vector<48x32xf32>
    %394 = arith.addf %355, %393 : vector<48x32xf32>
    %c1_198 = arith.constant 1 : index
    %c0_199 = arith.constant 0 : index
    %c0_200 = arith.constant 0 : index
    %395 = vector.load %arg20[%c1_198, %c0_199, %c0_200] : memref<2x1x32xf32, #tpu.memory_space<vmem>>, vector<1x1x32xf32>
    %396 = vector.shape_cast %395 : vector<1x1x32xf32> to vector<1x32xf32>
    %397 = vector.broadcast %396 : vector<1x32xf32> to vector<48x32xf32>
    %398 = arith.addf %394, %397 : vector<48x32xf32>
    %399 = vector.extract_strided_slice %398 {offsets = [16, 0], sizes = [1, 32], strides = [1, 1]} : vector<48x32xf32> to vector<1x32xf32>
    %400 = vector.extract_strided_slice %398 {offsets = [40, 0], sizes = [1, 32], strides = [1, 1]} : vector<48x32xf32> to vector<1x32xf32>
    %401 = tpu.concatenate %399, %400 in 0 : vector<1x32xf32>, vector<1x32xf32> -> vector<2x32xf32>
    %c0_201 = arith.constant 0 : index
    %c0_202 = arith.constant 0 : index
    %402 = vector.load %arg21[%c0_201, %c0_202] : memref<32x10xf32, #tpu.memory_space<vmem>>, vector<32x10xf32>
    %cst_203 = arith.constant dense<0.000000e+00> : vector<2x10xf32>
    %403 = tpu.matmul %401, %402, %cst_203 {dimension_numbers = #tpu.dot_dimension_numbers<[1], [0], [0], [1], [0, 0, 1, 1], [], []>} : vector<2x32xf32>, vector<32x10xf32>, vector<2x10xf32> -> vector<2x10xf32>
    %c0_204 = arith.constant 0 : index
    %c0_205 = arith.constant 0 : index
    %404 = vector.load %arg22[%c0_204, %c0_205] : memref<1x10xf32, #tpu.memory_space<vmem>>, vector<1x10xf32>
    %405 = vector.broadcast %404 : vector<1x10xf32> to vector<2x10xf32>
    %406 = arith.addf %403, %405 : vector<2x10xf32>
    %c0_206 = arith.constant 0 : index
    %c0_207 = arith.constant 0 : index
    %407 = vector.load %arg23[%c0_206, %c0_207] : memref<2x10xf32, #tpu.memory_space<vmem>>, vector<2x10xf32>
    tpu.vector_store %arg23[%c0_206, %c0_207], %406 {strides = array<i32>} : memref<2x10xf32, #tpu.memory_space<vmem>>, vector<2x10xf32>,
    return
  }
}

</mosaic_0001>

<llo_original>
// kernel: vit_forward.1
$region0: #{vit_forward.1}
  #allocation0 [shape = 'u32[]', space=smem, size = 0x4, offset = 0x4, fixed_abs, tag = 'smem constant byte address 0x4 - core index']
  #allocation1 [shape = 'u32[144,128]{1,0:T(1,128)}', space=vmem, size = 0x12000, scoped, tag = 'internal scratch']
  #allocation2 [shape = 'f32[48,32]{1,0:T(8,128)}', space=vmem, size = 0x6000, scoped, tag = 'scratch operand']
  %s0 = inlined_call_operand.vmem [shape: f32[2,16,64], index: 0, kind: input, shape index: {}]
  %s1 = inlined_call_operand.vmem [shape: f32[64,32], index: 1, kind: input, shape index: {}]
  %s2 = inlined_call_operand.vmem [shape: f32[1,32], index: 2, kind: input, shape index: {}]
  %s3 = inlined_call_operand.vmem [shape: f32[1,32], index: 3, kind: input, shape index: {}]
  %s4 = inlined_call_operand.vmem [shape: f32[17,32], index: 4, kind: input, shape index: {}]
  %s5 = inlined_call_operand.vmem [shape: f32[2,1,32], index: 5, kind: input, shape index: {}]
  %s6 = inlined_call_operand.vmem [shape: f32[2,1,32], index: 6, kind: input, shape index: {}]
  %s7 = inlined_call_operand.vmem [shape: f32[2,32,32], index: 7, kind: input, shape index: {}]
  %s8 = inlined_call_operand.vmem [shape: f32[2,1,32], index: 8, kind: input, shape index: {}]
  %s9 = inlined_call_operand.vmem [shape: f32[2,32,32], index: 9, kind: input, shape index: {}]
  %s10 = inlined_call_operand.vmem [shape: f32[2,1,32], index: 10, kind: input, shape index: {}]
  %s11 = inlined_call_operand.vmem [shape: f32[2,32,32], index: 11, kind: input, shape index: {}]
  %s12 = inlined_call_operand.vmem [shape: f32[2,1,32], index: 12, kind: input, shape index: {}]
  %s13 = inlined_call_operand.vmem [shape: f32[2,32,32], index: 13, kind: input, shape index: {}]
  %s14 = inlined_call_operand.vmem [shape: f32[2,1,32], index: 14, kind: input, shape index: {}]
  %s15 = inlined_call_operand.vmem [shape: f32[2,1,32], index: 15, kind: input, shape index: {}]
  %s16 = inlined_call_operand.vmem [shape: f32[2,1,32], index: 16, kind: input, shape index: {}]
  %s17 = inlined_call_operand.vmem [shape: f32[2,32,128], index: 17, kind: input, shape index: {}]
  %s18 = inlined_call_operand.vmem [shape: f32[2,1,128], index: 18, kind: input, shape index: {}]
  %s19 = inlined_call_operand.vmem [shape: f32[2,128,32], index: 19, kind: input, shape index: {}]
  %s20 = inlined_call_operand.vmem [shape: f32[2,1,32], index: 20, kind: input, shape index: {}]
  %s21 = inlined_call_operand.vmem [shape: f32[32,10], index: 21, kind: input, shape index: {}]
  %s22 = inlined_call_operand.vmem [shape: f32[1,10], index: 22, kind: input, shape index: {}]
  %s23 = inlined_call_operand.hbm [shape: f32[2,10], index: 23, kind: output, shape index: {}]
  %s24 = sld [smem:[#allocation0]]
  $region102: #{vit_forward.1} parent=0
    _
  %s26 = ssub.s32 1, %s24
  %s27 = scalar_select 0, %s26, %s24
  $region1: #{vit_forward.1} parent=0
    #allocation3 [shape = 'u8[1024]{0}', space=vmem, size = 0x400, scoped, tag = 'output window, operand 0, single buffered']
    #allocation4 [shape = 's32[1]{0}', space=sflag, size = 0x4, scoped, tag = 'scoped memory for vit_forward.1']
    %28 = vsyncpa [#allocation4], 0
    // Predicated region
    $region2: #{vit_forward.1} parent=1 // pred_check
      _
    $region3: #{vit_forward.1} parent=1 // pred_check_branch
      %30 = sbr.rel (0) target = $region5
    $region4: #{vit_forward.1} parent=1 // pred_region
      _
    $region5: #{vit_forward.1} parent=1 // pred_fallthru
      _
    // Predicated region
    $region6: #{vit_forward.1} parent=1 // pred_check
      _
    $region7: #{vit_forward.1} parent=1 // pred_check_branch
      %32 = sbr.rel (0) target = $region9
    $region8: #{vit_forward.1} parent=1 // pred_region
      _
    $region9: #{vit_forward.1} parent=1 // pred_fallthru
      _
    // Predicated region
    $region10: #{vit_forward.1} parent=1 // pred_check
      _
    $region11: #{vit_forward.1} parent=1 // pred_check_branch
      %34 = sbr.rel (0) target = $region13
    $region12: #{vit_forward.1} parent=1 // pred_region
      _
    $region13: #{vit_forward.1} parent=1 // pred_fallthru
      _
    // Predicated region
    $region14: #{vit_forward.1} parent=1 // pred_check
      _
    $region15: #{vit_forward.1} parent=1 // pred_check_branch
      %36 = sbr.rel (0) target = $region17
    $region16: #{vit_forward.1} parent=1 // pred_region
      _
    $region17: #{vit_forward.1} parent=1 // pred_fallthru
      _
    // Predicated region
    $region18: #{vit_forward.1} parent=1 // pred_check
      _
    $region19: #{vit_forward.1} parent=1 // pred_check_branch
      %38 = sbr.rel (0) target = $region21
    $region20: #{vit_forward.1} parent=1 // pred_region
      _
    $region21: #{vit_forward.1} parent=1 // pred_fallthru
      _
    // Predicated region
    $region22: #{vit_forward.1} parent=1 // pred_check
      _
    $region23: #{vit_forward.1} parent=1 // pred_check_branch
      %40 = sbr.rel (0) target = $region25
    $region24: #{vit_forward.1} parent=1 // pred_region
      _
    $region25: #{vit_forward.1} parent=1 // pred_fallthru
      _
    // Predicated region
    $region26: #{vit_forward.1} parent=1 // pred_check
      _
    $region27: #{vit_forward.1} parent=1 // pred_check_branch
      %42 = sbr.rel (0) target = $region29
    $region28: #{vit_forward.1} parent=1 // pred_region
      _
    $region29: #{vit_forward.1} parent=1 // pred_fallthru
      _
    // Predicated region
    $region30: #{vit_forward.1} parent=1 // pred_check
      _
    $region31: #{vit_forward.1} parent=1 // pred_check_branch
      %44 = sbr.rel (0) target = $region33
    $region32: #{vit_forward.1} parent=1 // pred_region
      _
    $region33: #{vit_forward.1} parent=1 // pred_fallthru
      _
    // Predicated region
    $region34: #{vit_forward.1} parent=1 // pred_check
      _
    $region35: #{vit_forward.1} parent=1 // pred_check_branch
      %46 = sbr.rel (0) target = $region37
    $region36: #{vit_forward.1} parent=1 // pred_region
      _
    $region37: #{vit_forward.1} parent=1 // pred_fallthru
      _
    // Predicated region
    $region38: #{vit_forward.1} parent=1 // pred_check
      _
    $region39: #{vit_forward.1} parent=1 // pred_check_branch
      %48 = sbr.rel (0) target = $region41
    $region40: #{vit_forward.1} parent=1 // pred_region
      _
    $region41: #{vit_forward.1} parent=1 // pred_fallthru
      _
    // Predicated region
    $region42: #{vit_forward.1} parent=1 // pred_check
      _
    $region43: #{vit_forward.1} parent=1 // pred_check_branch
      %50 = sbr.rel (0) target = $region45
    $region44: #{vit_forward.1} parent=1 // pred_region
      _
    $region45: #{vit_forward.1} parent=1 // pred_fallthru
      _
    // Predicated region
    $region46: #{vit_forward.1} parent=1 // pred_check
      _
    $region47: #{vit_forward.1} parent=1 // pred_check_branch
      %52 = sbr.rel (0) target = $region49
    $region48: #{vit_forward.1} parent=1 // pred_region
      _
    $region49: #{vit_forward.1} parent=1 // pred_fallthru
      _
    // Predicated region
    $region50: #{vit_forward.1} parent=1 // pred_check
      _
    $region51: #{vit_forward.1} parent=1 // pred_check_branch
      %54 = sbr.rel (0) target = $region53
    $region52: #{vit_forward.1} parent=1 // pred_region
      _
    $region53: #{vit_forward.1} parent=1 // pred_fallthru
      _
    // Predicated region
    $region54: #{vit_forward.1} parent=1 // pred_check
      _
    $region55: #{vit_forward.1} parent=1 // pred_check_branch
      %56 = sbr.rel (0) target = $region57
    $region56: #{vit_forward.1} parent=1 // pred_region
      _
    $region57: #{vit_forward.1} parent=1 // pred_fallthru
      _
    // Predicated region
    $region58: #{vit_forward.1} parent=1 // pred_check
      _
    $region59: #{vit_forward.1} parent=1 // pred_check_branch
      %58 = sbr.rel (0) target = $region61
    $region60: #{vit_forward.1} parent=1 // pred_region
      _
    $region61: #{vit_forward.1} parent=1 // pred_fallthru
      _
    // Predicated region
    $region62: #{vit_forward.1} parent=1 // pred_check
      _
    $region63: #{vit_forward.1} parent=1 // pred_check_branch
      %60 = sbr.rel (0) target = $region65
    $region64: #{vit_forward.1} parent=1 // pred_region
      _
    $region65: #{vit_forward.1} parent=1 // pred_fallthru
      _
    // Predicated region
    $region66: #{vit_forward.1} parent=1 // pred_check
      _
    $region67: #{vit_forward.1} parent=1 // pred_check_branch
      %62 = sbr.rel (0) target = $region69
    $region68: #{vit_forward.1} parent=1 // pred_region
      _
    $region69: #{vit_forward.1} parent=1 // pred_fallthru
      _
    // Predicated region
    $region70: #{vit_forward.1} parent=1 // pred_check
      _
    $region71: #{vit_forward.1} parent=1 // pred_check_branch
      %64 = sbr.rel (0) target = $region73
    $region72: #{vit_forward.1} parent=1 // pred_region
      _
    $region73: #{vit_forward.1} parent=1 // pred_fallthru
      _
    // Predicated region
    $region74: #{vit_forward.1} parent=1 // pred_check
      _
    $region75: #{vit_forward.1} parent=1 // pred_check_branch
      %66 = sbr.rel (0) target = $region77
    $region76: #{vit_forward.1} parent=1 // pred_region
      _
    $region77: #{vit_forward.1} parent=1 // pred_fallthru
      _
    // Predicated region
    $region78: #{vit_forward.1} parent=1 // pred_check
      _
    $region79: #{vit_forward.1} parent=1 // pred_check_branch
      %68 = sbr.rel (0) target = $region81
    $region80: #{vit_forward.1} parent=1 // pred_region
      _
    $region81: #{vit_forward.1} parent=1 // pred_fallthru
      _
    // Predicated region
    $region82: #{vit_forward.1} parent=1 // pred_check
      _
    $region83: #{vit_forward.1} parent=1 // pred_check_branch
      %70 = sbr.rel (0) target = $region85
    $region84: #{vit_forward.1} parent=1 // pred_region
      _
    $region85: #{vit_forward.1} parent=1 // pred_fallthru
      _
    // Predicated region
    $region86: #{vit_forward.1} parent=1 // pred_check
      _
    $region87: #{vit_forward.1} parent=1 // pred_check_branch
      %72 = sbr.rel (0) target = $region89
    $region88: #{vit_forward.1} parent=1 // pred_region
      _
    $region89: #{vit_forward.1} parent=1 // pred_fallthru
      _
    // Predicated region
    $region90: #{vit_forward.1} parent=1 // pred_check
      _
    $region91: #{vit_forward.1} parent=1 // pred_check_branch
      %74 = sbr.rel (0) target = $region93
    $region92: #{vit_forward.1} parent=1 // pred_region
      _
    $region93: #{vit_forward.1} parent=1 // pred_fallthru
      _
    %v75 = vld [vmem:[%s0] sm:$0xff]
    %v76 = vld [vmem:[%s0 + $0x8] sm:$0xff]
    %v77 = vld [vmem:[%s0 + $0x10] sm:$0xff]
    %v78 = vld [vmem:[%s0 + $0x18] sm:$0xff]
    %v79 = vld [vmem:[%s1] sm:$0xff]
    %v80 = vld [vmem:[%s1 + $0x8] sm:$0xff]
    %v81 = vld [vmem:[%s1 + $0x10] sm:$0xff]
    %v82 = vld [vmem:[%s1 + $0x18] sm:$0xff]
    %v83 = vld [vmem:[%s1 + $0x20] sm:$0xff]
    %v84 = vld [vmem:[%s1 + $0x28] sm:$0xff]
    %v85 = vld [vmem:[%s1 + $0x30] sm:$0xff]
    %v86 = vld [vmem:[%s1 + $0x38] sm:$0xff]
    %v87 = vld [vmem:[%s2] sm:$0x1]
    %v89 = vlaneseq
    %v90 = vshrl.u32 %v89, 7
    %v91 = vsub.s32 0, %v90
    %v92 = vrot.slane %v87, %v91
    %vm94 = vcmask 523264
    %v96 = vsel %vm94, %v75, 0
    %v99 = vsel %vm94, %v76, 0
    %v102 = vsel %vm94, %v77, 0
    %v105 = vsel %vm94, %v78, 0
    %107 = vmatprep.subr.mxu0 0.0
    %108 = vmatpush1.msra.mxu0 %v79
    %109 = vmatprep.subr.mxu0 0.0
    %110 = vmatpush1.msra.mxu0 %v80
    %111 = vmatprep.subr.mxu0 0.0
    %112 = vmatpush1.msra.mxu0 %v81
    %113 = vmatprep.subr.mxu0 0.0
    %114 = vmatpush1.msra.mxu0 %v82
    %115 = vmatprep.subr.mxu0 0.0
    %116 = vmatpush1.msra.mxu0 %v83
    %117 = vmatprep.subr.mxu0 0.0
    %118 = vmatpush1.msra.mxu0 %v84
    %119 = vmatprep.subr.mxu0 0.0
    %120 = vmatpush1.msra.mxu0 %v85
    %121 = vmatprep.subr.mxu0 0.0
    %122 = vmatpush1.msra.mxu0 %v86
    %123 = vmatprep.subr.mxu0 0.0
    %124 = vmatpush1.msra.mxu0 0.0
    %125 = vmatprep.subr.mxu0 0.0
    %126 = vmatpush1.msra.mxu0 0.0
    %127 = vmatprep.subr.mxu0 0.0
    %128 = vmatpush1.msra.mxu0 0.0
    %129 = vmatprep.subr.mxu0 0.0
    %130 = vmatpush1.msra.mxu0 0.0
    %131 = vmatprep.subr.mxu0 0.0
    %132 = vmatpush1.msra.mxu0 0.0
    %133 = vmatprep.subr.mxu0 0.0
    %134 = vmatpush1.msra.mxu0 0.0
    %135 = vmatprep.subr.mxu0 0.0
    %136 = vmatpush1.msra.mxu0 0.0
    %137 = vmatprep.subr.mxu0 0.0
    %138 = vmatpush1.msra.mxu0 0.0
    %139 = vmatprep.subr.mxu0 0.0
    %140 = vmatpush1.msra.mxu0 0.0
    %141 = vmatprep.subr.mxu0 0.0
    %142 = vmatpush1.msra.mxu0 0.0
    %143 = vmatprep.subr.mxu0 0.0
    %144 = vmatpush1.msra.mxu0 0.0
    %145 = vmatprep.subr.mxu0 0.0
    %146 = vmatpush1.msra.mxu0 0.0
    %147 = vmatprep.subr.mxu0 0.0
    %148 = vmatpush1.msra.mxu0 0.0
    %149 = vmatprep.subr.mxu0 0.0
    %150 = vmatpush1.msra.mxu0 0.0
    %151 = vmatprep.subr.mxu0 0.0
    %152 = vmatpush1.msra.mxu0 0.0
    %153 = vmatprep.subr.mxu0 0.0
    %154 = vmatpush1.msra.mxu0 0.0
    %155 = vmatprep.subr.mxu0 0.0
    %156 = vmatpush1.msra.mxu0 0.0
    %157 = vmatprep.subr.mxu0 0.0
    %158 = vmatpush1.msra.mxu0 0.0
    %159 = vmatprep.subr.mxu0 0.0
    %160 = vmatpush1.msra.mxu0 0.0
    %161 = vmatprep.subr.mxu0 0.0
    %162 = vmatpush1.msra.mxu0 0.0
    %163 = vmatprep.subr.mxu0 0.0
    %164 = vmatpush1.msra.mxu0 0.0
    %165 = vmatprep.subr.mxu0 0.0
    %166 = vmatpush1.msra.mxu0 0.0
    %167 = vmatprep.subr.mxu0 0.0
    %168 = vmatpush1.msra.mxu0 0.0
    %169 = vmatprep.subr.mxu0 0.0
    %170 = vmatpush1.msra.mxu0 0.0
    %171 = vmatprep.mubr.f32.mxu0 0.0
    %172 = vmatmul.mubr.f32.gmra.mrb[0].mxu0 %v96
    %v173 = vpop.f32.mrb[0].mxu0
    %v174 = vadd.f32 %v92, %v173
    %v175 = vpop.f32.mrb[0].mxu0
    %176 = vmatprep.mubr.f32.mxu0 0.0
    %177 = vmatmul.mubr.f32.gmra.mrb[0].mxu0 %v99
    %v178 = vpop.f32.mrb[0].mxu0
    %v179 = vadd.f32 %v92, %v178
    %v180 = vpop.f32.mrb[0].mxu0
    %181 = vmatprep.mubr.f32.mxu0 0.0
    %182 = vmatmul.mubr.f32.gmra.mrb[0].mxu0 %v102
    %v183 = vpop.f32.mrb[0].mxu0
    %v184 = vadd.f32 %v92, %v183
    %v185 = vpop.f32.mrb[0].mxu0
    %186 = vmatprep.mubr.f32.mxu0 0.0
    %187 = vmatmul.mubr.f32.gmra.mrb[0].mxu0 %v105
    %v188 = vpop.f32.mrb[0].mxu0
    %v189 = vadd.f32 %v92, %v188
    %v190 = vpop.f32.mrb[0].mxu0
    %191 = vdwg.mxu0
    %vm192 = vcmask 261120
    %193 = vst.msk [vmem:[#allocation2] sm:$0xff] %vm192, 0.0
    %194 = vst.msk [vmem:[#allocation2 + $0x8] sm:$0xff] %vm192, 0.0
    %195 = vst.msk [vmem:[#allocation2 + $0x10] sm:$0xff] %vm192, 0.0
    %196 = vst.msk [vmem:[#allocation2 + $0x18] sm:$0xff] %vm192, 0.0
    %197 = vst.msk [vmem:[#allocation2 + $0x20] sm:$0xff] %vm192, 0.0
    %198 = vst.msk [vmem:[#allocation2 + $0x28] sm:$0xff] %vm192, 0.0
    %v199 = vld [vmem:[%s3] sm:$0x1]
    %v200 = vld [vmem:[%s4] sm:$0x1]
    %v201 = vadd.f32 %v199, %v200
    %v202 = vld [vmem:[%s4 + $0x1] sm:$0xff]
    %v203 = vld [vmem:[%s4 + $0x9] sm:$0xff]
    %v204 = vadd.f32 %v174, %v202
    %v205 = vadd.f32 %v179, %v203
    %206 = vst.msk [vmem:[#allocation2] sm:$0xff] %vm192, %v204
    %207 = vst.msk [vmem:[#allocation2 + $0x8] sm:$0xff] %vm192, %v205
    %vm208 = vcmask 253952
    %209 = vst.msk [vmem:[#allocation2 + $0x10] sm:$0x1] %vm208, %v201
    %v210 = vadd.f32 %v184, %v202
    %v211 = vadd.f32 %v189, %v203
    %212 = vst.msk [vmem:[#allocation2 + $0x18] sm:$0xff] %vm192, %v210
    %213 = vst.msk [vmem:[#allocation2 + $0x20] sm:$0xff] %vm192, %v211
    %214 = vst.msk [vmem:[#allocation2 + $0x28] sm:$0x1] %vm208, %v201
    %v215 = vld [vmem:[#allocation2] sm:$0xff]
    %v216 = vld [vmem:[#allocation2 + $0x8] sm:$0xff]
    %v217 = vld [vmem:[#allocation2 + $0x10] sm:$0xff]
    %v218 = vld [vmem:[#allocation2 + $0x18] sm:$0xff]
    %v219 = vld [vmem:[#allocation2 + $0x20] sm:$0xff]
    %v220 = vld [vmem:[#allocation2 + $0x28] sm:$0xff]
    %v221 = vlaneseq
    %v222 = vand.u32 %v221, 127
    %vm223 = vcmp.lt.s32.totalorder %v222, 17
    %v224 = vld [vmem:[%s5] sm:$0x1]
    %v225 = vld [vmem:[%s6] sm:$0x1]
    %v226 = vsel %vm192, %v215, 0.0
    %227 = vadd.xlane.f32.xlu0 %v226
    %v228 = vpop.xlane.xlu0 %227
    %v229 = vsel %vm192, %v216, 0.0
    %230 = vadd.xlane.f32.xlu0 %v229
    %v231 = vpop.xlane.xlu0 %230
    %v232 = vsel %vm192, %v217, 0.0
    %233 = vadd.xlane.f32.xlu0 %v232
    %v234 = vpop.xlane.xlu0 %233
    %v235 = vsel %vm192, %v218, 0.0
    %236 = vadd.xlane.f32.xlu0 %v235
    %v237 = vpop.xlane.xlu0 %236
    %v238 = vsel %vm192, %v219, 0.0
    %239 = vadd.xlane.f32.xlu0 %v238
    %v240 = vpop.xlane.xlu0 %239
    %v241 = vsel %vm192, %v220, 0.0
    %242 = vadd.xlane.f32.xlu0 %v241
    %v243 = vpop.xlane.xlu0 %242
    %v244 = vrcp.pop 32.0
    %v245 = vmul.f32 %v228, %v244
    %v246 = vmul.f32 %v231, %v244
    %v247 = vmul.f32 %v234, %v244
    %v248 = vmul.f32 %v237, %v244
    %v249 = vmul.f32 %v240, %v244
    %v250 = vmul.f32 %v243, %v244
    %v251 = vsub.f32 %v215, %v245
    %v252 = vsub.f32 %v216, %v246
    %v253 = vsub.f32 %v217, %v247
    %v254 = vsub.f32 %v218, %v248
    %v255 = vsub.f32 %v219, %v249
    %v256 = vsub.f32 %v220, %v250
    %v257 = vmul.f32 %v251, %v251
    %v258 = vmul.f32 %v252, %v252
    %v259 = vmul.f32 %v253, %v253
    %v260 = vmul.f32 %v254, %v254
    %v261 = vmul.f32 %v255, %v255
    %v262 = vmul.f32 %v256, %v256
    %v263 = vsel %vm192, %v257, 0.0
    %264 = vadd.xlane.f32.xlu0 %v263
    %v265 = vpop.xlane.xlu0 %264
    %v266 = vsel %vm192, %v258, 0.0
    %267 = vadd.xlane.f32.xlu0 %v266
    %v268 = vpop.xlane.xlu0 %267
    %v269 = vsel %vm192, %v259, 0.0
    %270 = vadd.xlane.f32.xlu0 %v269
    %v271 = vpop.xlane.xlu0 %270
    %v272 = vsel %vm192, %v260, 0.0
    %273 = vadd.xlane.f32.xlu0 %v272
    %v274 = vpop.xlane.xlu0 %273
    %v275 = vsel %vm192, %v261, 0.0
    %276 = vadd.xlane.f32.xlu0 %v275
    %v277 = vpop.xlane.xlu0 %276
    %v278 = vsel %vm192, %v262, 0.0
    %279 = vadd.xlane.f32.xlu0 %v278
    %v280 = vpop.xlane.xlu0 %279
    %v281 = vmul.f32 %v265, %v244
    %v282 = vmul.f32 %v268, %v244
    %v283 = vmul.f32 %v271, %v244
    %v284 = vmul.f32 %v274, %v244
    %v285 = vmul.f32 %v277, %v244
    %v286 = vmul.f32 %v280, %v244
    %v287 = vadd.f32 %v281, 1e-05
    %v288 = vadd.f32 %v282, 1e-05
    %v289 = vadd.f32 %v283, 1e-05
    %v290 = vadd.f32 %v284, 1e-05
    %v291 = vadd.f32 %v285, 1e-05
    %v292 = vadd.f32 %v286, 1e-05
    %v293 = vrsqrt.pop %v287
    %v294 = vrsqrt.pop %v288
    %v295 = vrsqrt.pop %v289
    %v296 = vrsqrt.pop %v290
    %v297 = vrsqrt.pop %v291
    %v298 = vrsqrt.pop %v292
    %v299 = vmul.f32 %v251, %v293
    %v300 = vmul.f32 %v252, %v294
    %v301 = vmul.f32 %v253, %v295
    %v302 = vmul.f32 %v254, %v296
    %v303 = vmul.f32 %v255, %v297
    %v304 = vmul.f32 %v256, %v298
    %v306 = vlaneseq
    %v307 = vshrl.u32 %v306, 7
    %v308 = vsub.s32 0, %v307
    %v309 = vrot.slane %v224, %v308
    %v311 = vmul.f32 %v299, %v309
    %v312 = vmul.f32 %v300, %v309
    %v313 = vmul.f32 %v301, %v309
    %v314 = vmul.f32 %v302, %v309
    %v315 = vmul.f32 %v303, %v309
    %v316 = vmul.f32 %v304, %v309
    %v318 = vlaneseq
    %v319 = vshrl.u32 %v318, 7
    %v320 = vsub.s32 0, %v319
    %v321 = vrot.slane %v225, %v320
    %v323 = vadd.f32 %v311, %v321
    %v324 = vadd.f32 %v312, %v321
    %v325 = vadd.f32 %v313, %v321
    %v326 = vadd.f32 %v314, %v321
    %v327 = vadd.f32 %v315, %v321
    %v328 = vadd.f32 %v316, %v321
    %v329 = vld [vmem:[%s7] sm:$0xff]
    %v330 = vld [vmem:[%s7 + $0x8] sm:$0xff]
    %v331 = vld [vmem:[%s7 + $0x10] sm:$0xff]
    %v332 = vld [vmem:[%s7 + $0x18] sm:$0xff]
    %v333 = vld [vmem:[%s8] sm:$0x1]
    %v335 = vlaneseq
    %v336 = vshrl.u32 %v335, 7
    %v337 = vsub.s32 0, %v336
    %v338 = vrot.slane %v333, %v337
    %v341 = vsel %vm192, %v323, 0
    %v344 = vsel %vm192, %v324, 0
    %v347 = vsel %vm192, %v325, 0
    %v350 = vsel %vm192, %v326, 0
    %v353 = vsel %vm192, %v327, 0
    %v356 = vsel %vm192, %v328, 0
    %358 = vmatprep.subr.mxu0 0.0
    %359 = vmatpush1.msra.mxu0 %v329
    %360 = vmatprep.subr.mxu0 0.0
    %361 = vmatpush1.msra.mxu0 %v330
    %362 = vmatprep.subr.mxu0 0.0
    %363 = vmatpush1.msra.mxu0 %v331
    %364 = vmatprep.subr.mxu0 0.0
    %365 = vmatpush1.msra.mxu0 %v332
    %366 = vmatprep.subr.mxu0 0.0
    %367 = vmatpush1.msra.mxu0 0.0
    %368 = vmatprep.subr.mxu0 0.0
    %369 = vmatpush1.msra.mxu0 0.0
    %370 = vmatprep.subr.mxu0 0.0
    %371 = vmatpush1.msra.mxu0 0.0
    %372 = vmatprep.subr.mxu0 0.0
    %373 = vmatpush1.msra.mxu0 0.0
    %374 = vmatprep.subr.mxu0 0.0
    %375 = vmatpush1.msra.mxu0 0.0
    %376 = vmatprep.subr.mxu0 0.0
    %377 = vmatpush1.msra.mxu0 0.0
    %378 = vmatprep.subr.mxu0 0.0
    %379 = vmatpush1.msra.mxu0 0.0
    %380 = vmatprep.subr.mxu0 0.0
    %381 = vmatpush1.msra.mxu0 0.0
    %382 = vmatprep.subr.mxu0 0.0
    %383 = vmatpush1.msra.mxu0 0.0
    %384 = vmatprep.subr.mxu0 0.0
    %385 = vmatpush1.msra.mxu0 0.0
    %386 = vmatprep.subr.mxu0 0.0
    %387 = vmatpush1.msra.mxu0 0.0
    %388 = vmatprep.subr.mxu0 0.0
    %389 = vmatpush1.msra.mxu0 0.0
    %390 = vmatprep.subr.mxu0 0.0
    %391 = vmatpush1.msra.mxu0 0.0
    %392 = vmatprep.subr.mxu0 0.0
    %393 = vmatpush1.msra.mxu0 0.0
    %394 = vmatprep.subr.mxu0 0.0
    %395 = vmatpush1.msra.mxu0 0.0
    %396 = vmatprep.subr.mxu0 0.0
    %397 = vmatpush1.msra.mxu0 0.0
    %398 = vmatprep.subr.mxu0 0.0
    %399 = vmatpush1.msra.mxu0 0.0
    %400 = vmatprep.subr.mxu0 0.0
    %401 = vmatpush1.msra.mxu0 0.0
    %402 = vmatprep.subr.mxu0 0.0
    %403 = vmatpush1.msra.mxu0 0.0
    %404 = vmatprep.subr.mxu0 0.0
    %405 = vmatpush1.msra.mxu0 0.0
    %406 = vmatprep.subr.mxu0 0.0
    %407 = vmatpush1.msra.mxu0 0.0
    %408 = vmatprep.subr.mxu0 0.0
    %409 = vmatpush1.msra.mxu0 0.0
    %410 = vmatprep.subr.mxu0 0.0
    %411 = vmatpush1.msra.mxu0 0.0
    %412 = vmatprep.subr.mxu0 0.0
    %413 = vmatpush1.msra.mxu0 0.0
    %414 = vmatprep.subr.mxu0 0.0
    %415 = vmatpush1.msra.mxu0 0.0
    %416 = vmatprep.subr.mxu0 0.0
    %417 = vmatpush1.msra.mxu0 0.0
    %418 = vmatprep.subr.mxu0 0.0
    %419 = vmatpush1.msra.mxu0 0.0
    %420 = vmatprep.subr.mxu0 0.0
    %421 = vmatpush1.msra.mxu0 0.0
    %422 = vmatprep.mubr.f32.mxu0 0.0
    %423 = vmatmul.mubr.f32.gmra.mrb[0].mxu0 %v341
    %v424 = vpop.f32.mrb[0].mxu0
    %v425 = vadd.f32 %v338, %v424
    %v426 = vpop.f32.mrb[0].mxu0
    %427 = vmatprep.mubr.f32.mxu0 0.0
    %428 = vmatmul.mubr.f32.gmra.mrb[0].mxu0 %v344
    %v429 = vpop.f32.mrb[0].mxu0
    %v430 = vadd.f32 %v338, %v429
    %v431 = vpop.f32.mrb[0].mxu0
    %432 = vmatprep.mubr.f32.mxu0 0.0
    %433 = vmatmul.mubr.f32.gmra.mrb[0].mxu0 %v347
    %v434 = vpop.f32.mrb[0].mxu0
    %v435 = vadd.f32 %v338, %v434
    %v436 = vpop.f32.mrb[0].mxu0
    %437 = vmatprep.mubr.f32.mxu0 0.0
    %438 = vmatmul.mubr.f32.gmra.mrb[0].mxu0 %v350
    %v439 = vpop.f32.mrb[0].mxu0
    %v440 = vadd.f32 %v338, %v439
    %v441 = vpop.f32.mrb[0].mxu0
    %442 = vmatprep.mubr.f32.mxu0 0.0
    %443 = vmatmul.mubr.f32.gmra.mrb[0].mxu0 %v353
    %v444 = vpop.f32.mrb[0].mxu0
    %v445 = vadd.f32 %v338, %v444
    %v446 = vpop.f32.mrb[0].mxu0
    %447 = vmatprep.mubr.f32.mxu0 0.0
    %448 = vmatmul.mubr.f32.gmra.mrb[0].mxu0 %v356
    %v449 = vpop.f32.mrb[0].mxu0
    %v450 = vadd.f32 %v338, %v449
    %v451 = vpop.f32.mrb[0].mxu0
    %452 = vdwg.mxu0
    %v453 = vmul.f32 %v425, 0.35355338
    %v454 = vmul.f32 %v430, 0.35355338
    %v455 = vmul.f32 %v435, 0.35355338
    %v456 = vmul.f32 %v440, 0.35355338
    %v457 = vmul.f32 %v445, 0.35355338
    %v458 = vmul.f32 %v450, 0.35355338
    %v459 = vld [vmem:[%s9] sm:$0xff]
    %v460 = vld [vmem:[%s9 + $0x8] sm:$0xff]
    %v461 = vld [vmem:[%s9 + $0x10] sm:$0xff]
    %v462 = vld [vmem:[%s9 + $0x18] sm:$0xff]
    %v463 = vld [vmem:[%s10] sm:$0x1]
    %v465 = vlaneseq
    %v466 = vshrl.u32 %v465, 7
    %v467 = vsub.s32 0, %v466
    %v468 = vrot.slane %v463, %v467
    %470 = vmatprep.subr.mxu0 0.0
    %471 = vmatpush1.msra.mxu0 %v459
    %472 = vmatprep.subr.mxu0 0.0
    %473 = vmatpush1.msra.mxu0 %v460
    %474 = vmatprep.subr.mxu0 0.0
    %475 = vmatpush1.msra.mxu0 %v461
    %476 = vmatprep.subr.mxu0 0.0
    %477 = vmatpush1.msra.mxu0 %v462
    %478 = vmatprep.subr.mxu0 0.0
    %479 = vmatpush1.msra.mxu0 0.0
    %480 = vmatprep.subr.mxu0 0.0
    %481 = vmatpush1.msra.mxu0 0.0
    %482 = vmatprep.subr.mxu0 0.0
    %483 = vmatpush1.msra.mxu0 0.0
    %484 = vmatprep.subr.mxu0 0.0
    %485 = vmatpush1.msra.mxu0 0.0
    %486 = vmatprep.subr.mxu0 0.0
    %487 = vmatpush1.msra.mxu0 0.0
    %488 = vmatprep.subr.mxu0 0.0
    %489 = vmatpush1.msra.mxu0 0.0
    %490 = vmatprep.subr.mxu0 0.0
    %491 = vmatpush1.msra.mxu0 0.0
    %492 = vmatprep.subr.mxu0 0.0
    %493 = vmatpush1.msra.mxu0 0.0
    %494 = vmatprep.subr.mxu0 0.0
    %495 = vmatpush1.msra.mxu0 0.0
    %496 = vmatprep.subr.mxu0 0.0
    %497 = vmatpush1.msra.mxu0 0.0
    %498 = vmatprep.subr.mxu0 0.0
    %499 = vmatpush1.msra.mxu0 0.0
    %500 = vmatprep.subr.mxu0 0.0
    %501 = vmatpush1.msra.mxu0 0.0
    %502 = vmatprep.subr.mxu0 0.0
    %503 = vmatpush1.msra.mxu0 0.0
    %504 = vmatprep.subr.mxu0 0.0
    %505 = vmatpush1.msra.mxu0 0.0
    %506 = vmatprep.subr.mxu0 0.0
    %507 = vmatpush1.msra.mxu0 0.0
    %508 = vmatprep.subr.mxu0 0.0
    %509 = vmatpush1.msra.mxu0 0.0
    %510 = vmatprep.subr.mxu0 0.0
    %511 = vmatpush1.msra.mxu0 0.0
    %512 = vmatprep.subr.mxu0 0.0
    %513 = vmatpush1.msra.mxu0 0.0
    %514 = vmatprep.subr.mxu0 0.0
    %515 = vmatpush1.msra.mxu0 0.0
    %516 = vmatprep.subr.mxu0 0.0
    %517 = vmatpush1.msra.mxu0 0.0
    %518 = vmatprep.subr.mxu0 0.0
    %519 = vmatpush1.msra.mxu0 0.0
    %520 = vmatprep.subr.mxu0 0.0
    %521 = vmatpush1.msra.mxu0 0.0
    %522 = vmatprep.subr.mxu0 0.0
    %523 = vmatpush1.msra.mxu0 0.0
    %524 = vmatprep.subr.mxu0 0.0
    %525 = vmatpush1.msra.mxu0 0.0
    %526 = vmatprep.subr.mxu0 0.0
    %527 = vmatpush1.msra.mxu0 0.0
    %528 = vmatprep.subr.mxu0 0.0
    %529 = vmatpush1.msra.mxu0 0.0
    %530 = vmatprep.subr.mxu0 0.0
    %531 = vmatpush1.msra.mxu0 0.0
    %532 = vmatprep.subr.mxu0 0.0
    %533 = vmatpush1.msra.mxu0 0.0
    %534 = vmatprep.mubr.f32.mxu0 0.0
    %535 = vmatmul.mubr.f32.gmra.mrb[0].mxu0 %v341
    %v536 = vpop.f32.mrb[0].mxu0
    %v537 = vadd.f32 %v468, %v536
    %v538 = vpop.f32.mrb[0].mxu0
    %539 = vmatprep.mubr.f32.mxu0 0.0
    %540 = vmatmul.mubr.f32.gmra.mrb[0].mxu0 %v344
    %v541 = vpop.f32.mrb[0].mxu0
    %v542 = vadd.f32 %v468, %v541
    %v543 = vpop.f32.mrb[0].mxu0
    %544 = vmatprep.mubr.f32.mxu0 0.0
    %545 = vmatmul.mubr.f32.gmra.mrb[0].mxu0 %v347
    %v546 = vpop.f32.mrb[0].mxu0
    %v547 = vadd.f32 %v468, %v546
    %v548 = vpop.f32.mrb[0].mxu0
    %549 = vmatprep.mubr.f32.mxu0 0.0
    %550 = vmatmul.mubr.f32.gmra.mrb[0].mxu0 %v350
    %v551 = vpop.f32.mrb[0].mxu0
    %v552 = vadd.f32 %v468, %v551
    %v553 = vpop.f32.mrb[0].mxu0
    %554 = vmatprep.mubr.f32.mxu0 0.0
    %555 = vmatmul.mubr.f32.gmra.mrb[0].mxu0 %v353
    %v556 = vpop.f32.mrb[0].mxu0
    %v557 = vadd.f32 %v468, %v556
    %v558 = vpop.f32.mrb[0].mxu0
    %559 = vmatprep.mubr.f32.mxu0 0.0
    %560 = vmatmul.mubr.f32.gmra.mrb[0].mxu0 %v356
    %v561 = vpop.f32.mrb[0].mxu0
    %v562 = vadd.f32 %v468, %v561
    %v563 = vpop.f32.mrb[0].mxu0
    %564 = vdwg.mxu0
    %v565 = vld [vmem:[%s11] sm:$0xff]
    %v566 = vld [vmem:[%s11 + $0x8] sm:$0xff]
    %v567 = vld [vmem:[%s11 + $0x10] sm:$0xff]
    %v568 = vld [vmem:[%s11 + $0x18] sm:$0xff]
    %v569 = vld [vmem:[%s12] sm:$0x1]
    %v571 = vlaneseq
    %v572 = vshrl.u32 %v571, 7
    %v573 = vsub.s32 0, %v572
    %v574 = vrot.slane %v569, %v573
    %576 = vmatprep.subr.mxu0 0.0
    %577 = vmatpush1.msra.mxu0 %v565
    %578 = vmatprep.subr.mxu0 0.0
    %579 = vmatpush1.msra.mxu0 %v566
    %580 = vmatprep.subr.mxu0 0.0
    %581 = vmatpush1.msra.mxu0 %v567
    %582 = vmatprep.subr.mxu0 0.0
    %583 = vmatpush1.msra.mxu0 %v568
    %584 = vmatprep.subr.mxu0 0.0
    %585 = vmatpush1.msra.mxu0 0.0
    %586 = vmatprep.subr.mxu0 0.0
    %587 = vmatpush1.msra.mxu0 0.0
    %588 = vmatprep.subr.mxu0 0.0
    %589 = vmatpush1.msra.mxu0 0.0
    %590 = vmatprep.subr.mxu0 0.0
    %591 = vmatpush1.msra.mxu0 0.0
    %592 = vmatprep.subr.mxu0 0.0
    %593 = vmatpush1.msra.mxu0 0.0
    %594 = vmatprep.subr.mxu0 0.0
    %595 = vmatpush1.msra.mxu0 0.0
    %596 = vmatprep.subr.mxu0 0.0
    %597 = vmatpush1.msra.mxu0 0.0
    %598 = vmatprep.subr.mxu0 0.0
    %599 = vmatpush1.msra.mxu0 0.0
    %600 = vmatprep.subr.mxu0 0.0
    %601 = vmatpush1.msra.mxu0 0.0
    %602 = vmatprep.subr.mxu0 0.0
    %603 = vmatpush1.msra.mxu0 0.0
    %604 = vmatprep.subr.mxu0 0.0
    %605 = vmatpush1.msra.mxu0 0.0
    %606 = vmatprep.subr.mxu0 0.0
    %607 = vmatpush1.msra.mxu0 0.0
    %608 = vmatprep.subr.mxu0 0.0
    %609 = vmatpush1.msra.mxu0 0.0
    %610 = vmatprep.subr.mxu0 0.0
    %611 = vmatpush1.msra.mxu0 0.0
    %612 = vmatprep.subr.mxu0 0.0
    %613 = vmatpush1.msra.mxu0 0.0
    %614 = vmatprep.subr.mxu0 0.0
    %615 = vmatpush1.msra.mxu0 0.0
    %616 = vmatprep.subr.mxu0 0.0
    %617 = vmatpush1.msra.mxu0 0.0
    %618 = vmatprep.subr.mxu0 0.0
    %619 = vmatpush1.msra.mxu0 0.0
    %620 = vmatprep.subr.mxu0 0.0
    %621 = vmatpush1.msra.mxu0 0.0
    %622 = vmatprep.subr.mxu0 0.0
    %623 = vmatpush1.msra.mxu0 0.0
    %624 = vmatprep.subr.mxu0 0.0
    %625 = vmatpush1.msra.mxu0 0.0
    %626 = vmatprep.subr.mxu0 0.0
    %627 = vmatpush1.msra.mxu0 0.0
    %628 = vmatprep.subr.mxu0 0.0
    %629 = vmatpush1.msra.mxu0 0.0
    %630 = vmatprep.subr.mxu0 0.0
    %631 = vmatpush1.msra.mxu0 0.0
    %632 = vmatprep.subr.mxu0 0.0
    %633 = vmatpush1.msra.mxu0 0.0
    %634 = vmatprep.subr.mxu0 0.0
    %635 = vmatpush1.msra.mxu0 0.0
    %636 = vmatprep.subr.mxu0 0.0
    %637 = vmatpush1.msra.mxu0 0.0
    %638 = vmatprep.subr.mxu0 0.0
    %639 = vmatpush1.msra.mxu0 0.0
    %640 = vmatprep.mubr.f32.mxu0 0.0
    %641 = vmatmul.mubr.f32.gmra.mrb[0].mxu0 %v341
    %v642 = vpop.f32.mrb[0].mxu0
    %v643 = vadd.f32 %v574, %v642
    %v644 = vpop.f32.mrb[0].mxu0
    %645 = vmatprep.mubr.f32.mxu0 0.0
    %646 = vmatmul.mubr.f32.gmra.mrb[0].mxu0 %v344
    %v647 = vpop.f32.mrb[0].mxu0
    %v648 = vadd.f32 %v574, %v647
    %v649 = vpop.f32.mrb[0].mxu0
    %650 = vmatprep.mubr.f32.mxu0 0.0
    %651 = vmatmul.mubr.f32.gmra.mrb[0].mxu0 %v347
    %v652 = vpop.f32.mrb[0].mxu0
    %v653 = vadd.f32 %v574, %v652
    %v654 = vpop.f32.mrb[0].mxu0
    %655 = vmatprep.mubr.f32.mxu0 0.0
    %656 = vmatmul.mubr.f32.gmra.mrb[0].mxu0 %v350
    %v657 = vpop.f32.mrb[0].mxu0
    %v658 = vadd.f32 %v574, %v657
    %v659 = vpop.f32.mrb[0].mxu0
    %660 = vmatprep.mubr.f32.mxu0 0.0
    %661 = vmatmul.mubr.f32.gmra.mrb[0].mxu0 %v353
    %v662 = vpop.f32.mrb[0].mxu0
    %v663 = vadd.f32 %v574, %v662
    %v664 = vpop.f32.mrb[0].mxu0
    %665 = vmatprep.mubr.f32.mxu0 0.0
    %666 = vmatmul.mubr.f32.gmra.mrb[0].mxu0 %v356
    %v667 = vpop.f32.mrb[0].mxu0
    %v668 = vadd.f32 %v574, %v667
    %v669 = vpop.f32.mrb[0].mxu0
    %670 = vdwg.mxu0
    %v671 = vld [vmem:[%s13] sm:$0xff]
    %v672 = vld [vmem:[%s13 + $0x8] sm:$0xff]
    %v673 = vld [vmem:[%s13 + $0x10] sm:$0xff]
    %v674 = vld [vmem:[%s13 + $0x18] sm:$0xff]
    %vm675 = vcmask 64512
    %v677 = vsel %vm675, %v453, 0
    %v680 = vsel %vm675, %v454, 0
    %v683 = vsel %vm675, %v455, 0
    %v686 = vsel %vm675, %v537, 0
    %v689 = vsel %vm675, %v542, 0
    %v692 = vsel %vm675, %v547, 0
    %694 = vmatprep.subr.mxu0 0.0
    %695 = vmatpush1.xpose.msra.mxu0 %v686
    %696 = vmatprep.subr.mxu0 0.0
    %697 = vmatpush1.xpose.msra.mxu0 %v689
    %698 = vmatprep.subr.mxu0 0.0
    %699 = vmatpush1.xpose.msra.mxu0 %v692
    %700 = vmatprep.subr.mxu0 0.0
    %701 = vmatpush1.xpose.msra.mxu0 0.0
    %702 = vmatprep.subr.mxu0 0.0
    %703 = vmatpush1.xpose.msra.mxu0 0.0
    %704 = vmatprep.subr.mxu0 0.0
    %705 = vmatpush1.xpose.msra.mxu0 0.0
    %706 = vmatprep.subr.mxu0 0.0
    %707 = vmatpush1.xpose.msra.mxu0 0.0
    %708 = vmatprep.subr.mxu0 0.0
    %709 = vmatpush1.xpose.msra.mxu0 0.0
    %710 = vmatprep.subr.mxu0 0.0
    %711 = vmatpush1.xpose.msra.mxu0 0.0
    %712 = vmatprep.subr.mxu0 0.0
    %713 = vmatpush1.xpose.msra.mxu0 0.0
    %714 = vmatprep.subr.mxu0 0.0
    %715 = vmatpush1.xpose.msra.mxu0 0.0
    %716 = vmatprep.subr.mxu0 0.0
    %717 = vmatpush1.xpose.msra.mxu0 0.0
    %718 = vmatprep.subr.mxu0 0.0
    %719 = vmatpush1.xpose.msra.mxu0 0.0
    %720 = vmatprep.subr.mxu0 0.0
    %721 = vmatpush1.xpose.msra.mxu0 0.0
    %722 = vmatprep.subr.mxu0 0.0
    %723 = vmatpush1.xpose.msra.mxu0 0.0
    %724 = vmatprep.subr.mxu0 0.0
    %725 = vmatpush1.xpose.msra.mxu0 0.0
    %726 = vmatprep.subr.mxu0 0.0
    %727 = vmatpush1.xpose.msra.mxu0 0.0
    %728 = vmatprep.subr.mxu0 0.0
    %729 = vmatpush1.xpose.msra.mxu0 0.0
    %730 = vmatprep.subr.mxu0 0.0
    %731 = vmatpush1.xpose.msra.mxu0 0.0
    %732 = vmatprep.subr.mxu0 0.0
    %733 = vmatpush1.xpose.msra.mxu0 0.0
    %734 = vmatprep.subr.mxu0 0.0
    %735 = vmatpush1.xpose.msra.mxu0 0.0
    %736 = vmatprep.subr.mxu0 0.0
    %737 = vmatpush1.xpose.msra.mxu0 0.0
    %738 = vmatprep.subr.mxu0 0.0
    %739 = vmatpush1.xpose.msra.mxu0 0.0
    %740 = vmatprep.subr.mxu0 0.0
    %741 = vmatpush1.xpose.msra.mxu0 0.0
    %742 = vmatprep.subr.mxu0 0.0
    %743 = vmatpush1.xpose.msra.mxu0 0.0
    %744 = vmatprep.subr.mxu0 0.0
    %745 = vmatpush1.xpose.msra.mxu0 0.0
    %746 = vmatprep.subr.mxu0 0.0
    %747 = vmatpush1.xpose.msra.mxu0 0.0
    %748 = vmatprep.subr.mxu0 0.0
    %749 = vmatpush1.xpose.msra.mxu0 0.0
    %750 = vmatprep.subr.mxu0 0.0
    %751 = vmatpush1.xpose.msra.mxu0 0.0
    %752 = vmatprep.subr.mxu0 0.0
    %753 = vmatpush1.xpose.msra.mxu0 0.0
    %754 = vmatprep.subr.mxu0 0.0
    %755 = vmatpush1.xpose.msra.mxu0 0.0
    %756 = vmatprep.subr.mxu0 0.0
    %757 = vmatpush1.xpose.msra.mxu0 0.0
    %758 = vmatprep.mubr.f32.mxu0 0.0
    %759 = vmatmul.mubr.f32.gmra.mrb[0].mxu0 %v677
    %v760 = vpop.f32.mrb[0].mxu0
    %v761 = vadd.f32 0.0, %v760
    %v762 = vpop.f32.mrb[0].mxu0
    %763 = vmatprep.mubr.f32.mxu0 0.0
    %764 = vmatmul.mubr.f32.gmra.mrb[0].mxu0 %v680
    %v765 = vpop.f32.mrb[0].mxu0
    %v766 = vadd.f32 0.0, %v765
    %v767 = vpop.f32.mrb[0].mxu0
    %768 = vmatprep.mubr.f32.mxu0 0.0
    %769 = vmatmul.mubr.f32.gmra.mrb[0].mxu0 %v683
    %v770 = vpop.f32.mrb[0].mxu0
    %v771 = vadd.f32 0.0, %v770
    %v772 = vpop.f32.mrb[0].mxu0
    %773 = vdwg.mxu0
    %v775 = vsel %vm675, %v456, 0
    %v778 = vsel %vm675, %v457, 0
    %v781 = vsel %vm675, %v458, 0
    %v784 = vsel %vm675, %v552, 0
    %v787 = vsel %vm675, %v557, 0
    %v790 = vsel %vm675, %v562, 0
    %792 = vmatprep.subr.mxu0 0.0
    %793 = vmatpush1.xpose.msra.mxu0 %v784
    %794 = vmatprep.subr.mxu0 0.0
    %795 = vmatpush1.xpose.msra.mxu0 %v787
    %796 = vmatprep.subr.mxu0 0.0
    %797 = vmatpush1.xpose.msra.mxu0 %v790
    %798 = vmatprep.subr.mxu0 0.0
    %799 = vmatpush1.xpose.msra.mxu0 0.0
    %800 = vmatprep.subr.mxu0 0.0
    %801 = vmatpush1.xpose.msra.mxu0 0.0
    %802 = vmatprep.subr.mxu0 0.0
    %803 = vmatpush1.xpose.msra.mxu0 0.0
    %804 = vmatprep.subr.mxu0 0.0
    %805 = vmatpush1.xpose.msra.mxu0 0.0
    %806 = vmatprep.subr.mxu0 0.0
    %807 = vmatpush1.xpose.msra.mxu0 0.0
    %808 = vmatprep.subr.mxu0 0.0
    %809 = vmatpush1.xpose.msra.mxu0 0.0
    %810 = vmatprep.subr.mxu0 0.0
    %811 = vmatpush1.xpose.msra.mxu0 0.0
    %812 = vmatprep.subr.mxu0 0.0
    %813 = vmatpush1.xpose.msra.mxu0 0.0
    %814 = vmatprep.subr.mxu0 0.0
    %815 = vmatpush1.xpose.msra.mxu0 0.0
    %816 = vmatprep.subr.mxu0 0.0
    %817 = vmatpush1.xpose.msra.mxu0 0.0
    %818 = vmatprep.subr.mxu0 0.0
    %819 = vmatpush1.xpose.msra.mxu0 0.0
    %820 = vmatprep.subr.mxu0 0.0
    %821 = vmatpush1.xpose.msra.mxu0 0.0
    %822 = vmatprep.subr.mxu0 0.0
    %823 = vmatpush1.xpose.msra.mxu0 0.0
    %824 = vmatprep.subr.mxu0 0.0
    %825 = vmatpush1.xpose.msra.mxu0 0.0
    %826 = vmatprep.subr.mxu0 0.0
    %827 = vmatpush1.xpose.msra.mxu0 0.0
    %828 = vmatprep.subr.mxu0 0.0
    %829 = vmatpush1.xpose.msra.mxu0 0.0
    %830 = vmatprep.subr.mxu0 0.0
    %831 = vmatpush1.xpose.msra.mxu0 0.0
    %832 = vmatprep.subr.mxu0 0.0
    %833 = vmatpush1.xpose.msra.mxu0 0.0
    %834 = vmatprep.subr.mxu0 0.0
    %835 = vmatpush1.xpose.msra.mxu0 0.0
    %836 = vmatprep.subr.mxu0 0.0
    %837 = vmatpush1.xpose.msra.mxu0 0.0
    %838 = vmatprep.subr.mxu0 0.0
    %839 = vmatpush1.xpose.msra.mxu0 0.0
    %840 = vmatprep.subr.mxu0 0.0
    %841 = vmatpush1.xpose.msra.mxu0 0.0
    %842 = vmatprep.subr.mxu0 0.0
    %843 = vmatpush1.xpose.msra.mxu0 0.0
    %844 = vmatprep.subr.mxu0 0.0
    %845 = vmatpush1.xpose.msra.mxu0 0.0
    %846 = vmatprep.subr.mxu0 0.0
    %847 = vmatpush1.xpose.msra.mxu0 0.0
    %848 = vmatprep.subr.mxu0 0.0
    %849 = vmatpush1.xpose.msra.mxu0 0.0
    %850 = vmatprep.subr.mxu0 0.0
    %851 = vmatpush1.xpose.msra.mxu0 0.0
    %852 = vmatprep.subr.mxu0 0.0
    %853 = vmatpush1.xpose.msra.mxu0 0.0
    %854 = vmatprep.subr.mxu0 0.0
    %855 = vmatpush1.xpose.msra.mxu0 0.0
    %856 = vmatprep.mubr.f32.mxu0 0.0
    %857 = vmatmul.mubr.f32.gmra.mrb[0].mxu0 %v775
    %v858 = vpop.f32.mrb[0].mxu0
    %v859 = vadd.f32 0.0, %v858
    %v860 = vpop.f32.mrb[0].mxu0
    %861 = vmatprep.mubr.f32.mxu0 0.0
    %862 = vmatmul.mubr.f32.gmra.mrb[0].mxu0 %v778
    %v863 = vpop.f32.mrb[0].mxu0
    %v864 = vadd.f32 0.0, %v863
    %v865 = vpop.f32.mrb[0].mxu0
    %866 = vmatprep.mubr.f32.mxu0 0.0
    %867 = vmatmul.mubr.f32.gmra.mrb[0].mxu0 %v781
    %v868 = vpop.f32.mrb[0].mxu0
    %v869 = vadd.f32 0.0, %v868
    %v870 = vpop.f32.mrb[0].mxu0
    %871 = vdwg.mxu0
    %v872 = vsel %vm223, %v761, -1e+30
    %v873 = vsel %vm223, %v766, -1e+30
    %v874 = vsel %vm223, %v771, -1e+30
    %v875 = vsel %vm223, %v859, -1e+30
    %v876 = vsel %vm223, %v864, -1e+30
    %v877 = vsel %vm223, %v869, -1e+30
    %vm878 = vcmask 195584
    %v879 = vsel %vm878, %v872, -inf
    %880 = vmax.xlane.f32.xlu0 %v879
    %v881 = vpop.xlane.xlu0 %880
    %v882 = vsel %vm878, %v873, -inf
    %883 = vmax.xlane.f32.xlu0 %v882
    %v884 = vpop.xlane.xlu0 %883
    %v885 = vsel %vm878, %v874, -inf
    %886 = vmax.xlane.f32.xlu0 %v885
    %v887 = vpop.xlane.xlu0 %886
    %v888 = vsel %vm878, %v875, -inf
    %889 = vmax.xlane.f32.xlu0 %v888
    %v890 = vpop.xlane.xlu0 %889
    %v891 = vsel %vm878, %v876, -inf
    %892 = vmax.xlane.f32.xlu0 %v891
    %v893 = vpop.xlane.xlu0 %892
    %v894 = vsel %vm878, %v877, -inf
    %895 = vmax.xlane.f32.xlu0 %v894
    %v896 = vpop.xlane.xlu0 %895
    %v897 = vsub.f32 %v872, %v881
    %v898 = vsub.f32 %v873, %v884
    %v899 = vsub.f32 %v874, %v887
    %v900 = vsub.f32 %v875, %v890
    %v901 = vsub.f32 %v876, %v893
    %v902 = vsub.f32 %v877, %v896
    %v903 = vmul.f32 %v897, 1.442695
    %v904 = vpow.pop %v903
    %v905 = vmul.f32 %v898, 1.442695
    %v906 = vpow.pop %v905
    %v907 = vmul.f32 %v899, 1.442695
    %v908 = vpow.pop %v907
    %v909 = vmul.f32 %v900, 1.442695
    %v910 = vpow.pop %v909
    %v911 = vmul.f32 %v901, 1.442695
    %v912 = vpow.pop %v911
    %v913 = vmul.f32 %v902, 1.442695
    %v914 = vpow.pop %v913
    %v915 = vsel %vm878, %v904, 0.0
    %916 = vadd.xlane.f32.xlu0 %v915
    %v917 = vpop.xlane.xlu0 %916
    %v918 = vsel %vm878, %v906, 0.0
    %919 = vadd.xlane.f32.xlu0 %v918
    %v920 = vpop.xlane.xlu0 %919
    %v921 = vsel %vm878, %v908, 0.0
    %922 = vadd.xlane.f32.xlu0 %v921
    %v923 = vpop.xlane.xlu0 %922
    %v924 = vsel %vm878, %v910, 0.0
    %925 = vadd.xlane.f32.xlu0 %v924
    %v926 = vpop.xlane.xlu0 %925
    %v927 = vsel %vm878, %v912, 0.0
    %928 = vadd.xlane.f32.xlu0 %v927
    %v929 = vpop.xlane.xlu0 %928
    %v930 = vsel %vm878, %v914, 0.0
    %931 = vadd.xlane.f32.xlu0 %v930
    %v932 = vpop.xlane.xlu0 %931
    %v933 = vrcp.pop %v917
    %v934 = vrcp.pop %v920
    %v935 = vrcp.pop %v923
    %v936 = vrcp.pop %v926
    %v937 = vrcp.pop %v929
    %v938 = vrcp.pop %v932
    %v939 = vmul.f32 %v904, %v933
    %v940 = vmul.f32 %v906, %v934
    %v941 = vmul.f32 %v908, %v935
    %v942 = vmul.f32 %v910, %v936
    %v943 = vmul.f32 %v912, %v937
    %v944 = vmul.f32 %v914, %v938
    %v946 = vsel %vm878, %v939, 0
    %v949 = vsel %vm878, %v940, 0
    %v952 = vsel %vm878, %v941, 0
    %954 = vmatprep.subr.mxu0 0.0
    %955 = vmatpush1.msra.mxu0 %v643
    %956 = vmatprep.subr.mxu0 0.0
    %957 = vmatpush1.msra.mxu0 %v648
    %958 = vmatprep.subr.mxu0 0.0
    %959 = vmatpush1.msra.mxu0 %v653
    %960 = vmatprep.subr.mxu0 0.0
    %961 = vmatpush1.msra.mxu0 0.0
    %962 = vmatprep.subr.mxu0 0.0
    %963 = vmatpush1.msra.mxu0 0.0
    %964 = vmatprep.subr.mxu0 0.0
    %965 = vmatpush1.msra.mxu0 0.0
    %966 = vmatprep.subr.mxu0 0.0
    %967 = vmatpush1.msra.mxu0 0.0
    %968 = vmatprep.subr.mxu0 0.0
    %969 = vmatpush1.msra.mxu0 0.0
    %970 = vmatprep.subr.mxu0 0.0
    %971 = vmatpush1.msra.mxu0 0.0
    %972 = vmatprep.subr.mxu0 0.0
    %973 = vmatpush1.msra.mxu0 0.0
    %974 = vmatprep.subr.mxu0 0.0
    %975 = vmatpush1.msra.mxu0 0.0
    %976 = vmatprep.subr.mxu0 0.0
    %977 = vmatpush1.msra.mxu0 0.0
    %978 = vmatprep.subr.mxu0 0.0
    %979 = vmatpush1.msra.mxu0 0.0
    %980 = vmatprep.subr.mxu0 0.0
    %981 = vmatpush1.msra.mxu0 0.0
    %982 = vmatprep.subr.mxu0 0.0
    %983 = vmatpush1.msra.mxu0 0.0
    %984 = vmatprep.subr.mxu0 0.0
    %985 = vmatpush1.msra.mxu0 0.0
    %986 = vmatprep.subr.mxu0 0.0
    %987 = vmatpush1.msra.mxu0 0.0
    %988 = vmatprep.subr.mxu0 0.0
    %989 = vmatpush1.msra.mxu0 0.0
    %990 = vmatprep.subr.mxu0 0.0
    %991 = vmatpush1.msra.mxu0 0.0
    %992 = vmatprep.subr.mxu0 0.0
    %993 = vmatpush1.msra.mxu0 0.0
    %994 = vmatprep.subr.mxu0 0.0
    %995 = vmatpush1.msra.mxu0 0.0
    %996 = vmatprep.subr.mxu0 0.0
    %997 = vmatpush1.msra.mxu0 0.0
    %998 = vmatprep.subr.mxu0 0.0
    %999 = vmatpush1.msra.mxu0 0.0
    %1000 = vmatprep.subr.mxu0 0.0
    %1001 = vmatpush1.msra.mxu0 0.0
    %1002 = vmatprep.subr.mxu0 0.0
    %1003 = vmatpush1.msra.mxu0 0.0
    %1004 = vmatprep.subr.mxu0 0.0
    %1005 = vmatpush1.msra.mxu0 0.0
    %1006 = vmatprep.subr.mxu0 0.0
    %1007 = vmatpush1.msra.mxu0 0.0
    %1008 = vmatprep.subr.mxu0 0.0
    %1009 = vmatpush1.msra.mxu0 0.0
    %1010 = vmatprep.subr.mxu0 0.0
    %1011 = vmatpush1.msra.mxu0 0.0
    %1012 = vmatprep.subr.mxu0 0.0
    %1013 = vmatpush1.msra.mxu0 0.0
    %1014 = vmatprep.subr.mxu0 0.0
    %1015 = vmatpush1.msra.mxu0 0.0
    %1016 = vmatprep.subr.mxu0 0.0
    %1017 = vmatpush1.msra.mxu0 0.0
    %1018 = vmatprep.mubr.f32.mxu0 0.0
    %1019 = vmatmul.mubr.f32.gmra.mrb[0].mxu0 %v946
    %v1020 = vpop.f32.mrb[0].mxu0
    %v1021 = vadd.f32 0.0, %v1020
    %v1022 = vpop.f32.mrb[0].mxu0
    %1023 = vmatprep.mubr.f32.mxu0 0.0
    %1024 = vmatmul.mubr.f32.gmra.mrb[0].mxu0 %v949
    %v1025 = vpop.f32.mrb[0].mxu0
    %v1026 = vadd.f32 0.0, %v1025
    %v1027 = vpop.f32.mrb[0].mxu0
    %1028 = vmatprep.mubr.f32.mxu0 0.0
    %1029 = vmatmul.mubr.f32.gmra.mrb[0].mxu0 %v952
    %v1030 = vpop.f32.mrb[0].mxu0
    %v1031 = vadd.f32 0.0, %v1030
    %v1032 = vpop.f32.mrb[0].mxu0
    %1033 = vdwg.mxu0
    %v1035 = vsel %vm878, %v942, 0
    %v1038 = vsel %vm878, %v943, 0
    %v1041 = vsel %vm878, %v944, 0
    %1043 = vmatprep.subr.mxu0 0.0
    %1044 = vmatpush1.msra.mxu0 %v658
    %1045 = vmatprep.subr.mxu0 0.0
    %1046 = vmatpush1.msra.mxu0 %v663
    %1047 = vmatprep.subr.mxu0 0.0
    %1048 = vmatpush1.msra.mxu0 %v668
    %1049 = vmatprep.subr.mxu0 0.0
    %1050 = vmatpush1.msra.mxu0 0.0
    %1051 = vmatprep.subr.mxu0 0.0
    %1052 = vmatpush1.msra.mxu0 0.0
    %1053 = vmatprep.subr.mxu0 0.0
    %1054 = vmatpush1.msra.mxu0 0.0
    %1055 = vmatprep.subr.mxu0 0.0
    %1056 = vmatpush1.msra.mxu0 0.0
    %1057 = vmatprep.subr.mxu0 0.0
    %1058 = vmatpush1.msra.mxu0 0.0
    %1059 = vmatprep.subr.mxu0 0.0
    %1060 = vmatpush1.msra.mxu0 0.0
    %1061 = vmatprep.subr.mxu0 0.0
    %1062 = vmatpush1.msra.mxu0 0.0
    %1063 = vmatprep.subr.mxu0 0.0
    %1064 = vmatpush1.msra.mxu0 0.0
    %1065 = vmatprep.subr.mxu0 0.0
    %1066 = vmatpush1.msra.mxu0 0.0
    %1067 = vmatprep.subr.mxu0 0.0
    %1068 = vmatpush1.msra.mxu0 0.0
    %1069 = vmatprep.subr.mxu0 0.0
    %1070 = vmatpush1.msra.mxu0 0.0
    %1071 = vmatprep.subr.mxu0 0.0
    %1072 = vmatpush1.msra.mxu0 0.0
    %1073 = vmatprep.subr.mxu0 0.0
    %1074 = vmatpush1.msra.mxu0 0.0
    %1075 = vmatprep.subr.mxu0 0.0
    %1076 = vmatpush1.msra.mxu0 0.0
    %1077 = vmatprep.subr.mxu0 0.0
    %1078 = vmatpush1.msra.mxu0 0.0
    %1079 = vmatprep.subr.mxu0 0.0
    %1080 = vmatpush1.msra.mxu0 0.0
    %1081 = vmatprep.subr.mxu0 0.0
    %1082 = vmatpush1.msra.mxu0 0.0
    %1083 = vmatprep.subr.mxu0 0.0
    %1084 = vmatpush1.msra.mxu0 0.0
    %1085 = vmatprep.subr.mxu0 0.0
    %1086 = vmatpush1.msra.mxu0 0.0
    %1087 = vmatprep.subr.mxu0 0.0
    %1088 = vmatpush1.msra.mxu0 0.0
    %1089 = vmatprep.subr.mxu0 0.0
    %1090 = vmatpush1.msra.mxu0 0.0
    %1091 = vmatprep.subr.mxu0 0.0
    %1092 = vmatpush1.msra.mxu0 0.0
    %1093 = vmatprep.subr.mxu0 0.0
    %1094 = vmatpush1.msra.mxu0 0.0
    %1095 = vmatprep.subr.mxu0 0.0
    %1096 = vmatpush1.msra.mxu0 0.0
    %1097 = vmatprep.subr.mxu0 0.0
    %1098 = vmatpush1.msra.mxu0 0.0
    %1099 = vmatprep.subr.mxu0 0.0
    %1100 = vmatpush1.msra.mxu0 0.0
    %1101 = vmatprep.subr.mxu0 0.0
    %1102 = vmatpush1.msra.mxu0 0.0
    %1103 = vmatprep.subr.mxu0 0.0
    %1104 = vmatpush1.msra.mxu0 0.0
    %1105 = vmatprep.subr.mxu0 0.0
    %1106 = vmatpush1.msra.mxu0 0.0
    %1107 = vmatprep.mubr.f32.mxu0 0.0
    %1108 = vmatmul.mubr.f32.gmra.mrb[0].mxu0 %v1035
    %v1109 = vpop.f32.mrb[0].mxu0
    %v1110 = vadd.f32 0.0, %v1109
    %v1111 = vpop.f32.mrb[0].mxu0
    %1112 = vmatprep.mubr.f32.mxu0 0.0
    %1113 = vmatmul.mubr.f32.gmra.mrb[0].mxu0 %v1038
    %v1114 = vpop.f32.mrb[0].mxu0
    %v1115 = vadd.f32 0.0, %v1114
    %v1116 = vpop.f32.mrb[0].mxu0
    %1117 = vmatprep.mubr.f32.mxu0 0.0
    %1118 = vmatmul.mubr.f32.gmra.mrb[0].mxu0 %v1041
    %v1119 = vpop.f32.mrb[0].mxu0
    %v1120 = vadd.f32 0.0, %v1119
    %v1121 = vpop.f32.mrb[0].mxu0
    %1122 = vdwg.mxu0
    %1123 = vrot.lane.b32.xlu0 %v453, 120
    %v1124 = vpop.permute.xlu0 %1123
    %1125 = vrot.lane.b32.xlu0 %v454, 120
    %v1126 = vpop.permute.xlu0 %1125
    %1127 = vrot.lane.b32.xlu0 %v455, 120
    %v1128 = vpop.permute.xlu0 %1127
    %1129 = vrot.lane.b32.xlu0 %v537, 120
    %v1130 = vpop.permute.xlu0 %1129
    %1131 = vrot.lane.b32.xlu0 %v542, 120
    %v1132 = vpop.permute.xlu0 %1131
    %1133 = vrot.lane.b32.xlu0 %v547, 120
    %v1134 = vpop.permute.xlu0 %1133
    %v1135 = vsel %vm675, %v1124, 0
    %v1137 = vsel %vm675, %v1126, 0
    %v1139 = vsel %vm675, %v1128, 0
    %v1141 = vsel %vm675, %v1130, 0
    %v1143 = vsel %vm675, %v1132, 0
    %v1145 = vsel %vm675, %v1134, 0
    %1147 = vmatprep.subr.mxu0 0.0
    %1148 = vmatpush1.xpose.msra.mxu0 %v1141
    %1149 = vmatprep.subr.mxu0 0.0
    %1150 = vmatpush1.xpose.msra.mxu0 %v1143
    %1151 = vmatprep.subr.mxu0 0.0
    %1152 = vmatpush1.xpose.msra.mxu0 %v1145
    %1153 = vmatprep.subr.mxu0 0.0
    %1154 = vmatpush1.xpose.msra.mxu0 0.0
    %1155 = vmatprep.subr.mxu0 0.0
    %1156 = vmatpush1.xpose.msra.mxu0 0.0
    %1157 = vmatprep.subr.mxu0 0.0
    %1158 = vmatpush1.xpose.msra.mxu0 0.0
    %1159 = vmatprep.subr.mxu0 0.0
    %1160 = vmatpush1.xpose.msra.mxu0 0.0
    %1161 = vmatprep.subr.mxu0 0.0
    %1162 = vmatpush1.xpose.msra.mxu0 0.0
    %1163 = vmatprep.subr.mxu0 0.0
    %1164 = vmatpush1.xpose.msra.mxu0 0.0
    %1165 = vmatprep.subr.mxu0 0.0
    %1166 = vmatpush1.xpose.msra.mxu0 0.0
    %1167 = vmatprep.subr.mxu0 0.0
    %1168 = vmatpush1.xpose.msra.mxu0 0.0
    %1169 = vmatprep.subr.mxu0 0.0
    %1170 = vmatpush1.xpose.msra.mxu0 0.0
    %1171 = vmatprep.subr.mxu0 0.0
    %1172 = vmatpush1.xpose.msra.mxu0 0.0
    %1173 = vmatprep.subr.mxu0 0.0
    %1174 = vmatpush1.xpose.msra.mxu0 0.0
    %1175 = vmatprep.subr.mxu0 0.0
    %1176 = vmatpush1.xpose.msra.mxu0 0.0
    %1177 = vmatprep.subr.mxu0 0.0
    %1178 = vmatpush1.xpose.msra.mxu0 0.0
    %1179 = vmatprep.subr.mxu0 0.0
    %1180 = vmatpush1.xpose.msra.mxu0 0.0
    %1181 = vmatprep.subr.mxu0 0.0
    %1182 = vmatpush1.xpose.msra.mxu0 0.0
    %1183 = vmatprep.subr.mxu0 0.0
    %1184 = vmatpush1.xpose.msra.mxu0 0.0
    %1185 = vmatprep.subr.mxu0 0.0
    %1186 = vmatpush1.xpose.msra.mxu0 0.0
    %1187 = vmatprep.subr.mxu0 0.0
    %1188 = vmatpush1.xpose.msra.mxu0 0.0
    %1189 = vmatprep.subr.mxu0 0.0
    %1190 = vmatpush1.xpose.msra.mxu0 0.0
    %1191 = vmatprep.subr.mxu0 0.0
    %1192 = vmatpush1.xpose.msra.mxu0 0.0
    %1193 = vmatprep.subr.mxu0 0.0
    %1194 = vmatpush1.xpose.msra.mxu0 0.0
    %1195 = vmatprep.subr.mxu0 0.0
    %1196 = vmatpush1.xpose.msra.mxu0 0.0
    %1197 = vmatprep.subr.mxu0 0.0
    %1198 = vmatpush1.xpose.msra.mxu0 0.0
    %1199 = vmatprep.subr.mxu0 0.0
    %1200 = vmatpush1.xpose.msra.mxu0 0.0
    %1201 = vmatprep.subr.mxu0 0.0
    %1202 = vmatpush1.xpose.msra.mxu0 0.0
    %1203 = vmatprep.subr.mxu0 0.0
    %1204 = vmatpush1.xpose.msra.mxu0 0.0
    %1205 = vmatprep.subr.mxu0 0.0
    %1206 = vmatpush1.xpose.msra.mxu0 0.0
    %1207 = vmatprep.subr.mxu0 0.0
    %1208 = vmatpush1.xpose.msra.mxu0 0.0
    %1209 = vmatprep.subr.mxu0 0.0
    %1210 = vmatpush1.xpose.msra.mxu0 0.0
    %1211 = vmatprep.mubr.f32.mxu0 0.0
    %1212 = vmatmul.mubr.f32.gmra.mrb[0].mxu0 %v1135
    %v1213 = vpop.f32.mrb[0].mxu0
    %v1214 = vadd.f32 0.0, %v1213
    %v1215 = vpop.f32.mrb[0].mxu0
    %1216 = vmatprep.mubr.f32.mxu0 0.0
    %1217 = vmatmul.mubr.f32.gmra.mrb[0].mxu0 %v1137
    %v1218 = vpop.f32.mrb[0].mxu0
    %v1219 = vadd.f32 0.0, %v1218
    %v1220 = vpop.f32.mrb[0].mxu0
    %1221 = vmatprep.mubr.f32.mxu0 0.0
    %1222 = vmatmul.mubr.f32.gmra.mrb[0].mxu0 %v1139
    %v1223 = vpop.f32.mrb[0].mxu0
    %v1224 = vadd.f32 0.0, %v1223
    %v1225 = vpop.f32.mrb[0].mxu0
    %1226 = vdwg.mxu0
    %1227 = vrot.lane.b32.xlu0 %v456, 120
    %v1228 = vpop.permute.xlu0 %1227
    %1229 = vrot.lane.b32.xlu0 %v457, 120
    %v1230 = vpop.permute.xlu0 %1229
    %1231 = vrot.lane.b32.xlu0 %v458, 120
    %v1232 = vpop.permute.xlu0 %1231
    %1233 = vrot.lane.b32.xlu0 %v552, 120
    %v1234 = vpop.permute.xlu0 %1233
    %1235 = vrot.lane.b32.xlu0 %v557, 120
    %v1236 = vpop.permute.xlu0 %1235
    %1237 = vrot.lane.b32.xlu0 %v562, 120
    %v1238 = vpop.permute.xlu0 %1237
    %v1239 = vsel %vm675, %v1228, 0
    %v1241 = vsel %vm675, %v1230, 0
    %v1243 = vsel %vm675, %v1232, 0
    %v1245 = vsel %vm675, %v1234, 0
    %v1247 = vsel %vm675, %v1236, 0
    %v1249 = vsel %vm675, %v1238, 0
    %1251 = vmatprep.subr.mxu0 0.0
    %1252 = vmatpush1.xpose.msra.mxu0 %v1245
    %1253 = vmatprep.subr.mxu0 0.0
    %1254 = vmatpush1.xpose.msra.mxu0 %v1247
    %1255 = vmatprep.subr.mxu0 0.0
    %1256 = vmatpush1.xpose.msra.mxu0 %v1249
    %1257 = vmatprep.subr.mxu0 0.0
    %1258 = vmatpush1.xpose.msra.mxu0 0.0
    %1259 = vmatprep.subr.mxu0 0.0
    %1260 = vmatpush1.xpose.msra.mxu0 0.0
    %1261 = vmatprep.subr.mxu0 0.0
    %1262 = vmatpush1.xpose.msra.mxu0 0.0
    %1263 = vmatprep.subr.mxu0 0.0
    %1264 = vmatpush1.xpose.msra.mxu0 0.0
    %1265 = vmatprep.subr.mxu0 0.0
    %1266 = vmatpush1.xpose.msra.mxu0 0.0
    %1267 = vmatprep.subr.mxu0 0.0
    %1268 = vmatpush1.xpose.msra.mxu0 0.0
    %1269 = vmatprep.subr.mxu0 0.0
    %1270 = vmatpush1.xpose.msra.mxu0 0.0
    %1271 = vmatprep.subr.mxu0 0.0
    %1272 = vmatpush1.xpose.msra.mxu0 0.0
    %1273 = vmatprep.subr.mxu0 0.0
    %1274 = vmatpush1.xpose.msra.mxu0 0.0
    %1275 = vmatprep.subr.mxu0 0.0
    %1276 = vmatpush1.xpose.msra.mxu0 0.0
    %1277 = vmatprep.subr.mxu0 0.0
    %1278 = vmatpush1.xpose.msra.mxu0 0.0
    %1279 = vmatprep.subr.mxu0 0.0
    %1280 = vmatpush1.xpose.msra.mxu0 0.0
    %1281 = vmatprep.subr.mxu0 0.0
    %1282 = vmatpush1.xpose.msra.mxu0 0.0
    %1283 = vmatprep.subr.mxu0 0.0
    %1284 = vmatpush1.xpose.msra.mxu0 0.0
    %1285 = vmatprep.subr.mxu0 0.0
    %1286 = vmatpush1.xpose.msra.mxu0 0.0
    %1287 = vmatprep.subr.mxu0 0.0
    %1288 = vmatpush1.xpose.msra.mxu0 0.0
    %1289 = vmatprep.subr.mxu0 0.0
    %1290 = vmatpush1.xpose.msra.mxu0 0.0
    %1291 = vmatprep.subr.mxu0 0.0
    %1292 = vmatpush1.xpose.msra.mxu0 0.0
    %1293 = vmatprep.subr.mxu0 0.0
    %1294 = vmatpush1.xpose.msra.mxu0 0.0
    %1295 = vmatprep.subr.mxu0 0.0
    %1296 = vmatpush1.xpose.msra.mxu0 0.0
    %1297 = vmatprep.subr.mxu0 0.0
    %1298 = vmatpush1.xpose.msra.mxu0 0.0
    %1299 = vmatprep.subr.mxu0 0.0
    %1300 = vmatpush1.xpose.msra.mxu0 0.0
    %1301 = vmatprep.subr.mxu0 0.0
    %1302 = vmatpush1.xpose.msra.mxu0 0.0
    %1303 = vmatprep.subr.mxu0 0.0
    %1304 = vmatpush1.xpose.msra.mxu0 0.0
    %1305 = vmatprep.subr.mxu0 0.0
    %1306 = vmatpush1.xpose.msra.mxu0 0.0
    %1307 = vmatprep.subr.mxu0 0.0
    %1308 = vmatpush1.xpose.msra.mxu0 0.0
    %1309 = vmatprep.subr.mxu0 0.0
    %1310 = vmatpush1.xpose.msra.mxu0 0.0
    %1311 = vmatprep.subr.mxu0 0.0
    %1312 = vmatpush1.xpose.msra.mxu0 0.0
    %1313 = vmatprep.subr.mxu0 0.0
    %1314 = vmatpush1.xpose.msra.mxu0 0.0
    %1315 = vmatprep.mubr.f32.mxu0 0.0
    %1316 = vmatmul.mubr.f32.gmra.mrb[0].mxu0 %v1239
    %v1317 = vpop.f32.mrb[0].mxu0
    %v1318 = vadd.f32 0.0, %v1317
    %v1319 = vpop.f32.mrb[0].mxu0
    %1320 = vmatprep.mubr.f32.mxu0 0.0
    %1321 = vmatmul.mubr.f32.gmra.mrb[0].mxu0 %v1241
    %v1322 = vpop.f32.mrb[0].mxu0
    %v1323 = vadd.f32 0.0, %v1322
    %v1324 = vpop.f32.mrb[0].mxu0
    %1325 = vmatprep.mubr.f32.mxu0 0.0
    %1326 = vmatmul.mubr.f32.gmra.mrb[0].mxu0 %v1243
    %v1327 = vpop.f32.mrb[0].mxu0
    %v1328 = vadd.f32 0.0, %v1327
    %v1329 = vpop.f32.mrb[0].mxu0
    %1330 = vdwg.mxu0
    %v1331 = vsel %vm223, %v1214, -1e+30
    %v1332 = vsel %vm223, %v1219, -1e+30
    %v1333 = vsel %vm223, %v1224, -1e+30
    %v1334 = vsel %vm223, %v1318, -1e+30
    %v1335 = vsel %vm223, %v1323, -1e+30
    %v1336 = vsel %vm223, %v1328, -1e+30
    %v1337 = vsel %vm878, %v1331, -inf
    %1338 = vmax.xlane.f32.xlu0 %v1337
    %v1339 = vpop.xlane.xlu0 %1338
    %v1340 = vsel %vm878, %v1332, -inf
    %1341 = vmax.xlane.f32.xlu0 %v1340
    %v1342 = vpop.xlane.xlu0 %1341
    %v1343 = vsel %vm878, %v1333, -inf
    %1344 = vmax.xlane.f32.xlu0 %v1343
    %v1345 = vpop.xlane.xlu0 %1344
    %v1346 = vsel %vm878, %v1334, -inf
    %1347 = vmax.xlane.f32.xlu0 %v1346
    %v1348 = vpop.xlane.xlu0 %1347
    %v1349 = vsel %vm878, %v1335, -inf
    %1350 = vmax.xlane.f32.xlu0 %v1349
    %v1351 = vpop.xlane.xlu0 %1350
    %v1352 = vsel %vm878, %v1336, -inf
    %1353 = vmax.xlane.f32.xlu0 %v1352
    %v1354 = vpop.xlane.xlu0 %1353
    %v1355 = vsub.f32 %v1331, %v1339
    %v1356 = vsub.f32 %v1332, %v1342
    %v1357 = vsub.f32 %v1333, %v1345
    %v1358 = vsub.f32 %v1334, %v1348
    %v1359 = vsub.f32 %v1335, %v1351
    %v1360 = vsub.f32 %v1336, %v1354
    %v1361 = vmul.f32 %v1355, 1.442695
    %v1362 = vpow.pop %v1361
    %v1363 = vmul.f32 %v1356, 1.442695
    %v1364 = vpow.pop %v1363
    %v1365 = vmul.f32 %v1357, 1.442695
    %v1366 = vpow.pop %v1365
    %v1367 = vmul.f32 %v1358, 1.442695
    %v1368 = vpow.pop %v1367
    %v1369 = vmul.f32 %v1359, 1.442695
    %v1370 = vpow.pop %v1369
    %v1371 = vmul.f32 %v1360, 1.442695
    %v1372 = vpow.pop %v1371
    %v1373 = vsel %vm878, %v1362, 0.0
    %1374 = vadd.xlane.f32.xlu0 %v1373
    %v1375 = vpop.xlane.xlu0 %1374
    %v1376 = vsel %vm878, %v1364, 0.0
    %1377 = vadd.xlane.f32.xlu0 %v1376
    %v1378 = vpop.xlane.xlu0 %1377
    %v1379 = vsel %vm878, %v1366, 0.0
    %1380 = vadd.xlane.f32.xlu0 %v1379
    %v1381 = vpop.xlane.xlu0 %1380
    %v1382 = vsel %vm878, %v1368, 0.0
    %1383 = vadd.xlane.f32.xlu0 %v1382
    %v1384 = vpop.xlane.xlu0 %1383
    %v1385 = vsel %vm878, %v1370, 0.0
    %1386 = vadd.xlane.f32.xlu0 %v1385
    %v1387 = vpop.xlane.xlu0 %1386
    %v1388 = vsel %vm878, %v1372, 0.0
    %1389 = vadd.xlane.f32.xlu0 %v1388
    %v1390 = vpop.xlane.xlu0 %1389
    %v1391 = vrcp.pop %v1375
    %v1392 = vrcp.pop %v1378
    %v1393 = vrcp.pop %v1381
    %v1394 = vrcp.pop %v1384
    %v1395 = vrcp.pop %v1387
    %v1396 = vrcp.pop %v1390
    %v1397 = vmul.f32 %v1362, %v1391
    %v1398 = vmul.f32 %v1364, %v1392
    %v1399 = vmul.f32 %v1366, %v1393
    %v1400 = vmul.f32 %v1368, %v1394
    %v1401 = vmul.f32 %v1370, %v1395
    %v1402 = vmul.f32 %v1372, %v1396
    %1406 = vrot.lane.b32.xlu0 %v643, 120
    %v1407 = vpop.permute.xlu0 %1406
    %1408 = vrot.lane.b32.xlu0 %v648, 120
    %v1409 = vpop.permute.xlu0 %1408
    %1410 = vrot.lane.b32.xlu0 %v653, 120
    %v1411 = vpop.permute.xlu0 %1410
    %v1416 = vsel %vm878, %v1397, 0
    %v1419 = vsel %vm878, %v1398, 0
    %v1422 = vsel %vm878, %v1399, 0
    %1424 = vmatprep.subr.mxu0 0.0
    %1425 = vmatpush1.msra.mxu0 %v1407
    %1426 = vmatprep.subr.mxu0 0.0
    %1427 = vmatpush1.msra.mxu0 %v1409
    %1428 = vmatprep.subr.mxu0 0.0
    %1429 = vmatpush1.msra.mxu0 %v1411
    %1430 = vmatprep.subr.mxu0 0.0
    %1431 = vmatpush1.msra.mxu0 0.0
    %1432 = vmatprep.subr.mxu0 0.0
    %1433 = vmatpush1.msra.mxu0 0.0
    %1434 = vmatprep.subr.mxu0 0.0
    %1435 = vmatpush1.msra.mxu0 0.0
    %1436 = vmatprep.subr.mxu0 0.0
    %1437 = vmatpush1.msra.mxu0 0.0
    %1438 = vmatprep.subr.mxu0 0.0
    %1439 = vmatpush1.msra.mxu0 0.0
    %1440 = vmatprep.subr.mxu0 0.0
    %1441 = vmatpush1.msra.mxu0 0.0
    %1442 = vmatprep.subr.mxu0 0.0
    %1443 = vmatpush1.msra.mxu0 0.0
    %1444 = vmatprep.subr.mxu0 0.0
    %1445 = vmatpush1.msra.mxu0 0.0
    %1446 = vmatprep.subr.mxu0 0.0
    %1447 = vmatpush1.msra.mxu0 0.0
    %1448 = vmatprep.subr.mxu0 0.0
    %1449 = vmatpush1.msra.mxu0 0.0
    %1450 = vmatprep.subr.mxu0 0.0
    %1451 = vmatpush1.msra.mxu0 0.0
    %1452 = vmatprep.subr.mxu0 0.0
    %1453 = vmatpush1.msra.mxu0 0.0
    %1454 = vmatprep.subr.mxu0 0.0
    %1455 = vmatpush1.msra.mxu0 0.0
    %1456 = vmatprep.subr.mxu0 0.0
    %1457 = vmatpush1.msra.mxu0 0.0
    %1458 = vmatprep.subr.mxu0 0.0
    %1459 = vmatpush1.msra.mxu0 0.0
    %1460 = vmatprep.subr.mxu0 0.0
    %1461 = vmatpush1.msra.mxu0 0.0
    %1462 = vmatprep.subr.mxu0 0.0
    %1463 = vmatpush1.msra.mxu0 0.0
    %1464 = vmatprep.subr.mxu0 0.0
    %1465 = vmatpush1.msra.mxu0 0.0
    %1466 = vmatprep.subr.mxu0 0.0
    %1467 = vmatpush1.msra.mxu0 0.0
    %1468 = vmatprep.subr.mxu0 0.0
    %1469 = vmatpush1.msra.mxu0 0.0
    %1470 = vmatprep.subr.mxu0 0.0
    %1471 = vmatpush1.msra.mxu0 0.0
    %1472 = vmatprep.subr.mxu0 0.0
    %1473 = vmatpush1.msra.mxu0 0.0
    %1474 = vmatprep.subr.mxu0 0.0
    %1475 = vmatpush1.msra.mxu0 0.0
    %1476 = vmatprep.subr.mxu0 0.0
    %1477 = vmatpush1.msra.mxu0 0.0
    %1478 = vmatprep.subr.mxu0 0.0
    %1479 = vmatpush1.msra.mxu0 0.0
    %1480 = vmatprep.subr.mxu0 0.0
    %1481 = vmatpush1.msra.mxu0 0.0
    %1482 = vmatprep.subr.mxu0 0.0
    %1483 = vmatpush1.msra.mxu0 0.0
    %1484 = vmatprep.subr.mxu0 0.0
    %1485 = vmatpush1.msra.mxu0 0.0
    %1486 = vmatprep.subr.mxu0 0.0
    %1487 = vmatpush1.msra.mxu0 0.0
    %1488 = vmatprep.mubr.f32.mxu0 0.0
    %1489 = vmatmul.mubr.f32.gmra.mrb[0].mxu0 %v1416
    %v1490 = vpop.f32.mrb[0].mxu0
    %v1491 = vadd.f32 0.0, %v1490
    %v1492 = vpop.f32.mrb[0].mxu0
    %1493 = vmatprep.mubr.f32.mxu0 0.0
    %1494 = vmatmul.mubr.f32.gmra.mrb[0].mxu0 %v1419
    %v1495 = vpop.f32.mrb[0].mxu0
    %v1496 = vadd.f32 0.0, %v1495
    %v1497 = vpop.f32.mrb[0].mxu0
    %1498 = vmatprep.mubr.f32.mxu0 0.0
    %1499 = vmatmul.mubr.f32.gmra.mrb[0].mxu0 %v1422
    %v1500 = vpop.f32.mrb[0].mxu0
    %v1501 = vadd.f32 0.0, %v1500
    %v1502 = vpop.f32.mrb[0].mxu0
    %1503 = vdwg.mxu0
    %1507 = vrot.lane.b32.xlu0 %v658, 120
    %v1508 = vpop.permute.xlu0 %1507
    %1509 = vrot.lane.b32.xlu0 %v663, 120
    %v1510 = vpop.permute.xlu0 %1509
    %1511 = vrot.lane.b32.xlu0 %v668, 120
    %v1512 = vpop.permute.xlu0 %1511
    %v1517 = vsel %vm878, %v1400, 0
    %v1520 = vsel %vm878, %v1401, 0
    %v1523 = vsel %vm878, %v1402, 0
    %1525 = vmatprep.subr.mxu0 0.0
    %1526 = vmatpush1.msra.mxu0 %v1508
    %1527 = vmatprep.subr.mxu0 0.0
    %1528 = vmatpush1.msra.mxu0 %v1510
    %1529 = vmatprep.subr.mxu0 0.0
    %1530 = vmatpush1.msra.mxu0 %v1512
    %1531 = vmatprep.subr.mxu0 0.0
    %1532 = vmatpush1.msra.mxu0 0.0
    %1533 = vmatprep.subr.mxu0 0.0
    %1534 = vmatpush1.msra.mxu0 0.0
    %1535 = vmatprep.subr.mxu0 0.0
    %1536 = vmatpush1.msra.mxu0 0.0
    %1537 = vmatprep.subr.mxu0 0.0
    %1538 = vmatpush1.msra.mxu0 0.0
    %1539 = vmatprep.subr.mxu0 0.0
    %1540 = vmatpush1.msra.mxu0 0.0
    %1541 = vmatprep.subr.mxu0 0.0
    %1542 = vmatpush1.msra.mxu0 0.0
    %1543 = vmatprep.subr.mxu0 0.0
    %1544 = vmatpush1.msra.mxu0 0.0
    %1545 = vmatprep.subr.mxu0 0.0
    %1546 = vmatpush1.msra.mxu0 0.0
    %1547 = vmatprep.subr.mxu0 0.0
    %1548 = vmatpush1.msra.mxu0 0.0
    %1549 = vmatprep.subr.mxu0 0.0
    %1550 = vmatpush1.msra.mxu0 0.0
    %1551 = vmatprep.subr.mxu0 0.0
    %1552 = vmatpush1.msra.mxu0 0.0
    %1553 = vmatprep.subr.mxu0 0.0
    %1554 = vmatpush1.msra.mxu0 0.0
    %1555 = vmatprep.subr.mxu0 0.0
    %1556 = vmatpush1.msra.mxu0 0.0
    %1557 = vmatprep.subr.mxu0 0.0
    %1558 = vmatpush1.msra.mxu0 0.0
    %1559 = vmatprep.subr.mxu0 0.0
    %1560 = vmatpush1.msra.mxu0 0.0
    %1561 = vmatprep.subr.mxu0 0.0
    %1562 = vmatpush1.msra.mxu0 0.0
    %1563 = vmatprep.subr.mxu0 0.0
    %1564 = vmatpush1.msra.mxu0 0.0
    %1565 = vmatprep.subr.mxu0 0.0
    %1566 = vmatpush1.msra.mxu0 0.0
    %1567 = vmatprep.subr.mxu0 0.0
    %1568 = vmatpush1.msra.mxu0 0.0
    %1569 = vmatprep.subr.mxu0 0.0
    %1570 = vmatpush1.msra.mxu0 0.0
    %1571 = vmatprep.subr.mxu0 0.0
    %1572 = vmatpush1.msra.mxu0 0.0
    %1573 = vmatprep.subr.mxu0 0.0
    %1574 = vmatpush1.msra.mxu0 0.0
    %1575 = vmatprep.subr.mxu0 0.0
    %1576 = vmatpush1.msra.mxu0 0.0
    %1577 = vmatprep.subr.mxu0 0.0
    %1578 = vmatpush1.msra.mxu0 0.0
    %1579 = vmatprep.subr.mxu0 0.0
    %1580 = vmatpush1.msra.mxu0 0.0
    %1581 = vmatprep.subr.mxu0 0.0
    %1582 = vmatpush1.msra.mxu0 0.0
    %1583 = vmatprep.subr.mxu0 0.0
    %1584 = vmatpush1.msra.mxu0 0.0
    %1585 = vmatprep.subr.mxu0 0.0
    %1586 = vmatpush1.msra.mxu0 0.0
    %1587 = vmatprep.subr.mxu0 0.0
    %1588 = vmatpush1.msra.mxu0 0.0
    %1589 = vmatprep.mubr.f32.mxu0 0.0
    %1590 = vmatmul.mubr.f32.gmra.mrb[0].mxu0 %v1517
    %v1591 = vpop.f32.mrb[0].mxu0
    %v1592 = vadd.f32 0.0, %v1591
    %v1593 = vpop.f32.mrb[0].mxu0
    %1594 = vmatprep.mubr.f32.mxu0 0.0
    %1595 = vmatmul.mubr.f32.gmra.mrb[0].mxu0 %v1520
    %v1596 = vpop.f32.mrb[0].mxu0
    %v1597 = vadd.f32 0.0, %v1596
    %v1598 = vpop.f32.mrb[0].mxu0
    %1599 = vmatprep.mubr.f32.mxu0 0.0
    %1600 = vmatmul.mubr.f32.gmra.mrb[0].mxu0 %v1523
    %v1601 = vpop.f32.mrb[0].mxu0
    %v1602 = vadd.f32 0.0, %v1601
    %v1603 = vpop.f32.mrb[0].mxu0
    %1604 = vdwg.mxu0
    %v1606 = vsel %vm675, %v1491, 0
    %v1609 = vsel %vm675, %v1496, 0
    %v1612 = vsel %vm675, %v1501, 0
    %v1615 = vsel %vm675, %v1592, 0
    %v1618 = vsel %vm675, %v1597, 0
    %v1621 = vsel %vm675, %v1602, 0
    %1623 = vmatprep.subr.mxu0 0.0
    %1624 = vmatpush1.msra.mxu0 %v672
    %1625 = vmatprep.subr.mxu0 0.0
    %1626 = vmatpush1.msra.mxu0 0.0
    %1627 = vmatprep.subr.mxu0 0.0
    %1628 = vmatpush1.msra.mxu0 0.0
    %1629 = vmatprep.subr.mxu0 0.0
    %1630 = vmatpush1.msra.mxu0 0.0
    %1631 = vmatprep.subr.mxu0 0.0
    %1632 = vmatpush1.msra.mxu0 0.0
    %1633 = vmatprep.subr.mxu0 0.0
    %1634 = vmatpush1.msra.mxu0 0.0
    %1635 = vmatprep.subr.mxu0 0.0
    %1636 = vmatpush1.msra.mxu0 0.0
    %1637 = vmatprep.subr.mxu0 0.0
    %1638 = vmatpush1.msra.mxu0 0.0
    %1639 = vmatprep.subr.mxu0 0.0
    %1640 = vmatpush1.msra.mxu0 0.0
    %1641 = vmatprep.subr.mxu0 0.0
    %1642 = vmatpush1.msra.mxu0 0.0
    %1643 = vmatprep.subr.mxu0 0.0
    %1644 = vmatpush1.msra.mxu0 0.0
    %1645 = vmatprep.subr.mxu0 0.0
    %1646 = vmatpush1.msra.mxu0 0.0
    %1647 = vmatprep.subr.mxu0 0.0
    %1648 = vmatpush1.msra.mxu0 0.0
    %1649 = vmatprep.subr.mxu0 0.0
    %1650 = vmatpush1.msra.mxu0 0.0
    %1651 = vmatprep.subr.mxu0 0.0
    %1652 = vmatpush1.msra.mxu0 0.0
    %1653 = vmatprep.subr.mxu0 0.0
    %1654 = vmatpush1.msra.mxu0 0.0
    %1655 = vmatprep.subr.mxu0 0.0
    %1656 = vmatpush1.msra.mxu0 0.0
    %1657 = vmatprep.subr.mxu0 0.0
    %1658 = vmatpush1.msra.mxu0 0.0
    %1659 = vmatprep.subr.mxu0 0.0
    %1660 = vmatpush1.msra.mxu0 0.0
    %1661 = vmatprep.subr.mxu0 0.0
    %1662 = vmatpush1.msra.mxu0 0.0
    %1663 = vmatprep.subr.mxu0 0.0
    %1664 = vmatpush1.msra.mxu0 0.0
    %1665 = vmatprep.subr.mxu0 0.0
    %1666 = vmatpush1.msra.mxu0 0.0
    %1667 = vmatprep.subr.mxu0 0.0
    %1668 = vmatpush1.msra.mxu0 0.0
    %1669 = vmatprep.subr.mxu0 0.0
    %1670 = vmatpush1.msra.mxu0 0.0
    %1671 = vmatprep.subr.mxu0 0.0
    %1672 = vmatpush1.msra.mxu0 0.0
    %1673 = vmatprep.subr.mxu0 0.0
    %1674 = vmatpush1.msra.mxu0 0.0
    %1675 = vmatprep.subr.mxu0 0.0
    %1676 = vmatpush1.msra.mxu0 0.0
    %1677 = vmatprep.subr.mxu0 0.0
    %1678 = vmatpush1.msra.mxu0 0.0
    %1679 = vmatprep.subr.mxu0 0.0
    %1680 = vmatpush1.msra.mxu0 0.0
    %1681 = vmatprep.subr.mxu0 0.0
    %1682 = vmatpush1.msra.mxu0 0.0
    %1683 = vmatprep.subr.mxu0 0.0
    %1684 = vmatpush1.msra.mxu0 0.0
    %1685 = vmatprep.subr.mxu0 0.0
    %1686 = vmatpush1.msra.mxu0 0.0
    %1687 = vmatprep.mubr.f32.mxu0 0.0
    %1688 = vmatmul.mubr.f32.gmra.mrb[0].mxu0 %v1606
    %v1689 = vpop.f32.mrb[0].mxu0
    %v1690 = vadd.f32 0.0, %v1689
    %v1691 = vpop.f32.mrb[0].mxu0
    %1692 = vmatprep.mubr.f32.mxu0 0.0
    %1693 = vmatmul.mubr.f32.gmra.mrb[0].mxu0 %v1609
    %v1694 = vpop.f32.mrb[0].mxu0
    %v1695 = vadd.f32 0.0, %v1694
    %v1696 = vpop.f32.mrb[0].mxu0
    %1697 = vmatprep.mubr.f32.mxu0 0.0
    %1698 = vmatmul.mubr.f32.gmra.mrb[0].mxu0 %v1612
    %v1699 = vpop.f32.mrb[0].mxu0
    %v1700 = vadd.f32 0.0, %v1699
    %v1701 = vpop.f32.mrb[0].mxu0
    %1702 = vmatprep.mubr.f32.mxu0 0.0
    %1703 = vmatmul.mubr.f32.gmra.mrb[0].mxu0 %v1615
    %v1704 = vpop.f32.mrb[0].mxu0
    %v1705 = vadd.f32 0.0, %v1704
    %v1706 = vpop.f32.mrb[0].mxu0
    %1707 = vmatprep.mubr.f32.mxu0 0.0
    %1708 = vmatmul.mubr.f32.gmra.mrb[0].mxu0 %v1618
    %v1709 = vpop.f32.mrb[0].mxu0
    %v1710 = vadd.f32 0.0, %v1709
    %v1711 = vpop.f32.mrb[0].mxu0
    %1712 = vmatprep.mubr.f32.mxu0 0.0
    %1713 = vmatmul.mubr.f32.gmra.mrb[0].mxu0 %v1621
    %v1714 = vpop.f32.mrb[0].mxu0
    %v1715 = vadd.f32 0.0, %v1714
    %v1716 = vpop.f32.mrb[0].mxu0
    %1717 = vdwg.mxu0
    %v1719 = vsel %vm675, %v1021, 0
    %v1722 = vsel %vm675, %v1026, 0
    %v1725 = vsel %vm675, %v1031, 0
    %v1728 = vsel %vm675, %v1110, 0
    %v1731 = vsel %vm675, %v1115, 0
    %v1734 = vsel %vm675, %v1120, 0
    %1736 = vmatprep.subr.mxu0 0.0
    %1737 = vmatpush1.msra.mxu0 %v671
    %1738 = vmatprep.subr.mxu0 0.0
    %1739 = vmatpush1.msra.mxu0 0.0
    %1740 = vmatprep.subr.mxu0 0.0
    %1741 = vmatpush1.msra.mxu0 0.0
    %1742 = vmatprep.subr.mxu0 0.0
    %1743 = vmatpush1.msra.mxu0 0.0
    %1744 = vmatprep.subr.mxu0 0.0
    %1745 = vmatpush1.msra.mxu0 0.0
    %1746 = vmatprep.subr.mxu0 0.0
    %1747 = vmatpush1.msra.mxu0 0.0
    %1748 = vmatprep.subr.mxu0 0.0
    %1749 = vmatpush1.msra.mxu0 0.0
    %1750 = vmatprep.subr.mxu0 0.0
    %1751 = vmatpush1.msra.mxu0 0.0
    %1752 = vmatprep.subr.mxu0 0.0
    %1753 = vmatpush1.msra.mxu0 0.0
    %1754 = vmatprep.subr.mxu0 0.0
    %1755 = vmatpush1.msra.mxu0 0.0
    %1756 = vmatprep.subr.mxu0 0.0
    %1757 = vmatpush1.msra.mxu0 0.0
    %1758 = vmatprep.subr.mxu0 0.0
    %1759 = vmatpush1.msra.mxu0 0.0
    %1760 = vmatprep.subr.mxu0 0.0
    %1761 = vmatpush1.msra.mxu0 0.0
    %1762 = vmatprep.subr.mxu0 0.0
    %1763 = vmatpush1.msra.mxu0 0.0
    %1764 = vmatprep.subr.mxu0 0.0
    %1765 = vmatpush1.msra.mxu0 0.0
    %1766 = vmatprep.subr.mxu0 0.0
    %1767 = vmatpush1.msra.mxu0 0.0
    %1768 = vmatprep.subr.mxu0 0.0
    %1769 = vmatpush1.msra.mxu0 0.0
    %1770 = vmatprep.subr.mxu0 0.0
    %1771 = vmatpush1.msra.mxu0 0.0
    %1772 = vmatprep.subr.mxu0 0.0
    %1773 = vmatpush1.msra.mxu0 0.0
    %1774 = vmatprep.subr.mxu0 0.0
    %1775 = vmatpush1.msra.mxu0 0.0
    %1776 = vmatprep.subr.mxu0 0.0
    %1777 = vmatpush1.msra.mxu0 0.0
    %1778 = vmatprep.subr.mxu0 0.0
    %1779 = vmatpush1.msra.mxu0 0.0
    %1780 = vmatprep.subr.mxu0 0.0
    %1781 = vmatpush1.msra.mxu0 0.0
    %1782 = vmatprep.subr.mxu0 0.0
    %1783 = vmatpush1.msra.mxu0 0.0
    %1784 = vmatprep.subr.mxu0 0.0
    %1785 = vmatpush1.msra.mxu0 0.0
    %1786 = vmatprep.subr.mxu0 0.0
    %1787 = vmatpush1.msra.mxu0 0.0
    %1788 = vmatprep.subr.mxu0 0.0
    %1789 = vmatpush1.msra.mxu0 0.0
    %1790 = vmatprep.subr.mxu0 0.0
    %1791 = vmatpush1.msra.mxu0 0.0
    %1792 = vmatprep.subr.mxu0 0.0
    %1793 = vmatpush1.msra.mxu0 0.0
    %1794 = vmatprep.subr.mxu0 0.0
    %1795 = vmatpush1.msra.mxu0 0.0
    %1796 = vmatprep.subr.mxu0 0.0
    %1797 = vmatpush1.msra.mxu0 0.0
    %1798 = vmatprep.subr.mxu0 0.0
    %1799 = vmatpush1.msra.mxu0 0.0
    %1800 = vmatprep.mubr.f32.mxu0 0.0
    %1801 = vmatmul.mubr.f32.gmra.mrb[0].mxu0 %v1719
    %v1802 = vpop.f32.mrb[0].mxu0
    %v1803 = vadd.f32 %v1690, %v1802
    %v1804 = vpop.f32.mrb[0].mxu0
    %1805 = vmatprep.mubr.f32.mxu0 0.0
    %1806 = vmatmul.mubr.f32.gmra.mrb[0].mxu0 %v1722
    %v1807 = vpop.f32.mrb[0].mxu0
    %v1808 = vadd.f32 %v1695, %v1807
    %v1809 = vpop.f32.mrb[0].mxu0
    %1810 = vmatprep.mubr.f32.mxu0 0.0
    %1811 = vmatmul.mubr.f32.gmra.mrb[0].mxu0 %v1725
    %v1812 = vpop.f32.mrb[0].mxu0
    %v1813 = vadd.f32 %v1700, %v1812
    %v1814 = vpop.f32.mrb[0].mxu0
    %1815 = vmatprep.mubr.f32.mxu0 0.0
    %1816 = vmatmul.mubr.f32.gmra.mrb[0].mxu0 %v1728
    %v1817 = vpop.f32.mrb[0].mxu0
    %v1818 = vadd.f32 %v1705, %v1817
    %v1819 = vpop.f32.mrb[0].mxu0
    %1820 = vmatprep.mubr.f32.mxu0 0.0
    %1821 = vmatmul.mubr.f32.gmra.mrb[0].mxu0 %v1731
    %v1822 = vpop.f32.mrb[0].mxu0
    %v1823 = vadd.f32 %v1710, %v1822
    %v1824 = vpop.f32.mrb[0].mxu0
    %1825 = vmatprep.mubr.f32.mxu0 0.0
    %1826 = vmatmul.mubr.f32.gmra.mrb[0].mxu0 %v1734
    %v1827 = vpop.f32.mrb[0].mxu0
    %v1828 = vadd.f32 %v1715, %v1827
    %v1829 = vpop.f32.mrb[0].mxu0
    %1830 = vdwg.mxu0
    %1831 = vrot.lane.b32.xlu0 %v453, 112
    %v1832 = vpop.permute.xlu0 %1831
    %1833 = vrot.lane.b32.xlu0 %v454, 112
    %v1834 = vpop.permute.xlu0 %1833
    %1835 = vrot.lane.b32.xlu0 %v455, 112
    %v1836 = vpop.permute.xlu0 %1835
    %1837 = vrot.lane.b32.xlu0 %v537, 112
    %v1838 = vpop.permute.xlu0 %1837
    %1839 = vrot.lane.b32.xlu0 %v542, 112
    %v1840 = vpop.permute.xlu0 %1839
    %1841 = vrot.lane.b32.xlu0 %v547, 112
    %v1842 = vpop.permute.xlu0 %1841
    %v1843 = vsel %vm675, %v1832, 0
    %v1845 = vsel %vm675, %v1834, 0
    %v1847 = vsel %vm675, %v1836, 0
    %v1849 = vsel %vm675, %v1838, 0
    %v1851 = vsel %vm675, %v1840, 0
    %v1853 = vsel %vm675, %v1842, 0
    %1855 = vmatprep.subr.mxu0 0.0
    %1856 = vmatpush1.xpose.msra.mxu0 %v1849
    %1857 = vmatprep.subr.mxu0 0.0
    %1858 = vmatpush1.xpose.msra.mxu0 %v1851
    %1859 = vmatprep.subr.mxu0 0.0
    %1860 = vmatpush1.xpose.msra.mxu0 %v1853
    %1861 = vmatprep.subr.mxu0 0.0
    %1862 = vmatpush1.xpose.msra.mxu0 0.0
    %1863 = vmatprep.subr.mxu0 0.0
    %1864 = vmatpush1.xpose.msra.mxu0 0.0
    %1865 = vmatprep.subr.mxu0 0.0
    %1866 = vmatpush1.xpose.msra.mxu0 0.0
    %1867 = vmatprep.subr.mxu0 0.0
    %1868 = vmatpush1.xpose.msra.mxu0 0.0
    %1869 = vmatprep.subr.mxu0 0.0
    %1870 = vmatpush1.xpose.msra.mxu0 0.0
    %1871 = vmatprep.subr.mxu0 0.0
    %1872 = vmatpush1.xpose.msra.mxu0 0.0
    %1873 = vmatprep.subr.mxu0 0.0
    %1874 = vmatpush1.xpose.msra.mxu0 0.0
    %1875 = vmatprep.subr.mxu0 0.0
    %1876 = vmatpush1.xpose.msra.mxu0 0.0
    %1877 = vmatprep.subr.mxu0 0.0
    %1878 = vmatpush1.xpose.msra.mxu0 0.0
    %1879 = vmatprep.subr.mxu0 0.0
    %1880 = vmatpush1.xpose.msra.mxu0 0.0
    %1881 = vmatprep.subr.mxu0 0.0
    %1882 = vmatpush1.xpose.msra.mxu0 0.0
    %1883 = vmatprep.subr.mxu0 0.0
    %1884 = vmatpush1.xpose.msra.mxu0 0.0
    %1885 = vmatprep.subr.mxu0 0.0
    %1886 = vmatpush1.xpose.msra.mxu0 0.0
    %1887 = vmatprep.subr.mxu0 0.0
    %1888 = vmatpush1.xpose.msra.mxu0 0.0
    %1889 = vmatprep.subr.mxu0 0.0
    %1890 = vmatpush1.xpose.msra.mxu0 0.0
    %1891 = vmatprep.subr.mxu0 0.0
    %1892 = vmatpush1.xpose.msra.mxu0 0.0
    %1893 = vmatprep.subr.mxu0 0.0
    %1894 = vmatpush1.xpose.msra.mxu0 0.0
    %1895 = vmatprep.subr.mxu0 0.0
    %1896 = vmatpush1.xpose.msra.mxu0 0.0
    %1897 = vmatprep.subr.mxu0 0.0
    %1898 = vmatpush1.xpose.msra.mxu0 0.0
    %1899 = vmatprep.subr.mxu0 0.0
    %1900 = vmatpush1.xpose.msra.mxu0 0.0
    %1901 = vmatprep.subr.mxu0 0.0
    %1902 = vmatpush1.xpose.msra.mxu0 0.0
    %1903 = vmatprep.subr.mxu0 0.0
    %1904 = vmatpush1.xpose.msra.mxu0 0.0
    %1905 = vmatprep.subr.mxu0 0.0
    %1906 = vmatpush1.xpose.msra.mxu0 0.0
    %1907 = vmatprep.subr.mxu0 0.0
    %1908 = vmatpush1.xpose.msra.mxu0 0.0
    %1909 = vmatprep.subr.mxu0 0.0
    %1910 = vmatpush1.xpose.msra.mxu0 0.0
    %1911 = vmatprep.subr.mxu0 0.0
    %1912 = vmatpush1.xpose.msra.mxu0 0.0
    %1913 = vmatprep.subr.mxu0 0.0
    %1914 = vmatpush1.xpose.msra.mxu0 0.0
    %1915 = vmatprep.subr.mxu0 0.0
    %1916 = vmatpush1.xpose.msra.mxu0 0.0
    %1917 = vmatprep.subr.mxu0 0.0
    %1918 = vmatpush1.xpose.msra.mxu0 0.0
    %1919 = vmatprep.mubr.f32.mxu0 0.0
    %1920 = vmatmul.mubr.f32.gmra.mrb[0].mxu0 %v1843
    %v1921 = vpop.f32.mrb[0].mxu0
    %v1922 = vadd.f32 0.0, %v1921
    %v1923 = vpop.f32.mrb[0].mxu0
    %1924 = vmatprep.mubr.f32.mxu0 0.0
    %1925 = vmatmul.mubr.f32.gmra.mrb[0].mxu0 %v1845
    %v1926 = vpop.f32.mrb[0].mxu0
    %v1927 = vadd.f32 0.0, %v1926
    %v1928 = vpop.f32.mrb[0].mxu0
    %1929 = vmatprep.mubr.f32.mxu0 0.0
    %1930 = vmatmul.mubr.f32.gmra.mrb[0].mxu0 %v1847
    %v1931 = vpop.f32.mrb[0].mxu0
    %v1932 = vadd.f32 0.0, %v1931
    %v1933 = vpop.f32.mrb[0].mxu0
    %1934 = vdwg.mxu0
    %1935 = vrot.lane.b32.xlu0 %v456, 112
    %v1936 = vpop.permute.xlu0 %1935
    %1937 = vrot.lane.b32.xlu0 %v457, 112
    %v1938 = vpop.permute.xlu0 %1937
    %1939 = vrot.lane.b32.xlu0 %v458, 112
    %v1940 = vpop.permute.xlu0 %1939
    %1941 = vrot.lane.b32.xlu0 %v552, 112
    %v1942 = vpop.permute.xlu0 %1941
    %1943 = vrot.lane.b32.xlu0 %v557, 112
    %v1944 = vpop.permute.xlu0 %1943
    %1945 = vrot.lane.b32.xlu0 %v562, 112
    %v1946 = vpop.permute.xlu0 %1945
    %v1947 = vsel %vm675, %v1936, 0
    %v1949 = vsel %vm675, %v1938, 0
    %v1951 = vsel %vm675, %v1940, 0
    %v1953 = vsel %vm675, %v1942, 0
    %v1955 = vsel %vm675, %v1944, 0
    %v1957 = vsel %vm675, %v1946, 0
    %1959 = vmatprep.subr.mxu0 0.0
    %1960 = vmatpush1.xpose.msra.mxu0 %v1953
    %1961 = vmatprep.subr.mxu0 0.0
    %1962 = vmatpush1.xpose.msra.mxu0 %v1955
    %1963 = vmatprep.subr.mxu0 0.0
    %1964 = vmatpush1.xpose.msra.mxu0 %v1957
    %1965 = vmatprep.subr.mxu0 0.0
    %1966 = vmatpush1.xpose.msra.mxu0 0.0
    %1967 = vmatprep.subr.mxu0 0.0
    %1968 = vmatpush1.xpose.msra.mxu0 0.0
    %1969 = vmatprep.subr.mxu0 0.0
    %1970 = vmatpush1.xpose.msra.mxu0 0.0
    %1971 = vmatprep.subr.mxu0 0.0
    %1972 = vmatpush1.xpose.msra.mxu0 0.0
    %1973 = vmatprep.subr.mxu0 0.0
    %1974 = vmatpush1.xpose.msra.mxu0 0.0
    %1975 = vmatprep.subr.mxu0 0.0
    %1976 = vmatpush1.xpose.msra.mxu0 0.0
    %1977 = vmatprep.subr.mxu0 0.0
    %1978 = vmatpush1.xpose.msra.mxu0 0.0
    %1979 = vmatprep.subr.mxu0 0.0
    %1980 = vmatpush1.xpose.msra.mxu0 0.0
    %1981 = vmatprep.subr.mxu0 0.0
    %1982 = vmatpush1.xpose.msra.mxu0 0.0
    %1983 = vmatprep.subr.mxu0 0.0
    %1984 = vmatpush1.xpose.msra.mxu0 0.0
    %1985 = vmatprep.subr.mxu0 0.0
    %1986 = vmatpush1.xpose.msra.mxu0 0.0
    %1987 = vmatprep.subr.mxu0 0.0
    %1988 = vmatpush1.xpose.msra.mxu0 0.0
    %1989 = vmatprep.subr.mxu0 0.0
    %1990 = vmatpush1.xpose.msra.mxu0 0.0
    %1991 = vmatprep.subr.mxu0 0.0
    %1992 = vmatpush1.xpose.msra.mxu0 0.0
    %1993 = vmatprep.subr.mxu0 0.0
    %1994 = vmatpush1.xpose.msra.mxu0 0.0
    %1995 = vmatprep.subr.mxu0 0.0
    %1996 = vmatpush1.xpose.msra.mxu0 0.0
    %1997 = vmatprep.subr.mxu0 0.0
    %1998 = vmatpush1.xpose.msra.mxu0 0.0
    %1999 = vmatprep.subr.mxu0 0.0
    %2000 = vmatpush1.xpose.msra.mxu0 0.0
    %2001 = vmatprep.subr.mxu0 0.0
    %2002 = vmatpush1.xpose.msra.mxu0 0.0
    %2003 = vmatprep.subr.mxu0 0.0
    %2004 = vmatpush1.xpose.msra.mxu0 0.0
    %2005 = vmatprep.subr.mxu0 0.0
    %2006 = vmatpush1.xpose.msra.mxu0 0.0
    %2007 = vmatprep.subr.mxu0 0.0
    %2008 = vmatpush1.xpose.msra.mxu0 0.0
    %2009 = vmatprep.subr.mxu0 0.0
    %2010 = vmatpush1.xpose.msra.mxu0 0.0
    %2011 = vmatprep.subr.mxu0 0.0
    %2012 = vmatpush1.xpose.msra.mxu0 0.0
    %2013 = vmatprep.subr.mxu0 0.0
    %2014 = vmatpush1.xpose.msra.mxu0 0.0
    %2015 = vmatprep.subr.mxu0 0.0
    %2016 = vmatpush1.xpose.msra.mxu0 0.0
    %2017 = vmatprep.subr.mxu0 0.0
    %2018 = vmatpush1.xpose.msra.mxu0 0.0
    %2019 = vmatprep.subr.mxu0 0.0
    %2020 = vmatpush1.xpose.msra.mxu0 0.0
    %2021 = vmatprep.subr.mxu0 0.0
    %2022 = vmatpush1.xpose.msra.mxu0 0.0
    %2023 = vmatprep.mubr.f32.mxu0 0.0
    %2024 = vmatmul.mubr.f32.gmra.mrb[0].mxu0 %v1947
    %v2025 = vpop.f32.mrb[0].mxu0
    %v2026 = vadd.f32 0.0, %v2025
    %v2027 = vpop.f32.mrb[0].mxu0
    %2028 = vmatprep.mubr.f32.mxu0 0.0
    %2029 = vmatmul.mubr.f32.gmra.mrb[0].mxu0 %v1949
    %v2030 = vpop.f32.mrb[0].mxu0
    %v2031 = vadd.f32 0.0, %v2030
    %v2032 = vpop.f32.mrb[0].mxu0
    %2033 = vmatprep.mubr.f32.mxu0 0.0
    %2034 = vmatmul.mubr.f32.gmra.mrb[0].mxu0 %v1951
    %v2035 = vpop.f32.mrb[0].mxu0
    %v2036 = vadd.f32 0.0, %v2035
    %v2037 = vpop.f32.mrb[0].mxu0
    %2038 = vdwg.mxu0
    %v2039 = vsel %vm223, %v1922, -1e+30
    %v2040 = vsel %vm223, %v1927, -1e+30
    %v2041 = vsel %vm223, %v1932, -1e+30
    %v2042 = vsel %vm223, %v2026, -1e+30
    %v2043 = vsel %vm223, %v2031, -1e+30
    %v2044 = vsel %vm223, %v2036, -1e+30
    %v2045 = vsel %vm878, %v2039, -inf
    %2046 = vmax.xlane.f32.xlu0 %v2045
    %v2047 = vpop.xlane.xlu0 %2046
    %v2048 = vsel %vm878, %v2040, -inf
    %2049 = vmax.xlane.f32.xlu0 %v2048
    %v2050 = vpop.xlane.xlu0 %2049
    %v2051 = vsel %vm878, %v2041, -inf
    %2052 = vmax.xlane.f32.xlu0 %v2051
    %v2053 = vpop.xlane.xlu0 %2052
    %v2054 = vsel %vm878, %v2042, -inf
    %2055 = vmax.xlane.f32.xlu0 %v2054
    %v2056 = vpop.xlane.xlu0 %2055
    %v2057 = vsel %vm878, %v2043, -inf
    %2058 = vmax.xlane.f32.xlu0 %v2057
    %v2059 = vpop.xlane.xlu0 %2058
    %v2060 = vsel %vm878, %v2044, -inf
    %2061 = vmax.xlane.f32.xlu0 %v2060
    %v2062 = vpop.xlane.xlu0 %2061
    %v2063 = vsub.f32 %v2039, %v2047
    %v2064 = vsub.f32 %v2040, %v2050
    %v2065 = vsub.f32 %v2041, %v2053
    %v2066 = vsub.f32 %v2042, %v2056
    %v2067 = vsub.f32 %v2043, %v2059
    %v2068 = vsub.f32 %v2044, %v2062
    %v2069 = vmul.f32 %v2063, 1.442695
    %v2070 = vpow.pop %v2069
    %v2071 = vmul.f32 %v2064, 1.442695
    %v2072 = vpow.pop %v2071
    %v2073 = vmul.f32 %v2065, 1.442695
    %v2074 = vpow.pop %v2073
    %v2075 = vmul.f32 %v2066, 1.442695
    %v2076 = vpow.pop %v2075
    %v2077 = vmul.f32 %v2067, 1.442695
    %v2078 = vpow.pop %v2077
    %v2079 = vmul.f32 %v2068, 1.442695
    %v2080 = vpow.pop %v2079
    %v2081 = vsel %vm878, %v2070, 0.0
    %2082 = vadd.xlane.f32.xlu0 %v2081
    %v2083 = vpop.xlane.xlu0 %2082
    %v2084 = vsel %vm878, %v2072, 0.0
    %2085 = vadd.xlane.f32.xlu0 %v2084
    %v2086 = vpop.xlane.xlu0 %2085
    %v2087 = vsel %vm878, %v2074, 0.0
    %2088 = vadd.xlane.f32.xlu0 %v2087
    %v2089 = vpop.xlane.xlu0 %2088
    %v2090 = vsel %vm878, %v2076, 0.0
    %2091 = vadd.xlane.f32.xlu0 %v2090
    %v2092 = vpop.xlane.xlu0 %2091
    %v2093 = vsel %vm878, %v2078, 0.0
    %2094 = vadd.xlane.f32.xlu0 %v2093
    %v2095 = vpop.xlane.xlu0 %2094
    %v2096 = vsel %vm878, %v2080, 0.0
    %2097 = vadd.xlane.f32.xlu0 %v2096
    %v2098 = vpop.xlane.xlu0 %2097
    %v2099 = vrcp.pop %v2083
    %v2100 = vrcp.pop %v2086
    %v2101 = vrcp.pop %v2089
    %v2102 = vrcp.pop %v2092
    %v2103 = vrcp.pop %v2095
    %v2104 = vrcp.pop %v2098
    %v2105 = vmul.f32 %v2070, %v2099
    %v2106 = vmul.f32 %v2072, %v2100
    %v2107 = vmul.f32 %v2074, %v2101
    %v2108 = vmul.f32 %v2076, %v2102
    %v2109 = vmul.f32 %v2078, %v2103
    %v2110 = vmul.f32 %v2080, %v2104
    %2111 = vrot.lane.b32.xlu0 %v643, 112
    %v2112 = vpop.permute.xlu0 %2111
    %2113 = vrot.lane.b32.xlu0 %v648, 112
    %v2114 = vpop.permute.xlu0 %2113
    %2115 = vrot.lane.b32.xlu0 %v653, 112
    %v2116 = vpop.permute.xlu0 %2115
    %v2121 = vsel %vm878, %v2105, 0
    %v2124 = vsel %vm878, %v2106, 0
    %v2127 = vsel %vm878, %v2107, 0
    %2129 = vmatprep.subr.mxu0 0.0
    %2130 = vmatpush1.msra.mxu0 %v2112
    %2131 = vmatprep.subr.mxu0 0.0
    %2132 = vmatpush1.msra.mxu0 %v2114
    %2133 = vmatprep.subr.mxu0 0.0
    %2134 = vmatpush1.msra.mxu0 %v2116
    %2135 = vmatprep.subr.mxu0 0.0
    %2136 = vmatpush1.msra.mxu0 0.0
    %2137 = vmatprep.subr.mxu0 0.0
    %2138 = vmatpush1.msra.mxu0 0.0
    %2139 = vmatprep.subr.mxu0 0.0
    %2140 = vmatpush1.msra.mxu0 0.0
    %2141 = vmatprep.subr.mxu0 0.0
    %2142 = vmatpush1.msra.mxu0 0.0
    %2143 = vmatprep.subr.mxu0 0.0
    %2144 = vmatpush1.msra.mxu0 0.0
    %2145 = vmatprep.subr.mxu0 0.0
    %2146 = vmatpush1.msra.mxu0 0.0
    %2147 = vmatprep.subr.mxu0 0.0
    %2148 = vmatpush1.msra.mxu0 0.0
    %2149 = vmatprep.subr.mxu0 0.0
    %2150 = vmatpush1.msra.mxu0 0.0
    %2151 = vmatprep.subr.mxu0 0.0
    %2152 = vmatpush1.msra.mxu0 0.0
    %2153 = vmatprep.subr.mxu0 0.0
    %2154 = vmatpush1.msra.mxu0 0.0
    %2155 = vmatprep.subr.mxu0 0.0
    %2156 = vmatpush1.msra.mxu0 0.0
    %2157 = vmatprep.subr.mxu0 0.0
    %2158 = vmatpush1.msra.mxu0 0.0
    %2159 = vmatprep.subr.mxu0 0.0
    %2160 = vmatpush1.msra.mxu0 0.0
    %2161 = vmatprep.subr.mxu0 0.0
    %2162 = vmatpush1.msra.mxu0 0.0
    %2163 = vmatprep.subr.mxu0 0.0
    %2164 = vmatpush1.msra.mxu0 0.0
    %2165 = vmatprep.subr.mxu0 0.0
    %2166 = vmatpush1.msra.mxu0 0.0
    %2167 = vmatprep.subr.mxu0 0.0
    %2168 = vmatpush1.msra.mxu0 0.0
    %2169 = vmatprep.subr.mxu0 0.0
    %2170 = vmatpush1.msra.mxu0 0.0
    %2171 = vmatprep.subr.mxu0 0.0
    %2172 = vmatpush1.msra.mxu0 0.0
    %2173 = vmatprep.subr.mxu0 0.0
    %2174 = vmatpush1.msra.mxu0 0.0
    %2175 = vmatprep.subr.mxu0 0.0
    %2176 = vmatpush1.msra.mxu0 0.0
    %2177 = vmatprep.subr.mxu0 0.0
    %2178 = vmatpush1.msra.mxu0 0.0
    %2179 = vmatprep.subr.mxu0 0.0
    %2180 = vmatpush1.msra.mxu0 0.0
    %2181 = vmatprep.subr.mxu0 0.0
    %2182 = vmatpush1.msra.mxu0 0.0
    %2183 = vmatprep.subr.mxu0 0.0
    %2184 = vmatpush1.msra.mxu0 0.0
    %2185 = vmatprep.subr.mxu0 0.0
    %2186 = vmatpush1.msra.mxu0 0.0
    %2187 = vmatprep.subr.mxu0 0.0
    %2188 = vmatpush1.msra.mxu0 0.0
    %2189 = vmatprep.subr.mxu0 0.0
    %2190 = vmatpush1.msra.mxu0 0.0
    %2191 = vmatprep.subr.mxu0 0.0
    %2192 = vmatpush1.msra.mxu0 0.0
    %2193 = vmatprep.mubr.f32.mxu0 0.0
    %2194 = vmatmul.mubr.f32.gmra.mrb[0].mxu0 %v2121
    %v2195 = vpop.f32.mrb[0].mxu0
    %v2196 = vadd.f32 0.0, %v2195
    %v2197 = vpop.f32.mrb[0].mxu0
    %2198 = vmatprep.mubr.f32.mxu0 0.0
    %2199 = vmatmul.mubr.f32.gmra.mrb[0].mxu0 %v2124
    %v2200 = vpop.f32.mrb[0].mxu0
    %v2201 = vadd.f32 0.0, %v2200
    %v2202 = vpop.f32.mrb[0].mxu0
    %2203 = vmatprep.mubr.f32.mxu0 0.0
    %2204 = vmatmul.mubr.f32.gmra.mrb[0].mxu0 %v2127
    %v2205 = vpop.f32.mrb[0].mxu0
    %v2206 = vadd.f32 0.0, %v2205
    %v2207 = vpop.f32.mrb[0].mxu0
    %2208 = vdwg.mxu0
    %2209 = vrot.lane.b32.xlu0 %v658, 112
    %v2210 = vpop.permute.xlu0 %2209
    %2211 = vrot.lane.b32.xlu0 %v663, 112
    %v2212 = vpop.permute.xlu0 %2211
    %2213 = vrot.lane.b32.xlu0 %v668, 112
    %v2214 = vpop.permute.xlu0 %2213
    %v2219 = vsel %vm878, %v2108, 0
    %v2222 = vsel %vm878, %v2109, 0
    %v2225 = vsel %vm878, %v2110, 0
    %2227 = vmatprep.subr.mxu0 0.0
    %2228 = vmatpush1.msra.mxu0 %v2210
    %2229 = vmatprep.subr.mxu0 0.0
    %2230 = vmatpush1.msra.mxu0 %v2212
    %2231 = vmatprep.subr.mxu0 0.0
    %2232 = vmatpush1.msra.mxu0 %v2214
    %2233 = vmatprep.subr.mxu0 0.0
    %2234 = vmatpush1.msra.mxu0 0.0
    %2235 = vmatprep.subr.mxu0 0.0
    %2236 = vmatpush1.msra.mxu0 0.0
    %2237 = vmatprep.subr.mxu0 0.0
    %2238 = vmatpush1.msra.mxu0 0.0
    %2239 = vmatprep.subr.mxu0 0.0
    %2240 = vmatpush1.msra.mxu0 0.0
    %2241 = vmatprep.subr.mxu0 0.0
    %2242 = vmatpush1.msra.mxu0 0.0
    %2243 = vmatprep.subr.mxu0 0.0
    %2244 = vmatpush1.msra.mxu0 0.0
    %2245 = vmatprep.subr.mxu0 0.0
    %2246 = vmatpush1.msra.mxu0 0.0
    %2247 = vmatprep.subr.mxu0 0.0
    %2248 = vmatpush1.msra.mxu0 0.0
    %2249 = vmatprep.subr.mxu0 0.0
    %2250 = vmatpush1.msra.mxu0 0.0
    %2251 = vmatprep.subr.mxu0 0.0
    %2252 = vmatpush1.msra.mxu0 0.0
    %2253 = vmatprep.subr.mxu0 0.0
    %2254 = vmatpush1.msra.mxu0 0.0
    %2255 = vmatprep.subr.mxu0 0.0
    %2256 = vmatpush1.msra.mxu0 0.0
    %2257 = vmatprep.subr.mxu0 0.0
    %2258 = vmatpush1.msra.mxu0 0.0
    %2259 = vmatprep.subr.mxu0 0.0
    %2260 = vmatpush1.msra.mxu0 0.0
    %2261 = vmatprep.subr.mxu0 0.0
    %2262 = vmatpush1.msra.mxu0 0.0
    %2263 = vmatprep.subr.mxu0 0.0
    %2264 = vmatpush1.msra.mxu0 0.0
    %2265 = vmatprep.subr.mxu0 0.0
    %2266 = vmatpush1.msra.mxu0 0.0
    %2267 = vmatprep.subr.mxu0 0.0
    %2268 = vmatpush1.msra.mxu0 0.0
    %2269 = vmatprep.subr.mxu0 0.0
    %2270 = vmatpush1.msra.mxu0 0.0
    %2271 = vmatprep.subr.mxu0 0.0
    %2272 = vmatpush1.msra.mxu0 0.0
    %2273 = vmatprep.subr.mxu0 0.0
    %2274 = vmatpush1.msra.mxu0 0.0
    %2275 = vmatprep.subr.mxu0 0.0
    %2276 = vmatpush1.msra.mxu0 0.0
    %2277 = vmatprep.subr.mxu0 0.0
    %2278 = vmatpush1.msra.mxu0 0.0
    %2279 = vmatprep.subr.mxu0 0.0
    %2280 = vmatpush1.msra.mxu0 0.0
    %2281 = vmatprep.subr.mxu0 0.0
    %2282 = vmatpush1.msra.mxu0 0.0
    %2283 = vmatprep.subr.mxu0 0.0
    %2284 = vmatpush1.msra.mxu0 0.0
    %2285 = vmatprep.subr.mxu0 0.0
    %2286 = vmatpush1.msra.mxu0 0.0
    %2287 = vmatprep.subr.mxu0 0.0
    %2288 = vmatpush1.msra.mxu0 0.0
    %2289 = vmatprep.subr.mxu0 0.0
    %2290 = vmatpush1.msra.mxu0 0.0
    %2291 = vmatprep.mubr.f32.mxu0 0.0
    %2292 = vmatmul.mubr.f32.gmra.mrb[0].mxu0 %v2219
    %v2293 = vpop.f32.mrb[0].mxu0
    %v2294 = vadd.f32 0.0, %v2293
    %v2295 = vpop.f32.mrb[0].mxu0
    %2296 = vmatprep.mubr.f32.mxu0 0.0
    %2297 = vmatmul.mubr.f32.gmra.mrb[0].mxu0 %v2222
    %v2298 = vpop.f32.mrb[0].mxu0
    %v2299 = vadd.f32 0.0, %v2298
    %v2300 = vpop.f32.mrb[0].mxu0
    %2301 = vmatprep.mubr.f32.mxu0 0.0
    %2302 = vmatmul.mubr.f32.gmra.mrb[0].mxu0 %v2225
    %v2303 = vpop.f32.mrb[0].mxu0
    %v2304 = vadd.f32 0.0, %v2303
    %v2305 = vpop.f32.mrb[0].mxu0
    %2306 = vdwg.mxu0
    %v2308 = vsel %vm675, %v2196, 0
    %v2311 = vsel %vm675, %v2201, 0
    %v2314 = vsel %vm675, %v2206, 0
    %v2317 = vsel %vm675, %v2294, 0
    %v2320 = vsel %vm675, %v2299, 0
    %v2323 = vsel %vm675, %v2304, 0
    %2325 = vmatprep.subr.mxu0 0.0
    %2326 = vmatpush1.msra.mxu0 %v673
    %2327 = vmatprep.subr.mxu0 0.0
    %2328 = vmatpush1.msra.mxu0 0.0
    %2329 = vmatprep.subr.mxu0 0.0
    %2330 = vmatpush1.msra.mxu0 0.0
    %2331 = vmatprep.subr.mxu0 0.0
    %2332 = vmatpush1.msra.mxu0 0.0
    %2333 = vmatprep.subr.mxu0 0.0
    %2334 = vmatpush1.msra.mxu0 0.0
    %2335 = vmatprep.subr.mxu0 0.0
    %2336 = vmatpush1.msra.mxu0 0.0
    %2337 = vmatprep.subr.mxu0 0.0
    %2338 = vmatpush1.msra.mxu0 0.0
    %2339 = vmatprep.subr.mxu0 0.0
    %2340 = vmatpush1.msra.mxu0 0.0
    %2341 = vmatprep.subr.mxu0 0.0
    %2342 = vmatpush1.msra.mxu0 0.0
    %2343 = vmatprep.subr.mxu0 0.0
    %2344 = vmatpush1.msra.mxu0 0.0
    %2345 = vmatprep.subr.mxu0 0.0
    %2346 = vmatpush1.msra.mxu0 0.0
    %2347 = vmatprep.subr.mxu0 0.0
    %2348 = vmatpush1.msra.mxu0 0.0
    %2349 = vmatprep.subr.mxu0 0.0
    %2350 = vmatpush1.msra.mxu0 0.0
    %2351 = vmatprep.subr.mxu0 0.0
    %2352 = vmatpush1.msra.mxu0 0.0
    %2353 = vmatprep.subr.mxu0 0.0
    %2354 = vmatpush1.msra.mxu0 0.0
    %2355 = vmatprep.subr.mxu0 0.0
    %2356 = vmatpush1.msra.mxu0 0.0
    %2357 = vmatprep.subr.mxu0 0.0
    %2358 = vmatpush1.msra.mxu0 0.0
    %2359 = vmatprep.subr.mxu0 0.0
    %2360 = vmatpush1.msra.mxu0 0.0
    %2361 = vmatprep.subr.mxu0 0.0
    %2362 = vmatpush1.msra.mxu0 0.0
    %2363 = vmatprep.subr.mxu0 0.0
    %2364 = vmatpush1.msra.mxu0 0.0
    %2365 = vmatprep.subr.mxu0 0.0
    %2366 = vmatpush1.msra.mxu0 0.0
    %2367 = vmatprep.subr.mxu0 0.0
    %2368 = vmatpush1.msra.mxu0 0.0
    %2369 = vmatprep.subr.mxu0 0.0
    %2370 = vmatpush1.msra.mxu0 0.0
    %2371 = vmatprep.subr.mxu0 0.0
    %2372 = vmatpush1.msra.mxu0 0.0
    %2373 = vmatprep.subr.mxu0 0.0
    %2374 = vmatpush1.msra.mxu0 0.0
    %2375 = vmatprep.subr.mxu0 0.0
    %2376 = vmatpush1.msra.mxu0 0.0
    %2377 = vmatprep.subr.mxu0 0.0
    %2378 = vmatpush1.msra.mxu0 0.0
    %2379 = vmatprep.subr.mxu0 0.0
    %2380 = vmatpush1.msra.mxu0 0.0
    %2381 = vmatprep.subr.mxu0 0.0
    %2382 = vmatpush1.msra.mxu0 0.0
    %2383 = vmatprep.subr.mxu0 0.0
    %2384 = vmatpush1.msra.mxu0 0.0
    %2385 = vmatprep.subr.mxu0 0.0
    %2386 = vmatpush1.msra.mxu0 0.0
    %2387 = vmatprep.subr.mxu0 0.0
    %2388 = vmatpush1.msra.mxu0 0.0
    %2389 = vmatprep.mubr.f32.mxu0 0.0
    %2390 = vmatmul.mubr.f32.gmra.mrb[0].mxu0 %v2308
    %v2391 = vpop.f32.mrb[0].mxu0
    %v2392 = vadd.f32 0.0, %v2391
    %v2393 = vpop.f32.mrb[0].mxu0
    %2394 = vmatprep.mubr.f32.mxu0 0.0
    %2395 = vmatmul.mubr.f32.gmra.mrb[0].mxu0 %v2311
    %v2396 = vpop.f32.mrb[0].mxu0
    %v2397 = vadd.f32 0.0, %v2396
    %v2398 = vpop.f32.mrb[0].mxu0
    %2399 = vmatprep.mubr.f32.mxu0 0.0
    %2400 = vmatmul.mubr.f32.gmra.mrb[0].mxu0 %v2314
    %v2401 = vpop.f32.mrb[0].mxu0
    %v2402 = vadd.f32 0.0, %v2401
    %v2403 = vpop.f32.mrb[0].mxu0
    %2404 = vmatprep.mubr.f32.mxu0 0.0
    %2405 = vmatmul.mubr.f32.gmra.mrb[0].mxu0 %v2317
    %v2406 = vpop.f32.mrb[0].mxu0
    %v2407 = vadd.f32 0.0, %v2406
    %v2408 = vpop.f32.mrb[0].mxu0
    %2409 = vmatprep.mubr.f32.mxu0 0.0
    %2410 = vmatmul.mubr.f32.gmra.mrb[0].mxu0 %v2320
    %v2411 = vpop.f32.mrb[0].mxu0
    %v2412 = vadd.f32 0.0, %v2411
    %v2413 = vpop.f32.mrb[0].mxu0
    %2414 = vmatprep.mubr.f32.mxu0 0.0
    %2415 = vmatmul.mubr.f32.gmra.mrb[0].mxu0 %v2323
    %v2416 = vpop.f32.mrb[0].mxu0
    %v2417 = vadd.f32 0.0, %v2416
    %v2418 = vpop.f32.mrb[0].mxu0
    %2419 = vdwg.mxu0
    %v2420 = vadd.f32 %v1803, %v2392
    %v2421 = vadd.f32 %v1808, %v2397
    %v2422 = vadd.f32 %v1813, %v2402
    %v2423 = vadd.f32 %v1818, %v2407
    %v2424 = vadd.f32 %v1823, %v2412
    %v2425 = vadd.f32 %v1828, %v2417
    %2426 = vrot.lane.b32.xlu0 %v453, 104
    %v2427 = vpop.permute.xlu0 %2426
    %2428 = vrot.lane.b32.xlu0 %v454, 104
    %v2429 = vpop.permute.xlu0 %2428
    %2430 = vrot.lane.b32.xlu0 %v455, 104
    %v2431 = vpop.permute.xlu0 %2430
    %2432 = vrot.lane.b32.xlu0 %v537, 104
    %v2433 = vpop.permute.xlu0 %2432
    %2434 = vrot.lane.b32.xlu0 %v542, 104
    %v2435 = vpop.permute.xlu0 %2434
    %2436 = vrot.lane.b32.xlu0 %v547, 104
    %v2437 = vpop.permute.xlu0 %2436
    %v2438 = vsel %vm675, %v2427, 0
    %v2440 = vsel %vm675, %v2429, 0
    %v2442 = vsel %vm675, %v2431, 0
    %v2444 = vsel %vm675, %v2433, 0
    %v2446 = vsel %vm675, %v2435, 0
    %v2448 = vsel %vm675, %v2437, 0
    %2450 = vmatprep.subr.mxu0 0.0
    %2451 = vmatpush1.xpose.msra.mxu0 %v2444
    %2452 = vmatprep.subr.mxu0 0.0
    %2453 = vmatpush1.xpose.msra.mxu0 %v2446
    %2454 = vmatprep.subr.mxu0 0.0
    %2455 = vmatpush1.xpose.msra.mxu0 %v2448
    %2456 = vmatprep.subr.mxu0 0.0
    %2457 = vmatpush1.xpose.msra.mxu0 0.0
    %2458 = vmatprep.subr.mxu0 0.0
    %2459 = vmatpush1.xpose.msra.mxu0 0.0
    %2460 = vmatprep.subr.mxu0 0.0
    %2461 = vmatpush1.xpose.msra.mxu0 0.0
    %2462 = vmatprep.subr.mxu0 0.0
    %2463 = vmatpush1.xpose.msra.mxu0 0.0
    %2464 = vmatprep.subr.mxu0 0.0
    %2465 = vmatpush1.xpose.msra.mxu0 0.0
    %2466 = vmatprep.subr.mxu0 0.0
    %2467 = vmatpush1.xpose.msra.mxu0 0.0
    %2468 = vmatprep.subr.mxu0 0.0
    %2469 = vmatpush1.xpose.msra.mxu0 0.0
    %2470 = vmatprep.subr.mxu0 0.0
    %2471 = vmatpush1.xpose.msra.mxu0 0.0
    %2472 = vmatprep.subr.mxu0 0.0
    %2473 = vmatpush1.xpose.msra.mxu0 0.0
    %2474 = vmatprep.subr.mxu0 0.0
    %2475 = vmatpush1.xpose.msra.mxu0 0.0
    %2476 = vmatprep.subr.mxu0 0.0
    %2477 = vmatpush1.xpose.msra.mxu0 0.0
    %2478 = vmatprep.subr.mxu0 0.0
    %2479 = vmatpush1.xpose.msra.mxu0 0.0
    %2480 = vmatprep.subr.mxu0 0.0
    %2481 = vmatpush1.xpose.msra.mxu0 0.0
    %2482 = vmatprep.subr.mxu0 0.0
    %2483 = vmatpush1.xpose.msra.mxu0 0.0
    %2484 = vmatprep.subr.mxu0 0.0
    %2485 = vmatpush1.xpose.msra.mxu0 0.0
    %2486 = vmatprep.subr.mxu0 0.0
    %2487 = vmatpush1.xpose.msra.mxu0 0.0
    %2488 = vmatprep.subr.mxu0 0.0
    %2489 = vmatpush1.xpose.msra.mxu0 0.0
    %2490 = vmatprep.subr.mxu0 0.0
    %2491 = vmatpush1.xpose.msra.mxu0 0.0
    %2492 = vmatprep.subr.mxu0 0.0
    %2493 = vmatpush1.xpose.msra.mxu0 0.0
    %2494 = vmatprep.subr.mxu0 0.0
    %2495 = vmatpush1.xpose.msra.mxu0 0.0
    %2496 = vmatprep.subr.mxu0 0.0
    %2497 = vmatpush1.xpose.msra.mxu0 0.0
    %2498 = vmatprep.subr.mxu0 0.0
    %2499 = vmatpush1.xpose.msra.mxu0 0.0
    %2500 = vmatprep.subr.mxu0 0.0
    %2501 = vmatpush1.xpose.msra.mxu0 0.0
    %2502 = vmatprep.subr.mxu0 0.0
    %2503 = vmatpush1.xpose.msra.mxu0 0.0
    %2504 = vmatprep.subr.mxu0 0.0
    %2505 = vmatpush1.xpose.msra.mxu0 0.0
    %2506 = vmatprep.subr.mxu0 0.0
    %2507 = vmatpush1.xpose.msra.mxu0 0.0
    %2508 = vmatprep.subr.mxu0 0.0
    %2509 = vmatpush1.xpose.msra.mxu0 0.0
    %2510 = vmatprep.subr.mxu0 0.0
    %2511 = vmatpush1.xpose.msra.mxu0 0.0
    %2512 = vmatprep.subr.mxu0 0.0
    %2513 = vmatpush1.xpose.msra.mxu0 0.0
    %2514 = vmatprep.mubr.f32.mxu0 0.0
    %2515 = vmatmul.mubr.f32.gmra.mrb[0].mxu0 %v2438
    %v2516 = vpop.f32.mrb[0].mxu0
    %v2517 = vadd.f32 0.0, %v2516
    %v2518 = vpop.f32.mrb[0].mxu0
    %2519 = vmatprep.mubr.f32.mxu0 0.0
    %2520 = vmatmul.mubr.f32.gmra.mrb[0].mxu0 %v2440
    %v2521 = vpop.f32.mrb[0].mxu0
    %v2522 = vadd.f32 0.0, %v2521
    %v2523 = vpop.f32.mrb[0].mxu0
    %2524 = vmatprep.mubr.f32.mxu0 0.0
    %2525 = vmatmul.mubr.f32.gmra.mrb[0].mxu0 %v2442
    %v2526 = vpop.f32.mrb[0].mxu0
    %v2527 = vadd.f32 0.0, %v2526
    %v2528 = vpop.f32.mrb[0].mxu0
    %2529 = vdwg.mxu0
    %2530 = vrot.lane.b32.xlu0 %v456, 104
    %v2531 = vpop.permute.xlu0 %2530
    %2532 = vrot.lane.b32.xlu0 %v457, 104
    %v2533 = vpop.permute.xlu0 %2532
    %2534 = vrot.lane.b32.xlu0 %v458, 104
    %v2535 = vpop.permute.xlu0 %2534
    %2536 = vrot.lane.b32.xlu0 %v552, 104
    %v2537 = vpop.permute.xlu0 %2536
    %2538 = vrot.lane.b32.xlu0 %v557, 104
    %v2539 = vpop.permute.xlu0 %2538
    %2540 = vrot.lane.b32.xlu0 %v562, 104
    %v2541 = vpop.permute.xlu0 %2540
    %v2542 = vsel %vm675, %v2531, 0
    %v2544 = vsel %vm675, %v2533, 0
    %v2546 = vsel %vm675, %v2535, 0
    %v2548 = vsel %vm675, %v2537, 0
    %v2550 = vsel %vm675, %v2539, 0
    %v2552 = vsel %vm675, %v2541, 0
    %2554 = vmatprep.subr.mxu0 0.0
    %2555 = vmatpush1.xpose.msra.mxu0 %v2548
    %2556 = vmatprep.subr.mxu0 0.0
    %2557 = vmatpush1.xpose.msra.mxu0 %v2550
    %2558 = vmatprep.subr.mxu0 0.0
    %2559 = vmatpush1.xpose.msra.mxu0 %v2552
    %2560 = vmatprep.subr.mxu0 0.0
    %2561 = vmatpush1.xpose.msra.mxu0 0.0
    %2562 = vmatprep.subr.mxu0 0.0
    %2563 = vmatpush1.xpose.msra.mxu0 0.0
    %2564 = vmatprep.subr.mxu0 0.0
    %2565 = vmatpush1.xpose.msra.mxu0 0.0
    %2566 = vmatprep.subr.mxu0 0.0
    %2567 = vmatpush1.xpose.msra.mxu0 0.0
    %2568 = vmatprep.subr.mxu0 0.0
    %2569 = vmatpush1.xpose.msra.mxu0 0.0
    %2570 = vmatprep.subr.mxu0 0.0
    %2571 = vmatpush1.xpose.msra.mxu0 0.0
    %2572 = vmatprep.subr.mxu0 0.0
    %2573 = vmatpush1.xpose.msra.mxu0 0.0
    %2574 = vmatprep.subr.mxu0 0.0
    %2575 = vmatpush1.xpose.msra.mxu0 0.0
    %2576 = vmatprep.subr.mxu0 0.0
    %2577 = vmatpush1.xpose.msra.mxu0 0.0
    %2578 = vmatprep.subr.mxu0 0.0
    %2579 = vmatpush1.xpose.msra.mxu0 0.0
    %2580 = vmatprep.subr.mxu0 0.0
    %2581 = vmatpush1.xpose.msra.mxu0 0.0
    %2582 = vmatprep.subr.mxu0 0.0
    %2583 = vmatpush1.xpose.msra.mxu0 0.0
    %2584 = vmatprep.subr.mxu0 0.0
    %2585 = vmatpush1.xpose.msra.mxu0 0.0
    %2586 = vmatprep.subr.mxu0 0.0
    %2587 = vmatpush1.xpose.msra.mxu0 0.0
    %2588 = vmatprep.subr.mxu0 0.0
    %2589 = vmatpush1.xpose.msra.mxu0 0.0
    %2590 = vmatprep.subr.mxu0 0.0
    %2591 = vmatpush1.xpose.msra.mxu0 0.0
    %2592 = vmatprep.subr.mxu0 0.0
    %2593 = vmatpush1.xpose.msra.mxu0 0.0
    %2594 = vmatprep.subr.mxu0 0.0
    %2595 = vmatpush1.xpose.msra.mxu0 0.0
    %2596 = vmatprep.subr.mxu0 0.0
    %2597 = vmatpush1.xpose.msra.mxu0 0.0
    %2598 = vmatprep.subr.mxu0 0.0
    %2599 = vmatpush1.xpose.msra.mxu0 0.0
    %2600 = vmatprep.subr.mxu0 0.0
    %2601 = vmatpush1.xpose.msra.mxu0 0.0
    %2602 = vmatprep.subr.mxu0 0.0
    %2603 = vmatpush1.xpose.msra.mxu0 0.0
    %2604 = vmatprep.subr.mxu0 0.0
    %2605 = vmatpush1.xpose.msra.mxu0 0.0
    %2606 = vmatprep.subr.mxu0 0.0
    %2607 = vmatpush1.xpose.msra.mxu0 0.0
    %2608 = vmatprep.subr.mxu0 0.0
    %2609 = vmatpush1.xpose.msra.mxu0 0.0
    %2610 = vmatprep.subr.mxu0 0.0
    %2611 = vmatpush1.xpose.msra.mxu0 0.0
    %2612 = vmatprep.subr.mxu0 0.0
    %2613 = vmatpush1.xpose.msra.mxu0 0.0
    %2614 = vmatprep.subr.mxu0 0.0
    %2615 = vmatpush1.xpose.msra.mxu0 0.0
    %2616 = vmatprep.subr.mxu0 0.0
    %2617 = vmatpush1.xpose.msra.mxu0 0.0
    %2618 = vmatprep.mubr.f32.mxu0 0.0
    %2619 = vmatmul.mubr.f32.gmra.mrb[0].mxu0 %v2542
    %v2620 = vpop.f32.mrb[0].mxu0
    %v2621 = vadd.f32 0.0, %v2620
    %v2622 = vpop.f32.mrb[0].mxu0
    %2623 = vmatprep.mubr.f32.mxu0 0.0
    %2624 = vmatmul.mubr.f32.gmra.mrb[0].mxu0 %v2544
    %v2625 = vpop.f32.mrb[0].mxu0
    %v2626 = vadd.f32 0.0, %v2625
    %v2627 = vpop.f32.mrb[0].mxu0
    %2628 = vmatprep.mubr.f32.mxu0 0.0
    %2629 = vmatmul.mubr.f32.gmra.mrb[0].mxu0 %v2546
    %v2630 = vpop.f32.mrb[0].mxu0
    %v2631 = vadd.f32 0.0, %v2630
    %v2632 = vpop.f32.mrb[0].mxu0
    %2633 = vdwg.mxu0
    %v2634 = vsel %vm223, %v2517, -1e+30
    %v2635 = vsel %vm223, %v2522, -1e+30
    %v2636 = vsel %vm223, %v2527, -1e+30
    %v2637 = vsel %vm223, %v2621, -1e+30
    %v2638 = vsel %vm223, %v2626, -1e+30
    %v2639 = vsel %vm223, %v2631, -1e+30
    %v2640 = vsel %vm878, %v2634, -inf
    %2641 = vmax.xlane.f32.xlu0 %v2640
    %v2642 = vpop.xlane.xlu0 %2641
    %v2643 = vsel %vm878, %v2635, -inf
    %2644 = vmax.xlane.f32.xlu0 %v2643
    %v2645 = vpop.xlane.xlu0 %2644
    %v2646 = vsel %vm878, %v2636, -inf
    %2647 = vmax.xlane.f32.xlu0 %v2646
    %v2648 = vpop.xlane.xlu0 %2647
    %v2649 = vsel %vm878, %v2637, -inf
    %2650 = vmax.xlane.f32.xlu0 %v2649
    %v2651 = vpop.xlane.xlu0 %2650
    %v2652 = vsel %vm878, %v2638, -inf
    %2653 = vmax.xlane.f32.xlu0 %v2652
    %v2654 = vpop.xlane.xlu0 %2653
    %v2655 = vsel %vm878, %v2639, -inf
    %2656 = vmax.xlane.f32.xlu0 %v2655
    %v2657 = vpop.xlane.xlu0 %2656
    %v2658 = vsub.f32 %v2634, %v2642
    %v2659 = vsub.f32 %v2635, %v2645
    %v2660 = vsub.f32 %v2636, %v2648
    %v2661 = vsub.f32 %v2637, %v2651
    %v2662 = vsub.f32 %v2638, %v2654
    %v2663 = vsub.f32 %v2639, %v2657
    %v2664 = vmul.f32 %v2658, 1.442695
    %v2665 = vpow.pop %v2664
    %v2666 = vmul.f32 %v2659, 1.442695
    %v2667 = vpow.pop %v2666
    %v2668 = vmul.f32 %v2660, 1.442695
    %v2669 = vpow.pop %v2668
    %v2670 = vmul.f32 %v2661, 1.442695
    %v2671 = vpow.pop %v2670
    %v2672 = vmul.f32 %v2662, 1.442695
    %v2673 = vpow.pop %v2672
    %v2674 = vmul.f32 %v2663, 1.442695
    %v2675 = vpow.pop %v2674
    %v2676 = vsel %vm878, %v2665, 0.0
    %2677 = vadd.xlane.f32.xlu0 %v2676
    %v2678 = vpop.xlane.xlu0 %2677
    %v2679 = vsel %vm878, %v2667, 0.0
    %2680 = vadd.xlane.f32.xlu0 %v2679
    %v2681 = vpop.xlane.xlu0 %2680
    %v2682 = vsel %vm878, %v2669, 0.0
    %2683 = vadd.xlane.f32.xlu0 %v2682
    %v2684 = vpop.xlane.xlu0 %2683
    %v2685 = vsel %vm878, %v2671, 0.0
    %2686 = vadd.xlane.f32.xlu0 %v2685
    %v2687 = vpop.xlane.xlu0 %2686
    %v2688 = vsel %vm878, %v2673, 0.0
    %2689 = vadd.xlane.f32.xlu0 %v2688
    %v2690 = vpop.xlane.xlu0 %2689
    %v2691 = vsel %vm878, %v2675, 0.0
    %2692 = vadd.xlane.f32.xlu0 %v2691
    %v2693 = vpop.xlane.xlu0 %2692
    %v2694 = vrcp.pop %v2678
    %v2695 = vrcp.pop %v2681
    %v2696 = vrcp.pop %v2684
    %v2697 = vrcp.pop %v2687
    %v2698 = vrcp.pop %v2690
    %v2699 = vrcp.pop %v2693
    %v2700 = vmul.f32 %v2665, %v2694
    %v2701 = vmul.f32 %v2667, %v2695
    %v2702 = vmul.f32 %v2669, %v2696
    %v2703 = vmul.f32 %v2671, %v2697
    %v2704 = vmul.f32 %v2673, %v2698
    %v2705 = vmul.f32 %v2675, %v2699
    %2706 = vrot.lane.b32.xlu0 %v643, 104
    %v2707 = vpop.permute.xlu0 %2706
    %2708 = vrot.lane.b32.xlu0 %v648, 104
    %v2709 = vpop.permute.xlu0 %2708
    %2710 = vrot.lane.b32.xlu0 %v653, 104
    %v2711 = vpop.permute.xlu0 %2710
    %v2716 = vsel %vm878, %v2700, 0
    %v2719 = vsel %vm878, %v2701, 0
    %v2722 = vsel %vm878, %v2702, 0
    %2724 = vmatprep.subr.mxu0 0.0
    %2725 = vmatpush1.msra.mxu0 %v2707
    %2726 = vmatprep.subr.mxu0 0.0
    %2727 = vmatpush1.msra.mxu0 %v2709
    %2728 = vmatprep.subr.mxu0 0.0
    %2729 = vmatpush1.msra.mxu0 %v2711
    %2730 = vmatprep.subr.mxu0 0.0
    %2731 = vmatpush1.msra.mxu0 0.0
    %2732 = vmatprep.subr.mxu0 0.0
    %2733 = vmatpush1.msra.mxu0 0.0
    %2734 = vmatprep.subr.mxu0 0.0
    %2735 = vmatpush1.msra.mxu0 0.0
    %2736 = vmatprep.subr.mxu0 0.0
    %2737 = vmatpush1.msra.mxu0 0.0
    %2738 = vmatprep.subr.mxu0 0.0
    %2739 = vmatpush1.msra.mxu0 0.0
    %2740 = vmatprep.subr.mxu0 0.0
    %2741 = vmatpush1.msra.mxu0 0.0
    %2742 = vmatprep.subr.mxu0 0.0
    %2743 = vmatpush1.msra.mxu0 0.0
    %2744 = vmatprep.subr.mxu0 0.0
    %2745 = vmatpush1.msra.mxu0 0.0
    %2746 = vmatprep.subr.mxu0 0.0
    %2747 = vmatpush1.msra.mxu0 0.0
    %2748 = vmatprep.subr.mxu0 0.0
    %2749 = vmatpush1.msra.mxu0 0.0
    %2750 = vmatprep.subr.mxu0 0.0
    %2751 = vmatpush1.msra.mxu0 0.0
    %2752 = vmatprep.subr.mxu0 0.0
    %2753 = vmatpush1.msra.mxu0 0.0
    %2754 = vmatprep.subr.mxu0 0.0
    %2755 = vmatpush1.msra.mxu0 0.0
    %2756 = vmatprep.subr.mxu0 0.0
    %2757 = vmatpush1.msra.mxu0 0.0
    %2758 = vmatprep.subr.mxu0 0.0
    %2759 = vmatpush1.msra.mxu0 0.0
    %2760 = vmatprep.subr.mxu0 0.0
    %2761 = vmatpush1.msra.mxu0 0.0
    %2762 = vmatprep.subr.mxu0 0.0
    %2763 = vmatpush1.msra.mxu0 0.0
    %2764 = vmatprep.subr.mxu0 0.0
    %2765 = vmatpush1.msra.mxu0 0.0
    %2766 = vmatprep.subr.mxu0 0.0
    %2767 = vmatpush1.msra.mxu0 0.0
    %2768 = vmatprep.subr.mxu0 0.0
    %2769 = vmatpush1.msra.mxu0 0.0
    %2770 = vmatprep.subr.mxu0 0.0
    %2771 = vmatpush1.msra.mxu0 0.0
    %2772 = vmatprep.subr.mxu0 0.0
    %2773 = vmatpush1.msra.mxu0 0.0
    %2774 = vmatprep.subr.mxu0 0.0
    %2775 = vmatpush1.msra.mxu0 0.0
    %2776 = vmatprep.subr.mxu0 0.0
    %2777 = vmatpush1.msra.mxu0 0.0
    %2778 = vmatprep.subr.mxu0 0.0
    %2779 = vmatpush1.msra.mxu0 0.0
    %2780 = vmatprep.subr.mxu0 0.0
    %2781 = vmatpush1.msra.mxu0 0.0
    %2782 = vmatprep.subr.mxu0 0.0
    %2783 = vmatpush1.msra.mxu0 0.0
    %2784 = vmatprep.subr.mxu0 0.0
    %2785 = vmatpush1.msra.mxu0 0.0
    %2786 = vmatprep.subr.mxu0 0.0
    %2787 = vmatpush1.msra.mxu0 0.0
    %2788 = vmatprep.mubr.f32.mxu0 0.0
    %2789 = vmatmul.mubr.f32.gmra.mrb[0].mxu0 %v2716
    %v2790 = vpop.f32.mrb[0].mxu0
    %v2791 = vadd.f32 0.0, %v2790
    %v2792 = vpop.f32.mrb[0].mxu0
    %2793 = vmatprep.mubr.f32.mxu0 0.0
    %2794 = vmatmul.mubr.f32.gmra.mrb[0].mxu0 %v2719
    %v2795 = vpop.f32.mrb[0].mxu0
    %v2796 = vadd.f32 0.0, %v2795
    %v2797 = vpop.f32.mrb[0].mxu0
    %2798 = vmatprep.mubr.f32.mxu0 0.0
    %2799 = vmatmul.mubr.f32.gmra.mrb[0].mxu0 %v2722
    %v2800 = vpop.f32.mrb[0].mxu0
    %v2801 = vadd.f32 0.0, %v2800
    %v2802 = vpop.f32.mrb[0].mxu0
    %2803 = vdwg.mxu0
    %2804 = vrot.lane.b32.xlu0 %v658, 104
    %v2805 = vpop.permute.xlu0 %2804
    %2806 = vrot.lane.b32.xlu0 %v663, 104
    %v2807 = vpop.permute.xlu0 %2806
    %2808 = vrot.lane.b32.xlu0 %v668, 104
    %v2809 = vpop.permute.xlu0 %2808
    %v2814 = vsel %vm878, %v2703, 0
    %v2817 = vsel %vm878, %v2704, 0
    %v2820 = vsel %vm878, %v2705, 0
    %2822 = vmatprep.subr.mxu0 0.0
    %2823 = vmatpush1.msra.mxu0 %v2805
    %2824 = vmatprep.subr.mxu0 0.0
    %2825 = vmatpush1.msra.mxu0 %v2807
    %2826 = vmatprep.subr.mxu0 0.0
    %2827 = vmatpush1.msra.mxu0 %v2809
    %2828 = vmatprep.subr.mxu0 0.0
    %2829 = vmatpush1.msra.mxu0 0.0
    %2830 = vmatprep.subr.mxu0 0.0
    %2831 = vmatpush1.msra.mxu0 0.0
    %2832 = vmatprep.subr.mxu0 0.0
    %2833 = vmatpush1.msra.mxu0 0.0
    %2834 = vmatprep.subr.mxu0 0.0
    %2835 = vmatpush1.msra.mxu0 0.0
    %2836 = vmatprep.subr.mxu0 0.0
    %2837 = vmatpush1.msra.mxu0 0.0
    %2838 = vmatprep.subr.mxu0 0.0
    %2839 = vmatpush1.msra.mxu0 0.0
    %2840 = vmatprep.subr.mxu0 0.0
    %2841 = vmatpush1.msra.mxu0 0.0
    %2842 = vmatprep.subr.mxu0 0.0
    %2843 = vmatpush1.msra.mxu0 0.0
    %2844 = vmatprep.subr.mxu0 0.0
    %2845 = vmatpush1.msra.mxu0 0.0
    %2846 = vmatprep.subr.mxu0 0.0
    %2847 = vmatpush1.msra.mxu0 0.0
    %2848 = vmatprep.subr.mxu0 0.0
    %2849 = vmatpush1.msra.mxu0 0.0
    %2850 = vmatprep.subr.mxu0 0.0
    %2851 = vmatpush1.msra.mxu0 0.0
    %2852 = vmatprep.subr.mxu0 0.0
    %2853 = vmatpush1.msra.mxu0 0.0
    %2854 = vmatprep.subr.mxu0 0.0
    %2855 = vmatpush1.msra.mxu0 0.0
    %2856 = vmatprep.subr.mxu0 0.0
    %2857 = vmatpush1.msra.mxu0 0.0
    %2858 = vmatprep.subr.mxu0 0.0
    %2859 = vmatpush1.msra.mxu0 0.0
    %2860 = vmatprep.subr.mxu0 0.0
    %2861 = vmatpush1.msra.mxu0 0.0
    %2862 = vmatprep.subr.mxu0 0.0
    %2863 = vmatpush1.msra.mxu0 0.0
    %2864 = vmatprep.subr.mxu0 0.0
    %2865 = vmatpush1.msra.mxu0 0.0
    %2866 = vmatprep.subr.mxu0 0.0
    %2867 = vmatpush1.msra.mxu0 0.0
    %2868 = vmatprep.subr.mxu0 0.0
    %2869 = vmatpush1.msra.mxu0 0.0
    %2870 = vmatprep.subr.mxu0 0.0
    %2871 = vmatpush1.msra.mxu0 0.0
    %2872 = vmatprep.subr.mxu0 0.0
    %2873 = vmatpush1.msra.mxu0 0.0
    %2874 = vmatprep.subr.mxu0 0.0
    %2875 = vmatpush1.msra.mxu0 0.0
    %2876 = vmatprep.subr.mxu0 0.0
    %2877 = vmatpush1.msra.mxu0 0.0
    %2878 = vmatprep.subr.mxu0 0.0
    %2879 = vmatpush1.msra.mxu0 0.0
    %2880 = vmatprep.subr.mxu0 0.0
    %2881 = vmatpush1.msra.mxu0 0.0
    %2882 = vmatprep.subr.mxu0 0.0
    %2883 = vmatpush1.msra.mxu0 0.0
    %2884 = vmatprep.subr.mxu0 0.0
    %2885 = vmatpush1.msra.mxu0 0.0
    %2886 = vmatprep.mubr.f32.mxu0 0.0
    %2887 = vmatmul.mubr.f32.gmra.mrb[0].mxu0 %v2814
    %v2888 = vpop.f32.mrb[0].mxu0
    %v2889 = vadd.f32 0.0, %v2888
    %v2890 = vpop.f32.mrb[0].mxu0
    %2891 = vmatprep.mubr.f32.mxu0 0.0
    %2892 = vmatmul.mubr.f32.gmra.mrb[0].mxu0 %v2817
    %v2893 = vpop.f32.mrb[0].mxu0
    %v2894 = vadd.f32 0.0, %v2893
    %v2895 = vpop.f32.mrb[0].mxu0
    %2896 = vmatprep.mubr.f32.mxu0 0.0
    %2897 = vmatmul.mubr.f32.gmra.mrb[0].mxu0 %v2820
    %v2898 = vpop.f32.mrb[0].mxu0
    %v2899 = vadd.f32 0.0, %v2898
    %v2900 = vpop.f32.mrb[0].mxu0
    %2901 = vdwg.mxu0
    %v2903 = vsel %vm675, %v2791, 0
    %v2906 = vsel %vm675, %v2796, 0
    %v2909 = vsel %vm675, %v2801, 0
    %v2912 = vsel %vm675, %v2889, 0
    %v2915 = vsel %vm675, %v2894, 0
    %v2918 = vsel %vm675, %v2899, 0
    %2920 = vmatprep.subr.mxu0 0.0
    %2921 = vmatpush1.msra.mxu0 %v674
    %2922 = vmatprep.subr.mxu0 0.0
    %2923 = vmatpush1.msra.mxu0 0.0
    %2924 = vmatprep.subr.mxu0 0.0
    %2925 = vmatpush1.msra.mxu0 0.0
    %2926 = vmatprep.subr.mxu0 0.0
    %2927 = vmatpush1.msra.mxu0 0.0
    %2928 = vmatprep.subr.mxu0 0.0
    %2929 = vmatpush1.msra.mxu0 0.0
    %2930 = vmatprep.subr.mxu0 0.0
    %2931 = vmatpush1.msra.mxu0 0.0
    %2932 = vmatprep.subr.mxu0 0.0
    %2933 = vmatpush1.msra.mxu0 0.0
    %2934 = vmatprep.subr.mxu0 0.0
    %2935 = vmatpush1.msra.mxu0 0.0
    %2936 = vmatprep.subr.mxu0 0.0
    %2937 = vmatpush1.msra.mxu0 0.0
    %2938 = vmatprep.subr.mxu0 0.0
    %2939 = vmatpush1.msra.mxu0 0.0
    %2940 = vmatprep.subr.mxu0 0.0
    %2941 = vmatpush1.msra.mxu0 0.0
    %2942 = vmatprep.subr.mxu0 0.0
    %2943 = vmatpush1.msra.mxu0 0.0
    %2944 = vmatprep.subr.mxu0 0.0
    %2945 = vmatpush1.msra.mxu0 0.0
    %2946 = vmatprep.subr.mxu0 0.0
    %2947 = vmatpush1.msra.mxu0 0.0
    %2948 = vmatprep.subr.mxu0 0.0
    %2949 = vmatpush1.msra.mxu0 0.0
    %2950 = vmatprep.subr.mxu0 0.0
    %2951 = vmatpush1.msra.mxu0 0.0
    %2952 = vmatprep.subr.mxu0 0.0
    %2953 = vmatpush1.msra.mxu0 0.0
    %2954 = vmatprep.subr.mxu0 0.0
    %2955 = vmatpush1.msra.mxu0 0.0
    %2956 = vmatprep.subr.mxu0 0.0
    %2957 = vmatpush1.msra.mxu0 0.0
    %2958 = vmatprep.subr.mxu0 0.0
    %2959 = vmatpush1.msra.mxu0 0.0
    %2960 = vmatprep.subr.mxu0 0.0
    %2961 = vmatpush1.msra.mxu0 0.0
    %2962 = vmatprep.subr.mxu0 0.0
    %2963 = vmatpush1.msra.mxu0 0.0
    %2964 = vmatprep.subr.mxu0 0.0
    %2965 = vmatpush1.msra.mxu0 0.0
    %2966 = vmatprep.subr.mxu0 0.0
    %2967 = vmatpush1.msra.mxu0 0.0
    %2968 = vmatprep.subr.mxu0 0.0
    %2969 = vmatpush1.msra.mxu0 0.0
    %2970 = vmatprep.subr.mxu0 0.0
    %2971 = vmatpush1.msra.mxu0 0.0
    %2972 = vmatprep.subr.mxu0 0.0
    %2973 = vmatpush1.msra.mxu0 0.0
    %2974 = vmatprep.subr.mxu0 0.0
    %2975 = vmatpush1.msra.mxu0 0.0
    %2976 = vmatprep.subr.mxu0 0.0
    %2977 = vmatpush1.msra.mxu0 0.0
    %2978 = vmatprep.subr.mxu0 0.0
    %2979 = vmatpush1.msra.mxu0 0.0
    %2980 = vmatprep.subr.mxu0 0.0
    %2981 = vmatpush1.msra.mxu0 0.0
    %2982 = vmatprep.subr.mxu0 0.0
    %2983 = vmatpush1.msra.mxu0 0.0
    %2984 = vmatprep.mubr.f32.mxu0 0.0
    %2985 = vmatmul.mubr.f32.gmra.mrb[0].mxu0 %v2903
    %v2986 = vpop.f32.mrb[0].mxu0
    %v2987 = vadd.f32 0.0, %v2986
    %v2988 = vpop.f32.mrb[0].mxu0
    %2989 = vmatprep.mubr.f32.mxu0 0.0
    %2990 = vmatmul.mubr.f32.gmra.mrb[0].mxu0 %v2906
    %v2991 = vpop.f32.mrb[0].mxu0
    %v2992 = vadd.f32 0.0, %v2991
    %v2993 = vpop.f32.mrb[0].mxu0
    %2994 = vmatprep.mubr.f32.mxu0 0.0
    %2995 = vmatmul.mubr.f32.gmra.mrb[0].mxu0 %v2909
    %v2996 = vpop.f32.mrb[0].mxu0
    %v2997 = vadd.f32 0.0, %v2996
    %v2998 = vpop.f32.mrb[0].mxu0
    %2999 = vmatprep.mubr.f32.mxu0 0.0
    %3000 = vmatmul.mubr.f32.gmra.mrb[0].mxu0 %v2912
    %v3001 = vpop.f32.mrb[0].mxu0
    %v3002 = vadd.f32 0.0, %v3001
    %v3003 = vpop.f32.mrb[0].mxu0
    %3004 = vmatprep.mubr.f32.mxu0 0.0
    %3005 = vmatmul.mubr.f32.gmra.mrb[0].mxu0 %v2915
    %v3006 = vpop.f32.mrb[0].mxu0
    %v3007 = vadd.f32 0.0, %v3006
    %v3008 = vpop.f32.mrb[0].mxu0
    %3009 = vmatprep.mubr.f32.mxu0 0.0
    %3010 = vmatmul.mubr.f32.gmra.mrb[0].mxu0 %v2918
    %v3011 = vpop.f32.mrb[0].mxu0
    %v3012 = vadd.f32 0.0, %v3011
    %v3013 = vpop.f32.mrb[0].mxu0
    %3014 = vdwg.mxu0
    %v3015 = vadd.f32 %v2420, %v2987
    %v3016 = vadd.f32 %v2421, %v2992
    %v3017 = vadd.f32 %v2422, %v2997
    %v3018 = vadd.f32 %v2423, %v3002
    %v3019 = vadd.f32 %v2424, %v3007
    %v3020 = vadd.f32 %v2425, %v3012
    %v3021 = vadd.f32 %v215, %v3015
    %v3022 = vadd.f32 %v216, %v3016
    %v3023 = vadd.f32 %v217, %v3017
    %v3024 = vadd.f32 %v218, %v3018
    %v3025 = vadd.f32 %v219, %v3019
    %v3026 = vadd.f32 %v220, %v3020
    %v3027 = vld [vmem:[%s14] sm:$0x1]
    %v3029 = vlaneseq
    %v3030 = vshrl.u32 %v3029, 7
    %v3031 = vsub.s32 0, %v3030
    %v3032 = vrot.slane %v3027, %v3031
    %v3034 = vadd.f32 %v3021, %v3032
    %v3035 = vadd.f32 %v3022, %v3032
    %v3036 = vadd.f32 %v3023, %v3032
    %v3037 = vadd.f32 %v3024, %v3032
    %v3038 = vadd.f32 %v3025, %v3032
    %v3039 = vadd.f32 %v3026, %v3032
    %v3040 = vld [vmem:[%s15] sm:$0x1]
    %v3041 = vld [vmem:[%s16] sm:$0x1]
    %v3042 = vsel %vm192, %v3034, 0.0
    %3043 = vadd.xlane.f32.xlu0 %v3042
    %v3044 = vpop.xlane.xlu0 %3043
    %v3045 = vsel %vm192, %v3035, 0.0
    %3046 = vadd.xlane.f32.xlu0 %v3045
    %v3047 = vpop.xlane.xlu0 %3046
    %v3048 = vsel %vm192, %v3036, 0.0
    %3049 = vadd.xlane.f32.xlu0 %v3048
    %v3050 = vpop.xlane.xlu0 %3049
    %v3051 = vsel %vm192, %v3037, 0.0
    %3052 = vadd.xlane.f32.xlu0 %v3051
    %v3053 = vpop.xlane.xlu0 %3052
    %v3054 = vsel %vm192, %v3038, 0.0
    %3055 = vadd.xlane.f32.xlu0 %v3054
    %v3056 = vpop.xlane.xlu0 %3055
    %v3057 = vsel %vm192, %v3039, 0.0
    %3058 = vadd.xlane.f32.xlu0 %v3057
    %v3059 = vpop.xlane.xlu0 %3058
    %v3060 = vmul.f32 %v3044, %v244
    %v3061 = vmul.f32 %v3047, %v244
    %v3062 = vmul.f32 %v3050, %v244
    %v3063 = vmul.f32 %v3053, %v244
    %v3064 = vmul.f32 %v3056, %v244
    %v3065 = vmul.f32 %v3059, %v244
    %v3066 = vsub.f32 %v3034, %v3060
    %v3067 = vsub.f32 %v3035, %v3061
    %v3068 = vsub.f32 %v3036, %v3062
    %v3069 = vsub.f32 %v3037, %v3063
    %v3070 = vsub.f32 %v3038, %v3064
    %v3071 = vsub.f32 %v3039, %v3065
    %v3072 = vmul.f32 %v3066, %v3066
    %v3073 = vmul.f32 %v3067, %v3067
    %v3074 = vmul.f32 %v3068, %v3068
    %v3075 = vmul.f32 %v3069, %v3069
    %v3076 = vmul.f32 %v3070, %v3070
    %v3077 = vmul.f32 %v3071, %v3071
    %v3078 = vsel %vm192, %v3072, 0.0
    %3079 = vadd.xlane.f32.xlu0 %v3078
    %v3080 = vpop.xlane.xlu0 %3079
    %v3081 = vsel %vm192, %v3073, 0.0
    %3082 = vadd.xlane.f32.xlu0 %v3081
    %v3083 = vpop.xlane.xlu0 %3082
    %v3084 = vsel %vm192, %v3074, 0.0
    %3085 = vadd.xlane.f32.xlu0 %v3084
    %v3086 = vpop.xlane.xlu0 %3085
    %v3087 = vsel %vm192, %v3075, 0.0
    %3088 = vadd.xlane.f32.xlu0 %v3087
    %v3089 = vpop.xlane.xlu0 %3088
    %v3090 = vsel %vm192, %v3076, 0.0
    %3091 = vadd.xlane.f32.xlu0 %v3090
    %v3092 = vpop.xlane.xlu0 %3091
    %v3093 = vsel %vm192, %v3077, 0.0
    %3094 = vadd.xlane.f32.xlu0 %v3093
    %v3095 = vpop.xlane.xlu0 %3094
    %v3096 = vmul.f32 %v3080, %v244
    %v3097 = vmul.f32 %v3083, %v244
    %v3098 = vmul.f32 %v3086, %v244
    %v3099 = vmul.f32 %v3089, %v244
    %v3100 = vmul.f32 %v3092, %v244
    %v3101 = vmul.f32 %v3095, %v244
    %v3102 = vadd.f32 %v3096, 1e-05
    %v3103 = vadd.f32 %v3097, 1e-05
    %v3104 = vadd.f32 %v3098, 1e-05
    %v3105 = vadd.f32 %v3099, 1e-05
    %v3106 = vadd.f32 %v3100, 1e-05
    %v3107 = vadd.f32 %v3101, 1e-05
    %v3108 = vrsqrt.pop %v3102
    %v3109 = vrsqrt.pop %v3103
    %v3110 = vrsqrt.pop %v3104
    %v3111 = vrsqrt.pop %v3105
    %v3112 = vrsqrt.pop %v3106
    %v3113 = vrsqrt.pop %v3107
    %v3114 = vmul.f32 %v3066, %v3108
    %v3115 = vmul.f32 %v3067, %v3109
    %v3116 = vmul.f32 %v3068, %v3110
    %v3117 = vmul.f32 %v3069, %v3111
    %v3118 = vmul.f32 %v3070, %v3112
    %v3119 = vmul.f32 %v3071, %v3113
    %v3121 = vlaneseq
    %v3122 = vshrl.u32 %v3121, 7
    %v3123 = vsub.s32 0, %v3122
    %v3124 = vrot.slane %v3040, %v3123
    %v3126 = vmul.f32 %v3114, %v3124
    %v3127 = vmul.f32 %v3115, %v3124
    %v3128 = vmul.f32 %v3116, %v3124
    %v3129 = vmul.f32 %v3117, %v3124
    %v3130 = vmul.f32 %v3118, %v3124
    %v3131 = vmul.f32 %v3119, %v3124
    %v3133 = vlaneseq
    %v3134 = vshrl.u32 %v3133, 7
    %v3135 = vsub.s32 0, %v3134
    %v3136 = vrot.slane %v3041, %v3135
    %v3138 = vadd.f32 %v3126, %v3136
    %v3139 = vadd.f32 %v3127, %v3136
    %v3140 = vadd.f32 %v3128, %v3136
    %v3141 = vadd.f32 %v3129, %v3136
    %v3142 = vadd.f32 %v3130, %v3136
    %v3143 = vadd.f32 %v3131, %v3136
    %v3144 = vld [vmem:[%s17] sm:$0xff]
    %v3145 = vld [vmem:[%s17 + $0x8] sm:$0xff]
    %v3146 = vld [vmem:[%s17 + $0x10] sm:$0xff]
    %v3147 = vld [vmem:[%s17 + $0x18] sm:$0xff]
    %v3148 = vld [vmem:[%s18] sm:$0x1]
    %v3150 = vlaneseq
    %v3151 = vshrl.u32 %v3150, 7
    %v3152 = vsub.s32 0, %v3151
    %v3153 = vrot.slane %v3148, %v3152
    %v3156 = vsel %vm192, %v3138, 0
    %v3159 = vsel %vm192, %v3139, 0
    %v3162 = vsel %vm192, %v3140, 0
    %v3165 = vsel %vm192, %v3141, 0
    %v3168 = vsel %vm192, %v3142, 0
    %v3171 = vsel %vm192, %v3143, 0
    %3173 = vmatprep.subr.mxu0 0.0
    %3174 = vmatpush1.msra.mxu0 %v3144
    %3175 = vmatprep.subr.mxu0 0.0
    %3176 = vmatpush1.msra.mxu0 %v3145
    %3177 = vmatprep.subr.mxu0 0.0
    %3178 = vmatpush1.msra.mxu0 %v3146
    %3179 = vmatprep.subr.mxu0 0.0
    %3180 = vmatpush1.msra.mxu0 %v3147
    %3181 = vmatprep.subr.mxu0 0.0
    %3182 = vmatpush1.msra.mxu0 0.0
    %3183 = vmatprep.subr.mxu0 0.0
    %3184 = vmatpush1.msra.mxu0 0.0
    %3185 = vmatprep.subr.mxu0 0.0
    %3186 = vmatpush1.msra.mxu0 0.0
    %3187 = vmatprep.subr.mxu0 0.0
    %3188 = vmatpush1.msra.mxu0 0.0
    %3189 = vmatprep.subr.mxu0 0.0
    %3190 = vmatpush1.msra.mxu0 0.0
    %3191 = vmatprep.subr.mxu0 0.0
    %3192 = vmatpush1.msra.mxu0 0.0
    %3193 = vmatprep.subr.mxu0 0.0
    %3194 = vmatpush1.msra.mxu0 0.0
    %3195 = vmatprep.subr.mxu0 0.0
    %3196 = vmatpush1.msra.mxu0 0.0
    %3197 = vmatprep.subr.mxu0 0.0
    %3198 = vmatpush1.msra.mxu0 0.0
    %3199 = vmatprep.subr.mxu0 0.0
    %3200 = vmatpush1.msra.mxu0 0.0
    %3201 = vmatprep.subr.mxu0 0.0
    %3202 = vmatpush1.msra.mxu0 0.0
    %3203 = vmatprep.subr.mxu0 0.0
    %3204 = vmatpush1.msra.mxu0 0.0
    %3205 = vmatprep.subr.mxu0 0.0
    %3206 = vmatpush1.msra.mxu0 0.0
    %3207 = vmatprep.subr.mxu0 0.0
    %3208 = vmatpush1.msra.mxu0 0.0
    %3209 = vmatprep.subr.mxu0 0.0
    %3210 = vmatpush1.msra.mxu0 0.0
    %3211 = vmatprep.subr.mxu0 0.0
    %3212 = vmatpush1.msra.mxu0 0.0
    %3213 = vmatprep.subr.mxu0 0.0
    %3214 = vmatpush1.msra.mxu0 0.0
    %3215 = vmatprep.subr.mxu0 0.0
    %3216 = vmatpush1.msra.mxu0 0.0
    %3217 = vmatprep.subr.mxu0 0.0
    %3218 = vmatpush1.msra.mxu0 0.0
    %3219 = vmatprep.subr.mxu0 0.0
    %3220 = vmatpush1.msra.mxu0 0.0
    %3221 = vmatprep.subr.mxu0 0.0
    %3222 = vmatpush1.msra.mxu0 0.0
    %3223 = vmatprep.subr.mxu0 0.0
    %3224 = vmatpush1.msra.mxu0 0.0
    %3225 = vmatprep.subr.mxu0 0.0
    %3226 = vmatpush1.msra.mxu0 0.0
    %3227 = vmatprep.subr.mxu0 0.0
    %3228 = vmatpush1.msra.mxu0 0.0
    %3229 = vmatprep.subr.mxu0 0.0
    %3230 = vmatpush1.msra.mxu0 0.0
    %3231 = vmatprep.subr.mxu0 0.0
    %3232 = vmatpush1.msra.mxu0 0.0
    %3233 = vmatprep.subr.mxu0 0.0
    %3234 = vmatpush1.msra.mxu0 0.0
    %3235 = vmatprep.subr.mxu0 0.0
    %3236 = vmatpush1.msra.mxu0 0.0
    %3237 = vmatprep.mubr.f32.mxu0 0.0
    %3238 = vmatmul.mubr.f32.gmra.mrb[0].mxu0 %v3156
    %v3239 = vpop.f32.mrb[0].mxu0
    %v3240 = vadd.f32 %v3153, %v3239
    %v3241 = vpop.f32.mrb[0].mxu0
    %3242 = vmatprep.mubr.f32.mxu0 0.0
    %3243 = vmatmul.mubr.f32.gmra.mrb[0].mxu0 %v3159
    %v3244 = vpop.f32.mrb[0].mxu0
    %v3245 = vadd.f32 %v3153, %v3244
    %v3246 = vpop.f32.mrb[0].mxu0
    %3247 = vmatprep.mubr.f32.mxu0 0.0
    %3248 = vmatmul.mubr.f32.gmra.mrb[0].mxu0 %v3162
    %v3249 = vpop.f32.mrb[0].mxu0
    %v3250 = vadd.f32 %v3153, %v3249
    %v3251 = vpop.f32.mrb[0].mxu0
    %3252 = vmatprep.mubr.f32.mxu0 0.0
    %3253 = vmatmul.mubr.f32.gmra.mrb[0].mxu0 %v3165
    %v3254 = vpop.f32.mrb[0].mxu0
    %v3255 = vadd.f32 %v3153, %v3254
    %v3256 = vpop.f32.mrb[0].mxu0
    %3257 = vmatprep.mubr.f32.mxu0 0.0
    %3258 = vmatmul.mubr.f32.gmra.mrb[0].mxu0 %v3168
    %v3259 = vpop.f32.mrb[0].mxu0
    %v3260 = vadd.f32 %v3153, %v3259
    %v3261 = vpop.f32.mrb[0].mxu0
    %3262 = vmatprep.mubr.f32.mxu0 0.0
    %3263 = vmatmul.mubr.f32.gmra.mrb[0].mxu0 %v3171
    %v3264 = vpop.f32.mrb[0].mxu0
    %v3265 = vadd.f32 %v3153, %v3264
    %v3266 = vpop.f32.mrb[0].mxu0
    %3267 = vdwg.mxu0
    %v3268 = vmax.f32 %v3240, 0.0
    %v3269 = vmax.f32 %v3245, 0.0
    %v3270 = vmax.f32 %v3250, 0.0
    %v3271 = vmax.f32 %v3255, 0.0
    %v3272 = vmax.f32 %v3260, 0.0
    %v3273 = vmax.f32 %v3265, 0.0
    %v3274 = vld [vmem:[%s19] sm:$0xff]
    %v3275 = vld [vmem:[%s19 + $0x8] sm:$0xff]
    %v3276 = vld [vmem:[%s19 + $0x10] sm:$0xff]
    %v3277 = vld [vmem:[%s19 + $0x18] sm:$0xff]
    %v3278 = vld [vmem:[%s19 + $0x20] sm:$0xff]
    %v3279 = vld [vmem:[%s19 + $0x28] sm:$0xff]
    %v3280 = vld [vmem:[%s19 + $0x30] sm:$0xff]
    %v3281 = vld [vmem:[%s19 + $0x38] sm:$0xff]
    %v3282 = vld [vmem:[%s19 + $0x40] sm:$0xff]
    %v3283 = vld [vmem:[%s19 + $0x48] sm:$0xff]
    %v3284 = vld [vmem:[%s19 + $0x50] sm:$0xff]
    %v3285 = vld [vmem:[%s19 + $0x58] sm:$0xff]
    %v3286 = vld [vmem:[%s19 + $0x60] sm:$0xff]
    %v3287 = vld [vmem:[%s19 + $0x68] sm:$0xff]
    %v3288 = vld [vmem:[%s19 + $0x70] sm:$0xff]
    %v3289 = vld [vmem:[%s19 + $0x78] sm:$0xff]
    %3290 = vmatprep.subr.mxu0 0.0
    %3291 = vmatpush1.msra.mxu0 %v3274
    %3292 = vmatprep.subr.mxu0 0.0
    %3293 = vmatpush1.msra.mxu0 %v3275
    %3294 = vmatprep.subr.mxu0 0.0
    %3295 = vmatpush1.msra.mxu0 %v3276
    %3296 = vmatprep.subr.mxu0 0.0
    %3297 = vmatpush1.msra.mxu0 %v3277
    %3298 = vmatprep.subr.mxu0 0.0
    %3299 = vmatpush1.msra.mxu0 %v3278
    %3300 = vmatprep.subr.mxu0 0.0
    %3301 = vmatpush1.msra.mxu0 %v3279
    %3302 = vmatprep.subr.mxu0 0.0
    %3303 = vmatpush1.msra.mxu0 %v3280
    %3304 = vmatprep.subr.mxu0 0.0
    %3305 = vmatpush1.msra.mxu0 %v3281
    %3306 = vmatprep.subr.mxu0 0.0
    %3307 = vmatpush1.msra.mxu0 %v3282
    %3308 = vmatprep.subr.mxu0 0.0
    %3309 = vmatpush1.msra.mxu0 %v3283
    %3310 = vmatprep.subr.mxu0 0.0
    %3311 = vmatpush1.msra.mxu0 %v3284
    %3312 = vmatprep.subr.mxu0 0.0
    %3313 = vmatpush1.msra.mxu0 %v3285
    %3314 = vmatprep.subr.mxu0 0.0
    %3315 = vmatpush1.msra.mxu0 %v3286
    %3316 = vmatprep.subr.mxu0 0.0
    %3317 = vmatpush1.msra.mxu0 %v3287
    %3318 = vmatprep.subr.mxu0 0.0
    %3319 = vmatpush1.msra.mxu0 %v3288
    %3320 = vmatprep.subr.mxu0 0.0
    %3321 = vmatpush1.msra.mxu0 %v3289
    %3322 = vmatprep.subr.mxu0 0.0
    %3323 = vmatpush1.msra.mxu0 0.0
    %3324 = vmatprep.subr.mxu0 0.0
    %3325 = vmatpush1.msra.mxu0 0.0
    %3326 = vmatprep.subr.mxu0 0.0
    %3327 = vmatpush1.msra.mxu0 0.0
    %3328 = vmatprep.subr.mxu0 0.0
    %3329 = vmatpush1.msra.mxu0 0.0
    %3330 = vmatprep.subr.mxu0 0.0
    %3331 = vmatpush1.msra.mxu0 0.0
    %3332 = vmatprep.subr.mxu0 0.0
    %3333 = vmatpush1.msra.mxu0 0.0
    %3334 = vmatprep.subr.mxu0 0.0
    %3335 = vmatpush1.msra.mxu0 0.0
    %3336 = vmatprep.subr.mxu0 0.0
    %3337 = vmatpush1.msra.mxu0 0.0
    %3338 = vmatprep.subr.mxu0 0.0
    %3339 = vmatpush1.msra.mxu0 0.0
    %3340 = vmatprep.subr.mxu0 0.0
    %3341 = vmatpush1.msra.mxu0 0.0
    %3342 = vmatprep.subr.mxu0 0.0
    %3343 = vmatpush1.msra.mxu0 0.0
    %3344 = vmatprep.subr.mxu0 0.0
    %3345 = vmatpush1.msra.mxu0 0.0
    %3346 = vmatprep.subr.mxu0 0.0
    %3347 = vmatpush1.msra.mxu0 0.0
    %3348 = vmatprep.subr.mxu0 0.0
    %3349 = vmatpush1.msra.mxu0 0.0
    %3350 = vmatprep.subr.mxu0 0.0
    %3351 = vmatpush1.msra.mxu0 0.0
    %3352 = vmatprep.subr.mxu0 0.0
    %3353 = vmatpush1.msra.mxu0 0.0
    %3354 = vmatprep.mubr.f32.mxu0 0.0
    %3355 = vmatmul.mubr.f32.gmra.mrb[0].mxu0 %v3268
    %v3356 = vpop.f32.mrb[0].mxu0
    %v3357 = vadd.f32 0.0, %v3356
    %v3358 = vpop.f32.mrb[0].mxu0
    %3359 = vmatprep.mubr.f32.mxu0 0.0
    %3360 = vmatmul.mubr.f32.gmra.mrb[0].mxu0 %v3269
    %v3361 = vpop.f32.mrb[0].mxu0
    %v3362 = vadd.f32 0.0, %v3361
    %v3363 = vpop.f32.mrb[0].mxu0
    %3364 = vmatprep.mubr.f32.mxu0 0.0
    %3365 = vmatmul.mubr.f32.gmra.mrb[0].mxu0 %v3270
    %v3366 = vpop.f32.mrb[0].mxu0
    %v3367 = vadd.f32 0.0, %v3366
    %v3368 = vpop.f32.mrb[0].mxu0
    %3369 = vmatprep.mubr.f32.mxu0 0.0
    %3370 = vmatmul.mubr.f32.gmra.mrb[0].mxu0 %v3271
    %v3371 = vpop.f32.mrb[0].mxu0
    %v3372 = vadd.f32 0.0, %v3371
    %v3373 = vpop.f32.mrb[0].mxu0
    %3374 = vmatprep.mubr.f32.mxu0 0.0
    %3375 = vmatmul.mubr.f32.gmra.mrb[0].mxu0 %v3272
    %v3376 = vpop.f32.mrb[0].mxu0
    %v3377 = vadd.f32 0.0, %v3376
    %v3378 = vpop.f32.mrb[0].mxu0
    %3379 = vmatprep.mubr.f32.mxu0 0.0
    %3380 = vmatmul.mubr.f32.gmra.mrb[0].mxu0 %v3273
    %v3381 = vpop.f32.mrb[0].mxu0
    %v3382 = vadd.f32 0.0, %v3381
    %v3383 = vpop.f32.mrb[0].mxu0
    %3384 = vdwg.mxu0
    %v3385 = vadd.f32 %v3034, %v3357
    %v3386 = vadd.f32 %v3035, %v3362
    %v3387 = vadd.f32 %v3036, %v3367
    %v3388 = vadd.f32 %v3037, %v3372
    %v3389 = vadd.f32 %v3038, %v3377
    %v3390 = vadd.f32 %v3039, %v3382
    %v3391 = vld [vmem:[%s20] sm:$0x1]
    %v3393 = vlaneseq
    %v3394 = vshrl.u32 %v3393, 7
    %v3395 = vsub.s32 0, %v3394
    %v3396 = vrot.slane %v3391, %v3395
    %v3398 = vadd.f32 %v3385, %v3396
    %v3399 = vadd.f32 %v3386, %v3396
    %v3400 = vadd.f32 %v3387, %v3396
    %v3401 = vadd.f32 %v3388, %v3396
    %v3402 = vadd.f32 %v3389, %v3396
    %v3403 = vadd.f32 %v3390, %v3396
    %s3404 = scalar_lea.vmem %s5, 1
    %v3405 = vld [vmem:[%s3404] sm:$0x1]
    %s3406 = scalar_lea.vmem %s6, 1
    %v3407 = vld [vmem:[%s3406] sm:$0x1]
    %v3408 = vsel %vm192, %v3398, 0.0
    %3409 = vadd.xlane.f32.xlu0 %v3408
    %v3410 = vpop.xlane.xlu0 %3409
    %v3411 = vsel %vm192, %v3399, 0.0
    %3412 = vadd.xlane.f32.xlu0 %v3411
    %v3413 = vpop.xlane.xlu0 %3412
    %v3414 = vsel %vm192, %v3400, 0.0
    %3415 = vadd.xlane.f32.xlu0 %v3414
    %v3416 = vpop.xlane.xlu0 %3415
    %v3417 = vsel %vm192, %v3401, 0.0
    %3418 = vadd.xlane.f32.xlu0 %v3417
    %v3419 = vpop.xlane.xlu0 %3418
    %v3420 = vsel %vm192, %v3402, 0.0
    %3421 = vadd.xlane.f32.xlu0 %v3420
    %v3422 = vpop.xlane.xlu0 %3421
    %v3423 = vsel %vm192, %v3403, 0.0
    %3424 = vadd.xlane.f32.xlu0 %v3423
    %v3425 = vpop.xlane.xlu0 %3424
    %v3426 = vmul.f32 %v3410, %v244
    %v3427 = vmul.f32 %v3413, %v244
    %v3428 = vmul.f32 %v3416, %v244
    %v3429 = vmul.f32 %v3419, %v244
    %v3430 = vmul.f32 %v3422, %v244
    %v3431 = vmul.f32 %v3425, %v244
    %v3432 = vsub.f32 %v3398, %v3426
    %v3433 = vsub.f32 %v3399, %v3427
    %v3434 = vsub.f32 %v3400, %v3428
    %v3435 = vsub.f32 %v3401, %v3429
    %v3436 = vsub.f32 %v3402, %v3430
    %v3437 = vsub.f32 %v3403, %v3431
    %v3438 = vmul.f32 %v3432, %v3432
    %v3439 = vmul.f32 %v3433, %v3433
    %v3440 = vmul.f32 %v3434, %v3434
    %v3441 = vmul.f32 %v3435, %v3435
    %v3442 = vmul.f32 %v3436, %v3436
    %v3443 = vmul.f32 %v3437, %v3437
    %v3444 = vsel %vm192, %v3438, 0.0
    %3445 = vadd.xlane.f32.xlu0 %v3444
    %v3446 = vpop.xlane.xlu0 %3445
    %v3447 = vsel %vm192, %v3439, 0.0
    %3448 = vadd.xlane.f32.xlu0 %v3447
    %v3449 = vpop.xlane.xlu0 %3448
    %v3450 = vsel %vm192, %v3440, 0.0
    %3451 = vadd.xlane.f32.xlu0 %v3450
    %v3452 = vpop.xlane.xlu0 %3451
    %v3453 = vsel %vm192, %v3441, 0.0
    %3454 = vadd.xlane.f32.xlu0 %v3453
    %v3455 = vpop.xlane.xlu0 %3454
    %v3456 = vsel %vm192, %v3442, 0.0
    %3457 = vadd.xlane.f32.xlu0 %v3456
    %v3458 = vpop.xlane.xlu0 %3457
    %v3459 = vsel %vm192, %v3443, 0.0
    %3460 = vadd.xlane.f32.xlu0 %v3459
    %v3461 = vpop.xlane.xlu0 %3460
    %v3462 = vmul.f32 %v3446, %v244
    %v3463 = vmul.f32 %v3449, %v244
    %v3464 = vmul.f32 %v3452, %v244
    %v3465 = vmul.f32 %v3455, %v244
    %v3466 = vmul.f32 %v3458, %v244
    %v3467 = vmul.f32 %v3461, %v244
    %v3468 = vadd.f32 %v3462, 1e-05
    %v3469 = vadd.f32 %v3463, 1e-05
    %v3470 = vadd.f32 %v3464, 1e-05
    %v3471 = vadd.f32 %v3465, 1e-05
    %v3472 = vadd.f32 %v3466, 1e-05
    %v3473 = vadd.f32 %v3467, 1e-05
    %v3474 = vrsqrt.pop %v3468
    %v3475 = vrsqrt.pop %v3469
    %v3476 = vrsqrt.pop %v3470
    %v3477 = vrsqrt.pop %v3471
    %v3478 = vrsqrt.pop %v3472
    %v3479 = vrsqrt.pop %v3473
    %v3480 = vmul.f32 %v3432, %v3474
    %v3481 = vmul.f32 %v3433, %v3475
    %v3482 = vmul.f32 %v3434, %v3476
    %v3483 = vmul.f32 %v3435, %v3477
    %v3484 = vmul.f32 %v3436, %v3478
    %v3485 = vmul.f32 %v3437, %v3479
    %v3487 = vlaneseq
    %v3488 = vshrl.u32 %v3487, 7
    %v3489 = vsub.s32 0, %v3488
    %v3490 = vrot.slane %v3405, %v3489
    %v3492 = vmul.f32 %v3480, %v3490
    %v3493 = vmul.f32 %v3481, %v3490
    %v3494 = vmul.f32 %v3482, %v3490
    %v3495 = vmul.f32 %v3483, %v3490
    %v3496 = vmul.f32 %v3484, %v3490
    %v3497 = vmul.f32 %v3485, %v3490
    %v3499 = vlaneseq
    %v3500 = vshrl.u32 %v3499, 7
    %v3501 = vsub.s32 0, %v3500
    %v3502 = vrot.slane %v3407, %v3501
    %v3504 = vadd.f32 %v3492, %v3502
    %v3505 = vadd.f32 %v3493, %v3502
    %v3506 = vadd.f32 %v3494, %v3502
    %v3507 = vadd.f32 %v3495, %v3502
    %v3508 = vadd.f32 %v3496, %v3502
    %v3509 = vadd.f32 %v3497, %v3502
    %s3510 = scalar_lea.vmem %s7, 32
    %v3511 = vld [vmem:[%s3510] sm:$0xff]
    %v3512 = vld [vmem:[%s3510 + $0x8] sm:$0xff]
    %v3513 = vld [vmem:[%s3510 + $0x10] sm:$0xff]
    %v3514 = vld [vmem:[%s3510 + $0x18] sm:$0xff]
    %s3515 = scalar_lea.vmem %s8, 1
    %v3516 = vld [vmem:[%s3515] sm:$0x1]
    %v3518 = vlaneseq
    %v3519 = vshrl.u32 %v3518, 7
    %v3520 = vsub.s32 0, %v3519
    %v3521 = vrot.slane %v3516, %v3520
    %v3524 = vsel %vm192, %v3504, 0
    %v3527 = vsel %vm192, %v3505, 0
    %v3530 = vsel %vm192, %v3506, 0
    %v3533 = vsel %vm192, %v3507, 0
    %v3536 = vsel %vm192, %v3508, 0
    %v3539 = vsel %vm192, %v3509, 0
    %3541 = vmatprep.subr.mxu0 0.0
    %3542 = vmatpush1.msra.mxu0 %v3511
    %3543 = vmatprep.subr.mxu0 0.0
    %3544 = vmatpush1.msra.mxu0 %v3512
    %3545 = vmatprep.subr.mxu0 0.0
    %3546 = vmatpush1.msra.mxu0 %v3513
    %3547 = vmatprep.subr.mxu0 0.0
    %3548 = vmatpush1.msra.mxu0 %v3514
    %3549 = vmatprep.subr.mxu0 0.0
    %3550 = vmatpush1.msra.mxu0 0.0
    %3551 = vmatprep.subr.mxu0 0.0
    %3552 = vmatpush1.msra.mxu0 0.0
    %3553 = vmatprep.subr.mxu0 0.0
    %3554 = vmatpush1.msra.mxu0 0.0
    %3555 = vmatprep.subr.mxu0 0.0
    %3556 = vmatpush1.msra.mxu0 0.0
    %3557 = vmatprep.subr.mxu0 0.0
    %3558 = vmatpush1.msra.mxu0 0.0
    %3559 = vmatprep.subr.mxu0 0.0
    %3560 = vmatpush1.msra.mxu0 0.0
    %3561 = vmatprep.subr.mxu0 0.0
    %3562 = vmatpush1.msra.mxu0 0.0
    %3563 = vmatprep.subr.mxu0 0.0
    %3564 = vmatpush1.msra.mxu0 0.0
    %3565 = vmatprep.subr.mxu0 0.0
    %3566 = vmatpush1.msra.mxu0 0.0
    %3567 = vmatprep.subr.mxu0 0.0
    %3568 = vmatpush1.msra.mxu0 0.0
    %3569 = vmatprep.subr.mxu0 0.0
    %3570 = vmatpush1.msra.mxu0 0.0
    %3571 = vmatprep.subr.mxu0 0.0
    %3572 = vmatpush1.msra.mxu0 0.0
    %3573 = vmatprep.subr.mxu0 0.0
    %3574 = vmatpush1.msra.mxu0 0.0
    %3575 = vmatprep.subr.mxu0 0.0
    %3576 = vmatpush1.msra.mxu0 0.0
    %3577 = vmatprep.subr.mxu0 0.0
    %3578 = vmatpush1.msra.mxu0 0.0
    %3579 = vmatprep.subr.mxu0 0.0
    %3580 = vmatpush1.msra.mxu0 0.0
    %3581 = vmatprep.subr.mxu0 0.0
    %3582 = vmatpush1.msra.mxu0 0.0
    %3583 = vmatprep.subr.mxu0 0.0
    %3584 = vmatpush1.msra.mxu0 0.0
    %3585 = vmatprep.subr.mxu0 0.0
    %3586 = vmatpush1.msra.mxu0 0.0
    %3587 = vmatprep.subr.mxu0 0.0
    %3588 = vmatpush1.msra.mxu0 0.0
    %3589 = vmatprep.subr.mxu0 0.0
    %3590 = vmatpush1.msra.mxu0 0.0
    %3591 = vmatprep.subr.mxu0 0.0
    %3592 = vmatpush1.msra.mxu0 0.0
    %3593 = vmatprep.subr.mxu0 0.0
    %3594 = vmatpush1.msra.mxu0 0.0
    %3595 = vmatprep.subr.mxu0 0.0
    %3596 = vmatpush1.msra.mxu0 0.0
    %3597 = vmatprep.subr.mxu0 0.0
    %3598 = vmatpush1.msra.mxu0 0.0
    %3599 = vmatprep.subr.mxu0 0.0
    %3600 = vmatpush1.msra.mxu0 0.0
    %3601 = vmatprep.subr.mxu0 0.0
    %3602 = vmatpush1.msra.mxu0 0.0
    %3603 = vmatprep.subr.mxu0 0.0
    %3604 = vmatpush1.msra.mxu0 0.0
    %3605 = vmatprep.mubr.f32.mxu0 0.0
    %3606 = vmatmul.mubr.f32.gmra.mrb[0].mxu0 %v3524
    %v3607 = vpop.f32.mrb[0].mxu0
    %v3608 = vadd.f32 %v3521, %v3607
    %v3609 = vpop.f32.mrb[0].mxu0
    %3610 = vmatprep.mubr.f32.mxu0 0.0
    %3611 = vmatmul.mubr.f32.gmra.mrb[0].mxu0 %v3527
    %v3612 = vpop.f32.mrb[0].mxu0
    %v3613 = vadd.f32 %v3521, %v3612
    %v3614 = vpop.f32.mrb[0].mxu0
    %3615 = vmatprep.mubr.f32.mxu0 0.0
    %3616 = vmatmul.mubr.f32.gmra.mrb[0].mxu0 %v3530
    %v3617 = vpop.f32.mrb[0].mxu0
    %v3618 = vadd.f32 %v3521, %v3617
    %v3619 = vpop.f32.mrb[0].mxu0
    %3620 = vmatprep.mubr.f32.mxu0 0.0
    %3621 = vmatmul.mubr.f32.gmra.mrb[0].mxu0 %v3533
    %v3622 = vpop.f32.mrb[0].mxu0
    %v3623 = vadd.f32 %v3521, %v3622
    %v3624 = vpop.f32.mrb[0].mxu0
    %3625 = vmatprep.mubr.f32.mxu0 0.0
    %3626 = vmatmul.mubr.f32.gmra.mrb[0].mxu0 %v3536
    %v3627 = vpop.f32.mrb[0].mxu0
    %v3628 = vadd.f32 %v3521, %v3627
    %v3629 = vpop.f32.mrb[0].mxu0
    %3630 = vmatprep.mubr.f32.mxu0 0.0
    %3631 = vmatmul.mubr.f32.gmra.mrb[0].mxu0 %v3539
    %v3632 = vpop.f32.mrb[0].mxu0
    %v3633 = vadd.f32 %v3521, %v3632
    %v3634 = vpop.f32.mrb[0].mxu0
    %3635 = vdwg.mxu0
    %v3636 = vmul.f32 %v3608, 0.35355338
    %v3637 = vmul.f32 %v3613, 0.35355338
    %v3638 = vmul.f32 %v3618, 0.35355338
    %v3639 = vmul.f32 %v3623, 0.35355338
    %v3640 = vmul.f32 %v3628, 0.35355338
    %v3641 = vmul.f32 %v3633, 0.35355338
    %s3642 = scalar_lea.vmem %s9, 32
    %v3643 = vld [vmem:[%s3642] sm:$0xff]
    %v3644 = vld [vmem:[%s3642 + $0x8] sm:$0xff]
    %v3645 = vld [vmem:[%s3642 + $0x10] sm:$0xff]
    %v3646 = vld [vmem:[%s3642 + $0x18] sm:$0xff]
    %s3647 = scalar_lea.vmem %s10, 1
    %v3648 = vld [vmem:[%s3647] sm:$0x1]
    %v3650 = vlaneseq
    %v3651 = vshrl.u32 %v3650, 7
    %v3652 = vsub.s32 0, %v3651
    %v3653 = vrot.slane %v3648, %v3652
    %3655 = vmatprep.subr.mxu0 0.0
    %3656 = vmatpush1.msra.mxu0 %v3643
    %3657 = vmatprep.subr.mxu0 0.0
    %3658 = vmatpush1.msra.mxu0 %v3644
    %3659 = vmatprep.subr.mxu0 0.0
    %3660 = vmatpush1.msra.mxu0 %v3645
    %3661 = vmatprep.subr.mxu0 0.0
    %3662 = vmatpush1.msra.mxu0 %v3646
    %3663 = vmatprep.subr.mxu0 0.0
    %3664 = vmatpush1.msra.mxu0 0.0
    %3665 = vmatprep.subr.mxu0 0.0
    %3666 = vmatpush1.msra.mxu0 0.0
    %3667 = vmatprep.subr.mxu0 0.0
    %3668 = vmatpush1.msra.mxu0 0.0
    %3669 = vmatprep.subr.mxu0 0.0
    %3670 = vmatpush1.msra.mxu0 0.0
    %3671 = vmatprep.subr.mxu0 0.0
    %3672 = vmatpush1.msra.mxu0 0.0
    %3673 = vmatprep.subr.mxu0 0.0
    %3674 = vmatpush1.msra.mxu0 0.0
    %3675 = vmatprep.subr.mxu0 0.0
    %3676 = vmatpush1.msra.mxu0 0.0
    %3677 = vmatprep.subr.mxu0 0.0
    %3678 = vmatpush1.msra.mxu0 0.0
    %3679 = vmatprep.subr.mxu0 0.0
    %3680 = vmatpush1.msra.mxu0 0.0
    %3681 = vmatprep.subr.mxu0 0.0
    %3682 = vmatpush1.msra.mxu0 0.0
    %3683 = vmatprep.subr.mxu0 0.0
    %3684 = vmatpush1.msra.mxu0 0.0
    %3685 = vmatprep.subr.mxu0 0.0
    %3686 = vmatpush1.msra.mxu0 0.0
    %3687 = vmatprep.subr.mxu0 0.0
    %3688 = vmatpush1.msra.mxu0 0.0
    %3689 = vmatprep.subr.mxu0 0.0
    %3690 = vmatpush1.msra.mxu0 0.0
    %3691 = vmatprep.subr.mxu0 0.0
    %3692 = vmatpush1.msra.mxu0 0.0
    %3693 = vmatprep.subr.mxu0 0.0
    %3694 = vmatpush1.msra.mxu0 0.0
    %3695 = vmatprep.subr.mxu0 0.0
    %3696 = vmatpush1.msra.mxu0 0.0
    %3697 = vmatprep.subr.mxu0 0.0
    %3698 = vmatpush1.msra.mxu0 0.0
    %3699 = vmatprep.subr.mxu0 0.0
    %3700 = vmatpush1.msra.mxu0 0.0
    %3701 = vmatprep.subr.mxu0 0.0
    %3702 = vmatpush1.msra.mxu0 0.0
    %3703 = vmatprep.subr.mxu0 0.0
    %3704 = vmatpush1.msra.mxu0 0.0
    %3705 = vmatprep.subr.mxu0 0.0
    %3706 = vmatpush1.msra.mxu0 0.0
    %3707 = vmatprep.subr.mxu0 0.0
    %3708 = vmatpush1.msra.mxu0 0.0
    %3709 = vmatprep.subr.mxu0 0.0
    %3710 = vmatpush1.msra.mxu0 0.0
    %3711 = vmatprep.subr.mxu0 0.0
    %3712 = vmatpush1.msra.mxu0 0.0
    %3713 = vmatprep.subr.mxu0 0.0
    %3714 = vmatpush1.msra.mxu0 0.0
    %3715 = vmatprep.subr.mxu0 0.0
    %3716 = vmatpush1.msra.mxu0 0.0
    %3717 = vmatprep.subr.mxu0 0.0
    %3718 = vmatpush1.msra.mxu0 0.0
    %3719 = vmatprep.mubr.f32.mxu0 0.0
    %3720 = vmatmul.mubr.f32.gmra.mrb[0].mxu0 %v3524
    %v3721 = vpop.f32.mrb[0].mxu0
    %v3722 = vadd.f32 %v3653, %v3721
    %v3723 = vpop.f32.mrb[0].mxu0
    %3724 = vmatprep.mubr.f32.mxu0 0.0
    %3725 = vmatmul.mubr.f32.gmra.mrb[0].mxu0 %v3527
    %v3726 = vpop.f32.mrb[0].mxu0
    %v3727 = vadd.f32 %v3653, %v3726
    %v3728 = vpop.f32.mrb[0].mxu0
    %3729 = vmatprep.mubr.f32.mxu0 0.0
    %3730 = vmatmul.mubr.f32.gmra.mrb[0].mxu0 %v3530
    %v3731 = vpop.f32.mrb[0].mxu0
    %v3732 = vadd.f32 %v3653, %v3731
    %v3733 = vpop.f32.mrb[0].mxu0
    %3734 = vmatprep.mubr.f32.mxu0 0.0
    %3735 = vmatmul.mubr.f32.gmra.mrb[0].mxu0 %v3533
    %v3736 = vpop.f32.mrb[0].mxu0
    %v3737 = vadd.f32 %v3653, %v3736
    %v3738 = vpop.f32.mrb[0].mxu0
    %3739 = vmatprep.mubr.f32.mxu0 0.0
    %3740 = vmatmul.mubr.f32.gmra.mrb[0].mxu0 %v3536
    %v3741 = vpop.f32.mrb[0].mxu0
    %v3742 = vadd.f32 %v3653, %v3741
    %v3743 = vpop.f32.mrb[0].mxu0
    %3744 = vmatprep.mubr.f32.mxu0 0.0
    %3745 = vmatmul.mubr.f32.gmra.mrb[0].mxu0 %v3539
    %v3746 = vpop.f32.mrb[0].mxu0
    %v3747 = vadd.f32 %v3653, %v3746
    %v3748 = vpop.f32.mrb[0].mxu0
    %3749 = vdwg.mxu0
    %s3750 = scalar_lea.vmem %s11, 32
    %v3751 = vld [vmem:[%s3750] sm:$0xff]
    %v3752 = vld [vmem:[%s3750 + $0x8] sm:$0xff]
    %v3753 = vld [vmem:[%s3750 + $0x10] sm:$0xff]
    %v3754 = vld [vmem:[%s3750 + $0x18] sm:$0xff]
    %s3755 = scalar_lea.vmem %s12, 1
    %v3756 = vld [vmem:[%s3755] sm:$0x1]
    %v3758 = vlaneseq
    %v3759 = vshrl.u32 %v3758, 7
    %v3760 = vsub.s32 0, %v3759
    %v3761 = vrot.slane %v3756, %v3760
    %3763 = vmatprep.subr.mxu0 0.0
    %3764 = vmatpush1.msra.mxu0 %v3751
    %3765 = vmatprep.subr.mxu0 0.0
    %3766 = vmatpush1.msra.mxu0 %v3752
    %3767 = vmatprep.subr.mxu0 0.0
    %3768 = vmatpush1.msra.mxu0 %v3753
    %3769 = vmatprep.subr.mxu0 0.0
    %3770 = vmatpush1.msra.mxu0 %v3754
    %3771 = vmatprep.subr.mxu0 0.0
    %3772 = vmatpush1.msra.mxu0 0.0
    %3773 = vmatprep.subr.mxu0 0.0
    %3774 = vmatpush1.msra.mxu0 0.0
    %3775 = vmatprep.subr.mxu0 0.0
    %3776 = vmatpush1.msra.mxu0 0.0
    %3777 = vmatprep.subr.mxu0 0.0
    %3778 = vmatpush1.msra.mxu0 0.0
    %3779 = vmatprep.subr.mxu0 0.0
    %3780 = vmatpush1.msra.mxu0 0.0
    %3781 = vmatprep.subr.mxu0 0.0
    %3782 = vmatpush1.msra.mxu0 0.0
    %3783 = vmatprep.subr.mxu0 0.0
    %3784 = vmatpush1.msra.mxu0 0.0
    %3785 = vmatprep.subr.mxu0 0.0
    %3786 = vmatpush1.msra.mxu0 0.0
    %3787 = vmatprep.subr.mxu0 0.0
    %3788 = vmatpush1.msra.mxu0 0.0
    %3789 = vmatprep.subr.mxu0 0.0
    %3790 = vmatpush1.msra.mxu0 0.0
    %3791 = vmatprep.subr.mxu0 0.0
    %3792 = vmatpush1.msra.mxu0 0.0
    %3793 = vmatprep.subr.mxu0 0.0
    %3794 = vmatpush1.msra.mxu0 0.0
    %3795 = vmatprep.subr.mxu0 0.0
    %3796 = vmatpush1.msra.mxu0 0.0
    %3797 = vmatprep.subr.mxu0 0.0
    %3798 = vmatpush1.msra.mxu0 0.0
    %3799 = vmatprep.subr.mxu0 0.0
    %3800 = vmatpush1.msra.mxu0 0.0
    %3801 = vmatprep.subr.mxu0 0.0
    %3802 = vmatpush1.msra.mxu0 0.0
    %3803 = vmatprep.subr.mxu0 0.0
    %3804 = vmatpush1.msra.mxu0 0.0
    %3805 = vmatprep.subr.mxu0 0.0
    %3806 = vmatpush1.msra.mxu0 0.0
    %3807 = vmatprep.subr.mxu0 0.0
    %3808 = vmatpush1.msra.mxu0 0.0
    %3809 = vmatprep.subr.mxu0 0.0
    %3810 = vmatpush1.msra.mxu0 0.0
    %3811 = vmatprep.subr.mxu0 0.0
    %3812 = vmatpush1.msra.mxu0 0.0
    %3813 = vmatprep.subr.mxu0 0.0
    %3814 = vmatpush1.msra.mxu0 0.0
    %3815 = vmatprep.subr.mxu0 0.0
    %3816 = vmatpush1.msra.mxu0 0.0
    %3817 = vmatprep.subr.mxu0 0.0
    %3818 = vmatpush1.msra.mxu0 0.0
    %3819 = vmatprep.subr.mxu0 0.0
    %3820 = vmatpush1.msra.mxu0 0.0
    %3821 = vmatprep.subr.mxu0 0.0
    %3822 = vmatpush1.msra.mxu0 0.0
    %3823 = vmatprep.subr.mxu0 0.0
    %3824 = vmatpush1.msra.mxu0 0.0
    %3825 = vmatprep.subr.mxu0 0.0
    %3826 = vmatpush1.msra.mxu0 0.0
    %3827 = vmatprep.mubr.f32.mxu0 0.0
    %3828 = vmatmul.mubr.f32.gmra.mrb[0].mxu0 %v3524
    %v3829 = vpop.f32.mrb[0].mxu0
    %v3830 = vadd.f32 %v3761, %v3829
    %v3831 = vpop.f32.mrb[0].mxu0
    %3832 = vmatprep.mubr.f32.mxu0 0.0
    %3833 = vmatmul.mubr.f32.gmra.mrb[0].mxu0 %v3527
    %v3834 = vpop.f32.mrb[0].mxu0
    %v3835 = vadd.f32 %v3761, %v3834
    %v3836 = vpop.f32.mrb[0].mxu0
    %3837 = vmatprep.mubr.f32.mxu0 0.0
    %3838 = vmatmul.mubr.f32.gmra.mrb[0].mxu0 %v3530
    %v3839 = vpop.f32.mrb[0].mxu0
    %v3840 = vadd.f32 %v3761, %v3839
    %v3841 = vpop.f32.mrb[0].mxu0
    %3842 = vmatprep.mubr.f32.mxu0 0.0
    %3843 = vmatmul.mubr.f32.gmra.mrb[0].mxu0 %v3533
    %v3844 = vpop.f32.mrb[0].mxu0
    %v3845 = vadd.f32 %v3761, %v3844
    %v3846 = vpop.f32.mrb[0].mxu0
    %3847 = vmatprep.mubr.f32.mxu0 0.0
    %3848 = vmatmul.mubr.f32.gmra.mrb[0].mxu0 %v3536
    %v3849 = vpop.f32.mrb[0].mxu0
    %v3850 = vadd.f32 %v3761, %v3849
    %v3851 = vpop.f32.mrb[0].mxu0
    %3852 = vmatprep.mubr.f32.mxu0 0.0
    %3853 = vmatmul.mubr.f32.gmra.mrb[0].mxu0 %v3539
    %v3854 = vpop.f32.mrb[0].mxu0
    %v3855 = vadd.f32 %v3761, %v3854
    %v3856 = vpop.f32.mrb[0].mxu0
    %3857 = vdwg.mxu0
    %s3858 = scalar_lea.vmem %s13, 32
    %v3859 = vld [vmem:[%s3858] sm:$0xff]
    %v3860 = vld [vmem:[%s3858 + $0x8] sm:$0xff]
    %v3861 = vld [vmem:[%s3858 + $0x10] sm:$0xff]
    %v3862 = vld [vmem:[%s3858 + $0x18] sm:$0xff]
    %v3864 = vsel %vm675, %v3636, 0
    %v3867 = vsel %vm675, %v3637, 0
    %v3870 = vsel %vm675, %v3638, 0
    %v3873 = vsel %vm675, %v3722, 0
    %v3876 = vsel %vm675, %v3727, 0
    %v3879 = vsel %vm675, %v3732, 0
    %3881 = vmatprep.subr.mxu0 0.0
    %3882 = vmatpush1.xpose.msra.mxu0 %v3873
    %3883 = vmatprep.subr.mxu0 0.0
    %3884 = vmatpush1.xpose.msra.mxu0 %v3876
    %3885 = vmatprep.subr.mxu0 0.0
    %3886 = vmatpush1.xpose.msra.mxu0 %v3879
    %3887 = vmatprep.subr.mxu0 0.0
    %3888 = vmatpush1.xpose.msra.mxu0 0.0
    %3889 = vmatprep.subr.mxu0 0.0
    %3890 = vmatpush1.xpose.msra.mxu0 0.0
    %3891 = vmatprep.subr.mxu0 0.0
    %3892 = vmatpush1.xpose.msra.mxu0 0.0
    %3893 = vmatprep.subr.mxu0 0.0
    %3894 = vmatpush1.xpose.msra.mxu0 0.0
    %3895 = vmatprep.subr.mxu0 0.0
    %3896 = vmatpush1.xpose.msra.mxu0 0.0
    %3897 = vmatprep.subr.mxu0 0.0
    %3898 = vmatpush1.xpose.msra.mxu0 0.0
    %3899 = vmatprep.subr.mxu0 0.0
    %3900 = vmatpush1.xpose.msra.mxu0 0.0
    %3901 = vmatprep.subr.mxu0 0.0
    %3902 = vmatpush1.xpose.msra.mxu0 0.0
    %3903 = vmatprep.subr.mxu0 0.0
    %3904 = vmatpush1.xpose.msra.mxu0 0.0
    %3905 = vmatprep.subr.mxu0 0.0
    %3906 = vmatpush1.xpose.msra.mxu0 0.0
    %3907 = vmatprep.subr.mxu0 0.0
    %3908 = vmatpush1.xpose.msra.mxu0 0.0
    %3909 = vmatprep.subr.mxu0 0.0
    %3910 = vmatpush1.xpose.msra.mxu0 0.0
    %3911 = vmatprep.subr.mxu0 0.0
    %3912 = vmatpush1.xpose.msra.mxu0 0.0
    %3913 = vmatprep.subr.mxu0 0.0
    %3914 = vmatpush1.xpose.msra.mxu0 0.0
    %3915 = vmatprep.subr.mxu0 0.0
    %3916 = vmatpush1.xpose.msra.mxu0 0.0
    %3917 = vmatprep.subr.mxu0 0.0
    %3918 = vmatpush1.xpose.msra.mxu0 0.0
    %3919 = vmatprep.subr.mxu0 0.0
    %3920 = vmatpush1.xpose.msra.mxu0 0.0
    %3921 = vmatprep.subr.mxu0 0.0
    %3922 = vmatpush1.xpose.msra.mxu0 0.0
    %3923 = vmatprep.subr.mxu0 0.0
    %3924 = vmatpush1.xpose.msra.mxu0 0.0
    %3925 = vmatprep.subr.mxu0 0.0
    %3926 = vmatpush1.xpose.msra.mxu0 0.0
    %3927 = vmatprep.subr.mxu0 0.0
    %3928 = vmatpush1.xpose.msra.mxu0 0.0
    %3929 = vmatprep.subr.mxu0 0.0
    %3930 = vmatpush1.xpose.msra.mxu0 0.0
    %3931 = vmatprep.subr.mxu0 0.0
    %3932 = vmatpush1.xpose.msra.mxu0 0.0
    %3933 = vmatprep.subr.mxu0 0.0
    %3934 = vmatpush1.xpose.msra.mxu0 0.0
    %3935 = vmatprep.subr.mxu0 0.0
    %3936 = vmatpush1.xpose.msra.mxu0 0.0
    %3937 = vmatprep.subr.mxu0 0.0
    %3938 = vmatpush1.xpose.msra.mxu0 0.0
    %3939 = vmatprep.subr.mxu0 0.0
    %3940 = vmatpush1.xpose.msra.mxu0 0.0
    %3941 = vmatprep.subr.mxu0 0.0
    %3942 = vmatpush1.xpose.msra.mxu0 0.0
    %3943 = vmatprep.subr.mxu0 0.0
    %3944 = vmatpush1.xpose.msra.mxu0 0.0
    %3945 = vmatprep.mubr.f32.mxu0 0.0
    %3946 = vmatmul.mubr.f32.gmra.mrb[0].mxu0 %v3864
    %v3947 = vpop.f32.mrb[0].mxu0
    %v3948 = vadd.f32 0.0, %v3947
    %v3949 = vpop.f32.mrb[0].mxu0
    %3950 = vmatprep.mubr.f32.mxu0 0.0
    %3951 = vmatmul.mubr.f32.gmra.mrb[0].mxu0 %v3867
    %v3952 = vpop.f32.mrb[0].mxu0
    %v3953 = vadd.f32 0.0, %v3952
    %v3954 = vpop.f32.mrb[0].mxu0
    %3955 = vmatprep.mubr.f32.mxu0 0.0
    %3956 = vmatmul.mubr.f32.gmra.mrb[0].mxu0 %v3870
    %v3957 = vpop.f32.mrb[0].mxu0
    %v3958 = vadd.f32 0.0, %v3957
    %v3959 = vpop.f32.mrb[0].mxu0
    %3960 = vdwg.mxu0
    %v3962 = vsel %vm675, %v3639, 0
    %v3965 = vsel %vm675, %v3640, 0
    %v3968 = vsel %vm675, %v3641, 0
    %v3971 = vsel %vm675, %v3737, 0
    %v3974 = vsel %vm675, %v3742, 0
    %v3977 = vsel %vm675, %v3747, 0
    %3979 = vmatprep.subr.mxu0 0.0
    %3980 = vmatpush1.xpose.msra.mxu0 %v3971
    %3981 = vmatprep.subr.mxu0 0.0
    %3982 = vmatpush1.xpose.msra.mxu0 %v3974
    %3983 = vmatprep.subr.mxu0 0.0
    %3984 = vmatpush1.xpose.msra.mxu0 %v3977
    %3985 = vmatprep.subr.mxu0 0.0
    %3986 = vmatpush1.xpose.msra.mxu0 0.0
    %3987 = vmatprep.subr.mxu0 0.0
    %3988 = vmatpush1.xpose.msra.mxu0 0.0
    %3989 = vmatprep.subr.mxu0 0.0
    %3990 = vmatpush1.xpose.msra.mxu0 0.0
    %3991 = vmatprep.subr.mxu0 0.0
    %3992 = vmatpush1.xpose.msra.mxu0 0.0
    %3993 = vmatprep.subr.mxu0 0.0
    %3994 = vmatpush1.xpose.msra.mxu0 0.0
    %3995 = vmatprep.subr.mxu0 0.0
    %3996 = vmatpush1.xpose.msra.mxu0 0.0
    %3997 = vmatprep.subr.mxu0 0.0
    %3998 = vmatpush1.xpose.msra.mxu0 0.0
    %3999 = vmatprep.subr.mxu0 0.0
    %4000 = vmatpush1.xpose.msra.mxu0 0.0
    %4001 = vmatprep.subr.mxu0 0.0
    %4002 = vmatpush1.xpose.msra.mxu0 0.0
    %4003 = vmatprep.subr.mxu0 0.0
    %4004 = vmatpush1.xpose.msra.mxu0 0.0
    %4005 = vmatprep.subr.mxu0 0.0
    %4006 = vmatpush1.xpose.msra.mxu0 0.0
    %4007 = vmatprep.subr.mxu0 0.0
    %4008 = vmatpush1.xpose.msra.mxu0 0.0
    %4009 = vmatprep.subr.mxu0 0.0
    %4010 = vmatpush1.xpose.msra.mxu0 0.0
    %4011 = vmatprep.subr.mxu0 0.0
    %4012 = vmatpush1.xpose.msra.mxu0 0.0
    %4013 = vmatprep.subr.mxu0 0.0
    %4014 = vmatpush1.xpose.msra.mxu0 0.0
    %4015 = vmatprep.subr.mxu0 0.0
    %4016 = vmatpush1.xpose.msra.mxu0 0.0
    %4017 = vmatprep.subr.mxu0 0.0
    %4018 = vmatpush1.xpose.msra.mxu0 0.0
    %4019 = vmatprep.subr.mxu0 0.0
    %4020 = vmatpush1.xpose.msra.mxu0 0.0
    %4021 = vmatprep.subr.mxu0 0.0
    %4022 = vmatpush1.xpose.msra.mxu0 0.0
    %4023 = vmatprep.subr.mxu0 0.0
    %4024 = vmatpush1.xpose.msra.mxu0 0.0
    %4025 = vmatprep.subr.mxu0 0.0
    %4026 = vmatpush1.xpose.msra.mxu0 0.0
    %4027 = vmatprep.subr.mxu0 0.0
    %4028 = vmatpush1.xpose.msra.mxu0 0.0
    %4029 = vmatprep.subr.mxu0 0.0
    %4030 = vmatpush1.xpose.msra.mxu0 0.0
    %4031 = vmatprep.subr.mxu0 0.0
    %4032 = vmatpush1.xpose.msra.mxu0 0.0
    %4033 = vmatprep.subr.mxu0 0.0
    %4034 = vmatpush1.xpose.msra.mxu0 0.0
    %4035 = vmatprep.subr.mxu0 0.0
    %4036 = vmatpush1.xpose.msra.mxu0 0.0
    %4037 = vmatprep.subr.mxu0 0.0
    %4038 = vmatpush1.xpose.msra.mxu0 0.0
    %4039 = vmatprep.subr.mxu0 0.0
    %4040 = vmatpush1.xpose.msra.mxu0 0.0
    %4041 = vmatprep.subr.mxu0 0.0
    %4042 = vmatpush1.xpose.msra.mxu0 0.0
    %4043 = vmatprep.mubr.f32.mxu0 0.0
    %4044 = vmatmul.mubr.f32.gmra.mrb[0].mxu0 %v3962
    %v4045 = vpop.f32.mrb[0].mxu0
    %v4046 = vadd.f32 0.0, %v4045
    %v4047 = vpop.f32.mrb[0].mxu0
    %4048 = vmatprep.mubr.f32.mxu0 0.0
    %4049 = vmatmul.mubr.f32.gmra.mrb[0].mxu0 %v3965
    %v4050 = vpop.f32.mrb[0].mxu0
    %v4051 = vadd.f32 0.0, %v4050
    %v4052 = vpop.f32.mrb[0].mxu0
    %4053 = vmatprep.mubr.f32.mxu0 0.0
    %4054 = vmatmul.mubr.f32.gmra.mrb[0].mxu0 %v3968
    %v4055 = vpop.f32.mrb[0].mxu0
    %v4056 = vadd.f32 0.0, %v4055
    %v4057 = vpop.f32.mrb[0].mxu0
    %4058 = vdwg.mxu0
    %v4059 = vsel %vm223, %v3948, -1e+30
    %v4060 = vsel %vm223, %v3953, -1e+30
    %v4061 = vsel %vm223, %v3958, -1e+30
    %v4062 = vsel %vm223, %v4046, -1e+30
    %v4063 = vsel %vm223, %v4051, -1e+30
    %v4064 = vsel %vm223, %v4056, -1e+30
    %v4065 = vsel %vm878, %v4059, -inf
    %4066 = vmax.xlane.f32.xlu0 %v4065
    %v4067 = vpop.xlane.xlu0 %4066
    %v4068 = vsel %vm878, %v4060, -inf
    %4069 = vmax.xlane.f32.xlu0 %v4068
    %v4070 = vpop.xlane.xlu0 %4069
    %v4071 = vsel %vm878, %v4061, -inf
    %4072 = vmax.xlane.f32.xlu0 %v4071
    %v4073 = vpop.xlane.xlu0 %4072
    %v4074 = vsel %vm878, %v4062, -inf
    %4075 = vmax.xlane.f32.xlu0 %v4074
    %v4076 = vpop.xlane.xlu0 %4075
    %v4077 = vsel %vm878, %v4063, -inf
    %4078 = vmax.xlane.f32.xlu0 %v4077
    %v4079 = vpop.xlane.xlu0 %4078
    %v4080 = vsel %vm878, %v4064, -inf
    %4081 = vmax.xlane.f32.xlu0 %v4080
    %v4082 = vpop.xlane.xlu0 %4081
    %v4083 = vsub.f32 %v4059, %v4067
    %v4084 = vsub.f32 %v4060, %v4070
    %v4085 = vsub.f32 %v4061, %v4073
    %v4086 = vsub.f32 %v4062, %v4076
    %v4087 = vsub.f32 %v4063, %v4079
    %v4088 = vsub.f32 %v4064, %v4082
    %v4089 = vmul.f32 %v4083, 1.442695
    %v4090 = vpow.pop %v4089
    %v4091 = vmul.f32 %v4084, 1.442695
    %v4092 = vpow.pop %v4091
    %v4093 = vmul.f32 %v4085, 1.442695
    %v4094 = vpow.pop %v4093
    %v4095 = vmul.f32 %v4086, 1.442695
    %v4096 = vpow.pop %v4095
    %v4097 = vmul.f32 %v4087, 1.442695
    %v4098 = vpow.pop %v4097
    %v4099 = vmul.f32 %v4088, 1.442695
    %v4100 = vpow.pop %v4099
    %v4101 = vsel %vm878, %v4090, 0.0
    %4102 = vadd.xlane.f32.xlu0 %v4101
    %v4103 = vpop.xlane.xlu0 %4102
    %v4104 = vsel %vm878, %v4092, 0.0
    %4105 = vadd.xlane.f32.xlu0 %v4104
    %v4106 = vpop.xlane.xlu0 %4105
    %v4107 = vsel %vm878, %v4094, 0.0
    %4108 = vadd.xlane.f32.xlu0 %v4107
    %v4109 = vpop.xlane.xlu0 %4108
    %v4110 = vsel %vm878, %v4096, 0.0
    %4111 = vadd.xlane.f32.xlu0 %v4110
    %v4112 = vpop.xlane.xlu0 %4111
    %v4113 = vsel %vm878, %v4098, 0.0
    %4114 = vadd.xlane.f32.xlu0 %v4113
    %v4115 = vpop.xlane.xlu0 %4114
    %v4116 = vsel %vm878, %v4100, 0.0
    %4117 = vadd.xlane.f32.xlu0 %v4116
    %v4118 = vpop.xlane.xlu0 %4117
    %v4119 = vrcp.pop %v4103
    %v4120 = vrcp.pop %v4106
    %v4121 = vrcp.pop %v4109
    %v4122 = vrcp.pop %v4112
    %v4123 = vrcp.pop %v4115
    %v4124 = vrcp.pop %v4118
    %v4125 = vmul.f32 %v4090, %v4119
    %v4126 = vmul.f32 %v4092, %v4120
    %v4127 = vmul.f32 %v4094, %v4121
    %v4128 = vmul.f32 %v4096, %v4122
    %v4129 = vmul.f32 %v4098, %v4123
    %v4130 = vmul.f32 %v4100, %v4124
    %v4132 = vsel %vm878, %v4125, 0
    %v4135 = vsel %vm878, %v4126, 0
    %v4138 = vsel %vm878, %v4127, 0
    %4140 = vmatprep.subr.mxu0 0.0
    %4141 = vmatpush1.msra.mxu0 %v3830
    %4142 = vmatprep.subr.mxu0 0.0
    %4143 = vmatpush1.msra.mxu0 %v3835
    %4144 = vmatprep.subr.mxu0 0.0
    %4145 = vmatpush1.msra.mxu0 %v3840
    %4146 = vmatprep.subr.mxu0 0.0
    %4147 = vmatpush1.msra.mxu0 0.0
    %4148 = vmatprep.subr.mxu0 0.0
    %4149 = vmatpush1.msra.mxu0 0.0
    %4150 = vmatprep.subr.mxu0 0.0
    %4151 = vmatpush1.msra.mxu0 0.0
    %4152 = vmatprep.subr.mxu0 0.0
    %4153 = vmatpush1.msra.mxu0 0.0
    %4154 = vmatprep.subr.mxu0 0.0
    %4155 = vmatpush1.msra.mxu0 0.0
    %4156 = vmatprep.subr.mxu0 0.0
    %4157 = vmatpush1.msra.mxu0 0.0
    %4158 = vmatprep.subr.mxu0 0.0
    %4159 = vmatpush1.msra.mxu0 0.0
    %4160 = vmatprep.subr.mxu0 0.0
    %4161 = vmatpush1.msra.mxu0 0.0
    %4162 = vmatprep.subr.mxu0 0.0
    %4163 = vmatpush1.msra.mxu0 0.0
    %4164 = vmatprep.subr.mxu0 0.0
    %4165 = vmatpush1.msra.mxu0 0.0
    %4166 = vmatprep.subr.mxu0 0.0
    %4167 = vmatpush1.msra.mxu0 0.0
    %4168 = vmatprep.subr.mxu0 0.0
    %4169 = vmatpush1.msra.mxu0 0.0
    %4170 = vmatprep.subr.mxu0 0.0
    %4171 = vmatpush1.msra.mxu0 0.0
    %4172 = vmatprep.subr.mxu0 0.0
    %4173 = vmatpush1.msra.mxu0 0.0
    %4174 = vmatprep.subr.mxu0 0.0
    %4175 = vmatpush1.msra.mxu0 0.0
    %4176 = vmatprep.subr.mxu0 0.0
    %4177 = vmatpush1.msra.mxu0 0.0
    %4178 = vmatprep.subr.mxu0 0.0
    %4179 = vmatpush1.msra.mxu0 0.0
    %4180 = vmatprep.subr.mxu0 0.0
    %4181 = vmatpush1.msra.mxu0 0.0
    %4182 = vmatprep.subr.mxu0 0.0
    %4183 = vmatpush1.msra.mxu0 0.0
    %4184 = vmatprep.subr.mxu0 0.0
    %4185 = vmatpush1.msra.mxu0 0.0
    %4186 = vmatprep.subr.mxu0 0.0
    %4187 = vmatpush1.msra.mxu0 0.0
    %4188 = vmatprep.subr.mxu0 0.0
    %4189 = vmatpush1.msra.mxu0 0.0
    %4190 = vmatprep.subr.mxu0 0.0
    %4191 = vmatpush1.msra.mxu0 0.0
    %4192 = vmatprep.subr.mxu0 0.0
    %4193 = vmatpush1.msra.mxu0 0.0
    %4194 = vmatprep.subr.mxu0 0.0
    %4195 = vmatpush1.msra.mxu0 0.0
    %4196 = vmatprep.subr.mxu0 0.0
    %4197 = vmatpush1.msra.mxu0 0.0
    %4198 = vmatprep.subr.mxu0 0.0
    %4199 = vmatpush1.msra.mxu0 0.0
    %4200 = vmatprep.subr.mxu0 0.0
    %4201 = vmatpush1.msra.mxu0 0.0
    %4202 = vmatprep.subr.mxu0 0.0
    %4203 = vmatpush1.msra.mxu0 0.0
    %4204 = vmatprep.mubr.f32.mxu0 0.0
    %4205 = vmatmul.mubr.f32.gmra.mrb[0].mxu0 %v4132
    %v4206 = vpop.f32.mrb[0].mxu0
    %v4207 = vadd.f32 0.0, %v4206
    %v4208 = vpop.f32.mrb[0].mxu0
    %4209 = vmatprep.mubr.f32.mxu0 0.0
    %4210 = vmatmul.mubr.f32.gmra.mrb[0].mxu0 %v4135
    %v4211 = vpop.f32.mrb[0].mxu0
    %v4212 = vadd.f32 0.0, %v4211
    %v4213 = vpop.f32.mrb[0].mxu0
    %4214 = vmatprep.mubr.f32.mxu0 0.0
    %4215 = vmatmul.mubr.f32.gmra.mrb[0].mxu0 %v4138
    %v4216 = vpop.f32.mrb[0].mxu0
    %v4217 = vadd.f32 0.0, %v4216
    %v4218 = vpop.f32.mrb[0].mxu0
    %4219 = vdwg.mxu0
    %v4221 = vsel %vm878, %v4128, 0
    %v4224 = vsel %vm878, %v4129, 0
    %v4227 = vsel %vm878, %v4130, 0
    %4229 = vmatprep.subr.mxu0 0.0
    %4230 = vmatpush1.msra.mxu0 %v3845
    %4231 = vmatprep.subr.mxu0 0.0
    %4232 = vmatpush1.msra.mxu0 %v3850
    %4233 = vmatprep.subr.mxu0 0.0
    %4234 = vmatpush1.msra.mxu0 %v3855
    %4235 = vmatprep.subr.mxu0 0.0
    %4236 = vmatpush1.msra.mxu0 0.0
    %4237 = vmatprep.subr.mxu0 0.0
    %4238 = vmatpush1.msra.mxu0 0.0
    %4239 = vmatprep.subr.mxu0 0.0
    %4240 = vmatpush1.msra.mxu0 0.0
    %4241 = vmatprep.subr.mxu0 0.0
    %4242 = vmatpush1.msra.mxu0 0.0
    %4243 = vmatprep.subr.mxu0 0.0
    %4244 = vmatpush1.msra.mxu0 0.0
    %4245 = vmatprep.subr.mxu0 0.0
    %4246 = vmatpush1.msra.mxu0 0.0
    %4247 = vmatprep.subr.mxu0 0.0
    %4248 = vmatpush1.msra.mxu0 0.0
    %4249 = vmatprep.subr.mxu0 0.0
    %4250 = vmatpush1.msra.mxu0 0.0
    %4251 = vmatprep.subr.mxu0 0.0
    %4252 = vmatpush1.msra.mxu0 0.0
    %4253 = vmatprep.subr.mxu0 0.0
    %4254 = vmatpush1.msra.mxu0 0.0
    %4255 = vmatprep.subr.mxu0 0.0
    %4256 = vmatpush1.msra.mxu0 0.0
    %4257 = vmatprep.subr.mxu0 0.0
    %4258 = vmatpush1.msra.mxu0 0.0
    %4259 = vmatprep.subr.mxu0 0.0
    %4260 = vmatpush1.msra.mxu0 0.0
    %4261 = vmatprep.subr.mxu0 0.0
    %4262 = vmatpush1.msra.mxu0 0.0
    %4263 = vmatprep.subr.mxu0 0.0
    %4264 = vmatpush1.msra.mxu0 0.0
    %4265 = vmatprep.subr.mxu0 0.0
    %4266 = vmatpush1.msra.mxu0 0.0
    %4267 = vmatprep.subr.mxu0 0.0
    %4268 = vmatpush1.msra.mxu0 0.0
    %4269 = vmatprep.subr.mxu0 0.0
    %4270 = vmatpush1.msra.mxu0 0.0
    %4271 = vmatprep.subr.mxu0 0.0
    %4272 = vmatpush1.msra.mxu0 0.0
    %4273 = vmatprep.subr.mxu0 0.0
    %4274 = vmatpush1.msra.mxu0 0.0
    %4275 = vmatprep.subr.mxu0 0.0
    %4276 = vmatpush1.msra.mxu0 0.0
    %4277 = vmatprep.subr.mxu0 0.0
    %4278 = vmatpush1.msra.mxu0 0.0
    %4279 = vmatprep.subr.mxu0 0.0
    %4280 = vmatpush1.msra.mxu0 0.0
    %4281 = vmatprep.subr.mxu0 0.0
    %4282 = vmatpush1.msra.mxu0 0.0
    %4283 = vmatprep.subr.mxu0 0.0
    %4284 = vmatpush1.msra.mxu0 0.0
    %4285 = vmatprep.subr.mxu0 0.0
    %4286 = vmatpush1.msra.mxu0 0.0
    %4287 = vmatprep.subr.mxu0 0.0
    %4288 = vmatpush1.msra.mxu0 0.0
    %4289 = vmatprep.subr.mxu0 0.0
    %4290 = vmatpush1.msra.mxu0 0.0
    %4291 = vmatprep.subr.mxu0 0.0
    %4292 = vmatpush1.msra.mxu0 0.0
    %4293 = vmatprep.mubr.f32.mxu0 0.0
    %4294 = vmatmul.mubr.f32.gmra.mrb[0].mxu0 %v4221
    %v4295 = vpop.f32.mrb[0].mxu0
    %v4296 = vadd.f32 0.0, %v4295
    %v4297 = vpop.f32.mrb[0].mxu0
    %4298 = vmatprep.mubr.f32.mxu0 0.0
    %4299 = vmatmul.mubr.f32.gmra.mrb[0].mxu0 %v4224
    %v4300 = vpop.f32.mrb[0].mxu0
    %v4301 = vadd.f32 0.0, %v4300
    %v4302 = vpop.f32.mrb[0].mxu0
    %4303 = vmatprep.mubr.f32.mxu0 0.0
    %4304 = vmatmul.mubr.f32.gmra.mrb[0].mxu0 %v4227
    %v4305 = vpop.f32.mrb[0].mxu0
    %v4306 = vadd.f32 0.0, %v4305
    %v4307 = vpop.f32.mrb[0].mxu0
    %4308 = vdwg.mxu0
    %4309 = vrot.lane.b32.xlu0 %v3636, 120
    %v4310 = vpop.permute.xlu0 %4309
    %4311 = vrot.lane.b32.xlu0 %v3637, 120
    %v4312 = vpop.permute.xlu0 %4311
    %4313 = vrot.lane.b32.xlu0 %v3638, 120
    %v4314 = vpop.permute.xlu0 %4313
    %4315 = vrot.lane.b32.xlu0 %v3722, 120
    %v4316 = vpop.permute.xlu0 %4315
    %4317 = vrot.lane.b32.xlu0 %v3727, 120
    %v4318 = vpop.permute.xlu0 %4317
    %4319 = vrot.lane.b32.xlu0 %v3732, 120
    %v4320 = vpop.permute.xlu0 %4319
    %v4321 = vsel %vm675, %v4310, 0
    %v4323 = vsel %vm675, %v4312, 0
    %v4325 = vsel %vm675, %v4314, 0
    %v4327 = vsel %vm675, %v4316, 0
    %v4329 = vsel %vm675, %v4318, 0
    %v4331 = vsel %vm675, %v4320, 0
    %4333 = vmatprep.subr.mxu0 0.0
    %4334 = vmatpush1.xpose.msra.mxu0 %v4327
    %4335 = vmatprep.subr.mxu0 0.0
    %4336 = vmatpush1.xpose.msra.mxu0 %v4329
    %4337 = vmatprep.subr.mxu0 0.0
    %4338 = vmatpush1.xpose.msra.mxu0 %v4331
    %4339 = vmatprep.subr.mxu0 0.0
    %4340 = vmatpush1.xpose.msra.mxu0 0.0
    %4341 = vmatprep.subr.mxu0 0.0
    %4342 = vmatpush1.xpose.msra.mxu0 0.0
    %4343 = vmatprep.subr.mxu0 0.0
    %4344 = vmatpush1.xpose.msra.mxu0 0.0
    %4345 = vmatprep.subr.mxu0 0.0
    %4346 = vmatpush1.xpose.msra.mxu0 0.0
    %4347 = vmatprep.subr.mxu0 0.0
    %4348 = vmatpush1.xpose.msra.mxu0 0.0
    %4349 = vmatprep.subr.mxu0 0.0
    %4350 = vmatpush1.xpose.msra.mxu0 0.0
    %4351 = vmatprep.subr.mxu0 0.0
    %4352 = vmatpush1.xpose.msra.mxu0 0.0
    %4353 = vmatprep.subr.mxu0 0.0
    %4354 = vmatpush1.xpose.msra.mxu0 0.0
    %4355 = vmatprep.subr.mxu0 0.0
    %4356 = vmatpush1.xpose.msra.mxu0 0.0
    %4357 = vmatprep.subr.mxu0 0.0
    %4358 = vmatpush1.xpose.msra.mxu0 0.0
    %4359 = vmatprep.subr.mxu0 0.0
    %4360 = vmatpush1.xpose.msra.mxu0 0.0
    %4361 = vmatprep.subr.mxu0 0.0
    %4362 = vmatpush1.xpose.msra.mxu0 0.0
    %4363 = vmatprep.subr.mxu0 0.0
    %4364 = vmatpush1.xpose.msra.mxu0 0.0
    %4365 = vmatprep.subr.mxu0 0.0
    %4366 = vmatpush1.xpose.msra.mxu0 0.0
    %4367 = vmatprep.subr.mxu0 0.0
    %4368 = vmatpush1.xpose.msra.mxu0 0.0
    %4369 = vmatprep.subr.mxu0 0.0
    %4370 = vmatpush1.xpose.msra.mxu0 0.0
    %4371 = vmatprep.subr.mxu0 0.0
    %4372 = vmatpush1.xpose.msra.mxu0 0.0
    %4373 = vmatprep.subr.mxu0 0.0
    %4374 = vmatpush1.xpose.msra.mxu0 0.0
    %4375 = vmatprep.subr.mxu0 0.0
    %4376 = vmatpush1.xpose.msra.mxu0 0.0
    %4377 = vmatprep.subr.mxu0 0.0
    %4378 = vmatpush1.xpose.msra.mxu0 0.0
    %4379 = vmatprep.subr.mxu0 0.0
    %4380 = vmatpush1.xpose.msra.mxu0 0.0
    %4381 = vmatprep.subr.mxu0 0.0
    %4382 = vmatpush1.xpose.msra.mxu0 0.0
    %4383 = vmatprep.subr.mxu0 0.0
    %4384 = vmatpush1.xpose.msra.mxu0 0.0
    %4385 = vmatprep.subr.mxu0 0.0
    %4386 = vmatpush1.xpose.msra.mxu0 0.0
    %4387 = vmatprep.subr.mxu0 0.0
    %4388 = vmatpush1.xpose.msra.mxu0 0.0
    %4389 = vmatprep.subr.mxu0 0.0
    %4390 = vmatpush1.xpose.msra.mxu0 0.0
    %4391 = vmatprep.subr.mxu0 0.0
    %4392 = vmatpush1.xpose.msra.mxu0 0.0
    %4393 = vmatprep.subr.mxu0 0.0
    %4394 = vmatpush1.xpose.msra.mxu0 0.0
    %4395 = vmatprep.subr.mxu0 0.0
    %4396 = vmatpush1.xpose.msra.mxu0 0.0
    %4397 = vmatprep.mubr.f32.mxu0 0.0
    %4398 = vmatmul.mubr.f32.gmra.mrb[0].mxu0 %v4321
    %v4399 = vpop.f32.mrb[0].mxu0
    %v4400 = vadd.f32 0.0, %v4399
    %v4401 = vpop.f32.mrb[0].mxu0
    %4402 = vmatprep.mubr.f32.mxu0 0.0
    %4403 = vmatmul.mubr.f32.gmra.mrb[0].mxu0 %v4323
    %v4404 = vpop.f32.mrb[0].mxu0
    %v4405 = vadd.f32 0.0, %v4404
    %v4406 = vpop.f32.mrb[0].mxu0
    %4407 = vmatprep.mubr.f32.mxu0 0.0
    %4408 = vmatmul.mubr.f32.gmra.mrb[0].mxu0 %v4325
    %v4409 = vpop.f32.mrb[0].mxu0
    %v4410 = vadd.f32 0.0, %v4409
    %v4411 = vpop.f32.mrb[0].mxu0
    %4412 = vdwg.mxu0
    %4413 = vrot.lane.b32.xlu0 %v3639, 120
    %v4414 = vpop.permute.xlu0 %4413
    %4415 = vrot.lane.b32.xlu0 %v3640, 120
    %v4416 = vpop.permute.xlu0 %4415
    %4417 = vrot.lane.b32.xlu0 %v3641, 120
    %v4418 = vpop.permute.xlu0 %4417
    %4419 = vrot.lane.b32.xlu0 %v3737, 120
    %v4420 = vpop.permute.xlu0 %4419
    %4421 = vrot.lane.b32.xlu0 %v3742, 120
    %v4422 = vpop.permute.xlu0 %4421
    %4423 = vrot.lane.b32.xlu0 %v3747, 120
    %v4424 = vpop.permute.xlu0 %4423
    %v4425 = vsel %vm675, %v4414, 0
    %v4427 = vsel %vm675, %v4416, 0
    %v4429 = vsel %vm675, %v4418, 0
    %v4431 = vsel %vm675, %v4420, 0
    %v4433 = vsel %vm675, %v4422, 0
    %v4435 = vsel %vm675, %v4424, 0
    %4437 = vmatprep.subr.mxu0 0.0
    %4438 = vmatpush1.xpose.msra.mxu0 %v4431
    %4439 = vmatprep.subr.mxu0 0.0
    %4440 = vmatpush1.xpose.msra.mxu0 %v4433
    %4441 = vmatprep.subr.mxu0 0.0
    %4442 = vmatpush1.xpose.msra.mxu0 %v4435
    %4443 = vmatprep.subr.mxu0 0.0
    %4444 = vmatpush1.xpose.msra.mxu0 0.0
    %4445 = vmatprep.subr.mxu0 0.0
    %4446 = vmatpush1.xpose.msra.mxu0 0.0
    %4447 = vmatprep.subr.mxu0 0.0
    %4448 = vmatpush1.xpose.msra.mxu0 0.0
    %4449 = vmatprep.subr.mxu0 0.0
    %4450 = vmatpush1.xpose.msra.mxu0 0.0
    %4451 = vmatprep.subr.mxu0 0.0
    %4452 = vmatpush1.xpose.msra.mxu0 0.0
    %4453 = vmatprep.subr.mxu0 0.0
    %4454 = vmatpush1.xpose.msra.mxu0 0.0
    %4455 = vmatprep.subr.mxu0 0.0
    %4456 = vmatpush1.xpose.msra.mxu0 0.0
    %4457 = vmatprep.subr.mxu0 0.0
    %4458 = vmatpush1.xpose.msra.mxu0 0.0
    %4459 = vmatprep.subr.mxu0 0.0
    %4460 = vmatpush1.xpose.msra.mxu0 0.0
    %4461 = vmatprep.subr.mxu0 0.0
    %4462 = vmatpush1.xpose.msra.mxu0 0.0
    %4463 = vmatprep.subr.mxu0 0.0
    %4464 = vmatpush1.xpose.msra.mxu0 0.0
    %4465 = vmatprep.subr.mxu0 0.0
    %4466 = vmatpush1.xpose.msra.mxu0 0.0
    %4467 = vmatprep.subr.mxu0 0.0
    %4468 = vmatpush1.xpose.msra.mxu0 0.0
    %4469 = vmatprep.subr.mxu0 0.0
    %4470 = vmatpush1.xpose.msra.mxu0 0.0
    %4471 = vmatprep.subr.mxu0 0.0
    %4472 = vmatpush1.xpose.msra.mxu0 0.0
    %4473 = vmatprep.subr.mxu0 0.0
    %4474 = vmatpush1.xpose.msra.mxu0 0.0
    %4475 = vmatprep.subr.mxu0 0.0
    %4476 = vmatpush1.xpose.msra.mxu0 0.0
    %4477 = vmatprep.subr.mxu0 0.0
    %4478 = vmatpush1.xpose.msra.mxu0 0.0
    %4479 = vmatprep.subr.mxu0 0.0
    %4480 = vmatpush1.xpose.msra.mxu0 0.0
    %4481 = vmatprep.subr.mxu0 0.0
    %4482 = vmatpush1.xpose.msra.mxu0 0.0
    %4483 = vmatprep.subr.mxu0 0.0
    %4484 = vmatpush1.xpose.msra.mxu0 0.0
    %4485 = vmatprep.subr.mxu0 0.0
    %4486 = vmatpush1.xpose.msra.mxu0 0.0
    %4487 = vmatprep.subr.mxu0 0.0
    %4488 = vmatpush1.xpose.msra.mxu0 0.0
    %4489 = vmatprep.subr.mxu0 0.0
    %4490 = vmatpush1.xpose.msra.mxu0 0.0
    %4491 = vmatprep.subr.mxu0 0.0
    %4492 = vmatpush1.xpose.msra.mxu0 0.0
    %4493 = vmatprep.subr.mxu0 0.0
    %4494 = vmatpush1.xpose.msra.mxu0 0.0
    %4495 = vmatprep.subr.mxu0 0.0
    %4496 = vmatpush1.xpose.msra.mxu0 0.0
    %4497 = vmatprep.subr.mxu0 0.0
    %4498 = vmatpush1.xpose.msra.mxu0 0.0
    %4499 = vmatprep.subr.mxu0 0.0
    %4500 = vmatpush1.xpose.msra.mxu0 0.0
    %4501 = vmatprep.mubr.f32.mxu0 0.0
    %4502 = vmatmul.mubr.f32.gmra.mrb[0].mxu0 %v4425
    %v4503 = vpop.f32.mrb[0].mxu0
    %v4504 = vadd.f32 0.0, %v4503
    %v4505 = vpop.f32.mrb[0].mxu0
    %4506 = vmatprep.mubr.f32.mxu0 0.0
    %4507 = vmatmul.mubr.f32.gmra.mrb[0].mxu0 %v4427
    %v4508 = vpop.f32.mrb[0].mxu0
    %v4509 = vadd.f32 0.0, %v4508
    %v4510 = vpop.f32.mrb[0].mxu0
    %4511 = vmatprep.mubr.f32.mxu0 0.0
    %4512 = vmatmul.mubr.f32.gmra.mrb[0].mxu0 %v4429
    %v4513 = vpop.f32.mrb[0].mxu0
    %v4514 = vadd.f32 0.0, %v4513
    %v4515 = vpop.f32.mrb[0].mxu0
    %4516 = vdwg.mxu0
    %v4517 = vsel %vm223, %v4400, -1e+30
    %v4518 = vsel %vm223, %v4405, -1e+30
    %v4519 = vsel %vm223, %v4410, -1e+30
    %v4520 = vsel %vm223, %v4504, -1e+30
    %v4521 = vsel %vm223, %v4509, -1e+30
    %v4522 = vsel %vm223, %v4514, -1e+30
    %v4523 = vsel %vm878, %v4517, -inf
    %4524 = vmax.xlane.f32.xlu0 %v4523
    %v4525 = vpop.xlane.xlu0 %4524
    %v4526 = vsel %vm878, %v4518, -inf
    %4527 = vmax.xlane.f32.xlu0 %v4526
    %v4528 = vpop.xlane.xlu0 %4527
    %v4529 = vsel %vm878, %v4519, -inf
    %4530 = vmax.xlane.f32.xlu0 %v4529
    %v4531 = vpop.xlane.xlu0 %4530
    %v4532 = vsel %vm878, %v4520, -inf
    %4533 = vmax.xlane.f32.xlu0 %v4532
    %v4534 = vpop.xlane.xlu0 %4533
    %v4535 = vsel %vm878, %v4521, -inf
    %4536 = vmax.xlane.f32.xlu0 %v4535
    %v4537 = vpop.xlane.xlu0 %4536
    %v4538 = vsel %vm878, %v4522, -inf
    %4539 = vmax.xlane.f32.xlu0 %v4538
    %v4540 = vpop.xlane.xlu0 %4539
    %v4541 = vsub.f32 %v4517, %v4525
    %v4542 = vsub.f32 %v4518, %v4528
    %v4543 = vsub.f32 %v4519, %v4531
    %v4544 = vsub.f32 %v4520, %v4534
    %v4545 = vsub.f32 %v4521, %v4537
    %v4546 = vsub.f32 %v4522, %v4540
    %v4547 = vmul.f32 %v4541, 1.442695
    %v4548 = vpow.pop %v4547
    %v4549 = vmul.f32 %v4542, 1.442695
    %v4550 = vpow.pop %v4549
    %v4551 = vmul.f32 %v4543, 1.442695
    %v4552 = vpow.pop %v4551
    %v4553 = vmul.f32 %v4544, 1.442695
    %v4554 = vpow.pop %v4553
    %v4555 = vmul.f32 %v4545, 1.442695
    %v4556 = vpow.pop %v4555
    %v4557 = vmul.f32 %v4546, 1.442695
    %v4558 = vpow.pop %v4557
    %v4559 = vsel %vm878, %v4548, 0.0
    %4560 = vadd.xlane.f32.xlu0 %v4559
    %v4561 = vpop.xlane.xlu0 %4560
    %v4562 = vsel %vm878, %v4550, 0.0
    %4563 = vadd.xlane.f32.xlu0 %v4562
    %v4564 = vpop.xlane.xlu0 %4563
    %v4565 = vsel %vm878, %v4552, 0.0
    %4566 = vadd.xlane.f32.xlu0 %v4565
    %v4567 = vpop.xlane.xlu0 %4566
    %v4568 = vsel %vm878, %v4554, 0.0
    %4569 = vadd.xlane.f32.xlu0 %v4568
    %v4570 = vpop.xlane.xlu0 %4569
    %v4571 = vsel %vm878, %v4556, 0.0
    %4572 = vadd.xlane.f32.xlu0 %v4571
    %v4573 = vpop.xlane.xlu0 %4572
    %v4574 = vsel %vm878, %v4558, 0.0
    %4575 = vadd.xlane.f32.xlu0 %v4574
    %v4576 = vpop.xlane.xlu0 %4575
    %v4577 = vrcp.pop %v4561
    %v4578 = vrcp.pop %v4564
    %v4579 = vrcp.pop %v4567
    %v4580 = vrcp.pop %v4570
    %v4581 = vrcp.pop %v4573
    %v4582 = vrcp.pop %v4576
    %v4583 = vmul.f32 %v4548, %v4577
    %v4584 = vmul.f32 %v4550, %v4578
    %v4585 = vmul.f32 %v4552, %v4579
    %v4586 = vmul.f32 %v4554, %v4580
    %v4587 = vmul.f32 %v4556, %v4581
    %v4588 = vmul.f32 %v4558, %v4582
    %4592 = vrot.lane.b32.xlu0 %v3830, 120
    %v4593 = vpop.permute.xlu0 %4592
    %4594 = vrot.lane.b32.xlu0 %v3835, 120
    %v4595 = vpop.permute.xlu0 %4594
    %4596 = vrot.lane.b32.xlu0 %v3840, 120
    %v4597 = vpop.permute.xlu0 %4596
    %v4602 = vsel %vm878, %v4583, 0
    %v4605 = vsel %vm878, %v4584, 0
    %v4608 = vsel %vm878, %v4585, 0
    %4610 = vmatprep.subr.mxu0 0.0
    %4611 = vmatpush1.msra.mxu0 %v4593
    %4612 = vmatprep.subr.mxu0 0.0
    %4613 = vmatpush1.msra.mxu0 %v4595
    %4614 = vmatprep.subr.mxu0 0.0
    %4615 = vmatpush1.msra.mxu0 %v4597
    %4616 = vmatprep.subr.mxu0 0.0
    %4617 = vmatpush1.msra.mxu0 0.0
    %4618 = vmatprep.subr.mxu0 0.0
    %4619 = vmatpush1.msra.mxu0 0.0
    %4620 = vmatprep.subr.mxu0 0.0
    %4621 = vmatpush1.msra.mxu0 0.0
    %4622 = vmatprep.subr.mxu0 0.0
    %4623 = vmatpush1.msra.mxu0 0.0
    %4624 = vmatprep.subr.mxu0 0.0
    %4625 = vmatpush1.msra.mxu0 0.0
    %4626 = vmatprep.subr.mxu0 0.0
    %4627 = vmatpush1.msra.mxu0 0.0
    %4628 = vmatprep.subr.mxu0 0.0
    %4629 = vmatpush1.msra.mxu0 0.0
    %4630 = vmatprep.subr.mxu0 0.0
    %4631 = vmatpush1.msra.mxu0 0.0
    %4632 = vmatprep.subr.mxu0 0.0
    %4633 = vmatpush1.msra.mxu0 0.0
    %4634 = vmatprep.subr.mxu0 0.0
    %4635 = vmatpush1.msra.mxu0 0.0
    %4636 = vmatprep.subr.mxu0 0.0
    %4637 = vmatpush1.msra.mxu0 0.0
    %4638 = vmatprep.subr.mxu0 0.0
    %4639 = vmatpush1.msra.mxu0 0.0
    %4640 = vmatprep.subr.mxu0 0.0
    %4641 = vmatpush1.msra.mxu0 0.0
    %4642 = vmatprep.subr.mxu0 0.0
    %4643 = vmatpush1.msra.mxu0 0.0
    %4644 = vmatprep.subr.mxu0 0.0
    %4645 = vmatpush1.msra.mxu0 0.0
    %4646 = vmatprep.subr.mxu0 0.0
    %4647 = vmatpush1.msra.mxu0 0.0
    %4648 = vmatprep.subr.mxu0 0.0
    %4649 = vmatpush1.msra.mxu0 0.0
    %4650 = vmatprep.subr.mxu0 0.0
    %4651 = vmatpush1.msra.mxu0 0.0
    %4652 = vmatprep.subr.mxu0 0.0
    %4653 = vmatpush1.msra.mxu0 0.0
    %4654 = vmatprep.subr.mxu0 0.0
    %4655 = vmatpush1.msra.mxu0 0.0
    %4656 = vmatprep.subr.mxu0 0.0
    %4657 = vmatpush1.msra.mxu0 0.0
    %4658 = vmatprep.subr.mxu0 0.0
    %4659 = vmatpush1.msra.mxu0 0.0
    %4660 = vmatprep.subr.mxu0 0.0
    %4661 = vmatpush1.msra.mxu0 0.0
    %4662 = vmatprep.subr.mxu0 0.0
    %4663 = vmatpush1.msra.mxu0 0.0
    %4664 = vmatprep.subr.mxu0 0.0
    %4665 = vmatpush1.msra.mxu0 0.0
    %4666 = vmatprep.subr.mxu0 0.0
    %4667 = vmatpush1.msra.mxu0 0.0
    %4668 = vmatprep.subr.mxu0 0.0
    %4669 = vmatpush1.msra.mxu0 0.0
    %4670 = vmatprep.subr.mxu0 0.0
    %4671 = vmatpush1.msra.mxu0 0.0
    %4672 = vmatprep.subr.mxu0 0.0
    %4673 = vmatpush1.msra.mxu0 0.0
    %4674 = vmatprep.mubr.f32.mxu0 0.0
    %4675 = vmatmul.mubr.f32.gmra.mrb[0].mxu0 %v4602
    %v4676 = vpop.f32.mrb[0].mxu0
    %v4677 = vadd.f32 0.0, %v4676
    %v4678 = vpop.f32.mrb[0].mxu0
    %4679 = vmatprep.mubr.f32.mxu0 0.0
    %4680 = vmatmul.mubr.f32.gmra.mrb[0].mxu0 %v4605
    %v4681 = vpop.f32.mrb[0].mxu0
    %v4682 = vadd.f32 0.0, %v4681
    %v4683 = vpop.f32.mrb[0].mxu0
    %4684 = vmatprep.mubr.f32.mxu0 0.0
    %4685 = vmatmul.mubr.f32.gmra.mrb[0].mxu0 %v4608
    %v4686 = vpop.f32.mrb[0].mxu0
    %v4687 = vadd.f32 0.0, %v4686
    %v4688 = vpop.f32.mrb[0].mxu0
    %4689 = vdwg.mxu0
    %4693 = vrot.lane.b32.xlu0 %v3845, 120
    %v4694 = vpop.permute.xlu0 %4693
    %4695 = vrot.lane.b32.xlu0 %v3850, 120
    %v4696 = vpop.permute.xlu0 %4695
    %4697 = vrot.lane.b32.xlu0 %v3855, 120
    %v4698 = vpop.permute.xlu0 %4697
    %v4703 = vsel %vm878, %v4586, 0
    %v4706 = vsel %vm878, %v4587, 0
    %v4709 = vsel %vm878, %v4588, 0
    %4711 = vmatprep.subr.mxu0 0.0
    %4712 = vmatpush1.msra.mxu0 %v4694
    %4713 = vmatprep.subr.mxu0 0.0
    %4714 = vmatpush1.msra.mxu0 %v4696
    %4715 = vmatprep.subr.mxu0 0.0
    %4716 = vmatpush1.msra.mxu0 %v4698
    %4717 = vmatprep.subr.mxu0 0.0
    %4718 = vmatpush1.msra.mxu0 0.0
    %4719 = vmatprep.subr.mxu0 0.0
    %4720 = vmatpush1.msra.mxu0 0.0
    %4721 = vmatprep.subr.mxu0 0.0
    %4722 = vmatpush1.msra.mxu0 0.0
    %4723 = vmatprep.subr.mxu0 0.0
    %4724 = vmatpush1.msra.mxu0 0.0
    %4725 = vmatprep.subr.mxu0 0.0
    %4726 = vmatpush1.msra.mxu0 0.0
    %4727 = vmatprep.subr.mxu0 0.0
    %4728 = vmatpush1.msra.mxu0 0.0
    %4729 = vmatprep.subr.mxu0 0.0
    %4730 = vmatpush1.msra.mxu0 0.0
    %4731 = vmatprep.subr.mxu0 0.0
    %4732 = vmatpush1.msra.mxu0 0.0
    %4733 = vmatprep.subr.mxu0 0.0
    %4734 = vmatpush1.msra.mxu0 0.0
    %4735 = vmatprep.subr.mxu0 0.0
    %4736 = vmatpush1.msra.mxu0 0.0
    %4737 = vmatprep.subr.mxu0 0.0
    %4738 = vmatpush1.msra.mxu0 0.0
    %4739 = vmatprep.subr.mxu0 0.0
    %4740 = vmatpush1.msra.mxu0 0.0
    %4741 = vmatprep.subr.mxu0 0.0
    %4742 = vmatpush1.msra.mxu0 0.0
    %4743 = vmatprep.subr.mxu0 0.0
    %4744 = vmatpush1.msra.mxu0 0.0
    %4745 = vmatprep.subr.mxu0 0.0
    %4746 = vmatpush1.msra.mxu0 0.0
    %4747 = vmatprep.subr.mxu0 0.0
    %4748 = vmatpush1.msra.mxu0 0.0
    %4749 = vmatprep.subr.mxu0 0.0
    %4750 = vmatpush1.msra.mxu0 0.0
    %4751 = vmatprep.subr.mxu0 0.0
    %4752 = vmatpush1.msra.mxu0 0.0
    %4753 = vmatprep.subr.mxu0 0.0
    %4754 = vmatpush1.msra.mxu0 0.0
    %4755 = vmatprep.subr.mxu0 0.0
    %4756 = vmatpush1.msra.mxu0 0.0
    %4757 = vmatprep.subr.mxu0 0.0
    %4758 = vmatpush1.msra.mxu0 0.0
    %4759 = vmatprep.subr.mxu0 0.0
    %4760 = vmatpush1.msra.mxu0 0.0
    %4761 = vmatprep.subr.mxu0 0.0
    %4762 = vmatpush1.msra.mxu0 0.0
    %4763 = vmatprep.subr.mxu0 0.0
    %4764 = vmatpush1.msra.mxu0 0.0
    %4765 = vmatprep.subr.mxu0 0.0
    %4766 = vmatpush1.msra.mxu0 0.0
    %4767 = vmatprep.subr.mxu0 0.0
    %4768 = vmatpush1.msra.mxu0 0.0
    %4769 = vmatprep.subr.mxu0 0.0
    %4770 = vmatpush1.msra.mxu0 0.0
    %4771 = vmatprep.subr.mxu0 0.0
    %4772 = vmatpush1.msra.mxu0 0.0
    %4773 = vmatprep.subr.mxu0 0.0
    %4774 = vmatpush1.msra.mxu0 0.0
    %4775 = vmatprep.mubr.f32.mxu0 0.0
    %4776 = vmatmul.mubr.f32.gmra.mrb[0].mxu0 %v4703
    %v4777 = vpop.f32.mrb[0].mxu0
    %v4778 = vadd.f32 0.0, %v4777
    %v4779 = vpop.f32.mrb[0].mxu0
    %4780 = vmatprep.mubr.f32.mxu0 0.0
    %4781 = vmatmul.mubr.f32.gmra.mrb[0].mxu0 %v4706
    %v4782 = vpop.f32.mrb[0].mxu0
    %v4783 = vadd.f32 0.0, %v4782
    %v4784 = vpop.f32.mrb[0].mxu0
    %4785 = vmatprep.mubr.f32.mxu0 0.0
    %4786 = vmatmul.mubr.f32.gmra.mrb[0].mxu0 %v4709
    %v4787 = vpop.f32.mrb[0].mxu0
    %v4788 = vadd.f32 0.0, %v4787
    %v4789 = vpop.f32.mrb[0].mxu0
    %4790 = vdwg.mxu0
    %v4792 = vsel %vm675, %v4677, 0
    %v4795 = vsel %vm675, %v4682, 0
    %v4798 = vsel %vm675, %v4687, 0
    %v4801 = vsel %vm675, %v4778, 0
    %v4804 = vsel %vm675, %v4783, 0
    %v4807 = vsel %vm675, %v4788, 0
    %4809 = vmatprep.subr.mxu0 0.0
    %4810 = vmatpush1.msra.mxu0 %v3860
    %4811 = vmatprep.subr.mxu0 0.0
    %4812 = vmatpush1.msra.mxu0 0.0
    %4813 = vmatprep.subr.mxu0 0.0
    %4814 = vmatpush1.msra.mxu0 0.0
    %4815 = vmatprep.subr.mxu0 0.0
    %4816 = vmatpush1.msra.mxu0 0.0
    %4817 = vmatprep.subr.mxu0 0.0
    %4818 = vmatpush1.msra.mxu0 0.0
    %4819 = vmatprep.subr.mxu0 0.0
    %4820 = vmatpush1.msra.mxu0 0.0
    %4821 = vmatprep.subr.mxu0 0.0
    %4822 = vmatpush1.msra.mxu0 0.0
    %4823 = vmatprep.subr.mxu0 0.0
    %4824 = vmatpush1.msra.mxu0 0.0
    %4825 = vmatprep.subr.mxu0 0.0
    %4826 = vmatpush1.msra.mxu0 0.0
    %4827 = vmatprep.subr.mxu0 0.0
    %4828 = vmatpush1.msra.mxu0 0.0
    %4829 = vmatprep.subr.mxu0 0.0
    %4830 = vmatpush1.msra.mxu0 0.0
    %4831 = vmatprep.subr.mxu0 0.0
    %4832 = vmatpush1.msra.mxu0 0.0
    %4833 = vmatprep.subr.mxu0 0.0
    %4834 = vmatpush1.msra.mxu0 0.0
    %4835 = vmatprep.subr.mxu0 0.0
    %4836 = vmatpush1.msra.mxu0 0.0
    %4837 = vmatprep.subr.mxu0 0.0
    %4838 = vmatpush1.msra.mxu0 0.0
    %4839 = vmatprep.subr.mxu0 0.0
    %4840 = vmatpush1.msra.mxu0 0.0
    %4841 = vmatprep.subr.mxu0 0.0
    %4842 = vmatpush1.msra.mxu0 0.0
    %4843 = vmatprep.subr.mxu0 0.0
    %4844 = vmatpush1.msra.mxu0 0.0
    %4845 = vmatprep.subr.mxu0 0.0
    %4846 = vmatpush1.msra.mxu0 0.0
    %4847 = vmatprep.subr.mxu0 0.0
    %4848 = vmatpush1.msra.mxu0 0.0
    %4849 = vmatprep.subr.mxu0 0.0
    %4850 = vmatpush1.msra.mxu0 0.0
    %4851 = vmatprep.subr.mxu0 0.0
    %4852 = vmatpush1.msra.mxu0 0.0
    %4853 = vmatprep.subr.mxu0 0.0
    %4854 = vmatpush1.msra.mxu0 0.0
    %4855 = vmatprep.subr.mxu0 0.0
    %4856 = vmatpush1.msra.mxu0 0.0
    %4857 = vmatprep.subr.mxu0 0.0
    %4858 = vmatpush1.msra.mxu0 0.0
    %4859 = vmatprep.subr.mxu0 0.0
    %4860 = vmatpush1.msra.mxu0 0.0
    %4861 = vmatprep.subr.mxu0 0.0
    %4862 = vmatpush1.msra.mxu0 0.0
    %4863 = vmatprep.subr.mxu0 0.0
    %4864 = vmatpush1.msra.mxu0 0.0
    %4865 = vmatprep.subr.mxu0 0.0
    %4866 = vmatpush1.msra.mxu0 0.0
    %4867 = vmatprep.subr.mxu0 0.0
    %4868 = vmatpush1.msra.mxu0 0.0
    %4869 = vmatprep.subr.mxu0 0.0
    %4870 = vmatpush1.msra.mxu0 0.0
    %4871 = vmatprep.subr.mxu0 0.0
    %4872 = vmatpush1.msra.mxu0 0.0
    %4873 = vmatprep.mubr.f32.mxu0 0.0
    %4874 = vmatmul.mubr.f32.gmra.mrb[0].mxu0 %v4792
    %v4875 = vpop.f32.mrb[0].mxu0
    %v4876 = vadd.f32 0.0, %v4875
    %v4877 = vpop.f32.mrb[0].mxu0
    %4878 = vmatprep.mubr.f32.mxu0 0.0
    %4879 = vmatmul.mubr.f32.gmra.mrb[0].mxu0 %v4795
    %v4880 = vpop.f32.mrb[0].mxu0
    %v4881 = vadd.f32 0.0, %v4880
    %v4882 = vpop.f32.mrb[0].mxu0
    %4883 = vmatprep.mubr.f32.mxu0 0.0
    %4884 = vmatmul.mubr.f32.gmra.mrb[0].mxu0 %v4798
    %v4885 = vpop.f32.mrb[0].mxu0
    %v4886 = vadd.f32 0.0, %v4885
    %v4887 = vpop.f32.mrb[0].mxu0
    %4888 = vmatprep.mubr.f32.mxu0 0.0
    %4889 = vmatmul.mubr.f32.gmra.mrb[0].mxu0 %v4801
    %v4890 = vpop.f32.mrb[0].mxu0
    %v4891 = vadd.f32 0.0, %v4890
    %v4892 = vpop.f32.mrb[0].mxu0
    %4893 = vmatprep.mubr.f32.mxu0 0.0
    %4894 = vmatmul.mubr.f32.gmra.mrb[0].mxu0 %v4804
    %v4895 = vpop.f32.mrb[0].mxu0
    %v4896 = vadd.f32 0.0, %v4895
    %v4897 = vpop.f32.mrb[0].mxu0
    %4898 = vmatprep.mubr.f32.mxu0 0.0
    %4899 = vmatmul.mubr.f32.gmra.mrb[0].mxu0 %v4807
    %v4900 = vpop.f32.mrb[0].mxu0
    %v4901 = vadd.f32 0.0, %v4900
    %v4902 = vpop.f32.mrb[0].mxu0
    %4903 = vdwg.mxu0
    %v4905 = vsel %vm675, %v4207, 0
    %v4908 = vsel %vm675, %v4212, 0
    %v4911 = vsel %vm675, %v4217, 0
    %v4914 = vsel %vm675, %v4296, 0
    %v4917 = vsel %vm675, %v4301, 0
    %v4920 = vsel %vm675, %v4306, 0
    %4922 = vmatprep.subr.mxu0 0.0
    %4923 = vmatpush1.msra.mxu0 %v3859
    %4924 = vmatprep.subr.mxu0 0.0
    %4925 = vmatpush1.msra.mxu0 0.0
    %4926 = vmatprep.subr.mxu0 0.0
    %4927 = vmatpush1.msra.mxu0 0.0
    %4928 = vmatprep.subr.mxu0 0.0
    %4929 = vmatpush1.msra.mxu0 0.0
    %4930 = vmatprep.subr.mxu0 0.0
    %4931 = vmatpush1.msra.mxu0 0.0
    %4932 = vmatprep.subr.mxu0 0.0
    %4933 = vmatpush1.msra.mxu0 0.0
    %4934 = vmatprep.subr.mxu0 0.0
    %4935 = vmatpush1.msra.mxu0 0.0
    %4936 = vmatprep.subr.mxu0 0.0
    %4937 = vmatpush1.msra.mxu0 0.0
    %4938 = vmatprep.subr.mxu0 0.0
    %4939 = vmatpush1.msra.mxu0 0.0
    %4940 = vmatprep.subr.mxu0 0.0
    %4941 = vmatpush1.msra.mxu0 0.0
    %4942 = vmatprep.subr.mxu0 0.0
    %4943 = vmatpush1.msra.mxu0 0.0
    %4944 = vmatprep.subr.mxu0 0.0
    %4945 = vmatpush1.msra.mxu0 0.0
    %4946 = vmatprep.subr.mxu0 0.0
    %4947 = vmatpush1.msra.mxu0 0.0
    %4948 = vmatprep.subr.mxu0 0.0
    %4949 = vmatpush1.msra.mxu0 0.0
    %4950 = vmatprep.subr.mxu0 0.0
    %4951 = vmatpush1.msra.mxu0 0.0
    %4952 = vmatprep.subr.mxu0 0.0
    %4953 = vmatpush1.msra.mxu0 0.0
    %4954 = vmatprep.subr.mxu0 0.0
    %4955 = vmatpush1.msra.mxu0 0.0
    %4956 = vmatprep.subr.mxu0 0.0
    %4957 = vmatpush1.msra.mxu0 0.0
    %4958 = vmatprep.subr.mxu0 0.0
    %4959 = vmatpush1.msra.mxu0 0.0
    %4960 = vmatprep.subr.mxu0 0.0
    %4961 = vmatpush1.msra.mxu0 0.0
    %4962 = vmatprep.subr.mxu0 0.0
    %4963 = vmatpush1.msra.mxu0 0.0
    %4964 = vmatprep.subr.mxu0 0.0
    %4965 = vmatpush1.msra.mxu0 0.0
    %4966 = vmatprep.subr.mxu0 0.0
    %4967 = vmatpush1.msra.mxu0 0.0
    %4968 = vmatprep.subr.mxu0 0.0
    %4969 = vmatpush1.msra.mxu0 0.0
    %4970 = vmatprep.subr.mxu0 0.0
    %4971 = vmatpush1.msra.mxu0 0.0
    %4972 = vmatprep.subr.mxu0 0.0
    %4973 = vmatpush1.msra.mxu0 0.0
    %4974 = vmatprep.subr.mxu0 0.0
    %4975 = vmatpush1.msra.mxu0 0.0
    %4976 = vmatprep.subr.mxu0 0.0
    %4977 = vmatpush1.msra.mxu0 0.0
    %4978 = vmatprep.subr.mxu0 0.0
    %4979 = vmatpush1.msra.mxu0 0.0
    %4980 = vmatprep.subr.mxu0 0.0
    %4981 = vmatpush1.msra.mxu0 0.0
    %4982 = vmatprep.subr.mxu0 0.0
    %4983 = vmatpush1.msra.mxu0 0.0
    %4984 = vmatprep.subr.mxu0 0.0
    %4985 = vmatpush1.msra.mxu0 0.0
    %4986 = vmatprep.mubr.f32.mxu0 0.0
    %4987 = vmatmul.mubr.f32.gmra.mrb[0].mxu0 %v4905
    %v4988 = vpop.f32.mrb[0].mxu0
    %v4989 = vadd.f32 %v4876, %v4988
    %v4990 = vpop.f32.mrb[0].mxu0
    %4991 = vmatprep.mubr.f32.mxu0 0.0
    %4992 = vmatmul.mubr.f32.gmra.mrb[0].mxu0 %v4908
    %v4993 = vpop.f32.mrb[0].mxu0
    %v4994 = vadd.f32 %v4881, %v4993
    %v4995 = vpop.f32.mrb[0].mxu0
    %4996 = vmatprep.mubr.f32.mxu0 0.0
    %4997 = vmatmul.mubr.f32.gmra.mrb[0].mxu0 %v4911
    %v4998 = vpop.f32.mrb[0].mxu0
    %v4999 = vadd.f32 %v4886, %v4998
    %v5000 = vpop.f32.mrb[0].mxu0
    %5001 = vmatprep.mubr.f32.mxu0 0.0
    %5002 = vmatmul.mubr.f32.gmra.mrb[0].mxu0 %v4914
    %v5003 = vpop.f32.mrb[0].mxu0
    %v5004 = vadd.f32 %v4891, %v5003
    %v5005 = vpop.f32.mrb[0].mxu0
    %5006 = vmatprep.mubr.f32.mxu0 0.0
    %5007 = vmatmul.mubr.f32.gmra.mrb[0].mxu0 %v4917
    %v5008 = vpop.f32.mrb[0].mxu0
    %v5009 = vadd.f32 %v4896, %v5008
    %v5010 = vpop.f32.mrb[0].mxu0
    %5011 = vmatprep.mubr.f32.mxu0 0.0
    %5012 = vmatmul.mubr.f32.gmra.mrb[0].mxu0 %v4920
    %v5013 = vpop.f32.mrb[0].mxu0
    %v5014 = vadd.f32 %v4901, %v5013
    %v5015 = vpop.f32.mrb[0].mxu0
    %5016 = vdwg.mxu0
    %5017 = vrot.lane.b32.xlu0 %v3636, 112
    %v5018 = vpop.permute.xlu0 %5017
    %5019 = vrot.lane.b32.xlu0 %v3637, 112
    %v5020 = vpop.permute.xlu0 %5019
    %5021 = vrot.lane.b32.xlu0 %v3638, 112
    %v5022 = vpop.permute.xlu0 %5021
    %5023 = vrot.lane.b32.xlu0 %v3722, 112
    %v5024 = vpop.permute.xlu0 %5023
    %5025 = vrot.lane.b32.xlu0 %v3727, 112
    %v5026 = vpop.permute.xlu0 %5025
    %5027 = vrot.lane.b32.xlu0 %v3732, 112
    %v5028 = vpop.permute.xlu0 %5027
    %v5029 = vsel %vm675, %v5018, 0
    %v5031 = vsel %vm675, %v5020, 0
    %v5033 = vsel %vm675, %v5022, 0
    %v5035 = vsel %vm675, %v5024, 0
    %v5037 = vsel %vm675, %v5026, 0
    %v5039 = vsel %vm675, %v5028, 0
    %5041 = vmatprep.subr.mxu0 0.0
    %5042 = vmatpush1.xpose.msra.mxu0 %v5035
    %5043 = vmatprep.subr.mxu0 0.0
    %5044 = vmatpush1.xpose.msra.mxu0 %v5037
    %5045 = vmatprep.subr.mxu0 0.0
    %5046 = vmatpush1.xpose.msra.mxu0 %v5039
    %5047 = vmatprep.subr.mxu0 0.0
    %5048 = vmatpush1.xpose.msra.mxu0 0.0
    %5049 = vmatprep.subr.mxu0 0.0
    %5050 = vmatpush1.xpose.msra.mxu0 0.0
    %5051 = vmatprep.subr.mxu0 0.0
    %5052 = vmatpush1.xpose.msra.mxu0 0.0
    %5053 = vmatprep.subr.mxu0 0.0
    %5054 = vmatpush1.xpose.msra.mxu0 0.0
    %5055 = vmatprep.subr.mxu0 0.0
    %5056 = vmatpush1.xpose.msra.mxu0 0.0
    %5057 = vmatprep.subr.mxu0 0.0
    %5058 = vmatpush1.xpose.msra.mxu0 0.0
    %5059 = vmatprep.subr.mxu0 0.0
    %5060 = vmatpush1.xpose.msra.mxu0 0.0
    %5061 = vmatprep.subr.mxu0 0.0
    %5062 = vmatpush1.xpose.msra.mxu0 0.0
    %5063 = vmatprep.subr.mxu0 0.0
    %5064 = vmatpush1.xpose.msra.mxu0 0.0
    %5065 = vmatprep.subr.mxu0 0.0
    %5066 = vmatpush1.xpose.msra.mxu0 0.0
    %5067 = vmatprep.subr.mxu0 0.0
    %5068 = vmatpush1.xpose.msra.mxu0 0.0
    %5069 = vmatprep.subr.mxu0 0.0
    %5070 = vmatpush1.xpose.msra.mxu0 0.0
    %5071 = vmatprep.subr.mxu0 0.0
    %5072 = vmatpush1.xpose.msra.mxu0 0.0
    %5073 = vmatprep.subr.mxu0 0.0
    %5074 = vmatpush1.xpose.msra.mxu0 0.0
    %5075 = vmatprep.subr.mxu0 0.0
    %5076 = vmatpush1.xpose.msra.mxu0 0.0
    %5077 = vmatprep.subr.mxu0 0.0
    %5078 = vmatpush1.xpose.msra.mxu0 0.0
    %5079 = vmatprep.subr.mxu0 0.0
    %5080 = vmatpush1.xpose.msra.mxu0 0.0
    %5081 = vmatprep.subr.mxu0 0.0
    %5082 = vmatpush1.xpose.msra.mxu0 0.0
    %5083 = vmatprep.subr.mxu0 0.0
    %5084 = vmatpush1.xpose.msra.mxu0 0.0
    %5085 = vmatprep.subr.mxu0 0.0
    %5086 = vmatpush1.xpose.msra.mxu0 0.0
    %5087 = vmatprep.subr.mxu0 0.0
    %5088 = vmatpush1.xpose.msra.mxu0 0.0
    %5089 = vmatprep.subr.mxu0 0.0
    %5090 = vmatpush1.xpose.msra.mxu0 0.0
    %5091 = vmatprep.subr.mxu0 0.0
    %5092 = vmatpush1.xpose.msra.mxu0 0.0
    %5093 = vmatprep.subr.mxu0 0.0
    %5094 = vmatpush1.xpose.msra.mxu0 0.0
    %5095 = vmatprep.subr.mxu0 0.0
    %5096 = vmatpush1.xpose.msra.mxu0 0.0
    %5097 = vmatprep.subr.mxu0 0.0
    %5098 = vmatpush1.xpose.msra.mxu0 0.0
    %5099 = vmatprep.subr.mxu0 0.0
    %5100 = vmatpush1.xpose.msra.mxu0 0.0
    %5101 = vmatprep.subr.mxu0 0.0
    %5102 = vmatpush1.xpose.msra.mxu0 0.0
    %5103 = vmatprep.subr.mxu0 0.0
    %5104 = vmatpush1.xpose.msra.mxu0 0.0
    %5105 = vmatprep.mubr.f32.mxu0 0.0
    %5106 = vmatmul.mubr.f32.gmra.mrb[0].mxu0 %v5029
    %v5107 = vpop.f32.mrb[0].mxu0
    %v5108 = vadd.f32 0.0, %v5107
    %v5109 = vpop.f32.mrb[0].mxu0
    %5110 = vmatprep.mubr.f32.mxu0 0.0
    %5111 = vmatmul.mubr.f32.gmra.mrb[0].mxu0 %v5031
    %v5112 = vpop.f32.mrb[0].mxu0
    %v5113 = vadd.f32 0.0, %v5112
    %v5114 = vpop.f32.mrb[0].mxu0
    %5115 = vmatprep.mubr.f32.mxu0 0.0
    %5116 = vmatmul.mubr.f32.gmra.mrb[0].mxu0 %v5033
    %v5117 = vpop.f32.mrb[0].mxu0
    %v5118 = vadd.f32 0.0, %v5117
    %v5119 = vpop.f32.mrb[0].mxu0
    %5120 = vdwg.mxu0
    %5121 = vrot.lane.b32.xlu0 %v3639, 112
    %v5122 = vpop.permute.xlu0 %5121
    %5123 = vrot.lane.b32.xlu0 %v3640, 112
    %v5124 = vpop.permute.xlu0 %5123
    %5125 = vrot.lane.b32.xlu0 %v3641, 112
    %v5126 = vpop.permute.xlu0 %5125
    %5127 = vrot.lane.b32.xlu0 %v3737, 112
    %v5128 = vpop.permute.xlu0 %5127
    %5129 = vrot.lane.b32.xlu0 %v3742, 112
    %v5130 = vpop.permute.xlu0 %5129
    %5131 = vrot.lane.b32.xlu0 %v3747, 112
    %v5132 = vpop.permute.xlu0 %5131
    %v5133 = vsel %vm675, %v5122, 0
    %v5135 = vsel %vm675, %v5124, 0
    %v5137 = vsel %vm675, %v5126, 0
    %v5139 = vsel %vm675, %v5128, 0
    %v5141 = vsel %vm675, %v5130, 0
    %v5143 = vsel %vm675, %v5132, 0
    %5145 = vmatprep.subr.mxu0 0.0
    %5146 = vmatpush1.xpose.msra.mxu0 %v5139
    %5147 = vmatprep.subr.mxu0 0.0
    %5148 = vmatpush1.xpose.msra.mxu0 %v5141
    %5149 = vmatprep.subr.mxu0 0.0
    %5150 = vmatpush1.xpose.msra.mxu0 %v5143
    %5151 = vmatprep.subr.mxu0 0.0
    %5152 = vmatpush1.xpose.msra.mxu0 0.0
    %5153 = vmatprep.subr.mxu0 0.0
    %5154 = vmatpush1.xpose.msra.mxu0 0.0
    %5155 = vmatprep.subr.mxu0 0.0
    %5156 = vmatpush1.xpose.msra.mxu0 0.0
    %5157 = vmatprep.subr.mxu0 0.0
    %5158 = vmatpush1.xpose.msra.mxu0 0.0
    %5159 = vmatprep.subr.mxu0 0.0
    %5160 = vmatpush1.xpose.msra.mxu0 0.0
    %5161 = vmatprep.subr.mxu0 0.0
    %5162 = vmatpush1.xpose.msra.mxu0 0.0
    %5163 = vmatprep.subr.mxu0 0.0
    %5164 = vmatpush1.xpose.msra.mxu0 0.0
    %5165 = vmatprep.subr.mxu0 0.0
    %5166 = vmatpush1.xpose.msra.mxu0 0.0
    %5167 = vmatprep.subr.mxu0 0.0
    %5168 = vmatpush1.xpose.msra.mxu0 0.0
    %5169 = vmatprep.subr.mxu0 0.0
    %5170 = vmatpush1.xpose.msra.mxu0 0.0
    %5171 = vmatprep.subr.mxu0 0.0
    %5172 = vmatpush1.xpose.msra.mxu0 0.0
    %5173 = vmatprep.subr.mxu0 0.0
    %5174 = vmatpush1.xpose.msra.mxu0 0.0
    %5175 = vmatprep.subr.mxu0 0.0
    %5176 = vmatpush1.xpose.msra.mxu0 0.0
    %5177 = vmatprep.subr.mxu0 0.0
    %5178 = vmatpush1.xpose.msra.mxu0 0.0
    %5179 = vmatprep.subr.mxu0 0.0
    %5180 = vmatpush1.xpose.msra.mxu0 0.0
    %5181 = vmatprep.subr.mxu0 0.0
    %5182 = vmatpush1.xpose.msra.mxu0 0.0
    %5183 = vmatprep.subr.mxu0 0.0
    %5184 = vmatpush1.xpose.msra.mxu0 0.0
    %5185 = vmatprep.subr.mxu0 0.0
    %5186 = vmatpush1.xpose.msra.mxu0 0.0
    %5187 = vmatprep.subr.mxu0 0.0
    %5188 = vmatpush1.xpose.msra.mxu0 0.0
    %5189 = vmatprep.subr.mxu0 0.0
    %5190 = vmatpush1.xpose.msra.mxu0 0.0
    %5191 = vmatprep.subr.mxu0 0.0
    %5192 = vmatpush1.xpose.msra.mxu0 0.0
    %5193 = vmatprep.subr.mxu0 0.0
    %5194 = vmatpush1.xpose.msra.mxu0 0.0
    %5195 = vmatprep.subr.mxu0 0.0
    %5196 = vmatpush1.xpose.msra.mxu0 0.0
    %5197 = vmatprep.subr.mxu0 0.0
    %5198 = vmatpush1.xpose.msra.mxu0 0.0
    %5199 = vmatprep.subr.mxu0 0.0
    %5200 = vmatpush1.xpose.msra.mxu0 0.0
    %5201 = vmatprep.subr.mxu0 0.0
    %5202 = vmatpush1.xpose.msra.mxu0 0.0
    %5203 = vmatprep.subr.mxu0 0.0
    %5204 = vmatpush1.xpose.msra.mxu0 0.0
    %5205 = vmatprep.subr.mxu0 0.0
    %5206 = vmatpush1.xpose.msra.mxu0 0.0
    %5207 = vmatprep.subr.mxu0 0.0
    %5208 = vmatpush1.xpose.msra.mxu0 0.0
    %5209 = vmatprep.mubr.f32.mxu0 0.0
    %5210 = vmatmul.mubr.f32.gmra.mrb[0].mxu0 %v5133
    %v5211 = vpop.f32.mrb[0].mxu0
    %v5212 = vadd.f32 0.0, %v5211
    %v5213 = vpop.f32.mrb[0].mxu0
    %5214 = vmatprep.mubr.f32.mxu0 0.0
    %5215 = vmatmul.mubr.f32.gmra.mrb[0].mxu0 %v5135
    %v5216 = vpop.f32.mrb[0].mxu0
    %v5217 = vadd.f32 0.0, %v5216
    %v5218 = vpop.f32.mrb[0].mxu0
    %5219 = vmatprep.mubr.f32.mxu0 0.0
    %5220 = vmatmul.mubr.f32.gmra.mrb[0].mxu0 %v5137
    %v5221 = vpop.f32.mrb[0].mxu0
    %v5222 = vadd.f32 0.0, %v5221
    %v5223 = vpop.f32.mrb[0].mxu0
    %5224 = vdwg.mxu0
    %v5225 = vsel %vm223, %v5108, -1e+30
    %v5226 = vsel %vm223, %v5113, -1e+30
    %v5227 = vsel %vm223, %v5118, -1e+30
    %v5228 = vsel %vm223, %v5212, -1e+30
    %v5229 = vsel %vm223, %v5217, -1e+30
    %v5230 = vsel %vm223, %v5222, -1e+30
    %v5231 = vsel %vm878, %v5225, -inf
    %5232 = vmax.xlane.f32.xlu0 %v5231
    %v5233 = vpop.xlane.xlu0 %5232
    %v5234 = vsel %vm878, %v5226, -inf
    %5235 = vmax.xlane.f32.xlu0 %v5234
    %v5236 = vpop.xlane.xlu0 %5235
    %v5237 = vsel %vm878, %v5227, -inf
    %5238 = vmax.xlane.f32.xlu0 %v5237
    %v5239 = vpop.xlane.xlu0 %5238
    %v5240 = vsel %vm878, %v5228, -inf
    %5241 = vmax.xlane.f32.xlu0 %v5240
    %v5242 = vpop.xlane.xlu0 %5241
    %v5243 = vsel %vm878, %v5229, -inf
    %5244 = vmax.xlane.f32.xlu0 %v5243
    %v5245 = vpop.xlane.xlu0 %5244
    %v5246 = vsel %vm878, %v5230, -inf
    %5247 = vmax.xlane.f32.xlu0 %v5246
    %v5248 = vpop.xlane.xlu0 %5247
    %v5249 = vsub.f32 %v5225, %v5233
    %v5250 = vsub.f32 %v5226, %v5236
    %v5251 = vsub.f32 %v5227, %v5239
    %v5252 = vsub.f32 %v5228, %v5242
    %v5253 = vsub.f32 %v5229, %v5245
    %v5254 = vsub.f32 %v5230, %v5248
    %v5255 = vmul.f32 %v5249, 1.442695
    %v5256 = vpow.pop %v5255
    %v5257 = vmul.f32 %v5250, 1.442695
    %v5258 = vpow.pop %v5257
    %v5259 = vmul.f32 %v5251, 1.442695
    %v5260 = vpow.pop %v5259
    %v5261 = vmul.f32 %v5252, 1.442695
    %v5262 = vpow.pop %v5261
    %v5263 = vmul.f32 %v5253, 1.442695
    %v5264 = vpow.pop %v5263
    %v5265 = vmul.f32 %v5254, 1.442695
    %v5266 = vpow.pop %v5265
    %v5267 = vsel %vm878, %v5256, 0.0
    %5268 = vadd.xlane.f32.xlu0 %v5267
    %v5269 = vpop.xlane.xlu0 %5268
    %v5270 = vsel %vm878, %v5258, 0.0
    %5271 = vadd.xlane.f32.xlu0 %v5270
    %v5272 = vpop.xlane.xlu0 %5271
    %v5273 = vsel %vm878, %v5260, 0.0
    %5274 = vadd.xlane.f32.xlu0 %v5273
    %v5275 = vpop.xlane.xlu0 %5274
    %v5276 = vsel %vm878, %v5262, 0.0
    %5277 = vadd.xlane.f32.xlu0 %v5276
    %v5278 = vpop.xlane.xlu0 %5277
    %v5279 = vsel %vm878, %v5264, 0.0
    %5280 = vadd.xlane.f32.xlu0 %v5279
    %v5281 = vpop.xlane.xlu0 %5280
    %v5282 = vsel %vm878, %v5266, 0.0
    %5283 = vadd.xlane.f32.xlu0 %v5282
    %v5284 = vpop.xlane.xlu0 %5283
    %v5285 = vrcp.pop %v5269
    %v5286 = vrcp.pop %v5272
    %v5287 = vrcp.pop %v5275
    %v5288 = vrcp.pop %v5278
    %v5289 = vrcp.pop %v5281
    %v5290 = vrcp.pop %v5284
    %v5291 = vmul.f32 %v5256, %v5285
    %v5292 = vmul.f32 %v5258, %v5286
    %v5293 = vmul.f32 %v5260, %v5287
    %v5294 = vmul.f32 %v5262, %v5288
    %v5295 = vmul.f32 %v5264, %v5289
    %v5296 = vmul.f32 %v5266, %v5290
    %5297 = vrot.lane.b32.xlu0 %v3830, 112
    %v5298 = vpop.permute.xlu0 %5297
    %5299 = vrot.lane.b32.xlu0 %v3835, 112
    %v5300 = vpop.permute.xlu0 %5299
    %5301 = vrot.lane.b32.xlu0 %v3840, 112
    %v5302 = vpop.permute.xlu0 %5301
    %v5307 = vsel %vm878, %v5291, 0
    %v5310 = vsel %vm878, %v5292, 0
    %v5313 = vsel %vm878, %v5293, 0
    %5315 = vmatprep.subr.mxu0 0.0
    %5316 = vmatpush1.msra.mxu0 %v5298
    %5317 = vmatprep.subr.mxu0 0.0
    %5318 = vmatpush1.msra.mxu0 %v5300
    %5319 = vmatprep.subr.mxu0 0.0
    %5320 = vmatpush1.msra.mxu0 %v5302
    %5321 = vmatprep.subr.mxu0 0.0
    %5322 = vmatpush1.msra.mxu0 0.0
    %5323 = vmatprep.subr.mxu0 0.0
    %5324 = vmatpush1.msra.mxu0 0.0
    %5325 = vmatprep.subr.mxu0 0.0
    %5326 = vmatpush1.msra.mxu0 0.0
    %5327 = vmatprep.subr.mxu0 0.0
    %5328 = vmatpush1.msra.mxu0 0.0
    %5329 = vmatprep.subr.mxu0 0.0
    %5330 = vmatpush1.msra.mxu0 0.0
    %5331 = vmatprep.subr.mxu0 0.0
    %5332 = vmatpush1.msra.mxu0 0.0
    %5333 = vmatprep.subr.mxu0 0.0
    %5334 = vmatpush1.msra.mxu0 0.0
    %5335 = vmatprep.subr.mxu0 0.0
    %5336 = vmatpush1.msra.mxu0 0.0
    %5337 = vmatprep.subr.mxu0 0.0
    %5338 = vmatpush1.msra.mxu0 0.0
    %5339 = vmatprep.subr.mxu0 0.0
    %5340 = vmatpush1.msra.mxu0 0.0
    %5341 = vmatprep.subr.mxu0 0.0
    %5342 = vmatpush1.msra.mxu0 0.0
    %5343 = vmatprep.subr.mxu0 0.0
    %5344 = vmatpush1.msra.mxu0 0.0
    %5345 = vmatprep.subr.mxu0 0.0
    %5346 = vmatpush1.msra.mxu0 0.0
    %5347 = vmatprep.subr.mxu0 0.0
    %5348 = vmatpush1.msra.mxu0 0.0
    %5349 = vmatprep.subr.mxu0 0.0
    %5350 = vmatpush1.msra.mxu0 0.0
    %5351 = vmatprep.subr.mxu0 0.0
    %5352 = vmatpush1.msra.mxu0 0.0
    %5353 = vmatprep.subr.mxu0 0.0
    %5354 = vmatpush1.msra.mxu0 0.0
    %5355 = vmatprep.subr.mxu0 0.0
    %5356 = vmatpush1.msra.mxu0 0.0
    %5357 = vmatprep.subr.mxu0 0.0
    %5358 = vmatpush1.msra.mxu0 0.0
    %5359 = vmatprep.subr.mxu0 0.0
    %5360 = vmatpush1.msra.mxu0 0.0
    %5361 = vmatprep.subr.mxu0 0.0
    %5362 = vmatpush1.msra.mxu0 0.0
    %5363 = vmatprep.subr.mxu0 0.0
    %5364 = vmatpush1.msra.mxu0 0.0
    %5365 = vmatprep.subr.mxu0 0.0
    %5366 = vmatpush1.msra.mxu0 0.0
    %5367 = vmatprep.subr.mxu0 0.0
    %5368 = vmatpush1.msra.mxu0 0.0
    %5369 = vmatprep.subr.mxu0 0.0
    %5370 = vmatpush1.msra.mxu0 0.0
    %5371 = vmatprep.subr.mxu0 0.0
    %5372 = vmatpush1.msra.mxu0 0.0
    %5373 = vmatprep.subr.mxu0 0.0
    %5374 = vmatpush1.msra.mxu0 0.0
    %5375 = vmatprep.subr.mxu0 0.0
    %5376 = vmatpush1.msra.mxu0 0.0
    %5377 = vmatprep.subr.mxu0 0.0
    %5378 = vmatpush1.msra.mxu0 0.0
    %5379 = vmatprep.mubr.f32.mxu0 0.0
    %5380 = vmatmul.mubr.f32.gmra.mrb[0].mxu0 %v5307
    %v5381 = vpop.f32.mrb[0].mxu0
    %v5382 = vadd.f32 0.0, %v5381
    %v5383 = vpop.f32.mrb[0].mxu0
    %5384 = vmatprep.mubr.f32.mxu0 0.0
    %5385 = vmatmul.mubr.f32.gmra.mrb[0].mxu0 %v5310
    %v5386 = vpop.f32.mrb[0].mxu0
    %v5387 = vadd.f32 0.0, %v5386
    %v5388 = vpop.f32.mrb[0].mxu0
    %5389 = vmatprep.mubr.f32.mxu0 0.0
    %5390 = vmatmul.mubr.f32.gmra.mrb[0].mxu0 %v5313
    %v5391 = vpop.f32.mrb[0].mxu0
    %v5392 = vadd.f32 0.0, %v5391
    %v5393 = vpop.f32.mrb[0].mxu0
    %5394 = vdwg.mxu0
    %5395 = vrot.lane.b32.xlu0 %v3845, 112
    %v5396 = vpop.permute.xlu0 %5395
    %5397 = vrot.lane.b32.xlu0 %v3850, 112
    %v5398 = vpop.permute.xlu0 %5397
    %5399 = vrot.lane.b32.xlu0 %v3855, 112
    %v5400 = vpop.permute.xlu0 %5399
    %v5405 = vsel %vm878, %v5294, 0
    %v5408 = vsel %vm878, %v5295, 0
    %v5411 = vsel %vm878, %v5296, 0
    %5413 = vmatprep.subr.mxu0 0.0
    %5414 = vmatpush1.msra.mxu0 %v5396
    %5415 = vmatprep.subr.mxu0 0.0
    %5416 = vmatpush1.msra.mxu0 %v5398
    %5417 = vmatprep.subr.mxu0 0.0
    %5418 = vmatpush1.msra.mxu0 %v5400
    %5419 = vmatprep.subr.mxu0 0.0
    %5420 = vmatpush1.msra.mxu0 0.0
    %5421 = vmatprep.subr.mxu0 0.0
    %5422 = vmatpush1.msra.mxu0 0.0
    %5423 = vmatprep.subr.mxu0 0.0
    %5424 = vmatpush1.msra.mxu0 0.0
    %5425 = vmatprep.subr.mxu0 0.0
    %5426 = vmatpush1.msra.mxu0 0.0
    %5427 = vmatprep.subr.mxu0 0.0
    %5428 = vmatpush1.msra.mxu0 0.0
    %5429 = vmatprep.subr.mxu0 0.0
    %5430 = vmatpush1.msra.mxu0 0.0
    %5431 = vmatprep.subr.mxu0 0.0
    %5432 = vmatpush1.msra.mxu0 0.0
    %5433 = vmatprep.subr.mxu0 0.0
    %5434 = vmatpush1.msra.mxu0 0.0
    %5435 = vmatprep.subr.mxu0 0.0
    %5436 = vmatpush1.msra.mxu0 0.0
    %5437 = vmatprep.subr.mxu0 0.0
    %5438 = vmatpush1.msra.mxu0 0.0
    %5439 = vmatprep.subr.mxu0 0.0
    %5440 = vmatpush1.msra.mxu0 0.0
    %5441 = vmatprep.subr.mxu0 0.0
    %5442 = vmatpush1.msra.mxu0 0.0
    %5443 = vmatprep.subr.mxu0 0.0
    %5444 = vmatpush1.msra.mxu0 0.0
    %5445 = vmatprep.subr.mxu0 0.0
    %5446 = vmatpush1.msra.mxu0 0.0
    %5447 = vmatprep.subr.mxu0 0.0
    %5448 = vmatpush1.msra.mxu0 0.0
    %5449 = vmatprep.subr.mxu0 0.0
    %5450 = vmatpush1.msra.mxu0 0.0
    %5451 = vmatprep.subr.mxu0 0.0
    %5452 = vmatpush1.msra.mxu0 0.0
    %5453 = vmatprep.subr.mxu0 0.0
    %5454 = vmatpush1.msra.mxu0 0.0
    %5455 = vmatprep.subr.mxu0 0.0
    %5456 = vmatpush1.msra.mxu0 0.0
    %5457 = vmatprep.subr.mxu0 0.0
    %5458 = vmatpush1.msra.mxu0 0.0
    %5459 = vmatprep.subr.mxu0 0.0
    %5460 = vmatpush1.msra.mxu0 0.0
    %5461 = vmatprep.subr.mxu0 0.0
    %5462 = vmatpush1.msra.mxu0 0.0
    %5463 = vmatprep.subr.mxu0 0.0
    %5464 = vmatpush1.msra.mxu0 0.0
    %5465 = vmatprep.subr.mxu0 0.0
    %5466 = vmatpush1.msra.mxu0 0.0
    %5467 = vmatprep.subr.mxu0 0.0
    %5468 = vmatpush1.msra.mxu0 0.0
    %5469 = vmatprep.subr.mxu0 0.0
    %5470 = vmatpush1.msra.mxu0 0.0
    %5471 = vmatprep.subr.mxu0 0.0
    %5472 = vmatpush1.msra.mxu0 0.0
    %5473 = vmatprep.subr.mxu0 0.0
    %5474 = vmatpush1.msra.mxu0 0.0
    %5475 = vmatprep.subr.mxu0 0.0
    %5476 = vmatpush1.msra.mxu0 0.0
    %5477 = vmatprep.mubr.f32.mxu0 0.0
    %5478 = vmatmul.mubr.f32.gmra.mrb[0].mxu0 %v5405
    %v5479 = vpop.f32.mrb[0].mxu0
    %v5480 = vadd.f32 0.0, %v5479
    %v5481 = vpop.f32.mrb[0].mxu0
    %5482 = vmatprep.mubr.f32.mxu0 0.0
    %5483 = vmatmul.mubr.f32.gmra.mrb[0].mxu0 %v5408
    %v5484 = vpop.f32.mrb[0].mxu0
    %v5485 = vadd.f32 0.0, %v5484
    %v5486 = vpop.f32.mrb[0].mxu0
    %5487 = vmatprep.mubr.f32.mxu0 0.0
    %5488 = vmatmul.mubr.f32.gmra.mrb[0].mxu0 %v5411
    %v5489 = vpop.f32.mrb[0].mxu0
    %v5490 = vadd.f32 0.0, %v5489
    %v5491 = vpop.f32.mrb[0].mxu0
    %5492 = vdwg.mxu0
    %v5494 = vsel %vm675, %v5382, 0
    %v5497 = vsel %vm675, %v5387, 0
    %v5500 = vsel %vm675, %v5392, 0
    %v5503 = vsel %vm675, %v5480, 0
    %v5506 = vsel %vm675, %v5485, 0
    %v5509 = vsel %vm675, %v5490, 0
    %5511 = vmatprep.subr.mxu0 0.0
    %5512 = vmatpush1.msra.mxu0 %v3861
    %5513 = vmatprep.subr.mxu0 0.0
    %5514 = vmatpush1.msra.mxu0 0.0
    %5515 = vmatprep.subr.mxu0 0.0
    %5516 = vmatpush1.msra.mxu0 0.0
    %5517 = vmatprep.subr.mxu0 0.0
    %5518 = vmatpush1.msra.mxu0 0.0
    %5519 = vmatprep.subr.mxu0 0.0
    %5520 = vmatpush1.msra.mxu0 0.0
    %5521 = vmatprep.subr.mxu0 0.0
    %5522 = vmatpush1.msra.mxu0 0.0
    %5523 = vmatprep.subr.mxu0 0.0
    %5524 = vmatpush1.msra.mxu0 0.0
    %5525 = vmatprep.subr.mxu0 0.0
    %5526 = vmatpush1.msra.mxu0 0.0
    %5527 = vmatprep.subr.mxu0 0.0
    %5528 = vmatpush1.msra.mxu0 0.0
    %5529 = vmatprep.subr.mxu0 0.0
    %5530 = vmatpush1.msra.mxu0 0.0
    %5531 = vmatprep.subr.mxu0 0.0
    %5532 = vmatpush1.msra.mxu0 0.0
    %5533 = vmatprep.subr.mxu0 0.0
    %5534 = vmatpush1.msra.mxu0 0.0
    %5535 = vmatprep.subr.mxu0 0.0
    %5536 = vmatpush1.msra.mxu0 0.0
    %5537 = vmatprep.subr.mxu0 0.0
    %5538 = vmatpush1.msra.mxu0 0.0
    %5539 = vmatprep.subr.mxu0 0.0
    %5540 = vmatpush1.msra.mxu0 0.0
    %5541 = vmatprep.subr.mxu0 0.0
    %5542 = vmatpush1.msra.mxu0 0.0
    %5543 = vmatprep.subr.mxu0 0.0
    %5544 = vmatpush1.msra.mxu0 0.0
    %5545 = vmatprep.subr.mxu0 0.0
    %5546 = vmatpush1.msra.mxu0 0.0
    %5547 = vmatprep.subr.mxu0 0.0
    %5548 = vmatpush1.msra.mxu0 0.0
    %5549 = vmatprep.subr.mxu0 0.0
    %5550 = vmatpush1.msra.mxu0 0.0
    %5551 = vmatprep.subr.mxu0 0.0
    %5552 = vmatpush1.msra.mxu0 0.0
    %5553 = vmatprep.subr.mxu0 0.0
    %5554 = vmatpush1.msra.mxu0 0.0
    %5555 = vmatprep.subr.mxu0 0.0
    %5556 = vmatpush1.msra.mxu0 0.0
    %5557 = vmatprep.subr.mxu0 0.0
    %5558 = vmatpush1.msra.mxu0 0.0
    %5559 = vmatprep.subr.mxu0 0.0
    %5560 = vmatpush1.msra.mxu0 0.0
    %5561 = vmatprep.subr.mxu0 0.0
    %5562 = vmatpush1.msra.mxu0 0.0
    %5563 = vmatprep.subr.mxu0 0.0
    %5564 = vmatpush1.msra.mxu0 0.0
    %5565 = vmatprep.subr.mxu0 0.0
    %5566 = vmatpush1.msra.mxu0 0.0
    %5567 = vmatprep.subr.mxu0 0.0
    %5568 = vmatpush1.msra.mxu0 0.0
    %5569 = vmatprep.subr.mxu0 0.0
    %5570 = vmatpush1.msra.mxu0 0.0
    %5571 = vmatprep.subr.mxu0 0.0
    %5572 = vmatpush1.msra.mxu0 0.0
    %5573 = vmatprep.subr.mxu0 0.0
    %5574 = vmatpush1.msra.mxu0 0.0
    %5575 = vmatprep.mubr.f32.mxu0 0.0
    %5576 = vmatmul.mubr.f32.gmra.mrb[0].mxu0 %v5494
    %v5577 = vpop.f32.mrb[0].mxu0
    %v5578 = vadd.f32 0.0, %v5577
    %v5579 = vpop.f32.mrb[0].mxu0
    %5580 = vmatprep.mubr.f32.mxu0 0.0
    %5581 = vmatmul.mubr.f32.gmra.mrb[0].mxu0 %v5497
    %v5582 = vpop.f32.mrb[0].mxu0
    %v5583 = vadd.f32 0.0, %v5582
    %v5584 = vpop.f32.mrb[0].mxu0
    %5585 = vmatprep.mubr.f32.mxu0 0.0
    %5586 = vmatmul.mubr.f32.gmra.mrb[0].mxu0 %v5500
    %v5587 = vpop.f32.mrb[0].mxu0
    %v5588 = vadd.f32 0.0, %v5587
    %v5589 = vpop.f32.mrb[0].mxu0
    %5590 = vmatprep.mubr.f32.mxu0 0.0
    %5591 = vmatmul.mubr.f32.gmra.mrb[0].mxu0 %v5503
    %v5592 = vpop.f32.mrb[0].mxu0
    %v5593 = vadd.f32 0.0, %v5592
    %v5594 = vpop.f32.mrb[0].mxu0
    %5595 = vmatprep.mubr.f32.mxu0 0.0
    %5596 = vmatmul.mubr.f32.gmra.mrb[0].mxu0 %v5506
    %v5597 = vpop.f32.mrb[0].mxu0
    %v5598 = vadd.f32 0.0, %v5597
    %v5599 = vpop.f32.mrb[0].mxu0
    %5600 = vmatprep.mubr.f32.mxu0 0.0
    %5601 = vmatmul.mubr.f32.gmra.mrb[0].mxu0 %v5509
    %v5602 = vpop.f32.mrb[0].mxu0
    %v5603 = vadd.f32 0.0, %v5602
    %v5604 = vpop.f32.mrb[0].mxu0
    %5605 = vdwg.mxu0
    %v5606 = vadd.f32 %v4989, %v5578
    %v5607 = vadd.f32 %v4994, %v5583
    %v5608 = vadd.f32 %v4999, %v5588
    %v5609 = vadd.f32 %v5004, %v5593
    %v5610 = vadd.f32 %v5009, %v5598
    %v5611 = vadd.f32 %v5014, %v5603
    %5612 = vrot.lane.b32.xlu0 %v3636, 104
    %v5613 = vpop.permute.xlu0 %5612
    %5614 = vrot.lane.b32.xlu0 %v3637, 104
    %v5615 = vpop.permute.xlu0 %5614
    %5616 = vrot.lane.b32.xlu0 %v3638, 104
    %v5617 = vpop.permute.xlu0 %5616
    %5618 = vrot.lane.b32.xlu0 %v3722, 104
    %v5619 = vpop.permute.xlu0 %5618
    %5620 = vrot.lane.b32.xlu0 %v3727, 104
    %v5621 = vpop.permute.xlu0 %5620
    %5622 = vrot.lane.b32.xlu0 %v3732, 104
    %v5623 = vpop.permute.xlu0 %5622
    %v5624 = vsel %vm675, %v5613, 0
    %v5626 = vsel %vm675, %v5615, 0
    %v5628 = vsel %vm675, %v5617, 0
    %v5630 = vsel %vm675, %v5619, 0
    %v5632 = vsel %vm675, %v5621, 0
    %v5634 = vsel %vm675, %v5623, 0
    %5636 = vmatprep.subr.mxu0 0.0
    %5637 = vmatpush1.xpose.msra.mxu0 %v5630
    %5638 = vmatprep.subr.mxu0 0.0
    %5639 = vmatpush1.xpose.msra.mxu0 %v5632
    %5640 = vmatprep.subr.mxu0 0.0
    %5641 = vmatpush1.xpose.msra.mxu0 %v5634
    %5642 = vmatprep.subr.mxu0 0.0
    %5643 = vmatpush1.xpose.msra.mxu0 0.0
    %5644 = vmatprep.subr.mxu0 0.0
    %5645 = vmatpush1.xpose.msra.mxu0 0.0
    %5646 = vmatprep.subr.mxu0 0.0
    %5647 = vmatpush1.xpose.msra.mxu0 0.0
    %5648 = vmatprep.subr.mxu0 0.0
    %5649 = vmatpush1.xpose.msra.mxu0 0.0
    %5650 = vmatprep.subr.mxu0 0.0
    %5651 = vmatpush1.xpose.msra.mxu0 0.0
    %5652 = vmatprep.subr.mxu0 0.0
    %5653 = vmatpush1.xpose.msra.mxu0 0.0
    %5654 = vmatprep.subr.mxu0 0.0
    %5655 = vmatpush1.xpose.msra.mxu0 0.0
    %5656 = vmatprep.subr.mxu0 0.0
    %5657 = vmatpush1.xpose.msra.mxu0 0.0
    %5658 = vmatprep.subr.mxu0 0.0
    %5659 = vmatpush1.xpose.msra.mxu0 0.0
    %5660 = vmatprep.subr.mxu0 0.0
    %5661 = vmatpush1.xpose.msra.mxu0 0.0
    %5662 = vmatprep.subr.mxu0 0.0
    %5663 = vmatpush1.xpose.msra.mxu0 0.0
    %5664 = vmatprep.subr.mxu0 0.0
    %5665 = vmatpush1.xpose.msra.mxu0 0.0
    %5666 = vmatprep.subr.mxu0 0.0
    %5667 = vmatpush1.xpose.msra.mxu0 0.0
    %5668 = vmatprep.subr.mxu0 0.0
    %5669 = vmatpush1.xpose.msra.mxu0 0.0
    %5670 = vmatprep.subr.mxu0 0.0
    %5671 = vmatpush1.xpose.msra.mxu0 0.0
    %5672 = vmatprep.subr.mxu0 0.0
    %5673 = vmatpush1.xpose.msra.mxu0 0.0
    %5674 = vmatprep.subr.mxu0 0.0
    %5675 = vmatpush1.xpose.msra.mxu0 0.0
    %5676 = vmatprep.subr.mxu0 0.0
    %5677 = vmatpush1.xpose.msra.mxu0 0.0
    %5678 = vmatprep.subr.mxu0 0.0
    %5679 = vmatpush1.xpose.msra.mxu0 0.0
    %5680 = vmatprep.subr.mxu0 0.0
    %5681 = vmatpush1.xpose.msra.mxu0 0.0
    %5682 = vmatprep.subr.mxu0 0.0
    %5683 = vmatpush1.xpose.msra.mxu0 0.0
    %5684 = vmatprep.subr.mxu0 0.0
    %5685 = vmatpush1.xpose.msra.mxu0 0.0
    %5686 = vmatprep.subr.mxu0 0.0
    %5687 = vmatpush1.xpose.msra.mxu0 0.0
    %5688 = vmatprep.subr.mxu0 0.0
    %5689 = vmatpush1.xpose.msra.mxu0 0.0
    %5690 = vmatprep.subr.mxu0 0.0
    %5691 = vmatpush1.xpose.msra.mxu0 0.0
    %5692 = vmatprep.subr.mxu0 0.0
    %5693 = vmatpush1.xpose.msra.mxu0 0.0
    %5694 = vmatprep.subr.mxu0 0.0
    %5695 = vmatpush1.xpose.msra.mxu0 0.0
    %5696 = vmatprep.subr.mxu0 0.0
    %5697 = vmatpush1.xpose.msra.mxu0 0.0
    %5698 = vmatprep.subr.mxu0 0.0
    %5699 = vmatpush1.xpose.msra.mxu0 0.0
    %5700 = vmatprep.mubr.f32.mxu0 0.0
    %5701 = vmatmul.mubr.f32.gmra.mrb[0].mxu0 %v5624
    %v5702 = vpop.f32.mrb[0].mxu0
    %v5703 = vadd.f32 0.0, %v5702
    %v5704 = vpop.f32.mrb[0].mxu0
    %5705 = vmatprep.mubr.f32.mxu0 0.0
    %5706 = vmatmul.mubr.f32.gmra.mrb[0].mxu0 %v5626
    %v5707 = vpop.f32.mrb[0].mxu0
    %v5708 = vadd.f32 0.0, %v5707
    %v5709 = vpop.f32.mrb[0].mxu0
    %5710 = vmatprep.mubr.f32.mxu0 0.0
    %5711 = vmatmul.mubr.f32.gmra.mrb[0].mxu0 %v5628
    %v5712 = vpop.f32.mrb[0].mxu0
    %v5713 = vadd.f32 0.0, %v5712
    %v5714 = vpop.f32.mrb[0].mxu0
    %5715 = vdwg.mxu0
    %5716 = vrot.lane.b32.xlu0 %v3639, 104
    %v5717 = vpop.permute.xlu0 %5716
    %5718 = vrot.lane.b32.xlu0 %v3640, 104
    %v5719 = vpop.permute.xlu0 %5718
    %5720 = vrot.lane.b32.xlu0 %v3641, 104
    %v5721 = vpop.permute.xlu0 %5720
    %5722 = vrot.lane.b32.xlu0 %v3737, 104
    %v5723 = vpop.permute.xlu0 %5722
    %5724 = vrot.lane.b32.xlu0 %v3742, 104
    %v5725 = vpop.permute.xlu0 %5724
    %5726 = vrot.lane.b32.xlu0 %v3747, 104
    %v5727 = vpop.permute.xlu0 %5726
    %v5728 = vsel %vm675, %v5717, 0
    %v5730 = vsel %vm675, %v5719, 0
    %v5732 = vsel %vm675, %v5721, 0
    %v5734 = vsel %vm675, %v5723, 0
    %v5736 = vsel %vm675, %v5725, 0
    %v5738 = vsel %vm675, %v5727, 0
    %5740 = vmatprep.subr.mxu0 0.0
    %5741 = vmatpush1.xpose.msra.mxu0 %v5734
    %5742 = vmatprep.subr.mxu0 0.0
    %5743 = vmatpush1.xpose.msra.mxu0 %v5736
    %5744 = vmatprep.subr.mxu0 0.0
    %5745 = vmatpush1.xpose.msra.mxu0 %v5738
    %5746 = vmatprep.subr.mxu0 0.0
    %5747 = vmatpush1.xpose.msra.mxu0 0.0
    %5748 = vmatprep.subr.mxu0 0.0
    %5749 = vmatpush1.xpose.msra.mxu0 0.0
    %5750 = vmatprep.subr.mxu0 0.0
    %5751 = vmatpush1.xpose.msra.mxu0 0.0
    %5752 = vmatprep.subr.mxu0 0.0
    %5753 = vmatpush1.xpose.msra.mxu0 0.0
    %5754 = vmatprep.subr.mxu0 0.0
    %5755 = vmatpush1.xpose.msra.mxu0 0.0
    %5756 = vmatprep.subr.mxu0 0.0
    %5757 = vmatpush1.xpose.msra.mxu0 0.0
    %5758 = vmatprep.subr.mxu0 0.0
    %5759 = vmatpush1.xpose.msra.mxu0 0.0
    %5760 = vmatprep.subr.mxu0 0.0
    %5761 = vmatpush1.xpose.msra.mxu0 0.0
    %5762 = vmatprep.subr.mxu0 0.0
    %5763 = vmatpush1.xpose.msra.mxu0 0.0
    %5764 = vmatprep.subr.mxu0 0.0
    %5765 = vmatpush1.xpose.msra.mxu0 0.0
    %5766 = vmatprep.subr.mxu0 0.0
    %5767 = vmatpush1.xpose.msra.mxu0 0.0
    %5768 = vmatprep.subr.mxu0 0.0
    %5769 = vmatpush1.xpose.msra.mxu0 0.0
    %5770 = vmatprep.subr.mxu0 0.0
    %5771 = vmatpush1.xpose.msra.mxu0 0.0
    %5772 = vmatprep.subr.mxu0 0.0
    %5773 = vmatpush1.xpose.msra.mxu0 0.0
    %5774 = vmatprep.subr.mxu0 0.0
    %5775 = vmatpush1.xpose.msra.mxu0 0.0
    %5776 = vmatprep.subr.mxu0 0.0
    %5777 = vmatpush1.xpose.msra.mxu0 0.0
    %5778 = vmatprep.subr.mxu0 0.0
    %5779 = vmatpush1.xpose.msra.mxu0 0.0
    %5780 = vmatprep.subr.mxu0 0.0
    %5781 = vmatpush1.xpose.msra.mxu0 0.0
    %5782 = vmatprep.subr.mxu0 0.0
    %5783 = vmatpush1.xpose.msra.mxu0 0.0
    %5784 = vmatprep.subr.mxu0 0.0
    %5785 = vmatpush1.xpose.msra.mxu0 0.0
    %5786 = vmatprep.subr.mxu0 0.0
    %5787 = vmatpush1.xpose.msra.mxu0 0.0
    %5788 = vmatprep.subr.mxu0 0.0
    %5789 = vmatpush1.xpose.msra.mxu0 0.0
    %5790 = vmatprep.subr.mxu0 0.0
    %5791 = vmatpush1.xpose.msra.mxu0 0.0
    %5792 = vmatprep.subr.mxu0 0.0
    %5793 = vmatpush1.xpose.msra.mxu0 0.0
    %5794 = vmatprep.subr.mxu0 0.0
    %5795 = vmatpush1.xpose.msra.mxu0 0.0
    %5796 = vmatprep.subr.mxu0 0.0
    %5797 = vmatpush1.xpose.msra.mxu0 0.0
    %5798 = vmatprep.subr.mxu0 0.0
    %5799 = vmatpush1.xpose.msra.mxu0 0.0
    %5800 = vmatprep.subr.mxu0 0.0
    %5801 = vmatpush1.xpose.msra.mxu0 0.0
    %5802 = vmatprep.subr.mxu0 0.0
    %5803 = vmatpush1.xpose.msra.mxu0 0.0
    %5804 = vmatprep.mubr.f32.mxu0 0.0
    %5805 = vmatmul.mubr.f32.gmra.mrb[0].mxu0 %v5728
    %v5806 = vpop.f32.mrb[0].mxu0
    %v5807 = vadd.f32 0.0, %v5806
    %v5808 = vpop.f32.mrb[0].mxu0
    %5809 = vmatprep.mubr.f32.mxu0 0.0
    %5810 = vmatmul.mubr.f32.gmra.mrb[0].mxu0 %v5730
    %v5811 = vpop.f32.mrb[0].mxu0
    %v5812 = vadd.f32 0.0, %v5811
    %v5813 = vpop.f32.mrb[0].mxu0
    %5814 = vmatprep.mubr.f32.mxu0 0.0
    %5815 = vmatmul.mubr.f32.gmra.mrb[0].mxu0 %v5732
    %v5816 = vpop.f32.mrb[0].mxu0
    %v5817 = vadd.f32 0.0, %v5816
    %v5818 = vpop.f32.mrb[0].mxu0
    %5819 = vdwg.mxu0
    %v5820 = vsel %vm223, %v5703, -1e+30
    %v5821 = vsel %vm223, %v5708, -1e+30
    %v5822 = vsel %vm223, %v5713, -1e+30
    %v5823 = vsel %vm223, %v5807, -1e+30
    %v5824 = vsel %vm223, %v5812, -1e+30
    %v5825 = vsel %vm223, %v5817, -1e+30
    %v5826 = vsel %vm878, %v5820, -inf
    %5827 = vmax.xlane.f32.xlu0 %v5826
    %v5828 = vpop.xlane.xlu0 %5827
    %v5829 = vsel %vm878, %v5821, -inf
    %5830 = vmax.xlane.f32.xlu0 %v5829
    %v5831 = vpop.xlane.xlu0 %5830
    %v5832 = vsel %vm878, %v5822, -inf
    %5833 = vmax.xlane.f32.xlu0 %v5832
    %v5834 = vpop.xlane.xlu0 %5833
    %v5835 = vsel %vm878, %v5823, -inf
    %5836 = vmax.xlane.f32.xlu0 %v5835
    %v5837 = vpop.xlane.xlu0 %5836
    %v5838 = vsel %vm878, %v5824, -inf
    %5839 = vmax.xlane.f32.xlu0 %v5838
    %v5840 = vpop.xlane.xlu0 %5839
    %v5841 = vsel %vm878, %v5825, -inf
    %5842 = vmax.xlane.f32.xlu0 %v5841
    %v5843 = vpop.xlane.xlu0 %5842
    %v5844 = vsub.f32 %v5820, %v5828
    %v5845 = vsub.f32 %v5821, %v5831
    %v5846 = vsub.f32 %v5822, %v5834
    %v5847 = vsub.f32 %v5823, %v5837
    %v5848 = vsub.f32 %v5824, %v5840
    %v5849 = vsub.f32 %v5825, %v5843
    %v5850 = vmul.f32 %v5844, 1.442695
    %v5851 = vpow.pop %v5850
    %v5852 = vmul.f32 %v5845, 1.442695
    %v5853 = vpow.pop %v5852
    %v5854 = vmul.f32 %v5846, 1.442695
    %v5855 = vpow.pop %v5854
    %v5856 = vmul.f32 %v5847, 1.442695
    %v5857 = vpow.pop %v5856
    %v5858 = vmul.f32 %v5848, 1.442695
    %v5859 = vpow.pop %v5858
    %v5860 = vmul.f32 %v5849, 1.442695
    %v5861 = vpow.pop %v5860
    %v5862 = vsel %vm878, %v5851, 0.0
    %5863 = vadd.xlane.f32.xlu0 %v5862
    %v5864 = vpop.xlane.xlu0 %5863
    %v5865 = vsel %vm878, %v5853, 0.0
    %5866 = vadd.xlane.f32.xlu0 %v5865
    %v5867 = vpop.xlane.xlu0 %5866
    %v5868 = vsel %vm878, %v5855, 0.0
    %5869 = vadd.xlane.f32.xlu0 %v5868
    %v5870 = vpop.xlane.xlu0 %5869
    %v5871 = vsel %vm878, %v5857, 0.0
    %5872 = vadd.xlane.f32.xlu0 %v5871
    %v5873 = vpop.xlane.xlu0 %5872
    %v5874 = vsel %vm878, %v5859, 0.0
    %5875 = vadd.xlane.f32.xlu0 %v5874
    %v5876 = vpop.xlane.xlu0 %5875
    %v5877 = vsel %vm878, %v5861, 0.0
    %5878 = vadd.xlane.f32.xlu0 %v5877
    %v5879 = vpop.xlane.xlu0 %5878
    %v5880 = vrcp.pop %v5864
    %v5881 = vrcp.pop %v5867
    %v5882 = vrcp.pop %v5870
    %v5883 = vrcp.pop %v5873
    %v5884 = vrcp.pop %v5876
    %v5885 = vrcp.pop %v5879
    %v5886 = vmul.f32 %v5851, %v5880
    %v5887 = vmul.f32 %v5853, %v5881
    %v5888 = vmul.f32 %v5855, %v5882
    %v5889 = vmul.f32 %v5857, %v5883
    %v5890 = vmul.f32 %v5859, %v5884
    %v5891 = vmul.f32 %v5861, %v5885
    %5892 = vrot.lane.b32.xlu0 %v3830, 104
    %v5893 = vpop.permute.xlu0 %5892
    %5894 = vrot.lane.b32.xlu0 %v3835, 104
    %v5895 = vpop.permute.xlu0 %5894
    %5896 = vrot.lane.b32.xlu0 %v3840, 104
    %v5897 = vpop.permute.xlu0 %5896
    %v5902 = vsel %vm878, %v5886, 0
    %v5905 = vsel %vm878, %v5887, 0
    %v5908 = vsel %vm878, %v5888, 0
    %5910 = vmatprep.subr.mxu0 0.0
    %5911 = vmatpush1.msra.mxu0 %v5893
    %5912 = vmatprep.subr.mxu0 0.0
    %5913 = vmatpush1.msra.mxu0 %v5895
    %5914 = vmatprep.subr.mxu0 0.0
    %5915 = vmatpush1.msra.mxu0 %v5897
    %5916 = vmatprep.subr.mxu0 0.0
    %5917 = vmatpush1.msra.mxu0 0.0
    %5918 = vmatprep.subr.mxu0 0.0
    %5919 = vmatpush1.msra.mxu0 0.0
    %5920 = vmatprep.subr.mxu0 0.0
    %5921 = vmatpush1.msra.mxu0 0.0
    %5922 = vmatprep.subr.mxu0 0.0
    %5923 = vmatpush1.msra.mxu0 0.0
    %5924 = vmatprep.subr.mxu0 0.0
    %5925 = vmatpush1.msra.mxu0 0.0
    %5926 = vmatprep.subr.mxu0 0.0
    %5927 = vmatpush1.msra.mxu0 0.0
    %5928 = vmatprep.subr.mxu0 0.0
    %5929 = vmatpush1.msra.mxu0 0.0
    %5930 = vmatprep.subr.mxu0 0.0
    %5931 = vmatpush1.msra.mxu0 0.0
    %5932 = vmatprep.subr.mxu0 0.0
    %5933 = vmatpush1.msra.mxu0 0.0
    %5934 = vmatprep.subr.mxu0 0.0
    %5935 = vmatpush1.msra.mxu0 0.0
    %5936 = vmatprep.subr.mxu0 0.0
    %5937 = vmatpush1.msra.mxu0 0.0
    %5938 = vmatprep.subr.mxu0 0.0
    %5939 = vmatpush1.msra.mxu0 0.0
    %5940 = vmatprep.subr.mxu0 0.0
    %5941 = vmatpush1.msra.mxu0 0.0
    %5942 = vmatprep.subr.mxu0 0.0
    %5943 = vmatpush1.msra.mxu0 0.0
    %5944 = vmatprep.subr.mxu0 0.0
    %5945 = vmatpush1.msra.mxu0 0.0
    %5946 = vmatprep.subr.mxu0 0.0
    %5947 = vmatpush1.msra.mxu0 0.0
    %5948 = vmatprep.subr.mxu0 0.0
    %5949 = vmatpush1.msra.mxu0 0.0
    %5950 = vmatprep.subr.mxu0 0.0
    %5951 = vmatpush1.msra.mxu0 0.0
    %5952 = vmatprep.subr.mxu0 0.0
    %5953 = vmatpush1.msra.mxu0 0.0
    %5954 = vmatprep.subr.mxu0 0.0
    %5955 = vmatpush1.msra.mxu0 0.0
    %5956 = vmatprep.subr.mxu0 0.0
    %5957 = vmatpush1.msra.mxu0 0.0
    %5958 = vmatprep.subr.mxu0 0.0
    %5959 = vmatpush1.msra.mxu0 0.0
    %5960 = vmatprep.subr.mxu0 0.0
    %5961 = vmatpush1.msra.mxu0 0.0
    %5962 = vmatprep.subr.mxu0 0.0
    %5963 = vmatpush1.msra.mxu0 0.0
    %5964 = vmatprep.subr.mxu0 0.0
    %5965 = vmatpush1.msra.mxu0 0.0
    %5966 = vmatprep.subr.mxu0 0.0
    %5967 = vmatpush1.msra.mxu0 0.0
    %5968 = vmatprep.subr.mxu0 0.0
    %5969 = vmatpush1.msra.mxu0 0.0
    %5970 = vmatprep.subr.mxu0 0.0
    %5971 = vmatpush1.msra.mxu0 0.0
    %5972 = vmatprep.subr.mxu0 0.0
    %5973 = vmatpush1.msra.mxu0 0.0
    %5974 = vmatprep.mubr.f32.mxu0 0.0
    %5975 = vmatmul.mubr.f32.gmra.mrb[0].mxu0 %v5902
    %v5976 = vpop.f32.mrb[0].mxu0
    %v5977 = vadd.f32 0.0, %v5976
    %v5978 = vpop.f32.mrb[0].mxu0
    %5979 = vmatprep.mubr.f32.mxu0 0.0
    %5980 = vmatmul.mubr.f32.gmra.mrb[0].mxu0 %v5905
    %v5981 = vpop.f32.mrb[0].mxu0
    %v5982 = vadd.f32 0.0, %v5981
    %v5983 = vpop.f32.mrb[0].mxu0
    %5984 = vmatprep.mubr.f32.mxu0 0.0
    %5985 = vmatmul.mubr.f32.gmra.mrb[0].mxu0 %v5908
    %v5986 = vpop.f32.mrb[0].mxu0
    %v5987 = vadd.f32 0.0, %v5986
    %v5988 = vpop.f32.mrb[0].mxu0
    %5989 = vdwg.mxu0
    %5990 = vrot.lane.b32.xlu0 %v3845, 104
    %v5991 = vpop.permute.xlu0 %5990
    %5992 = vrot.lane.b32.xlu0 %v3850, 104
    %v5993 = vpop.permute.xlu0 %5992
    %5994 = vrot.lane.b32.xlu0 %v3855, 104
    %v5995 = vpop.permute.xlu0 %5994
    %v6000 = vsel %vm878, %v5889, 0
    %v6003 = vsel %vm878, %v5890, 0
    %v6006 = vsel %vm878, %v5891, 0
    %6008 = vmatprep.subr.mxu0 0.0
    %6009 = vmatpush1.msra.mxu0 %v5991
    %6010 = vmatprep.subr.mxu0 0.0
    %6011 = vmatpush1.msra.mxu0 %v5993
    %6012 = vmatprep.subr.mxu0 0.0
    %6013 = vmatpush1.msra.mxu0 %v5995
    %6014 = vmatprep.subr.mxu0 0.0
    %6015 = vmatpush1.msra.mxu0 0.0
    %6016 = vmatprep.subr.mxu0 0.0
    %6017 = vmatpush1.msra.mxu0 0.0
    %6018 = vmatprep.subr.mxu0 0.0
    %6019 = vmatpush1.msra.mxu0 0.0
    %6020 = vmatprep.subr.mxu0 0.0
    %6021 = vmatpush1.msra.mxu0 0.0
    %6022 = vmatprep.subr.mxu0 0.0
    %6023 = vmatpush1.msra.mxu0 0.0
    %6024 = vmatprep.subr.mxu0 0.0
    %6025 = vmatpush1.msra.mxu0 0.0
    %6026 = vmatprep.subr.mxu0 0.0
    %6027 = vmatpush1.msra.mxu0 0.0
    %6028 = vmatprep.subr.mxu0 0.0
    %6029 = vmatpush1.msra.mxu0 0.0
    %6030 = vmatprep.subr.mxu0 0.0
    %6031 = vmatpush1.msra.mxu0 0.0
    %6032 = vmatprep.subr.mxu0 0.0
    %6033 = vmatpush1.msra.mxu0 0.0
    %6034 = vmatprep.subr.mxu0 0.0
    %6035 = vmatpush1.msra.mxu0 0.0
    %6036 = vmatprep.subr.mxu0 0.0
    %6037 = vmatpush1.msra.mxu0 0.0
    %6038 = vmatprep.subr.mxu0 0.0
    %6039 = vmatpush1.msra.mxu0 0.0
    %6040 = vmatprep.subr.mxu0 0.0
    %6041 = vmatpush1.msra.mxu0 0.0
    %6042 = vmatprep.subr.mxu0 0.0
    %6043 = vmatpush1.msra.mxu0 0.0
    %6044 = vmatprep.subr.mxu0 0.0
    %6045 = vmatpush1.msra.mxu0 0.0
    %6046 = vmatprep.subr.mxu0 0.0
    %6047 = vmatpush1.msra.mxu0 0.0
    %6048 = vmatprep.subr.mxu0 0.0
    %6049 = vmatpush1.msra.mxu0 0.0
    %6050 = vmatprep.subr.mxu0 0.0
    %6051 = vmatpush1.msra.mxu0 0.0
    %6052 = vmatprep.subr.mxu0 0.0
    %6053 = vmatpush1.msra.mxu0 0.0
    %6054 = vmatprep.subr.mxu0 0.0
    %6055 = vmatpush1.msra.mxu0 0.0
    %6056 = vmatprep.subr.mxu0 0.0
    %6057 = vmatpush1.msra.mxu0 0.0
    %6058 = vmatprep.subr.mxu0 0.0
    %6059 = vmatpush1.msra.mxu0 0.0
    %6060 = vmatprep.subr.mxu0 0.0
    %6061 = vmatpush1.msra.mxu0 0.0
    %6062 = vmatprep.subr.mxu0 0.0
    %6063 = vmatpush1.msra.mxu0 0.0
    %6064 = vmatprep.subr.mxu0 0.0
    %6065 = vmatpush1.msra.mxu0 0.0
    %6066 = vmatprep.subr.mxu0 0.0
    %6067 = vmatpush1.msra.mxu0 0.0
    %6068 = vmatprep.subr.mxu0 0.0
    %6069 = vmatpush1.msra.mxu0 0.0
    %6070 = vmatprep.subr.mxu0 0.0
    %6071 = vmatpush1.msra.mxu0 0.0
    %6072 = vmatprep.mubr.f32.mxu0 0.0
    %6073 = vmatmul.mubr.f32.gmra.mrb[0].mxu0 %v6000
    %v6074 = vpop.f32.mrb[0].mxu0
    %v6075 = vadd.f32 0.0, %v6074
    %v6076 = vpop.f32.mrb[0].mxu0
    %6077 = vmatprep.mubr.f32.mxu0 0.0
    %6078 = vmatmul.mubr.f32.gmra.mrb[0].mxu0 %v6003
    %v6079 = vpop.f32.mrb[0].mxu0
    %v6080 = vadd.f32 0.0, %v6079
    %v6081 = vpop.f32.mrb[0].mxu0
    %6082 = vmatprep.mubr.f32.mxu0 0.0
    %6083 = vmatmul.mubr.f32.gmra.mrb[0].mxu0 %v6006
    %v6084 = vpop.f32.mrb[0].mxu0
    %v6085 = vadd.f32 0.0, %v6084
    %v6086 = vpop.f32.mrb[0].mxu0
    %6087 = vdwg.mxu0
    %v6089 = vsel %vm675, %v5977, 0
    %v6092 = vsel %vm675, %v5982, 0
    %v6095 = vsel %vm675, %v5987, 0
    %v6098 = vsel %vm675, %v6075, 0
    %v6101 = vsel %vm675, %v6080, 0
    %v6104 = vsel %vm675, %v6085, 0
    %6106 = vmatprep.subr.mxu0 0.0
    %6107 = vmatpush1.msra.mxu0 %v3862
    %6108 = vmatprep.subr.mxu0 0.0
    %6109 = vmatpush1.msra.mxu0 0.0
    %6110 = vmatprep.subr.mxu0 0.0
    %6111 = vmatpush1.msra.mxu0 0.0
    %6112 = vmatprep.subr.mxu0 0.0
    %6113 = vmatpush1.msra.mxu0 0.0
    %6114 = vmatprep.subr.mxu0 0.0
    %6115 = vmatpush1.msra.mxu0 0.0
    %6116 = vmatprep.subr.mxu0 0.0
    %6117 = vmatpush1.msra.mxu0 0.0
    %6118 = vmatprep.subr.mxu0 0.0
    %6119 = vmatpush1.msra.mxu0 0.0
    %6120 = vmatprep.subr.mxu0 0.0
    %6121 = vmatpush1.msra.mxu0 0.0
    %6122 = vmatprep.subr.mxu0 0.0
    %6123 = vmatpush1.msra.mxu0 0.0
    %6124 = vmatprep.subr.mxu0 0.0
    %6125 = vmatpush1.msra.mxu0 0.0
    %6126 = vmatprep.subr.mxu0 0.0
    %6127 = vmatpush1.msra.mxu0 0.0
    %6128 = vmatprep.subr.mxu0 0.0
    %6129 = vmatpush1.msra.mxu0 0.0
    %6130 = vmatprep.subr.mxu0 0.0
    %6131 = vmatpush1.msra.mxu0 0.0
    %6132 = vmatprep.subr.mxu0 0.0
    %6133 = vmatpush1.msra.mxu0 0.0
    %6134 = vmatprep.subr.mxu0 0.0
    %6135 = vmatpush1.msra.mxu0 0.0
    %6136 = vmatprep.subr.mxu0 0.0
    %6137 = vmatpush1.msra.mxu0 0.0
    %6138 = vmatprep.subr.mxu0 0.0
    %6139 = vmatpush1.msra.mxu0 0.0
    %6140 = vmatprep.subr.mxu0 0.0
    %6141 = vmatpush1.msra.mxu0 0.0
    %6142 = vmatprep.subr.mxu0 0.0
    %6143 = vmatpush1.msra.mxu0 0.0
    %6144 = vmatprep.subr.mxu0 0.0
    %6145 = vmatpush1.msra.mxu0 0.0
    %6146 = vmatprep.subr.mxu0 0.0
    %6147 = vmatpush1.msra.mxu0 0.0
    %6148 = vmatprep.subr.mxu0 0.0
    %6149 = vmatpush1.msra.mxu0 0.0
    %6150 = vmatprep.subr.mxu0 0.0
    %6151 = vmatpush1.msra.mxu0 0.0
    %6152 = vmatprep.subr.mxu0 0.0
    %6153 = vmatpush1.msra.mxu0 0.0
    %6154 = vmatprep.subr.mxu0 0.0
    %6155 = vmatpush1.msra.mxu0 0.0
    %6156 = vmatprep.subr.mxu0 0.0
    %6157 = vmatpush1.msra.mxu0 0.0
    %6158 = vmatprep.subr.mxu0 0.0
    %6159 = vmatpush1.msra.mxu0 0.0
    %6160 = vmatprep.subr.mxu0 0.0
    %6161 = vmatpush1.msra.mxu0 0.0
    %6162 = vmatprep.subr.mxu0 0.0
    %6163 = vmatpush1.msra.mxu0 0.0
    %6164 = vmatprep.subr.mxu0 0.0
    %6165 = vmatpush1.msra.mxu0 0.0
    %6166 = vmatprep.subr.mxu0 0.0
    %6167 = vmatpush1.msra.mxu0 0.0
    %6168 = vmatprep.subr.mxu0 0.0
    %6169 = vmatpush1.msra.mxu0 0.0
    %6170 = vmatprep.mubr.f32.mxu0 0.0
    %6171 = vmatmul.mubr.f32.gmra.mrb[0].mxu0 %v6089
    %v6172 = vpop.f32.mrb[0].mxu0
    %v6173 = vadd.f32 0.0, %v6172
    %v6174 = vpop.f32.mrb[0].mxu0
    %6175 = vmatprep.mubr.f32.mxu0 0.0
    %6176 = vmatmul.mubr.f32.gmra.mrb[0].mxu0 %v6092
    %v6177 = vpop.f32.mrb[0].mxu0
    %v6178 = vadd.f32 0.0, %v6177
    %v6179 = vpop.f32.mrb[0].mxu0
    %6180 = vmatprep.mubr.f32.mxu0 0.0
    %6181 = vmatmul.mubr.f32.gmra.mrb[0].mxu0 %v6095
    %v6182 = vpop.f32.mrb[0].mxu0
    %v6183 = vadd.f32 0.0, %v6182
    %v6184 = vpop.f32.mrb[0].mxu0
    %6185 = vmatprep.mubr.f32.mxu0 0.0
    %6186 = vmatmul.mubr.f32.gmra.mrb[0].mxu0 %v6098
    %v6187 = vpop.f32.mrb[0].mxu0
    %v6188 = vadd.f32 0.0, %v6187
    %v6189 = vpop.f32.mrb[0].mxu0
    %6190 = vmatprep.mubr.f32.mxu0 0.0
    %6191 = vmatmul.mubr.f32.gmra.mrb[0].mxu0 %v6101
    %v6192 = vpop.f32.mrb[0].mxu0
    %v6193 = vadd.f32 0.0, %v6192
    %v6194 = vpop.f32.mrb[0].mxu0
    %6195 = vmatprep.mubr.f32.mxu0 0.0
    %6196 = vmatmul.mubr.f32.gmra.mrb[0].mxu0 %v6104
    %v6197 = vpop.f32.mrb[0].mxu0
    %v6198 = vadd.f32 0.0, %v6197
    %v6199 = vpop.f32.mrb[0].mxu0
    %6200 = vdwg.mxu0
    %v6201 = vadd.f32 %v5606, %v6173
    %v6202 = vadd.f32 %v5607, %v6178
    %v6203 = vadd.f32 %v5608, %v6183
    %v6204 = vadd.f32 %v5609, %v6188
    %v6205 = vadd.f32 %v5610, %v6193
    %v6206 = vadd.f32 %v5611, %v6198
    %v6207 = vadd.f32 %v3398, %v6201
    %v6208 = vadd.f32 %v3399, %v6202
    %v6209 = vadd.f32 %v3400, %v6203
    %v6210 = vadd.f32 %v3401, %v6204
    %v6211 = vadd.f32 %v3402, %v6205
    %v6212 = vadd.f32 %v3403, %v6206
    %s6213 = scalar_lea.vmem %s14, 1
    %v6214 = vld [vmem:[%s6213] sm:$0x1]
    %v6216 = vlaneseq
    %v6217 = vshrl.u32 %v6216, 7
    %v6218 = vsub.s32 0, %v6217
    %v6219 = vrot.slane %v6214, %v6218
    %v6221 = vadd.f32 %v6207, %v6219
    %v6222 = vadd.f32 %v6208, %v6219
    %v6223 = vadd.f32 %v6209, %v6219
    %v6224 = vadd.f32 %v6210, %v6219
    %v6225 = vadd.f32 %v6211, %v6219
    %v6226 = vadd.f32 %v6212, %v6219
    %s6227 = scalar_lea.vmem %s15, 1
    %v6228 = vld [vmem:[%s6227] sm:$0x1]
    %s6229 = scalar_lea.vmem %s16, 1
    %v6230 = vld [vmem:[%s6229] sm:$0x1]
    %v6231 = vsel %vm192, %v6221, 0.0
    %6232 = vadd.xlane.f32.xlu0 %v6231
    %v6233 = vpop.xlane.xlu0 %6232
    %v6234 = vsel %vm192, %v6222, 0.0
    %6235 = vadd.xlane.f32.xlu0 %v6234
    %v6236 = vpop.xlane.xlu0 %6235
    %v6237 = vsel %vm192, %v6223, 0.0
    %6238 = vadd.xlane.f32.xlu0 %v6237
    %v6239 = vpop.xlane.xlu0 %6238
    %v6240 = vsel %vm192, %v6224, 0.0
    %6241 = vadd.xlane.f32.xlu0 %v6240
    %v6242 = vpop.xlane.xlu0 %6241
    %v6243 = vsel %vm192, %v6225, 0.0
    %6244 = vadd.xlane.f32.xlu0 %v6243
    %v6245 = vpop.xlane.xlu0 %6244
    %v6246 = vsel %vm192, %v6226, 0.0
    %6247 = vadd.xlane.f32.xlu0 %v6246
    %v6248 = vpop.xlane.xlu0 %6247
    %v6249 = vmul.f32 %v6233, %v244
    %v6250 = vmul.f32 %v6236, %v244
    %v6251 = vmul.f32 %v6239, %v244
    %v6252 = vmul.f32 %v6242, %v244
    %v6253 = vmul.f32 %v6245, %v244
    %v6254 = vmul.f32 %v6248, %v244
    %v6255 = vsub.f32 %v6221, %v6249
    %v6256 = vsub.f32 %v6222, %v6250
    %v6257 = vsub.f32 %v6223, %v6251
    %v6258 = vsub.f32 %v6224, %v6252
    %v6259 = vsub.f32 %v6225, %v6253
    %v6260 = vsub.f32 %v6226, %v6254
    %v6261 = vmul.f32 %v6255, %v6255
    %v6262 = vmul.f32 %v6256, %v6256
    %v6263 = vmul.f32 %v6257, %v6257
    %v6264 = vmul.f32 %v6258, %v6258
    %v6265 = vmul.f32 %v6259, %v6259
    %v6266 = vmul.f32 %v6260, %v6260
    %v6267 = vsel %vm192, %v6261, 0.0
    %6268 = vadd.xlane.f32.xlu0 %v6267
    %v6269 = vpop.xlane.xlu0 %6268
    %v6270 = vsel %vm192, %v6262, 0.0
    %6271 = vadd.xlane.f32.xlu0 %v6270
    %v6272 = vpop.xlane.xlu0 %6271
    %v6273 = vsel %vm192, %v6263, 0.0
    %6274 = vadd.xlane.f32.xlu0 %v6273
    %v6275 = vpop.xlane.xlu0 %6274
    %v6276 = vsel %vm192, %v6264, 0.0
    %6277 = vadd.xlane.f32.xlu0 %v6276
    %v6278 = vpop.xlane.xlu0 %6277
    %v6279 = vsel %vm192, %v6265, 0.0
    %6280 = vadd.xlane.f32.xlu0 %v6279
    %v6281 = vpop.xlane.xlu0 %6280
    %v6282 = vsel %vm192, %v6266, 0.0
    %6283 = vadd.xlane.f32.xlu0 %v6282
    %v6284 = vpop.xlane.xlu0 %6283
    %v6285 = vmul.f32 %v6269, %v244
    %v6286 = vmul.f32 %v6272, %v244
    %v6287 = vmul.f32 %v6275, %v244
    %v6288 = vmul.f32 %v6278, %v244
    %v6289 = vmul.f32 %v6281, %v244
    %v6290 = vmul.f32 %v6284, %v244
    %v6291 = vadd.f32 %v6285, 1e-05
    %v6292 = vadd.f32 %v6286, 1e-05
    %v6293 = vadd.f32 %v6287, 1e-05
    %v6294 = vadd.f32 %v6288, 1e-05
    %v6295 = vadd.f32 %v6289, 1e-05
    %v6296 = vadd.f32 %v6290, 1e-05
    %v6297 = vrsqrt.pop %v6291
    %v6298 = vrsqrt.pop %v6292
    %v6299 = vrsqrt.pop %v6293
    %v6300 = vrsqrt.pop %v6294
    %v6301 = vrsqrt.pop %v6295
    %v6302 = vrsqrt.pop %v6296
    %v6303 = vmul.f32 %v6255, %v6297
    %v6304 = vmul.f32 %v6256, %v6298
    %v6305 = vmul.f32 %v6257, %v6299
    %v6306 = vmul.f32 %v6258, %v6300
    %v6307 = vmul.f32 %v6259, %v6301
    %v6308 = vmul.f32 %v6260, %v6302
    %v6310 = vlaneseq
    %v6311 = vshrl.u32 %v6310, 7
    %v6312 = vsub.s32 0, %v6311
    %v6313 = vrot.slane %v6228, %v6312
    %v6315 = vmul.f32 %v6303, %v6313
    %v6316 = vmul.f32 %v6304, %v6313
    %v6317 = vmul.f32 %v6305, %v6313
    %v6318 = vmul.f32 %v6306, %v6313
    %v6319 = vmul.f32 %v6307, %v6313
    %v6320 = vmul.f32 %v6308, %v6313
    %v6322 = vlaneseq
    %v6323 = vshrl.u32 %v6322, 7
    %v6324 = vsub.s32 0, %v6323
    %v6325 = vrot.slane %v6230, %v6324
    %v6327 = vadd.f32 %v6315, %v6325
    %v6328 = vadd.f32 %v6316, %v6325
    %v6329 = vadd.f32 %v6317, %v6325
    %v6330 = vadd.f32 %v6318, %v6325
    %v6331 = vadd.f32 %v6319, %v6325
    %v6332 = vadd.f32 %v6320, %v6325
    %s6333 = scalar_lea.vmem %s17, 32
    %v6334 = vld [vmem:[%s6333] sm:$0xff]
    %v6335 = vld [vmem:[%s6333 + $0x8] sm:$0xff]
    %v6336 = vld [vmem:[%s6333 + $0x10] sm:$0xff]
    %v6337 = vld [vmem:[%s6333 + $0x18] sm:$0xff]
    %s6338 = scalar_lea.vmem %s18, 1
    %v6339 = vld [vmem:[%s6338] sm:$0x1]
    %v6341 = vlaneseq
    %v6342 = vshrl.u32 %v6341, 7
    %v6343 = vsub.s32 0, %v6342
    %v6344 = vrot.slane %v6339, %v6343
    %v6347 = vsel %vm192, %v6327, 0
    %v6350 = vsel %vm192, %v6328, 0
    %v6353 = vsel %vm192, %v6329, 0
    %v6356 = vsel %vm192, %v6330, 0
    %v6359 = vsel %vm192, %v6331, 0
    %v6362 = vsel %vm192, %v6332, 0
    %6364 = vmatprep.subr.mxu0 0.0
    %6365 = vmatpush1.msra.mxu0 %v6334
    %6366 = vmatprep.subr.mxu0 0.0
    %6367 = vmatpush1.msra.mxu0 %v6335
    %6368 = vmatprep.subr.mxu0 0.0
    %6369 = vmatpush1.msra.mxu0 %v6336
    %6370 = vmatprep.subr.mxu0 0.0
    %6371 = vmatpush1.msra.mxu0 %v6337
    %6372 = vmatprep.subr.mxu0 0.0
    %6373 = vmatpush1.msra.mxu0 0.0
    %6374 = vmatprep.subr.mxu0 0.0
    %6375 = vmatpush1.msra.mxu0 0.0
    %6376 = vmatprep.subr.mxu0 0.0
    %6377 = vmatpush1.msra.mxu0 0.0
    %6378 = vmatprep.subr.mxu0 0.0
    %6379 = vmatpush1.msra.mxu0 0.0
    %6380 = vmatprep.subr.mxu0 0.0
    %6381 = vmatpush1.msra.mxu0 0.0
    %6382 = vmatprep.subr.mxu0 0.0
    %6383 = vmatpush1.msra.mxu0 0.0
    %6384 = vmatprep.subr.mxu0 0.0
    %6385 = vmatpush1.msra.mxu0 0.0
    %6386 = vmatprep.subr.mxu0 0.0
    %6387 = vmatpush1.msra.mxu0 0.0
    %6388 = vmatprep.subr.mxu0 0.0
    %6389 = vmatpush1.msra.mxu0 0.0
    %6390 = vmatprep.subr.mxu0 0.0
    %6391 = vmatpush1.msra.mxu0 0.0
    %6392 = vmatprep.subr.mxu0 0.0
    %6393 = vmatpush1.msra.mxu0 0.0
    %6394 = vmatprep.subr.mxu0 0.0
    %6395 = vmatpush1.msra.mxu0 0.0
    %6396 = vmatprep.subr.mxu0 0.0
    %6397 = vmatpush1.msra.mxu0 0.0
    %6398 = vmatprep.subr.mxu0 0.0
    %6399 = vmatpush1.msra.mxu0 0.0
    %6400 = vmatprep.subr.mxu0 0.0
    %6401 = vmatpush1.msra.mxu0 0.0
    %6402 = vmatprep.subr.mxu0 0.0
    %6403 = vmatpush1.msra.mxu0 0.0
    %6404 = vmatprep.subr.mxu0 0.0
    %6405 = vmatpush1.msra.mxu0 0.0
    %6406 = vmatprep.subr.mxu0 0.0
    %6407 = vmatpush1.msra.mxu0 0.0
    %6408 = vmatprep.subr.mxu0 0.0
    %6409 = vmatpush1.msra.mxu0 0.0
    %6410 = vmatprep.subr.mxu0 0.0
    %6411 = vmatpush1.msra.mxu0 0.0
    %6412 = vmatprep.subr.mxu0 0.0
    %6413 = vmatpush1.msra.mxu0 0.0
    %6414 = vmatprep.subr.mxu0 0.0
    %6415 = vmatpush1.msra.mxu0 0.0
    %6416 = vmatprep.subr.mxu0 0.0
    %6417 = vmatpush1.msra.mxu0 0.0
    %6418 = vmatprep.subr.mxu0 0.0
    %6419 = vmatpush1.msra.mxu0 0.0
    %6420 = vmatprep.subr.mxu0 0.0
    %6421 = vmatpush1.msra.mxu0 0.0
    %6422 = vmatprep.subr.mxu0 0.0
    %6423 = vmatpush1.msra.mxu0 0.0
    %6424 = vmatprep.subr.mxu0 0.0
    %6425 = vmatpush1.msra.mxu0 0.0
    %6426 = vmatprep.subr.mxu0 0.0
    %6427 = vmatpush1.msra.mxu0 0.0
    %6428 = vmatprep.mubr.f32.mxu0 0.0
    %6429 = vmatmul.mubr.f32.gmra.mrb[0].mxu0 %v6347
    %v6430 = vpop.f32.mrb[0].mxu0
    %v6431 = vadd.f32 %v6344, %v6430
    %v6432 = vpop.f32.mrb[0].mxu0
    %6433 = vmatprep.mubr.f32.mxu0 0.0
    %6434 = vmatmul.mubr.f32.gmra.mrb[0].mxu0 %v6350
    %v6435 = vpop.f32.mrb[0].mxu0
    %v6436 = vadd.f32 %v6344, %v6435
    %v6437 = vpop.f32.mrb[0].mxu0
    %6438 = vmatprep.mubr.f32.mxu0 0.0
    %6439 = vmatmul.mubr.f32.gmra.mrb[0].mxu0 %v6353
    %v6440 = vpop.f32.mrb[0].mxu0
    %v6441 = vadd.f32 %v6344, %v6440
    %v6442 = vpop.f32.mrb[0].mxu0
    %6443 = vmatprep.mubr.f32.mxu0 0.0
    %6444 = vmatmul.mubr.f32.gmra.mrb[0].mxu0 %v6356
    %v6445 = vpop.f32.mrb[0].mxu0
    %v6446 = vadd.f32 %v6344, %v6445
    %v6447 = vpop.f32.mrb[0].mxu0
    %6448 = vmatprep.mubr.f32.mxu0 0.0
    %6449 = vmatmul.mubr.f32.gmra.mrb[0].mxu0 %v6359
    %v6450 = vpop.f32.mrb[0].mxu0
    %v6451 = vadd.f32 %v6344, %v6450
    %v6452 = vpop.f32.mrb[0].mxu0
    %6453 = vmatprep.mubr.f32.mxu0 0.0
    %6454 = vmatmul.mubr.f32.gmra.mrb[0].mxu0 %v6362
    %v6455 = vpop.f32.mrb[0].mxu0
    %v6456 = vadd.f32 %v6344, %v6455
    %v6457 = vpop.f32.mrb[0].mxu0
    %6458 = vdwg.mxu0
    %v6459 = vmax.f32 %v6431, 0.0
    %v6460 = vmax.f32 %v6436, 0.0
    %v6461 = vmax.f32 %v6441, 0.0
    %v6462 = vmax.f32 %v6446, 0.0
    %v6463 = vmax.f32 %v6451, 0.0
    %v6464 = vmax.f32 %v6456, 0.0
    %s6465 = scalar_lea.vmem %s19, 128
    %v6466 = vld [vmem:[%s6465] sm:$0xff]
    %v6467 = vld [vmem:[%s6465 + $0x8] sm:$0xff]
    %v6468 = vld [vmem:[%s6465 + $0x10] sm:$0xff]
    %v6469 = vld [vmem:[%s6465 + $0x18] sm:$0xff]
    %v6470 = vld [vmem:[%s6465 + $0x20] sm:$0xff]
    %v6471 = vld [vmem:[%s6465 + $0x28] sm:$0xff]
    %v6472 = vld [vmem:[%s6465 + $0x30] sm:$0xff]
    %v6473 = vld [vmem:[%s6465 + $0x38] sm:$0xff]
    %v6474 = vld [vmem:[%s6465 + $0x40] sm:$0xff]
    %v6475 = vld [vmem:[%s6465 + $0x48] sm:$0xff]
    %v6476 = vld [vmem:[%s6465 + $0x50] sm:$0xff]
    %v6477 = vld [vmem:[%s6465 + $0x58] sm:$0xff]
    %v6478 = vld [vmem:[%s6465 + $0x60] sm:$0xff]
    %v6479 = vld [vmem:[%s6465 + $0x68] sm:$0xff]
    %v6480 = vld [vmem:[%s6465 + $0x70] sm:$0xff]
    %v6481 = vld [vmem:[%s6465 + $0x78] sm:$0xff]
    %6482 = vmatprep.subr.mxu0 0.0
    %6483 = vmatpush1.msra.mxu0 %v6466
    %6484 = vmatprep.subr.mxu0 0.0
    %6485 = vmatpush1.msra.mxu0 %v6467
    %6486 = vmatprep.subr.mxu0 0.0
    %6487 = vmatpush1.msra.mxu0 %v6468
    %6488 = vmatprep.subr.mxu0 0.0
    %6489 = vmatpush1.msra.mxu0 %v6469
    %6490 = vmatprep.subr.mxu0 0.0
    %6491 = vmatpush1.msra.mxu0 %v6470
    %6492 = vmatprep.subr.mxu0 0.0
    %6493 = vmatpush1.msra.mxu0 %v6471
    %6494 = vmatprep.subr.mxu0 0.0
    %6495 = vmatpush1.msra.mxu0 %v6472
    %6496 = vmatprep.subr.mxu0 0.0
    %6497 = vmatpush1.msra.mxu0 %v6473
    %6498 = vmatprep.subr.mxu0 0.0
    %6499 = vmatpush1.msra.mxu0 %v6474
    %6500 = vmatprep.subr.mxu0 0.0
    %6501 = vmatpush1.msra.mxu0 %v6475
    %6502 = vmatprep.subr.mxu0 0.0
    %6503 = vmatpush1.msra.mxu0 %v6476
    %6504 = vmatprep.subr.mxu0 0.0
    %6505 = vmatpush1.msra.mxu0 %v6477
    %6506 = vmatprep.subr.mxu0 0.0
    %6507 = vmatpush1.msra.mxu0 %v6478
    %6508 = vmatprep.subr.mxu0 0.0
    %6509 = vmatpush1.msra.mxu0 %v6479
    %6510 = vmatprep.subr.mxu0 0.0
    %6511 = vmatpush1.msra.mxu0 %v6480
    %6512 = vmatprep.subr.mxu0 0.0
    %6513 = vmatpush1.msra.mxu0 %v6481
    %6514 = vmatprep.subr.mxu0 0.0
    %6515 = vmatpush1.msra.mxu0 0.0
    %6516 = vmatprep.subr.mxu0 0.0
    %6517 = vmatpush1.msra.mxu0 0.0
    %6518 = vmatprep.subr.mxu0 0.0
    %6519 = vmatpush1.msra.mxu0 0.0
    %6520 = vmatprep.subr.mxu0 0.0
    %6521 = vmatpush1.msra.mxu0 0.0
    %6522 = vmatprep.subr.mxu0 0.0
    %6523 = vmatpush1.msra.mxu0 0.0
    %6524 = vmatprep.subr.mxu0 0.0
    %6525 = vmatpush1.msra.mxu0 0.0
    %6526 = vmatprep.subr.mxu0 0.0
    %6527 = vmatpush1.msra.mxu0 0.0
    %6528 = vmatprep.subr.mxu0 0.0
    %6529 = vmatpush1.msra.mxu0 0.0
    %6530 = vmatprep.subr.mxu0 0.0
    %6531 = vmatpush1.msra.mxu0 0.0
    %6532 = vmatprep.subr.mxu0 0.0
    %6533 = vmatpush1.msra.mxu0 0.0
    %6534 = vmatprep.subr.mxu0 0.0
    %6535 = vmatpush1.msra.mxu0 0.0
    %6536 = vmatprep.subr.mxu0 0.0
    %6537 = vmatpush1.msra.mxu0 0.0
    %6538 = vmatprep.subr.mxu0 0.0
    %6539 = vmatpush1.msra.mxu0 0.0
    %6540 = vmatprep.subr.mxu0 0.0
    %6541 = vmatpush1.msra.mxu0 0.0
    %6542 = vmatprep.subr.mxu0 0.0
    %6543 = vmatpush1.msra.mxu0 0.0
    %6544 = vmatprep.subr.mxu0 0.0
    %6545 = vmatpush1.msra.mxu0 0.0
    %6546 = vmatprep.mubr.f32.mxu0 0.0
    %6547 = vmatmul.mubr.f32.gmra.mrb[0].mxu0 %v6459
    %v6548 = vpop.f32.mrb[0].mxu0
    %v6549 = vpop.f32.mrb[0].mxu0
    %6550 = vmatprep.mubr.f32.mxu0 0.0
    %6551 = vmatmul.mubr.f32.gmra.mrb[0].mxu0 %v6460
    %v6552 = vpop.f32.mrb[0].mxu0
    %v6553 = vpop.f32.mrb[0].mxu0
    %6554 = vmatprep.mubr.f32.mxu0 0.0
    %6555 = vmatmul.mubr.f32.gmra.mrb[0].mxu0 %v6461
    %v6556 = vpop.f32.mrb[0].mxu0
    %v6557 = vadd.f32 0.0, %v6556
    %v6558 = vpop.f32.mrb[0].mxu0
    %6559 = vmatprep.mubr.f32.mxu0 0.0
    %6560 = vmatmul.mubr.f32.gmra.mrb[0].mxu0 %v6462
    %v6561 = vpop.f32.mrb[0].mxu0
    %v6562 = vpop.f32.mrb[0].mxu0
    %6563 = vmatprep.mubr.f32.mxu0 0.0
    %6564 = vmatmul.mubr.f32.gmra.mrb[0].mxu0 %v6463
    %v6565 = vpop.f32.mrb[0].mxu0
    %v6566 = vpop.f32.mrb[0].mxu0
    %6567 = vmatprep.mubr.f32.mxu0 0.0
    %6568 = vmatmul.mubr.f32.gmra.mrb[0].mxu0 %v6464
    %v6569 = vpop.f32.mrb[0].mxu0
    %v6570 = vadd.f32 0.0, %v6569
    %v6571 = vpop.f32.mrb[0].mxu0
    %6572 = vdwg.mxu0
    %v6573 = vadd.f32 %v6223, %v6557
    %v6574 = vadd.f32 %v6226, %v6570
    %s6575 = scalar_lea.vmem %s20, 1
    %v6576 = vld [vmem:[%s6575] sm:$0x1]
    %v6578 = vlaneseq
    %v6579 = vshrl.u32 %v6578, 7
    %v6580 = vsub.s32 0, %v6579
    %v6581 = vrot.slane %v6576, %v6580
    %v6583 = vadd.f32 %v6573, %v6581
    %v6584 = vadd.f32 %v6574, %v6581
    %v6586 = vrot.slane %v6584, 7
    %vm6588 = vcmask 1040384
    %v6589 = vsel %vm6588, %v6583, %v6586
    %v6590 = vld [vmem:[%s21] sm:$0xff]
    %v6591 = vld [vmem:[%s21 + $0x8] sm:$0xff]
    %v6592 = vld [vmem:[%s21 + $0x10] sm:$0xff]
    %v6593 = vld [vmem:[%s21 + $0x18] sm:$0xff]
    %v6594 = vld [vmem:[%s22] sm:$0x1]
    %v6596 = vlaneseq
    %v6597 = vshrl.u32 %v6596, 7
    %v6598 = vsub.s32 0, %v6597
    %v6599 = vrot.slane %v6594, %v6598
    %v6602 = vsel %vm192, %v6589, 0
    %6604 = vmatprep.subr.mxu0 0.0
    %6605 = vmatpush1.msra.mxu0 %v6590
    %6606 = vmatprep.subr.mxu0 0.0
    %6607 = vmatpush1.msra.mxu0 %v6591
    %6608 = vmatprep.subr.mxu0 0.0
    %6609 = vmatpush1.msra.mxu0 %v6592
    %6610 = vmatprep.subr.mxu0 0.0
    %6611 = vmatpush1.msra.mxu0 %v6593
    %6612 = vmatprep.subr.mxu0 0.0
    %6613 = vmatpush1.msra.mxu0 0.0
    %6614 = vmatprep.subr.mxu0 0.0
    %6615 = vmatpush1.msra.mxu0 0.0
    %6616 = vmatprep.subr.mxu0 0.0
    %6617 = vmatpush1.msra.mxu0 0.0
    %6618 = vmatprep.subr.mxu0 0.0
    %6619 = vmatpush1.msra.mxu0 0.0
    %6620 = vmatprep.subr.mxu0 0.0
    %6621 = vmatpush1.msra.mxu0 0.0
    %6622 = vmatprep.subr.mxu0 0.0
    %6623 = vmatpush1.msra.mxu0 0.0
    %6624 = vmatprep.subr.mxu0 0.0
    %6625 = vmatpush1.msra.mxu0 0.0
    %6626 = vmatprep.subr.mxu0 0.0
    %6627 = vmatpush1.msra.mxu0 0.0
    %6628 = vmatprep.subr.mxu0 0.0
    %6629 = vmatpush1.msra.mxu0 0.0
    %6630 = vmatprep.subr.mxu0 0.0
    %6631 = vmatpush1.msra.mxu0 0.0
    %6632 = vmatprep.subr.mxu0 0.0
    %6633 = vmatpush1.msra.mxu0 0.0
    %6634 = vmatprep.subr.mxu0 0.0
    %6635 = vmatpush1.msra.mxu0 0.0
    %6636 = vmatprep.subr.mxu0 0.0
    %6637 = vmatpush1.msra.mxu0 0.0
    %6638 = vmatprep.subr.mxu0 0.0
    %6639 = vmatpush1.msra.mxu0 0.0
    %6640 = vmatprep.subr.mxu0 0.0
    %6641 = vmatpush1.msra.mxu0 0.0
    %6642 = vmatprep.subr.mxu0 0.0
    %6643 = vmatpush1.msra.mxu0 0.0
    %6644 = vmatprep.subr.mxu0 0.0
    %6645 = vmatpush1.msra.mxu0 0.0
    %6646 = vmatprep.subr.mxu0 0.0
    %6647 = vmatpush1.msra.mxu0 0.0
    %6648 = vmatprep.subr.mxu0 0.0
    %6649 = vmatpush1.msra.mxu0 0.0
    %6650 = vmatprep.subr.mxu0 0.0
    %6651 = vmatpush1.msra.mxu0 0.0
    %6652 = vmatprep.subr.mxu0 0.0
    %6653 = vmatpush1.msra.mxu0 0.0
    %6654 = vmatprep.subr.mxu0 0.0
    %6655 = vmatpush1.msra.mxu0 0.0
    %6656 = vmatprep.subr.mxu0 0.0
    %6657 = vmatpush1.msra.mxu0 0.0
    %6658 = vmatprep.subr.mxu0 0.0
    %6659 = vmatpush1.msra.mxu0 0.0
    %6660 = vmatprep.subr.mxu0 0.0
    %6661 = vmatpush1.msra.mxu0 0.0
    %6662 = vmatprep.subr.mxu0 0.0
    %6663 = vmatpush1.msra.mxu0 0.0
    %6664 = vmatprep.subr.mxu0 0.0
    %6665 = vmatpush1.msra.mxu0 0.0
    %6666 = vmatprep.subr.mxu0 0.0
    %6667 = vmatpush1.msra.mxu0 0.0
    %6668 = vmatprep.mubr.f32.mxu0 0.0
    %6669 = vmatmul.mubr.f32.gmra.mrb[0].mxu0 %v6602
    %v6670 = vpop.f32.mrb[0].mxu0
    %v6671 = vadd.f32 %v6599, %v6670
    %v6672 = vpop.f32.mrb[0].mxu0
    %6673 = vdwg.mxu0
    %vm6674 = vcmask 74752
    %6675 = vst.msk [vmem:[#allocation3] sm:$0x3] %vm6674, %v6671
    // Predicated region
    $region94: #{vit_forward.1} parent=1 // pred_check
      _
    $region95: #{vit_forward.1} parent=1 // pred_check_branch
      %6677 = sbr.rel (0) target = $region97
    $region96: #{vit_forward.1} parent=1 // pred_region
      %s6679 = ssub.s32 32, 32
      %6680 = vsyncadd [#allocation4], %s6679
      %s6682 = sshll.u32 [#allocation3], 4
      %s6683 = int_to_ptr.vmem [resolvable:$true] %s6682
      %6685 = dma.vmem_to_hbm [thread:$0]  %s6683, 32, %s23, [#allocation4]
    $region97: #{vit_forward.1} parent=1 // pred_fallthru
      _
    // Predicated region
    $region98: #{vit_forward.1} parent=1 // pred_check
      _
    $region99: #{vit_forward.1} parent=1 // pred_check_branch
      %6687 = sbr.rel (0) target = $region101
    $region100: #{vit_forward.1} parent=1 // pred_region
      %6688 = dma.done [#allocation4], 32
    $region101: #{vit_forward.1} parent=1 // pred_fallthru
      _
    %6689 = vsyncpa [#allocation4], 1

</llo_original>
